<compile_context>
chip_gen: v6e
topology: v6e:2x2x1
jax: 0.10.0
libtpu: 0.0.40
codegen_flags: <defaults>
</compile_context>

<pallas_src>
import math

import jax
import jax.numpy as jnp
from jax.experimental import pallas as pl
from jax.experimental.pallas import tpu as pltpu

LRELU_GAIN = float(math.sqrt(2.0 / (1.0 + 0.2 ** 2)))   # calculate_gain('leaky_relu', 0.2)
IN_EPS = 1e-8                                           # instance-norm eps (assumed)
INV_SQRT2 = float(1.0 / math.sqrt(2.0))


# ------------------------------------------------------------------ fused block kernel

def encoder_block(mats, x, img_ds, *, first):
    """One StyleALAEAltEncoderBlock plus the encoder's `x + from_rgb(img); x /= sqrt(2)`
    skip, fused into a single pallas_call.

    mats   : dict of pre-scaled weight matrices (see prepare_block_mats)
    x      : (B, H, W, Cin) bf16 activations from the previous block, or None if `first`
    img_ds : (B, H, W, 3) bf16 nearest-downsampled input image
    returns: (x_out (B, H/2, W/2, Cout) bf16, w_contrib (B, 1, w_size) f32)
    """
    B, H, W, _ = img_ds.shape
    Cin = mats["wrgb"].shape[1]
    Cout = mats["b1"].shape[1]
    w_size = mats["a1b"].shape[1]
    Hp, Wp = H // 2, W // 2

    def kernel(*refs):
        if first:
            x_ref, rest = None, refs
        else:
            x_ref, rest = refs[0], refs[1:]
        (img_ref, wrgb_ref, brgb_ref, w1_ref, b1_ref, w2_ref, b2_ref,
         a1m_ref, a1s_ref, a1b_ref, a2m_ref, a2s_ref, a2b_ref,
         xo_ref, wo_ref, pad1_ref, pad2_ref) = rest

        # ---- skip path: x = (x + from_rgb(img)) / sqrt(2) -----------------------------
        r = jnp.dot(img_ref[0].reshape(H * W, 3), wrgb_ref[...],
                    preferred_element_type=jnp.float32) + brgb_ref[...]
        if first:
            # The torch forward applies layers[n].from_rgb(img) twice before the first
            # block (once outside the loop, once inside it): x = 2*from_rgb(img)/sqrt(2).
            x0 = r * (2.0 * INV_SQRT2)
        else:
            x0 = (x_ref[0].reshape(H * W, Cin).astype(jnp.float32) + r) * INV_SQRT2

        def conv3x3_lrelu(v, pad_ref, wmat_ref, bias_ref, c_in):
            # 3x3 "same" conv as ONE wide-K (9*c_in) im2col matmul on the MXU.
            # The 1-pixel halo is built in VMEM: input stored at sublane-aligned
            # column offset 8 inside a zeroed scratch -> unmasked interior store,
            # no extra HBM pad copy.
            pad_ref[...] = jnp.zeros_like(pad_ref)
            pad_ref[1:H + 1, 8:W + 8, :] = v.reshape(H, W, c_in).astype(pad_ref.dtype)
            slab = jnp.concatenate(
                [pad_ref[a:a + H, b + 7:b + 7 + W, :]
                 for a in range(3) for b in range(3)],
                axis=-1,
            ).reshape(H * W, 9 * c_in)
            y = jnp.dot(slab, wmat_ref[...], preferred_element_type=jnp.float32)
            y = y + bias_ref[...]
            return jnp.where(y >= 0.0, y, 0.2 * y)            # leaky_relu(0.2)

        def inst_norm(v):
            # TODO(synk): instance_norm_with_style_out assumed = spatial mean/std
            #             (biased variance, eps=1e-8) returning (x_norm, mean, std).
            m = jnp.mean(v, axis=0, keepdims=True)
            var = jnp.mean(jnp.square(v - m), axis=0, keepdims=True)
            s = jnp.sqrt(var + IN_EPS)
            return (v - m) / s, m, s

        # ---- conv1 + lrelu + instance-norm + aff1 -------------------------------------
        y1 = conv3x3_lrelu(x0, pad1_ref, w1_ref, b1_ref, Cin)
        y1n, m1, s1 = inst_norm(y1)
        style1 = (jnp.dot(m1, a1m_ref[...], preferred_element_type=jnp.float32)
                  + jnp.dot(s1, a1s_ref[...], preferred_element_type=jnp.float32)
                  + a1b_ref[...])

        # ---- conv2 + lrelu -------------------------------------------------------------
        y2 = conv3x3_lrelu(y1n, pad2_ref, w2_ref, b2_ref, Cout)

        # ---- 2x2 average pool on the flattened (H*W, C) slab ---------------------------
        # W is even, so adjacent flat-row pairs never straddle an image row.
        yw = y2.reshape(H * Wp, 2, Cout)
        yw = yw[:, 0, :] + yw[:, 1, :]                         # pool along W
        yh = yw.reshape(Hp, 2, Wp, Cout)
        pooled = ((yh[:, 0] + yh[:, 1]) * 0.25).reshape(Hp * Wp, Cout)   # pool along H

        # ---- instance-norm + aff2 ------------------------------------------------------
        pooled_n, m2, s2 = inst_norm(pooled)
        style2 = (jnp.dot(m2, a2m_ref[...], preferred_element_type=jnp.float32)
                  + jnp.dot(s2, a2s_ref[...], preferred_element_type=jnp.float32)
                  + a2b_ref[...])

        xo_ref[...] = pooled_n.reshape(1, Hp, Wp, Cout).astype(xo_ref.dtype)
        wo_ref[...] = (style1 + style2).reshape(1, 1, w_size)

    inputs, in_specs = [], []
    if not first:
        inputs.append(x)
        in_specs.append(pl.BlockSpec((1, H, W, Cin), lambda b: (b, 0, 0, 0)))
    inputs.append(img_ds)
    in_specs.append(pl.BlockSpec((1, H, W, 3), lambda b: (b, 0, 0, 0)))
    for name in ("wrgb", "brgb", "w1", "b1", "w2", "b2",
                 "a1m", "a1s", "a1b", "a2m", "a2s", "a2b"):
        arr = mats[name]
        inputs.append(arr)
        in_specs.append(pl.BlockSpec(arr.shape, lambda b, nd=arr.ndim: (0,) * nd))

    x_out, w_out = pl.pallas_call(
        kernel,
        out_shape=(jax.ShapeDtypeStruct((B, Hp, Wp, Cout), jnp.bfloat16),
                   jax.ShapeDtypeStruct((B, 1, w_size), jnp.float32)),
        grid=(B,),
        in_specs=in_specs,
        out_specs=(pl.BlockSpec((1, Hp, Wp, Cout), lambda b: (b, 0, 0, 0)),
                   pl.BlockSpec((1, 1, w_size), lambda b: (b, 0, 0))),
        scratch_shapes=[pltpu.VMEM((H + 2, W + 16, Cin), jnp.bfloat16),
                        pltpu.VMEM((H + 2, W + 16, Cout), jnp.bfloat16)],
        compiler_params=pltpu.CompilerParams(dimension_semantics=("parallel",)),
    )(*inputs)
    return x_out, w_out


# ------------------------------------------------------------------------ param helpers

def prepare_block_mats(p):
    """Pre-scale / reshape torch-layout params into kernel-friendly matrices."""
    cout, cin = p["conv1_w"].shape[0], p["conv1_w"].shape[1]
    # Conv2dNormalizedLR he constants (default gain assumed = lrelu gain; aff gain = 1.0).
    he1 = LRELU_GAIN / math.sqrt(cin * 9)
    he2 = LRELU_GAIN / math.sqrt(cout * 9)
    he_rgb = LRELU_GAIN / math.sqrt(3.0)
    he_aff = 1.0 / math.sqrt(2 * cout)

    w1 = jnp.transpose(p["conv1_w"], (2, 3, 1, 0)).reshape(9 * cin, cout) * he1
    w2 = jnp.transpose(p["conv2_w"], (2, 3, 1, 0)).reshape(9 * cout, cout) * he2
    wrgb = jnp.transpose(p["rgb_w"][:, :, 0, 0]) * he_rgb          # (3, cin)
    a1 = jnp.transpose(p["aff1_w"][:, :, 0, 0]) * he_aff           # (2*cout, w_size)
    a2 = jnp.transpose(p["aff2_w"][:, :, 0, 0]) * he_aff
    f32 = jnp.float32
    return {
        "w1": w1.astype(jnp.bfloat16), "b1": p["conv1_b"].reshape(1, cout).astype(f32),
        "w2": w2.astype(jnp.bfloat16), "b2": p["conv2_b"].reshape(1, cout).astype(f32),
        "wrgb": wrgb.astype(jnp.bfloat16), "brgb": p["rgb_b"].reshape(1, cin).astype(f32),
        "a1m": a1[:cout].astype(f32), "a1s": a1[cout:].astype(f32),
        "a1b": p["aff1_b"].reshape(1, -1).astype(f32),
        "a2m": a2[:cout].astype(f32), "a2s": a2[cout:].astype(f32),
        "a2b": p["aff2_b"].reshape(1, -1).astype(f32),
    }


def init_block_params(key, in_size, out_size, w_size):
    """Mirrors StyleALAEAltEncoderBlock params (N(0,1) weights, zero biases)."""
    k = jax.random.split(key, 5)
    return {
        "conv1_w": jax.random.normal(k[0], (out_size, in_size, 3, 3), jnp.float32),
        "conv1_b": jnp.zeros((out_size,), jnp.float32),
        "conv2_w": jax.random.normal(k[1], (out_size, out_size, 3, 3), jnp.float32),
        "conv2_b": jnp.zeros((out_size,), jnp.float32),
        "rgb_w": jax.random.normal(k[2], (in_size, 3, 1, 1), jnp.float32),
        "rgb_b": jnp.zeros((in_size,), jnp.float32),
        "aff1_w": jax.random.normal(k[3], (w_size, 2 * out_size, 1, 1), jnp.float32),
        "aff1_b": jnp.zeros((w_size,), jnp.float32),
        "aff2_w": jax.random.normal(k[4], (w_size, 2 * out_size, 1, 1), jnp.float32),
        "aff2_b": jnp.zeros((w_size,), jnp.float32),
    }


def init_encoder_params(key, w_size, n_downscales, full_res_h_size,
                        scaling_factor=2, max_h_size=1e10):
    deepest = min(int(full_res_h_size * scaling_factor ** n_downscales), int(max_h_size))
    keys = jax.random.split(key, n_downscales + 1)
    layers = [init_block_params(keys[0], deepest, deepest, w_size)]      # layer_list[0]
    for i in range(n_downscales):
        inp = min(int(full_res_h_size * scaling_factor ** (n_downscales - i - 1)), int(max_h_size))
        outp = min(int(full_res_h_size * scaling_factor ** (n_downscales - i)), int(max_h_size))
        layers.append(init_block_params(keys[i + 1], inp, outp, w_size))
    return {"layers": layers, "w_size": w_size, "n_downscales": n_downscales}


# ------------------------------------------------------------------------------ forward

def encoder_forward(params, img_nchw, phase=None):
    """ALAESkipEncoder.forward — default phase=None (alpha == 0) path."""
    n = params["n_downscales"]
    if phase is None:
        phase = n
    n_ds = min(int(phase), n)
    # TODO(synk): the fractional-phase (0 < alpha < 1) blending branch is not implemented;
    #             only the integer-phase / phase=None path used by default is covered.
    img = jnp.transpose(img_nchw, (0, 2, 3, 1)).astype(jnp.bfloat16)     # NHWC, bf16
    B = img.shape[0]

    x, w = None, None
    for i in range(n_ds + 1):
        p = params["layers"][n_ds - i]
        mats = prepare_block_mats(p)
        f = 2 ** i
        img_ds = img[:, ::f, ::f, :]     # F.interpolate(img, size=H/2**i), mode='nearest'
        x, w_blk = encoder_block(mats, x, img_ds, first=(i == 0))
        w = w_blk if w is None else w + w_blk
    return w.reshape(B, params["w_size"], 1, 1).astype(jnp.float32)      # torch (B, w, 1, 1)


# --------------------------------------------------------------------------------- main

if __name__ == "__main__":
    key = jax.random.PRNGKey(0)
    k_params, k_img = jax.random.split(key)

    w_size, n_downscales, full_res_h_size, batch, res = 8, 2, 4, 2, 16
    params = init_encoder_params(k_params, w_size, n_downscales, full_res_h_size)
    img = jax.random.normal(k_img, (batch, 3, res, res), jnp.float32)    # (B, 3, H, W)

    w = encoder_forward(params, img)
    w = jax.block_until_ready(w)

    assert w.shape == (batch, w_size, 1, 1), w.shape
    assert w.dtype == jnp.float32
    assert bool(jnp.all(jnp.isfinite(w)))
    print("KERNEL_OK")
</pallas_src>

<mosaic_0001>
module attributes {stable_mosaic.version = 11 : i64} {
  func.func @kernel(%arg0: i32, %arg1: memref<1x16x16x3xbf16, #tpu.memory_space<vmem>>, %arg2: memref<3x4xbf16, #tpu.memory_space<vmem>>, %arg3: memref<1x4xf32, #tpu.memory_space<vmem>>, %arg4: memref<36x8xbf16, #tpu.memory_space<vmem>>, %arg5: memref<1x8xf32, #tpu.memory_space<vmem>>, %arg6: memref<72x8xbf16, #tpu.memory_space<vmem>>, %arg7: memref<1x8xf32, #tpu.memory_space<vmem>>, %arg8: memref<8x8xf32, #tpu.memory_space<vmem>>, %arg9: memref<8x8xf32, #tpu.memory_space<vmem>>, %arg10: memref<1x8xf32, #tpu.memory_space<vmem>>, %arg11: memref<8x8xf32, #tpu.memory_space<vmem>>, %arg12: memref<8x8xf32, #tpu.memory_space<vmem>>, %arg13: memref<1x8xf32, #tpu.memory_space<vmem>>, %arg14: memref<1x8x8x8xbf16, #tpu.memory_space<vmem>>, %arg15: memref<1x1x8xf32, #tpu.memory_space<vmem>>, %arg16: memref<18x32x4xbf16, #tpu.memory_space<vmem>>, %arg17: memref<18x32x8xbf16, #tpu.memory_space<vmem>>) attributes {dimension_semantics = [#tpu.dimension_semantics<parallel>], iteration_bounds = array<i64: 2>, scalar_prefetch = 0 : i64, scratch_operands = 2 : i64, tpu.core_type = #tpu.core_type<tc>, window_params = [{transform_indices = @transform_0, window_bounds = array<i64: 1, 16, 16, 3>}, {pipeline_mode = #tpu.pipeline_mode<synchronous>, transform_indices = @transform_1, window_bounds = array<i64: 3, 4>}, {pipeline_mode = #tpu.pipeline_mode<synchronous>, transform_indices = @transform_2, window_bounds = array<i64: 1, 4>}, {pipeline_mode = #tpu.pipeline_mode<synchronous>, transform_indices = @transform_3, window_bounds = array<i64: 36, 8>}, {pipeline_mode = #tpu.pipeline_mode<synchronous>, transform_indices = @transform_4, window_bounds = array<i64: 1, 8>}, {pipeline_mode = #tpu.pipeline_mode<synchronous>, transform_indices = @transform_5, window_bounds = array<i64: 72, 8>}, {pipeline_mode = #tpu.pipeline_mode<synchronous>, transform_indices = @transform_6, window_bounds = array<i64: 1, 8>}, {pipeline_mode = #tpu.pipeline_mode<synchronous>, transform_indices = @transform_7, window_bounds = array<i64: 8, 8>}, {pipeline_mode = #tpu.pipeline_mode<synchronous>, transform_indices = @transform_8, window_bounds = array<i64: 8, 8>}, {pipeline_mode = #tpu.pipeline_mode<synchronous>, transform_indices = @transform_9, window_bounds = array<i64: 1, 8>}, {pipeline_mode = #tpu.pipeline_mode<synchronous>, transform_indices = @transform_10, window_bounds = array<i64: 8, 8>}, {pipeline_mode = #tpu.pipeline_mode<synchronous>, transform_indices = @transform_11, window_bounds = array<i64: 8, 8>}, {pipeline_mode = #tpu.pipeline_mode<synchronous>, transform_indices = @transform_12, window_bounds = array<i64: 1, 8>}, {transform_indices = @transform_13, window_bounds = array<i64: 1, 8, 8, 8>}, {transform_indices = @transform_14, window_bounds = array<i64: 1, 1, 8>}]} {
    %c0 = arith.constant 0 : index
    %c0_0 = arith.constant 0 : index
    %c0_1 = arith.constant 0 : index
    %c0_2 = arith.constant 0 : index
    %0 = vector.load %arg1[%c0, %c0_0, %c0_1, %c0_2] : memref<1x16x16x3xbf16, #tpu.memory_space<vmem>>, vector<1x16x16x3xbf16>
    %1 = vector.shape_cast %0 : vector<1x16x16x3xbf16> to vector<16x16x3xbf16>
    %2 = vector.shape_cast %1 : vector<16x16x3xbf16> to vector<256x3xbf16>
    %c0_3 = arith.constant 0 : index
    %c0_4 = arith.constant 0 : index
    %3 = vector.load %arg2[%c0_3, %c0_4] : memref<3x4xbf16, #tpu.memory_space<vmem>>, vector<3x4xbf16>
    %cst = arith.constant dense<0.000000e+00> : vector<256x4xf32>
    %4 = tpu.matmul %2, %3, %cst {dimension_numbers = #tpu.dot_dimension_numbers<[1], [0], [0], [1], [0, 0, 1, 1], [], []>} : vector<256x3xbf16>, vector<3x4xbf16>, vector<256x4xf32> -> vector<256x4xf32>
    %c0_5 = arith.constant 0 : index
    %c0_6 = arith.constant 0 : index
    %5 = vector.load %arg3[%c0_5, %c0_6] : memref<1x4xf32, #tpu.memory_space<vmem>>, vector<1x4xf32>
    %6 = vector.broadcast %5 : vector<1x4xf32> to vector<256x4xf32>
    %7 = arith.addf %4, %6 : vector<256x4xf32>
    %cst_7 = arith.constant 1.41421354 : f32
    %8 = vector.broadcast %cst_7 : f32 to vector<256x4xf32>
    %9 = arith.mulf %7, %8 : vector<256x4xf32>
    %cst_8 = arith.constant 0.000000e+00 : bf16
    %10 = vector.broadcast %cst_8 : bf16 to vector<18x32x4xbf16>
    %c0_9 = arith.constant 0 : index
    %c0_10 = arith.constant 0 : index
    %c0_11 = arith.constant 0 : index
    %11 = vector.load %arg16[%c0_9, %c0_10, %c0_11] : memref<18x32x4xbf16, #tpu.memory_space<vmem>>, vector<18x32x4xbf16>
    tpu.vector_store %arg16[%c0_9, %c0_10, %c0_11], %10 {strides = array<i32>} : memref<18x32x4xbf16, #tpu.memory_space<vmem>>, vector<18x32x4xbf16>,
    %12 = vector.shape_cast %9 : vector<256x4xf32> to vector<16x16x4xf32>
    %13 = arith.truncf %12 : vector<16x16x4xf32> to vector<16x16x4xbf16>
    %c1 = arith.constant 1 : index
    %c8 = arith.constant 8 : index
    %c0_12 = arith.constant 0 : index
    %14 = vector.load %arg16[%c1, %c8, %c0_12] : memref<18x32x4xbf16, #tpu.memory_space<vmem>>, vector<16x16x4xbf16>
    tpu.vector_store %arg16[%c1, %c8, %c0_12], %13 {strides = array<i32>} : memref<18x32x4xbf16, #tpu.memory_space<vmem>>, vector<16x16x4xbf16>,
    %c0_13 = arith.constant 0 : index
    %c7 = arith.constant 7 : index
    %c0_14 = arith.constant 0 : index
    %15 = vector.load %arg16[%c0_13, %c7, %c0_14] : memref<18x32x4xbf16, #tpu.memory_space<vmem>>, vector<16x16x4xbf16>
    %c0_15 = arith.constant 0 : index
    %c8_16 = arith.constant 8 : index
    %c0_17 = arith.constant 0 : index
    %16 = vector.load %arg16[%c0_15, %c8_16, %c0_17] : memref<18x32x4xbf16, #tpu.memory_space<vmem>>, vector<16x16x4xbf16>
    %c0_18 = arith.constant 0 : index
    %c9 = arith.constant 9 : index
    %c0_19 = arith.constant 0 : index
    %17 = vector.load %arg16[%c0_18, %c9, %c0_19] : memref<18x32x4xbf16, #tpu.memory_space<vmem>>, vector<16x16x4xbf16>
    %c1_20 = arith.constant 1 : index
    %c7_21 = arith.constant 7 : index
    %c0_22 = arith.constant 0 : index
    %18 = vector.load %arg16[%c1_20, %c7_21, %c0_22] : memref<18x32x4xbf16, #tpu.memory_space<vmem>>, vector<16x16x4xbf16>
    %c1_23 = arith.constant 1 : index
    %c8_24 = arith.constant 8 : index
    %c0_25 = arith.constant 0 : index
    %19 = vector.load %arg16[%c1_23, %c8_24, %c0_25] : memref<18x32x4xbf16, #tpu.memory_space<vmem>>, vector<16x16x4xbf16>
    %c1_26 = arith.constant 1 : index
    %c9_27 = arith.constant 9 : index
    %c0_28 = arith.constant 0 : index
    %20 = vector.load %arg16[%c1_26, %c9_27, %c0_28] : memref<18x32x4xbf16, #tpu.memory_space<vmem>>, vector<16x16x4xbf16>
    %c2 = arith.constant 2 : index
    %c7_29 = arith.constant 7 : index
    %c0_30 = arith.constant 0 : index
    %21 = vector.load %arg16[%c2, %c7_29, %c0_30] : memref<18x32x4xbf16, #tpu.memory_space<vmem>>, vector<16x16x4xbf16>
    %c2_31 = arith.constant 2 : index
    %c8_32 = arith.constant 8 : index
    %c0_33 = arith.constant 0 : index
    %22 = vector.load %arg16[%c2_31, %c8_32, %c0_33] : memref<18x32x4xbf16, #tpu.memory_space<vmem>>, vector<16x16x4xbf16>
    %c2_34 = arith.constant 2 : index
    %c9_35 = arith.constant 9 : index
    %c0_36 = arith.constant 0 : index
    %23 = vector.load %arg16[%c2_34, %c9_35, %c0_36] : memref<18x32x4xbf16, #tpu.memory_space<vmem>>, vector<16x16x4xbf16>
    %24 = tpu.concatenate %15, %16, %17, %18, %19, %20, %21, %22, %23 in 2 : vector<16x16x4xbf16>, vector<16x16x4xbf16>, vector<16x16x4xbf16>, vector<16x16x4xbf16>, vector<16x16x4xbf16>, vector<16x16x4xbf16>, vector<16x16x4xbf16>, vector<16x16x4xbf16>, vector<16x16x4xbf16> -> vector<16x16x36xbf16>
    %25 = vector.shape_cast %24 : vector<16x16x36xbf16> to vector<256x36xbf16>
    %c0_37 = arith.constant 0 : index
    %c0_38 = arith.constant 0 : index
    %26 = vector.load %arg4[%c0_37, %c0_38] : memref<36x8xbf16, #tpu.memory_space<vmem>>, vector<36x8xbf16>
    %cst_39 = arith.constant dense<0.000000e+00> : vector<256x8xf32>
    %27 = tpu.matmul %25, %26, %cst_39 {dimension_numbers = #tpu.dot_dimension_numbers<[1], [0], [0], [1], [0, 0, 1, 1], [], []>} : vector<256x36xbf16>, vector<36x8xbf16>, vector<256x8xf32> -> vector<256x8xf32>
    %c0_40 = arith.constant 0 : index
    %c0_41 = arith.constant 0 : index
    %28 = vector.load %arg5[%c0_40, %c0_41] : memref<1x8xf32, #tpu.memory_space<vmem>>, vector<1x8xf32>
    %29 = vector.broadcast %28 : vector<1x8xf32> to vector<256x8xf32>
    %30 = arith.addf %27, %29 : vector<256x8xf32>
    %cst_42 = arith.constant 0.000000e+00 : f32
    %31 = vector.broadcast %cst_42 : f32 to vector<256x8xf32>
    %32 = arith.cmpf oge, %30, %31 : vector<256x8xf32>
    %cst_43 = arith.constant 2.000000e-01 : f32
    %33 = vector.broadcast %cst_43 : f32 to vector<256x8xf32>
    %34 = arith.mulf %33, %30 : vector<256x8xf32>
    %35 = arith.select %32, %30, %34 : vector<256x8xi1>, vector<256x8xf32>
    %cst_44 = arith.constant dense<0.000000e+00> : vector<8xf32>
    %36 = vector.multi_reduction <add>, %35, %cst_44 [0] : vector<256x8xf32> to vector<8xf32>
    %37 = vector.shape_cast %36 : vector<8xf32> to vector<1x8xf32>
    %cst_45 = arith.constant 2.560000e+02 : f32
    %38 = vector.broadcast %cst_45 : f32 to vector<1x8xf32>
    %39 = arith.divf %37, %38 : vector<1x8xf32>
    %40 = vector.broadcast %39 : vector<1x8xf32> to vector<256x8xf32>
    %41 = arith.subf %35, %40 : vector<256x8xf32>
    %42 = arith.mulf %41, %41 : vector<256x8xf32>
    %cst_46 = arith.constant dense<0.000000e+00> : vector<8xf32>
    %43 = vector.multi_reduction <add>, %42, %cst_46 [0] : vector<256x8xf32> to vector<8xf32>
    %44 = vector.shape_cast %43 : vector<8xf32> to vector<1x8xf32>
    %cst_47 = arith.constant 2.560000e+02 : f32
    %45 = vector.broadcast %cst_47 : f32 to vector<1x8xf32>
    %46 = arith.divf %44, %45 : vector<1x8xf32>
    %cst_48 = arith.constant 9.99999993E-9 : f32
    %47 = vector.broadcast %cst_48 : f32 to vector<1x8xf32>
    %48 = arith.addf %46, %47 : vector<1x8xf32>
    %49 = math.sqrt %48 : vector<1x8xf32>
    %50 = vector.broadcast %39 : vector<1x8xf32> to vector<256x8xf32>
    %51 = arith.subf %35, %50 : vector<256x8xf32>
    %52 = vector.broadcast %49 : vector<1x8xf32> to vector<256x8xf32>
    %53 = arith.divf %51, %52 : vector<256x8xf32>
    %c0_49 = arith.constant 0 : index
    %c0_50 = arith.constant 0 : index
    %54 = vector.load %arg8[%c0_49, %c0_50] : memref<8x8xf32, #tpu.memory_space<vmem>>, vector<8x8xf32>
    %cst_51 = arith.constant dense<0.000000e+00> : vector<1x8xf32>
    %55 = tpu.matmul %39, %54, %cst_51 {dimension_numbers = #tpu.dot_dimension_numbers<[1], [0], [0], [1], [0, 0, 1, 1], [], []>} : vector<1x8xf32>, vector<8x8xf32>, vector<1x8xf32> -> vector<1x8xf32>
    %c0_52 = arith.constant 0 : index
    %c0_53 = arith.constant 0 : index
    %56 = vector.load %arg9[%c0_52, %c0_53] : memref<8x8xf32, #tpu.memory_space<vmem>>, vector<8x8xf32>
    %cst_54 = arith.constant dense<0.000000e+00> : vector<1x8xf32>
    %57 = tpu.matmul %49, %56, %cst_54 {dimension_numbers = #tpu.dot_dimension_numbers<[1], [0], [0], [1], [0, 0, 1, 1], [], []>} : vector<1x8xf32>, vector<8x8xf32>, vector<1x8xf32> -> vector<1x8xf32>
    %58 = arith.addf %55, %57 : vector<1x8xf32>
    %c0_55 = arith.constant 0 : index
    %c0_56 = arith.constant 0 : index
    %59 = vector.load %arg10[%c0_55, %c0_56] : memref<1x8xf32, #tpu.memory_space<vmem>>, vector<1x8xf32>
    %60 = arith.addf %58, %59 : vector<1x8xf32>
    %cst_57 = arith.constant 0.000000e+00 : bf16
    %61 = vector.broadcast %cst_57 : bf16 to vector<18x32x8xbf16>
    %c0_58 = arith.constant 0 : index
    %c0_59 = arith.constant 0 : index
    %c0_60 = arith.constant 0 : index
    %62 = vector.load %arg17[%c0_58, %c0_59, %c0_60] : memref<18x32x8xbf16, #tpu.memory_space<vmem>>, vector<18x32x8xbf16>
    tpu.vector_store %arg17[%c0_58, %c0_59, %c0_60], %61 {strides = array<i32>} : memref<18x32x8xbf16, #tpu.memory_space<vmem>>, vector<18x32x8xbf16>,
    %63 = vector.shape_cast %53 : vector<256x8xf32> to vector<16x16x8xf32>
    %64 = arith.truncf %63 : vector<16x16x8xf32> to vector<16x16x8xbf16>
    %c1_61 = arith.constant 1 : index
    %c8_62 = arith.constant 8 : index
    %c0_63 = arith.constant 0 : index
    %65 = vector.load %arg17[%c1_61, %c8_62, %c0_63] : memref<18x32x8xbf16, #tpu.memory_space<vmem>>, vector<16x16x8xbf16>
    tpu.vector_store %arg17[%c1_61, %c8_62, %c0_63], %64 {strides = array<i32>} : memref<18x32x8xbf16, #tpu.memory_space<vmem>>, vector<16x16x8xbf16>,
    %c0_64 = arith.constant 0 : index
    %c7_65 = arith.constant 7 : index
    %c0_66 = arith.constant 0 : index
    %66 = vector.load %arg17[%c0_64, %c7_65, %c0_66] : memref<18x32x8xbf16, #tpu.memory_space<vmem>>, vector<16x16x8xbf16>
    %c0_67 = arith.constant 0 : index
    %c8_68 = arith.constant 8 : index
    %c0_69 = arith.constant 0 : index
    %67 = vector.load %arg17[%c0_67, %c8_68, %c0_69] : memref<18x32x8xbf16, #tpu.memory_space<vmem>>, vector<16x16x8xbf16>
    %c0_70 = arith.constant 0 : index
    %c9_71 = arith.constant 9 : index
    %c0_72 = arith.constant 0 : index
    %68 = vector.load %arg17[%c0_70, %c9_71, %c0_72] : memref<18x32x8xbf16, #tpu.memory_space<vmem>>, vector<16x16x8xbf16>
    %c1_73 = arith.constant 1 : index
    %c7_74 = arith.constant 7 : index
    %c0_75 = arith.constant 0 : index
    %69 = vector.load %arg17[%c1_73, %c7_74, %c0_75] : memref<18x32x8xbf16, #tpu.memory_space<vmem>>, vector<16x16x8xbf16>
    %c1_76 = arith.constant 1 : index
    %c8_77 = arith.constant 8 : index
    %c0_78 = arith.constant 0 : index
    %70 = vector.load %arg17[%c1_76, %c8_77, %c0_78] : memref<18x32x8xbf16, #tpu.memory_space<vmem>>, vector<16x16x8xbf16>
    %c1_79 = arith.constant 1 : index
    %c9_80 = arith.constant 9 : index
    %c0_81 = arith.constant 0 : index
    %71 = vector.load %arg17[%c1_79, %c9_80, %c0_81] : memref<18x32x8xbf16, #tpu.memory_space<vmem>>, vector<16x16x8xbf16>
    %c2_82 = arith.constant 2 : index
    %c7_83 = arith.constant 7 : index
    %c0_84 = arith.constant 0 : index
    %72 = vector.load %arg17[%c2_82, %c7_83, %c0_84] : memref<18x32x8xbf16, #tpu.memory_space<vmem>>, vector<16x16x8xbf16>
    %c2_85 = arith.constant 2 : index
    %c8_86 = arith.constant 8 : index
    %c0_87 = arith.constant 0 : index
    %73 = vector.load %arg17[%c2_85, %c8_86, %c0_87] : memref<18x32x8xbf16, #tpu.memory_space<vmem>>, vector<16x16x8xbf16>
    %c2_88 = arith.constant 2 : index
    %c9_89 = arith.constant 9 : index
    %c0_90 = arith.constant 0 : index
    %74 = vector.load %arg17[%c2_88, %c9_89, %c0_90] : memref<18x32x8xbf16, #tpu.memory_space<vmem>>, vector<16x16x8xbf16>
    %75 = tpu.concatenate %66, %67, %68, %69, %70, %71, %72, %73, %74 in 2 : vector<16x16x8xbf16>, vector<16x16x8xbf16>, vector<16x16x8xbf16>, vector<16x16x8xbf16>, vector<16x16x8xbf16>, vector<16x16x8xbf16>, vector<16x16x8xbf16>, vector<16x16x8xbf16>, vector<16x16x8xbf16> -> vector<16x16x72xbf16>
    %76 = vector.shape_cast %75 : vector<16x16x72xbf16> to vector<256x72xbf16>
    %c0_91 = arith.constant 0 : index
    %c0_92 = arith.constant 0 : index
    %77 = vector.load %arg6[%c0_91, %c0_92] : memref<72x8xbf16, #tpu.memory_space<vmem>>, vector<72x8xbf16>
    %cst_93 = arith.constant dense<0.000000e+00> : vector<256x8xf32>
    %78 = tpu.matmul %76, %77, %cst_93 {dimension_numbers = #tpu.dot_dimension_numbers<[1], [0], [0], [1], [0, 0, 1, 1], [], []>} : vector<256x72xbf16>, vector<72x8xbf16>, vector<256x8xf32> -> vector<256x8xf32>
    %c0_94 = arith.constant 0 : index
    %c0_95 = arith.constant 0 : index
    %79 = vector.load %arg7[%c0_94, %c0_95] : memref<1x8xf32, #tpu.memory_space<vmem>>, vector<1x8xf32>
    %80 = vector.broadcast %79 : vector<1x8xf32> to vector<256x8xf32>
    %81 = arith.addf %78, %80 : vector<256x8xf32>
    %cst_96 = arith.constant 0.000000e+00 : f32
    %82 = vector.broadcast %cst_96 : f32 to vector<256x8xf32>
    %83 = arith.cmpf oge, %81, %82 : vector<256x8xf32>
    %cst_97 = arith.constant 2.000000e-01 : f32
    %84 = vector.broadcast %cst_97 : f32 to vector<256x8xf32>
    %85 = arith.mulf %84, %81 : vector<256x8xf32>
    %86 = arith.select %83, %81, %85 : vector<256x8xi1>, vector<256x8xf32>
    %87 = vector.shape_cast %86 : vector<256x8xf32> to vector<128x2x8xf32>
    %88 = vector.extract_strided_slice %87 {offsets = [0, 0, 0], sizes = [128, 1, 8], strides = [1, 1, 1]} : vector<128x2x8xf32> to vector<128x1x8xf32>
    %89 = vector.shape_cast %88 : vector<128x1x8xf32> to vector<128x8xf32>
    %90 = vector.extract_strided_slice %87 {offsets = [0, 1, 0], sizes = [128, 1, 8], strides = [1, 1, 1]} : vector<128x2x8xf32> to vector<128x1x8xf32>
    %91 = vector.shape_cast %90 : vector<128x1x8xf32> to vector<128x8xf32>
    %92 = arith.addf %89, %91 : vector<128x8xf32>
    %93 = vector.shape_cast %92 : vector<128x8xf32> to vector<8x2x8x8xf32>
    %94 = vector.extract_strided_slice %93 {offsets = [0, 0, 0, 0], sizes = [8, 1, 8, 8], strides = [1, 1, 1, 1]} : vector<8x2x8x8xf32> to vector<8x1x8x8xf32>
    %95 = vector.shape_cast %94 : vector<8x1x8x8xf32> to vector<8x8x8xf32>
    %96 = vector.extract_strided_slice %93 {offsets = [0, 1, 0, 0], sizes = [8, 1, 8, 8], strides = [1, 1, 1, 1]} : vector<8x2x8x8xf32> to vector<8x1x8x8xf32>
    %97 = vector.shape_cast %96 : vector<8x1x8x8xf32> to vector<8x8x8xf32>
    %98 = arith.addf %95, %97 : vector<8x8x8xf32>
    %cst_98 = arith.constant 2.500000e-01 : f32
    %99 = vector.broadcast %cst_98 : f32 to vector<8x8x8xf32>
    %100 = arith.mulf %98, %99 : vector<8x8x8xf32>
    %101 = vector.shape_cast %100 : vector<8x8x8xf32> to vector<64x8xf32>
    %cst_99 = arith.constant dense<0.000000e+00> : vector<8xf32>
    %102 = vector.multi_reduction <add>, %101, %cst_99 [0] : vector<64x8xf32> to vector<8xf32>
    %103 = vector.shape_cast %102 : vector<8xf32> to vector<1x8xf32>
    %cst_100 = arith.constant 6.400000e+01 : f32
    %104 = vector.broadcast %cst_100 : f32 to vector<1x8xf32>
    %105 = arith.divf %103, %104 : vector<1x8xf32>
    %106 = vector.broadcast %105 : vector<1x8xf32> to vector<64x8xf32>
    %107 = arith.subf %101, %106 : vector<64x8xf32>
    %108 = arith.mulf %107, %107 : vector<64x8xf32>
    %cst_101 = arith.constant dense<0.000000e+00> : vector<8xf32>
    %109 = vector.multi_reduction <add>, %108, %cst_101 [0] : vector<64x8xf32> to vector<8xf32>
    %110 = vector.shape_cast %109 : vector<8xf32> to vector<1x8xf32>
    %cst_102 = arith.constant 6.400000e+01 : f32
    %111 = vector.broadcast %cst_102 : f32 to vector<1x8xf32>
    %112 = arith.divf %110, %111 : vector<1x8xf32>
    %cst_103 = arith.constant 9.99999993E-9 : f32
    %113 = vector.broadcast %cst_103 : f32 to vector<1x8xf32>
    %114 = arith.addf %112, %113 : vector<1x8xf32>
    %115 = math.sqrt %114 : vector<1x8xf32>
    %116 = vector.broadcast %105 : vector<1x8xf32> to vector<64x8xf32>
    %117 = arith.subf %101, %116 : vector<64x8xf32>
    %118 = vector.broadcast %115 : vector<1x8xf32> to vector<64x8xf32>
    %119 = arith.divf %117, %118 : vector<64x8xf32>
    %c0_104 = arith.constant 0 : index
    %c0_105 = arith.constant 0 : index
    %120 = vector.load %arg11[%c0_104, %c0_105] : memref<8x8xf32, #tpu.memory_space<vmem>>, vector<8x8xf32>
    %cst_106 = arith.constant dense<0.000000e+00> : vector<1x8xf32>
    %121 = tpu.matmul %105, %120, %cst_106 {dimension_numbers = #tpu.dot_dimension_numbers<[1], [0], [0], [1], [0, 0, 1, 1], [], []>} : vector<1x8xf32>, vector<8x8xf32>, vector<1x8xf32> -> vector<1x8xf32>
    %c0_107 = arith.constant 0 : index
    %c0_108 = arith.constant 0 : index
    %122 = vector.load %arg12[%c0_107, %c0_108] : memref<8x8xf32, #tpu.memory_space<vmem>>, vector<8x8xf32>
    %cst_109 = arith.constant dense<0.000000e+00> : vector<1x8xf32>
    %123 = tpu.matmul %115, %122, %cst_109 {dimension_numbers = #tpu.dot_dimension_numbers<[1], [0], [0], [1], [0, 0, 1, 1], [], []>} : vector<1x8xf32>, vector<8x8xf32>, vector<1x8xf32> -> vector<1x8xf32>
    %124 = arith.addf %121, %123 : vector<1x8xf32>
    %c0_110 = arith.constant 0 : index
    %c0_111 = arith.constant 0 : index
    %125 = vector.load %arg13[%c0_110, %c0_111] : memref<1x8xf32, #tpu.memory_space<vmem>>, vector<1x8xf32>
    %126 = arith.addf %124, %125 : vector<1x8xf32>
    %127 = vector.shape_cast %119 : vector<64x8xf32> to vector<1x8x8x8xf32>
    %128 = arith.truncf %127 : vector<1x8x8x8xf32> to vector<1x8x8x8xbf16>
    %c0_112 = arith.constant 0 : index
    %c0_113 = arith.constant 0 : index
    %c0_114 = arith.constant 0 : index
    %c0_115 = arith.constant 0 : index
    %129 = vector.load %arg14[%c0_112, %c0_113, %c0_114, %c0_115] : memref<1x8x8x8xbf16, #tpu.memory_space<vmem>>, vector<1x8x8x8xbf16>
    tpu.vector_store %arg14[%c0_112, %c0_113, %c0_114, %c0_115], %128 {strides = array<i32>} : memref<1x8x8x8xbf16, #tpu.memory_space<vmem>>, vector<1x8x8x8xbf16>,
    %130 = arith.addf %60, %126 : vector<1x8xf32>
    %131 = vector.shape_cast %130 : vector<1x8xf32> to vector<1x1x8xf32>
    %c0_116 = arith.constant 0 : index
    %c0_117 = arith.constant 0 : index
    %c0_118 = arith.constant 0 : index
    %132 = vector.load %arg15[%c0_116, %c0_117, %c0_118] : memref<1x1x8xf32, #tpu.memory_space<vmem>>, vector<1x1x8xf32>
    tpu.vector_store %arg15[%c0_116, %c0_117, %c0_118], %131 {strides = array<i32>} : memref<1x1x8xf32, #tpu.memory_space<vmem>>, vector<1x1x8xf32>,
    return
  }
  func.func @transform_0(%arg0: i32) -> (i32, i32, i32, i32) {
    %c0_i32 = arith.constant 0 : i32
    %c0_i32_0 = arith.constant 0 : i32
    %c0_i32_1 = arith.constant 0 : i32
    %c0_i32_2 = arith.constant 0 : i32
    return %arg0, %c0_i32, %c0_i32_0, %c0_i32_1 : i32, i32, i32, i32
  }
  func.func @transform_1(%arg0: i32) -> (i32, i32) {
    %c0_i32 = arith.constant 0 : i32
    %c0_i32_0 = arith.constant 0 : i32
    %c0_i32_1 = arith.constant 0 : i32
    return %c0_i32, %c0_i32_0 : i32, i32
  }
  func.func @transform_2(%arg0: i32) -> (i32, i32) {
    %c0_i32 = arith.constant 0 : i32
    %c0_i32_0 = arith.constant 0 : i32
    %c0_i32_1 = arith.constant 0 : i32
    return %c0_i32, %c0_i32_0 : i32, i32
  }
  func.func @transform_3(%arg0: i32) -> (i32, i32) {
    %c0_i32 = arith.constant 0 : i32
    %c0_i32_0 = arith.constant 0 : i32
    %c0_i32_1 = arith.constant 0 : i32
    return %c0_i32, %c0_i32_0 : i32, i32
  }
  func.func @transform_4(%arg0: i32) -> (i32, i32) {
    %c0_i32 = arith.constant 0 : i32
    %c0_i32_0 = arith.constant 0 : i32
    %c0_i32_1 = arith.constant 0 : i32
    return %c0_i32, %c0_i32_0 : i32, i32
  }
  func.func @transform_5(%arg0: i32) -> (i32, i32) {
    %c0_i32 = arith.constant 0 : i32
    %c0_i32_0 = arith.constant 0 : i32
    %c0_i32_1 = arith.constant 0 : i32
    return %c0_i32, %c0_i32_0 : i32, i32
  }
  func.func @transform_6(%arg0: i32) -> (i32, i32) {
    %c0_i32 = arith.constant 0 : i32
    %c0_i32_0 = arith.constant 0 : i32
    %c0_i32_1 = arith.constant 0 : i32
    return %c0_i32, %c0_i32_0 : i32, i32
  }
  func.func @transform_7(%arg0: i32) -> (i32, i32) {
    %c0_i32 = arith.constant 0 : i32
    %c0_i32_0 = arith.constant 0 : i32
    %c0_i32_1 = arith.constant 0 : i32
    return %c0_i32, %c0_i32_0 : i32, i32
  }
  func.func @transform_8(%arg0: i32) -> (i32, i32) {
    %c0_i32 = arith.constant 0 : i32
    %c0_i32_0 = arith.constant 0 : i32
    %c0_i32_1 = arith.constant 0 : i32
    return %c0_i32, %c0_i32_0 : i32, i32
  }
  func.func @transform_9(%arg0: i32) -> (i32, i32) {
    %c0_i32 = arith.constant 0 : i32
    %c0_i32_0 = arith.constant 0 : i32
    %c0_i32_1 = arith.constant 0 : i32
    return %c0_i32, %c0_i32_0 : i32, i32
  }
  func.func @transform_10(%arg0: i32) -> (i32, i32) {
    %c0_i32 = arith.constant 0 : i32
    %c0_i32_0 = arith.constant 0 : i32
    %c0_i32_1 = arith.constant 0 : i32
    return %c0_i32, %c0_i32_0 : i32, i32
  }
  func.func @transform_11(%arg0: i32) -> (i32, i32) {
    %c0_i32 = arith.constant 0 : i32
    %c0_i32_0 = arith.constant 0 : i32
    %c0_i32_1 = arith.constant 0 : i32
    return %c0_i32, %c0_i32_0 : i32, i32
  }
  func.func @transform_12(%arg0: i32) -> (i32, i32) {
    %c0_i32 = arith.constant 0 : i32
    %c0_i32_0 = arith.constant 0 : i32
    %c0_i32_1 = arith.constant 0 : i32
    return %c0_i32, %c0_i32_0 : i32, i32
  }
  func.func @transform_13(%arg0: i32) -> (i32, i32, i32, i32) {
    %c0_i32 = arith.constant 0 : i32
    %c0_i32_0 = arith.constant 0 : i32
    %c0_i32_1 = arith.constant 0 : i32
    %c0_i32_2 = arith.constant 0 : i32
    return %arg0, %c0_i32, %c0_i32_0, %c0_i32_1 : i32, i32, i32, i32
  }
  func.func @transform_14(%arg0: i32) -> (i32, i32, i32) {
    %c0_i32 = arith.constant 0 : i32
    %c0_i32_0 = arith.constant 0 : i32
    %c0_i32_1 = arith.constant 0 : i32
    return %arg0, %c0_i32, %c0_i32_0 : i32, i32, i32
  }
}

</mosaic_0001>

<llo_original>
// kernel: tpu_custom_call.1
$region0: #{tpu_custom_call.1}
  #allocation0 [shape = 'u32[]', space=smem, size = 0x4, offset = 0x4, fixed_abs, tag = 'smem constant byte address 0x4 - core index']
  #allocation1 [shape = 'u32[144,128]{1,0:T(1,128)}', space=vmem, size = 0x12000, scoped, tag = 'internal scratch']
  #allocation2 [shape = 'bf16[18,32,4]{2,1,0:T(8,128)(2,1)}', space=vmem, size = 0x24000, scoped, tag = 'scratch operand']
  #allocation3 [shape = 'bf16[18,32,8]{2,1,0:T(8,128)(2,1)}', space=vmem, size = 0x24000, scoped, tag = 'scratch operand']
  %s0 = inlined_call_operand.vmem [shape: bf16[2,16,16,3], index: 0, kind: input, shape index: {}]
  %s1 = inlined_call_operand.vmem [shape: bf16[3,4], index: 1, kind: input, shape index: {}]
  %s2 = inlined_call_operand.vmem [shape: f32[1,4], index: 2, kind: input, shape index: {}]
  %s3 = inlined_call_operand.vmem [shape: bf16[36,8], index: 3, kind: input, shape index: {}]
  %s4 = inlined_call_operand.vmem [shape: f32[1,8], index: 4, kind: input, shape index: {}]
  %s5 = inlined_call_operand.vmem [shape: bf16[72,8], index: 5, kind: input, shape index: {}]
  %s6 = inlined_call_operand.vmem [shape: f32[1,8], index: 6, kind: input, shape index: {}]
  %s7 = inlined_call_operand.vmem [shape: f32[8,8], index: 7, kind: input, shape index: {}]
  %s8 = inlined_call_operand.vmem [shape: f32[8,8], index: 8, kind: input, shape index: {}]
  %s9 = inlined_call_operand.vmem [shape: f32[1,8], index: 9, kind: input, shape index: {}]
  %s10 = inlined_call_operand.vmem [shape: f32[8,8], index: 10, kind: input, shape index: {}]
  %s11 = inlined_call_operand.vmem [shape: f32[8,8], index: 11, kind: input, shape index: {}]
  %s12 = inlined_call_operand.vmem [shape: f32[1,8], index: 12, kind: input, shape index: {}]
  %s13 = inlined_call_operand.hbm [shape: bf16[2,8,8,8], index: 13, kind: output, shape index: {0}]
  %s14 = inlined_call_operand.hbm [shape: f32[2,1,8], index: 14, kind: output, shape index: {1}]
  %15 = xla_tuple %s13, %s14
  %s16 = sld [smem:[#allocation0]]
  $region93: #{tpu_custom_call.1} parent=0
    _
  %s18 = ssub.s32 1, %s16
  %s19 = scalar_select 0, %s18, %s16
  $region1: #{tpu_custom_call.1} parent=0
    #allocation4 [shape = 'u8[32768]{0}', space=vmem, size = 0x8000, scoped, tag = 'output window, operand 0']
    #allocation5 [shape = 's32[2]{0}', space=sflag, size = 0x8, scoped, tag = 'scoped memory for tpu_custom_call.1']
    #allocation6 [shape = 'u8[1024]{0}', space=vmem, size = 0x400, scoped, tag = 'output window, operand 1']
    #allocation7 [shape = 's32[2]{0}', space=sflag, size = 0x8, scoped, tag = 'scoped memory for tpu_custom_call.1']
    %20 = vsyncpa [#allocation5], 0
    %s21 = scalar_lea.sflag [#allocation5], 1
    %22 = vsyncpa %s21, 0
    %23 = vsyncpa [#allocation7], 0
    %s24 = scalar_lea.sflag [#allocation7], 1
    %25 = vsyncpa %s24, 0
    loop: start=0, step=1, limit=4
    $region2: #{tpu_custom_call.1} parent=1 // loop_pre_header
      _
    $region3: #{tpu_custom_call.1} parent=1 // loop_header
      %s27 = sphi 0, %s31
      %p28 = scmp.ge.s32.totalorder %s27, 4
      %s37 = sphi 0, %s39
      %s40 = sphi 0, %s37
      %s41 = sphi 0, %s40
      %s57 = sphi 0, %s41
      %s61 = sphi 0, %s61
      %s63 = sphi 0, %s61
      %s64 = sphi 0, %s63
      %s78 = sphi 0, %s64
      %s82 = sphi 0, %s82
      %s84 = sphi 0, %s82
      %s85 = sphi 0, %s84
      %s99 = sphi 0, %s85
      %s103 = sphi 0, %s103
      %s105 = sphi 0, %s103
      %s106 = sphi 0, %s105
      %s120 = sphi 0, %s106
      %s124 = sphi 0, %s124
      %s126 = sphi 0, %s124
      %s127 = sphi 0, %s126
      %s141 = sphi 0, %s127
      %s145 = sphi 0, %s145
      %s147 = sphi 0, %s145
      %s148 = sphi 0, %s147
      %s162 = sphi 0, %s148
      %s166 = sphi 0, %s166
      %s168 = sphi 0, %s166
      %s169 = sphi 0, %s168
      %s183 = sphi 0, %s169
      %s187 = sphi 0, %s187
      %s189 = sphi 0, %s187
      %s190 = sphi 0, %s189
      %s204 = sphi 0, %s190
      %s208 = sphi 0, %s208
      %s210 = sphi 0, %s208
      %s211 = sphi 0, %s210
      %s225 = sphi 0, %s211
      %s229 = sphi 0, %s229
      %s231 = sphi 0, %s229
      %s232 = sphi 0, %s231
      %s246 = sphi 0, %s232
      %s250 = sphi 0, %s250
      %s252 = sphi 0, %s250
      %s253 = sphi 0, %s252
      %s267 = sphi 0, %s253
      %s271 = sphi 0, %s271
      %s273 = sphi 0, %s271
      %s274 = sphi 0, %s273
      %s288 = sphi 0, %s274
      %s292 = sphi 0, %s292
      %s294 = sphi 0, %s292
      %s295 = sphi 0, %s294
      %s309 = sphi 0, %s295
      %s315 = sphi 0, %s317
      %s318 = sphi 0, %s315
      %s319 = sphi 0, %s318
      %s335 = sphi 0, %s319
      %s341 = sphi 0, %s343
      %s344 = sphi 0, %s341
      %s345 = sphi 0, %s344
      %s361 = sphi 0, %s345
    $region4: #{tpu_custom_call.1} parent=1 // loop_header_branch
      %30 = sbr.rel (%p28) target = $region8
    $region5: #{tpu_custom_call.1} parent=1 // loop_body
      %s32 = ssub.s32 %s27, 1
      %s33 = ssub.s32 %s27, 2
      %s34 = sadd.s32 %s27, 1
      %s35 = ssub.s32 %s27, %s34
      %p36 = scmp.eq.s32.totalorder %s35, 0
      %s38 = sadd.s32 %s37, 1
      %s39 = scalar_select %p36, %s37, %s38
      %p42 = pneg %p36
      %p43 = scmp.eq.s32.totalorder %s27, 1
      %p44 = por %p42, %p43
      %p45 = scmp.ne.s32.totalorder %s37, %s40
      %p46 = scmp.eq.s32.totalorder %s27, 0
      %p47 = por %p45, %p46
      %p48 = scmp.ne.s32.totalorder %s37, %s40
      %p49 = scmp.eq.s32.totalorder %s32, 1
      %p50 = por %p48, %p49
      %p51 = scmp.ne.s32.totalorder %s40, %s41
      %p52 = scmp.eq.s32.totalorder %s32, 0
      %p53 = por %p51, %p52
      %p54 = scmp.ne.s32.totalorder %s40, %s41
      %p55 = scmp.eq.s32.totalorder %s33, 1
      %p56 = por %p54, %p55
      %p58 = scmp.ne.s32.totalorder %s41, %s57
      %p59 = scmp.eq.s32.totalorder %s33, 0
      %p60 = por %p58, %p59
      %s62 = sadd.s32 %s61, 1
      %p65 = scmp.eq.s32.totalorder %s27, 1
      %p66 = scmp.ne.s32.totalorder %s61, %s63
      %p67 = scmp.eq.s32.totalorder %s27, 0
      %p68 = por %p66, %p67
      %p69 = scmp.ne.s32.totalorder %s61, %s63
      %p70 = scmp.eq.s32.totalorder %s32, 1
      %p71 = por %p69, %p70
      %p72 = scmp.ne.s32.totalorder %s63, %s64
      %p73 = scmp.eq.s32.totalorder %s32, 0
      %p74 = por %p72, %p73
      %p75 = scmp.ne.s32.totalorder %s63, %s64
      %p76 = scmp.eq.s32.totalorder %s33, 1
      %p77 = por %p75, %p76
      %p79 = scmp.ne.s32.totalorder %s64, %s78
      %p80 = scmp.eq.s32.totalorder %s33, 0
      %p81 = por %p79, %p80
      %s83 = sadd.s32 %s82, 1
      %p86 = scmp.eq.s32.totalorder %s27, 1
      %p87 = scmp.ne.s32.totalorder %s82, %s84
      %p88 = scmp.eq.s32.totalorder %s27, 0
      %p89 = por %p87, %p88
      %p90 = scmp.ne.s32.totalorder %s82, %s84
      %p91 = scmp.eq.s32.totalorder %s32, 1
      %p92 = por %p90, %p91
      %p93 = scmp.ne.s32.totalorder %s84, %s85
      %p94 = scmp.eq.s32.totalorder %s32, 0
      %p95 = por %p93, %p94
      %p96 = scmp.ne.s32.totalorder %s84, %s85
      %p97 = scmp.eq.s32.totalorder %s33, 1
      %p98 = por %p96, %p97
      %p100 = scmp.ne.s32.totalorder %s85, %s99
      %p101 = scmp.eq.s32.totalorder %s33, 0
      %p102 = por %p100, %p101
      %s104 = sadd.s32 %s103, 1
      %p107 = scmp.eq.s32.totalorder %s27, 1
      %p108 = scmp.ne.s32.totalorder %s103, %s105
      %p109 = scmp.eq.s32.totalorder %s27, 0
      %p110 = por %p108, %p109
      %p111 = scmp.ne.s32.totalorder %s103, %s105
      %p112 = scmp.eq.s32.totalorder %s32, 1
      %p113 = por %p111, %p112
      %p114 = scmp.ne.s32.totalorder %s105, %s106
      %p115 = scmp.eq.s32.totalorder %s32, 0
      %p116 = por %p114, %p115
      %p117 = scmp.ne.s32.totalorder %s105, %s106
      %p118 = scmp.eq.s32.totalorder %s33, 1
      %p119 = por %p117, %p118
      %p121 = scmp.ne.s32.totalorder %s106, %s120
      %p122 = scmp.eq.s32.totalorder %s33, 0
      %p123 = por %p121, %p122
      %s125 = sadd.s32 %s124, 1
      %p128 = scmp.eq.s32.totalorder %s27, 1
      %p129 = scmp.ne.s32.totalorder %s124, %s126
      %p130 = scmp.eq.s32.totalorder %s27, 0
      %p131 = por %p129, %p130
      %p132 = scmp.ne.s32.totalorder %s124, %s126
      %p133 = scmp.eq.s32.totalorder %s32, 1
      %p134 = por %p132, %p133
      %p135 = scmp.ne.s32.totalorder %s126, %s127
      %p136 = scmp.eq.s32.totalorder %s32, 0
      %p137 = por %p135, %p136
      %p138 = scmp.ne.s32.totalorder %s126, %s127
      %p139 = scmp.eq.s32.totalorder %s33, 1
      %p140 = por %p138, %p139
      %p142 = scmp.ne.s32.totalorder %s127, %s141
      %p143 = scmp.eq.s32.totalorder %s33, 0
      %p144 = por %p142, %p143
      %s146 = sadd.s32 %s145, 1
      %p149 = scmp.eq.s32.totalorder %s27, 1
      %p150 = scmp.ne.s32.totalorder %s145, %s147
      %p151 = scmp.eq.s32.totalorder %s27, 0
      %p152 = por %p150, %p151
      %p153 = scmp.ne.s32.totalorder %s145, %s147
      %p154 = scmp.eq.s32.totalorder %s32, 1
      %p155 = por %p153, %p154
      %p156 = scmp.ne.s32.totalorder %s147, %s148
      %p157 = scmp.eq.s32.totalorder %s32, 0
      %p158 = por %p156, %p157
      %p159 = scmp.ne.s32.totalorder %s147, %s148
      %p160 = scmp.eq.s32.totalorder %s33, 1
      %p161 = por %p159, %p160
      %p163 = scmp.ne.s32.totalorder %s148, %s162
      %p164 = scmp.eq.s32.totalorder %s33, 0
      %p165 = por %p163, %p164
      %s167 = sadd.s32 %s166, 1
      %p170 = scmp.eq.s32.totalorder %s27, 1
      %p171 = scmp.ne.s32.totalorder %s166, %s168
      %p172 = scmp.eq.s32.totalorder %s27, 0
      %p173 = por %p171, %p172
      %p174 = scmp.ne.s32.totalorder %s166, %s168
      %p175 = scmp.eq.s32.totalorder %s32, 1
      %p176 = por %p174, %p175
      %p177 = scmp.ne.s32.totalorder %s168, %s169
      %p178 = scmp.eq.s32.totalorder %s32, 0
      %p179 = por %p177, %p178
      %p180 = scmp.ne.s32.totalorder %s168, %s169
      %p181 = scmp.eq.s32.totalorder %s33, 1
      %p182 = por %p180, %p181
      %p184 = scmp.ne.s32.totalorder %s169, %s183
      %p185 = scmp.eq.s32.totalorder %s33, 0
      %p186 = por %p184, %p185
      %s188 = sadd.s32 %s187, 1
      %p191 = scmp.eq.s32.totalorder %s27, 1
      %p192 = scmp.ne.s32.totalorder %s187, %s189
      %p193 = scmp.eq.s32.totalorder %s27, 0
      %p194 = por %p192, %p193
      %p195 = scmp.ne.s32.totalorder %s187, %s189
      %p196 = scmp.eq.s32.totalorder %s32, 1
      %p197 = por %p195, %p196
      %p198 = scmp.ne.s32.totalorder %s189, %s190
      %p199 = scmp.eq.s32.totalorder %s32, 0
      %p200 = por %p198, %p199
      %p201 = scmp.ne.s32.totalorder %s189, %s190
      %p202 = scmp.eq.s32.totalorder %s33, 1
      %p203 = por %p201, %p202
      %p205 = scmp.ne.s32.totalorder %s190, %s204
      %p206 = scmp.eq.s32.totalorder %s33, 0
      %p207 = por %p205, %p206
      %s209 = sadd.s32 %s208, 1
      %p212 = scmp.eq.s32.totalorder %s27, 1
      %p213 = scmp.ne.s32.totalorder %s208, %s210
      %p214 = scmp.eq.s32.totalorder %s27, 0
      %p215 = por %p213, %p214
      %p216 = scmp.ne.s32.totalorder %s208, %s210
      %p217 = scmp.eq.s32.totalorder %s32, 1
      %p218 = por %p216, %p217
      %p219 = scmp.ne.s32.totalorder %s210, %s211
      %p220 = scmp.eq.s32.totalorder %s32, 0
      %p221 = por %p219, %p220
      %p222 = scmp.ne.s32.totalorder %s210, %s211
      %p223 = scmp.eq.s32.totalorder %s33, 1
      %p224 = por %p222, %p223
      %p226 = scmp.ne.s32.totalorder %s211, %s225
      %p227 = scmp.eq.s32.totalorder %s33, 0
      %p228 = por %p226, %p227
      %s230 = sadd.s32 %s229, 1
      %p233 = scmp.eq.s32.totalorder %s27, 1
      %p234 = scmp.ne.s32.totalorder %s229, %s231
      %p235 = scmp.eq.s32.totalorder %s27, 0
      %p236 = por %p234, %p235
      %p237 = scmp.ne.s32.totalorder %s229, %s231
      %p238 = scmp.eq.s32.totalorder %s32, 1
      %p239 = por %p237, %p238
      %p240 = scmp.ne.s32.totalorder %s231, %s232
      %p241 = scmp.eq.s32.totalorder %s32, 0
      %p242 = por %p240, %p241
      %p243 = scmp.ne.s32.totalorder %s231, %s232
      %p244 = scmp.eq.s32.totalorder %s33, 1
      %p245 = por %p243, %p244
      %p247 = scmp.ne.s32.totalorder %s232, %s246
      %p248 = scmp.eq.s32.totalorder %s33, 0
      %p249 = por %p247, %p248
      %s251 = sadd.s32 %s250, 1
      %p254 = scmp.eq.s32.totalorder %s27, 1
      %p255 = scmp.ne.s32.totalorder %s250, %s252
      %p256 = scmp.eq.s32.totalorder %s27, 0
      %p257 = por %p255, %p256
      %p258 = scmp.ne.s32.totalorder %s250, %s252
      %p259 = scmp.eq.s32.totalorder %s32, 1
      %p260 = por %p258, %p259
      %p261 = scmp.ne.s32.totalorder %s252, %s253
      %p262 = scmp.eq.s32.totalorder %s32, 0
      %p263 = por %p261, %p262
      %p264 = scmp.ne.s32.totalorder %s252, %s253
      %p265 = scmp.eq.s32.totalorder %s33, 1
      %p266 = por %p264, %p265
      %p268 = scmp.ne.s32.totalorder %s253, %s267
      %p269 = scmp.eq.s32.totalorder %s33, 0
      %p270 = por %p268, %p269
      %s272 = sadd.s32 %s271, 1
      %p275 = scmp.eq.s32.totalorder %s27, 1
      %p276 = scmp.ne.s32.totalorder %s271, %s273
      %p277 = scmp.eq.s32.totalorder %s27, 0
      %p278 = por %p276, %p277
      %p279 = scmp.ne.s32.totalorder %s271, %s273
      %p280 = scmp.eq.s32.totalorder %s32, 1
      %p281 = por %p279, %p280
      %p282 = scmp.ne.s32.totalorder %s273, %s274
      %p283 = scmp.eq.s32.totalorder %s32, 0
      %p284 = por %p282, %p283
      %p285 = scmp.ne.s32.totalorder %s273, %s274
      %p286 = scmp.eq.s32.totalorder %s33, 1
      %p287 = por %p285, %p286
      %p289 = scmp.ne.s32.totalorder %s274, %s288
      %p290 = scmp.eq.s32.totalorder %s33, 0
      %p291 = por %p289, %p290
      %s293 = sadd.s32 %s292, 1
      %p296 = scmp.eq.s32.totalorder %s27, 1
      %p297 = scmp.ne.s32.totalorder %s292, %s294
      %p298 = scmp.eq.s32.totalorder %s27, 0
      %p299 = por %p297, %p298
      %p300 = scmp.ne.s32.totalorder %s292, %s294
      %p301 = scmp.eq.s32.totalorder %s32, 1
      %p302 = por %p300, %p301
      %p303 = scmp.ne.s32.totalorder %s294, %s295
      %p304 = scmp.eq.s32.totalorder %s32, 0
      %p305 = por %p303, %p304
      %p306 = scmp.ne.s32.totalorder %s294, %s295
      %p307 = scmp.eq.s32.totalorder %s33, 1
      %p308 = por %p306, %p307
      %p310 = scmp.ne.s32.totalorder %s295, %s309
      %p311 = scmp.eq.s32.totalorder %s33, 0
      %p312 = por %p310, %p311
      %s313 = ssub.s32 %s27, %s34
      %p314 = scmp.eq.s32.totalorder %s313, 0
      %s316 = sadd.s32 %s315, 1
      %s317 = scalar_select %p314, %s315, %s316
      %p320 = pneg %p314
      %p321 = scmp.eq.s32.totalorder %s27, 1
      %p322 = por %p320, %p321
      %p323 = scmp.ne.s32.totalorder %s315, %s318
      %p324 = scmp.eq.s32.totalorder %s27, 0
      %p325 = por %p323, %p324
      %p326 = scmp.ne.s32.totalorder %s315, %s318
      %p327 = scmp.eq.s32.totalorder %s32, 1
      %p328 = por %p326, %p327
      %p329 = scmp.ne.s32.totalorder %s318, %s319
      %p330 = scmp.eq.s32.totalorder %s32, 0
      %p331 = por %p329, %p330
      %p332 = scmp.ne.s32.totalorder %s318, %s319
      %p333 = scmp.eq.s32.totalorder %s33, 1
      %p334 = por %p332, %p333
      %p336 = scmp.ne.s32.totalorder %s319, %s335
      %p337 = scmp.eq.s32.totalorder %s33, 0
      %p338 = por %p336, %p337
      %s339 = ssub.s32 %s27, %s34
      %p340 = scmp.eq.s32.totalorder %s339, 0
      %s342 = sadd.s32 %s341, 1
      %s343 = scalar_select %p340, %s341, %s342
      %p346 = pneg %p340
      %p347 = scmp.eq.s32.totalorder %s27, 1
      %p348 = por %p346, %p347
      %p349 = scmp.ne.s32.totalorder %s341, %s344
      %p350 = scmp.eq.s32.totalorder %s27, 0
      %p351 = por %p349, %p350
      %p352 = scmp.ne.s32.totalorder %s341, %s344
      %p353 = scmp.eq.s32.totalorder %s32, 1
      %p354 = por %p352, %p353
      %p355 = scmp.ne.s32.totalorder %s344, %s345
      %p356 = scmp.eq.s32.totalorder %s32, 0
      %p357 = por %p355, %p356
      %p358 = scmp.ne.s32.totalorder %s344, %s345
      %p359 = scmp.eq.s32.totalorder %s33, 1
      %p360 = por %p358, %p359
      %p362 = scmp.ne.s32.totalorder %s345, %s361
      %p363 = scmp.eq.s32.totalorder %s33, 0
      %p364 = por %p362, %p363
      %p365 = scmp.le.s32.totalorder 1, %s27
      %p366 = scmp.lt.s32.totalorder %s27, 3
      %p367 = pnand %p365, %p366
      %p368 = pneg %p367
      // Predicated region
      $region9: #{tpu_custom_call.1} parent=5 // pred_check
        _
      $region10: #{tpu_custom_call.1} parent=5 // pred_check_branch
        %370 = sbr.rel (%p367) target = $region12
      $region11: #{tpu_custom_call.1} parent=5 // pred_region
        %s371 = ssub.s32 %s27, 1
        // Predicated region
        $region13: #{tpu_custom_call.1} parent=11 // pred_check
          %p372 = pneg %p74
        $region14: #{tpu_custom_call.1} parent=11 // pred_check_branch
          %374 = sbr.rel (%p372) target = $region16
        $region15: #{tpu_custom_call.1} parent=11 // pred_region
          _
        $region16: #{tpu_custom_call.1} parent=11 // pred_fallthru
          _
        // Predicated region
        $region17: #{tpu_custom_call.1} parent=11 // pred_check
          %p375 = pneg %p95
        $region18: #{tpu_custom_call.1} parent=11 // pred_check_branch
          %377 = sbr.rel (%p375) target = $region20
        $region19: #{tpu_custom_call.1} parent=11 // pred_region
          _
        $region20: #{tpu_custom_call.1} parent=11 // pred_fallthru
          _
        // Predicated region
        $region21: #{tpu_custom_call.1} parent=11 // pred_check
          %p378 = pneg %p116
        $region22: #{tpu_custom_call.1} parent=11 // pred_check_branch
          %380 = sbr.rel (%p378) target = $region24
        $region23: #{tpu_custom_call.1} parent=11 // pred_region
          _
        $region24: #{tpu_custom_call.1} parent=11 // pred_fallthru
          _
        // Predicated region
        $region25: #{tpu_custom_call.1} parent=11 // pred_check
          %p381 = pneg %p137
        $region26: #{tpu_custom_call.1} parent=11 // pred_check_branch
          %383 = sbr.rel (%p381) target = $region28
        $region27: #{tpu_custom_call.1} parent=11 // pred_region
          _
        $region28: #{tpu_custom_call.1} parent=11 // pred_fallthru
          _
        // Predicated region
        $region29: #{tpu_custom_call.1} parent=11 // pred_check
          %p384 = pneg %p158
        $region30: #{tpu_custom_call.1} parent=11 // pred_check_branch
          %386 = sbr.rel (%p384) target = $region32
        $region31: #{tpu_custom_call.1} parent=11 // pred_region
          _
        $region32: #{tpu_custom_call.1} parent=11 // pred_fallthru
          _
        // Predicated region
        $region33: #{tpu_custom_call.1} parent=11 // pred_check
          %p387 = pneg %p179
        $region34: #{tpu_custom_call.1} parent=11 // pred_check_branch
          %389 = sbr.rel (%p387) target = $region36
        $region35: #{tpu_custom_call.1} parent=11 // pred_region
          _
        $region36: #{tpu_custom_call.1} parent=11 // pred_fallthru
          _
        // Predicated region
        $region37: #{tpu_custom_call.1} parent=11 // pred_check
          %p390 = pneg %p200
        $region38: #{tpu_custom_call.1} parent=11 // pred_check_branch
          %392 = sbr.rel (%p390) target = $region40
        $region39: #{tpu_custom_call.1} parent=11 // pred_region
          _
        $region40: #{tpu_custom_call.1} parent=11 // pred_fallthru
          _
        // Predicated region
        $region41: #{tpu_custom_call.1} parent=11 // pred_check
          %p393 = pneg %p221
        $region42: #{tpu_custom_call.1} parent=11 // pred_check_branch
          %395 = sbr.rel (%p393) target = $region44
        $region43: #{tpu_custom_call.1} parent=11 // pred_region
          _
        $region44: #{tpu_custom_call.1} parent=11 // pred_fallthru
          _
        // Predicated region
        $region45: #{tpu_custom_call.1} parent=11 // pred_check
          %p396 = pneg %p242
        $region46: #{tpu_custom_call.1} parent=11 // pred_check_branch
          %398 = sbr.rel (%p396) target = $region48
        $region47: #{tpu_custom_call.1} parent=11 // pred_region
          _
        $region48: #{tpu_custom_call.1} parent=11 // pred_fallthru
          _
        // Predicated region
        $region49: #{tpu_custom_call.1} parent=11 // pred_check
          %p399 = pneg %p263
        $region50: #{tpu_custom_call.1} parent=11 // pred_check_branch
          %401 = sbr.rel (%p399) target = $region52
        $region51: #{tpu_custom_call.1} parent=11 // pred_region
          _
        $region52: #{tpu_custom_call.1} parent=11 // pred_fallthru
          _
        // Predicated region
        $region53: #{tpu_custom_call.1} parent=11 // pred_check
          %p402 = pneg %p284
        $region54: #{tpu_custom_call.1} parent=11 // pred_check_branch
          %404 = sbr.rel (%p402) target = $region56
        $region55: #{tpu_custom_call.1} parent=11 // pred_region
          _
        $region56: #{tpu_custom_call.1} parent=11 // pred_fallthru
          _
        // Predicated region
        $region57: #{tpu_custom_call.1} parent=11 // pred_check
          %p405 = pneg %p305
        $region58: #{tpu_custom_call.1} parent=11 // pred_check_branch
          %407 = sbr.rel (%p405) target = $region60
        $region59: #{tpu_custom_call.1} parent=11 // pred_region
          _
        $region60: #{tpu_custom_call.1} parent=11 // pred_fallthru
          _
      $region12: #{tpu_custom_call.1} parent=5 // pred_fallthru
        _
      %p408 = scmp.lt.s32.totalorder %s27, 2
      // Predicated region
      $region61: #{tpu_custom_call.1} parent=5 // pred_check
        %p409 = pneg %p408
      $region62: #{tpu_custom_call.1} parent=5 // pred_check_branch
        %411 = sbr.rel (%p409) target = $region64
      $region63: #{tpu_custom_call.1} parent=5 // pred_region
        // Predicated region
        $region65: #{tpu_custom_call.1} parent=63 // pred_check
          %p412 = pneg %p47
        $region66: #{tpu_custom_call.1} parent=63 // pred_check_branch
          %414 = sbr.rel (%p412) target = $region68
        $region67: #{tpu_custom_call.1} parent=63 // pred_region
          %p415 = scmp.lt.s32.totalorder %s27, 1
          %s416 = scalar_select %p415, %s27, 1
          %s417 = smul.addr %s416, 32
          %s418 = smul.addr %s417, 4
          %s419 = scalar_lea.vmem %s0, %s418
        $region68: #{tpu_custom_call.1} parent=63 // pred_fallthru
          _
      $region64: #{tpu_custom_call.1} parent=5 // pred_fallthru
        _
      %p420 = scmp.le.s32.totalorder 1, %s27
      %p421 = scmp.lt.s32.totalorder %s27, 3
      %p422 = pnand %p420, %p421
      %p423 = pneg %p422
      // Predicated region
      $region69: #{tpu_custom_call.1} parent=5 // pred_check
        _
      $region70: #{tpu_custom_call.1} parent=5 // pred_check_branch
        %425 = sbr.rel (%p422) target = $region72
      $region71: #{tpu_custom_call.1} parent=5 // pred_region
        %s426 = ssub.s32 %s27, 1
        %p427 = scmp.lt.s32.totalorder %s32, 1
        %s428 = scalar_select %p427, %s32, 1
        %s429 = smul.addr %s428, 32
        %s430 = smul.addr %s429, 4
        %s431 = scalar_lea.vmem %s0, %s430
        %p432 = pneg %p53
        %p433 = pneg %p50
        %p434 = pneg %p74
        %p435 = pneg %p71
        %p436 = pneg %p95
        %p437 = pneg %p92
        %p438 = pneg %p116
        %p439 = pneg %p113
        %p440 = pneg %p137
        %p441 = pneg %p134
        %p442 = pneg %p158
        %p443 = pneg %p155
        %p444 = pneg %p179
        %p445 = pneg %p176
        %p446 = pneg %p200
        %p447 = pneg %p197
        %p448 = pneg %p221
        %p449 = pneg %p218
        %p450 = pneg %p242
        %p451 = pneg %p239
        %p452 = pneg %p263
        %p453 = pneg %p260
        %p454 = pneg %p284
        %p455 = pneg %p281
        %p456 = pneg %p305
        %p457 = pneg %p302
        %p458 = pneg %p331
        %p459 = pneg %p328
        %s460 = sand.u32 %s318, 1
        %s461 = scalar_lea.sflag [#allocation5], %s460
        %s462 = sand.u32 %s318, 1
        %s463 = smul.addr %s462, 32
        %s464 = scalar_lea.vmem [#allocation4], %s463
        %p465 = pneg %p357
        %p466 = pneg %p354
        %s467 = sand.u32 %s344, 1
        %s468 = scalar_lea.sflag [#allocation7], %s467
        %s469 = sand.u32 %s344, 1
        %s470 = scalar_lea.vmem [#allocation6], %s469
        %p471 = scmp.lt.s32.totalorder %s32, 1
        %s472 = scalar_select %p471, %s32, 1
        %s473 = smul.addr %s472, 32
        %s474 = smul.addr %s473, 4
        %s475 = scalar_lea.vmem %s0, %s474
        %v477 = vld [vmem:[%s475] sm:$0xf]
        %v478 = vld [vmem:[%s475 + $0x4] sm:$0xf]
        %v479 = vld [vmem:[%s475 + $0x8] sm:$0xf]
        %v480 = vld [vmem:[%s475 + $0xc] sm:$0xf]
        %v481 = vld [vmem:[%s475 + $0x10] sm:$0xf]
        %v482 = vld [vmem:[%s475 + $0x14] sm:$0xf]
        %v483 = vld [vmem:[%s475 + $0x18] sm:$0xf]
        %v484 = vld [vmem:[%s475 + $0x1c] sm:$0xf]
        %v485 = vld [vmem:[%s475 + $0x20] sm:$0xf]
        %v486 = vld [vmem:[%s475 + $0x24] sm:$0xf]
        %v487 = vld [vmem:[%s475 + $0x28] sm:$0xf]
        %v488 = vld [vmem:[%s475 + $0x2c] sm:$0xf]
        %v489 = vld [vmem:[%s475 + $0x30] sm:$0xf]
        %v490 = vld [vmem:[%s475 + $0x34] sm:$0xf]
        %v491 = vld [vmem:[%s475 + $0x38] sm:$0xf]
        %v492 = vld [vmem:[%s475 + $0x3c] sm:$0xf]
        %v493 = vld [vmem:[%s475 + $0x40] sm:$0xf]
        %v494 = vld [vmem:[%s475 + $0x44] sm:$0xf]
        %v495 = vld [vmem:[%s475 + $0x48] sm:$0xf]
        %v496 = vld [vmem:[%s475 + $0x4c] sm:$0xf]
        %v497 = vld [vmem:[%s475 + $0x50] sm:$0xf]
        %v498 = vld [vmem:[%s475 + $0x54] sm:$0xf]
        %v499 = vld [vmem:[%s475 + $0x58] sm:$0xf]
        %v500 = vld [vmem:[%s475 + $0x5c] sm:$0xf]
        %v501 = vld [vmem:[%s475 + $0x60] sm:$0xf]
        %v502 = vld [vmem:[%s475 + $0x64] sm:$0xf]
        %v503 = vld [vmem:[%s475 + $0x68] sm:$0xf]
        %v504 = vld [vmem:[%s475 + $0x6c] sm:$0xf]
        %v505 = vld [vmem:[%s475 + $0x70] sm:$0xf]
        %v506 = vld [vmem:[%s475 + $0x74] sm:$0xf]
        %v507 = vld [vmem:[%s475 + $0x78] sm:$0xf]
        %v508 = vld [vmem:[%s475 + $0x7c] sm:$0xf]
        %v509 = vld [vmem:[%s1] sm:$0x3]
        %v510 = vld [vmem:[%s2] sm:$0x1]
        %v512 = vlaneseq
        %v513 = vshrl.u32 %v512, 7
        %v514 = vsub.s32 0, %v513
        %v515 = vrot.slane %v510, %v514
        %v549 = vunpack.c.l.b16 %v477
        %v550 = vunpack.c.l.b16 %v478
        %v551 = vunpack.c.l.b16 %v479
        %v552 = vunpack.c.l.b16 %v480
        %v553 = vunpack.c.l.b16 %v481
        %v554 = vunpack.c.l.b16 %v482
        %v555 = vunpack.c.l.b16 %v483
        %v556 = vunpack.c.l.b16 %v484
        %v557 = vunpack.c.l.b16 %v485
        %v558 = vunpack.c.l.b16 %v486
        %v559 = vunpack.c.l.b16 %v487
        %v560 = vunpack.c.l.b16 %v488
        %v561 = vunpack.c.l.b16 %v489
        %v562 = vunpack.c.l.b16 %v490
        %v563 = vunpack.c.l.b16 %v491
        %v564 = vunpack.c.l.b16 %v492
        %v565 = vunpack.c.l.b16 %v493
        %v566 = vunpack.c.l.b16 %v494
        %v567 = vunpack.c.l.b16 %v495
        %v568 = vunpack.c.l.b16 %v496
        %v569 = vunpack.c.l.b16 %v497
        %v570 = vunpack.c.l.b16 %v498
        %v571 = vunpack.c.l.b16 %v499
        %v572 = vunpack.c.l.b16 %v500
        %v573 = vunpack.c.l.b16 %v501
        %v574 = vunpack.c.l.b16 %v502
        %v575 = vunpack.c.l.b16 %v503
        %v576 = vunpack.c.l.b16 %v504
        %v577 = vunpack.c.l.b16 %v505
        %v578 = vunpack.c.l.b16 %v506
        %v579 = vunpack.c.l.b16 %v507
        %v580 = vunpack.c.l.b16 %v508
        %v581 = vpack.c.b16 %v550, %v549
        %v582 = vpack.c.b16 %v552, %v551
        %v583 = vpack.c.b16 %v554, %v553
        %v584 = vpack.c.b16 %v556, %v555
        %v585 = vpack.c.b16 %v558, %v557
        %v586 = vpack.c.b16 %v560, %v559
        %v587 = vpack.c.b16 %v562, %v561
        %v588 = vpack.c.b16 %v564, %v563
        %v589 = vpack.c.b16 %v566, %v565
        %v590 = vpack.c.b16 %v568, %v567
        %v591 = vpack.c.b16 %v570, %v569
        %v592 = vpack.c.b16 %v572, %v571
        %v593 = vpack.c.b16 %v574, %v573
        %v594 = vpack.c.b16 %v576, %v575
        %v595 = vpack.c.b16 %v578, %v577
        %v596 = vpack.c.b16 %v580, %v579
        %vm597 = vcmask 23552
        %v599 = vsel %vm597, %v581, 0
        %v602 = vsel %vm597, %v582, 0
        %v605 = vsel %vm597, %v583, 0
        %v608 = vsel %vm597, %v584, 0
        %v611 = vsel %vm597, %v585, 0
        %v614 = vsel %vm597, %v586, 0
        %v617 = vsel %vm597, %v587, 0
        %v620 = vsel %vm597, %v588, 0
        %v623 = vsel %vm597, %v589, 0
        %v626 = vsel %vm597, %v590, 0
        %v629 = vsel %vm597, %v591, 0
        %v632 = vsel %vm597, %v592, 0
        %v635 = vsel %vm597, %v593, 0
        %v638 = vsel %vm597, %v594, 0
        %v641 = vsel %vm597, %v595, 0
        %v644 = vsel %vm597, %v596, 0
        %vm646 = vcmask 1040384
        %vm647 = vcmask 1041408
        %v648 = vsel %vm646, 4294967295, 65535
        %v649 = vsel %vm647, %v648, 0
        %v651 = vand.u32 %v509, %v649
        %653 = vmatprep.subr.bf16.mxu0 0
        %654 = vmatpush1.bf16.msra.mxu0 0
        %655 = vmatprep.subr.bf16.mxu0 0
        %656 = vmatpush1.bf16.msra.mxu0 0
        %657 = vmatprep.subr.bf16.mxu0 0
        %658 = vmatpush1.bf16.msra.mxu0 0
        %659 = vmatprep.subr.bf16.mxu0 0
        %660 = vmatpush1.bf16.msra.mxu0 0
        %661 = vmatprep.subr.bf16.mxu0 0
        %662 = vmatpush1.bf16.msra.mxu0 0
        %663 = vmatprep.subr.bf16.mxu0 0
        %664 = vmatpush1.bf16.msra.mxu0 0
        %665 = vmatprep.subr.bf16.mxu0 0
        %666 = vmatpush1.bf16.msra.mxu0 0
        %667 = vmatprep.subr.bf16.mxu0 0
        %668 = vmatpush1.bf16.msra.mxu0 %v651
        %669 = vmatprep.subr.bf16.mxu0 0
        %670 = vmatpush2.bf16.msra.mxu0 0
        %671 = vmatprep.subr.bf16.mxu0 0
        %672 = vmatpush2.bf16.msra.mxu0 0
        %673 = vmatprep.subr.bf16.mxu0 0
        %674 = vmatpush2.bf16.msra.mxu0 0
        %675 = vmatprep.subr.bf16.mxu0 0
        %676 = vmatpush2.bf16.msra.mxu0 0
        %677 = vmatprep.subr.bf16.mxu0 0
        %678 = vmatpush2.bf16.msra.mxu0 0
        %679 = vmatprep.subr.bf16.mxu0 0
        %680 = vmatpush2.bf16.msra.mxu0 0
        %681 = vmatprep.subr.bf16.mxu0 0
        %682 = vmatpush2.bf16.msra.mxu0 0
        %683 = vmatprep.subr.bf16.mxu0 0
        %684 = vmatpush2.bf16.msra.mxu0 0
        %685 = vmatprep.mubr.bf16.mxu0 0
        %686 = vmatmul.mubr.bf16.gmra.mxu0 %v599
        %v687 = vpop.f32.mrf.mxu0
        %v688 = vadd.f32 %v515, %v687
        %v689 = vpop.f32.mrf.mxu0
        %v690 = vpop.f32.mrf.mxu0
        %v691 = vadd.f32 %v515, %v690
        %v692 = vpop.f32.mrf.mxu0
        %693 = vmatprep.mubr.bf16.mxu0 0
        %694 = vmatmul.mubr.bf16.gmra.mxu0 %v602
        %v695 = vpop.f32.mrf.mxu0
        %v696 = vadd.f32 %v515, %v695
        %v697 = vpop.f32.mrf.mxu0
        %v698 = vpop.f32.mrf.mxu0
        %v699 = vadd.f32 %v515, %v698
        %v700 = vpop.f32.mrf.mxu0
        %701 = vmatprep.mubr.bf16.mxu0 0
        %702 = vmatmul.mubr.bf16.gmra.mxu0 %v605
        %v703 = vpop.f32.mrf.mxu0
        %v704 = vadd.f32 %v515, %v703
        %v705 = vpop.f32.mrf.mxu0
        %v706 = vpop.f32.mrf.mxu0
        %v707 = vadd.f32 %v515, %v706
        %v708 = vpop.f32.mrf.mxu0
        %709 = vmatprep.mubr.bf16.mxu0 0
        %710 = vmatmul.mubr.bf16.gmra.mxu0 %v608
        %v711 = vpop.f32.mrf.mxu0
        %v712 = vadd.f32 %v515, %v711
        %v713 = vpop.f32.mrf.mxu0
        %v714 = vpop.f32.mrf.mxu0
        %v715 = vadd.f32 %v515, %v714
        %v716 = vpop.f32.mrf.mxu0
        %717 = vmatprep.mubr.bf16.mxu0 0
        %718 = vmatmul.mubr.bf16.gmra.mxu0 %v611
        %v719 = vpop.f32.mrf.mxu0
        %v720 = vadd.f32 %v515, %v719
        %v721 = vpop.f32.mrf.mxu0
        %v722 = vpop.f32.mrf.mxu0
        %v723 = vadd.f32 %v515, %v722
        %v724 = vpop.f32.mrf.mxu0
        %725 = vmatprep.mubr.bf16.mxu0 0
        %726 = vmatmul.mubr.bf16.gmra.mxu0 %v614
        %v727 = vpop.f32.mrf.mxu0
        %v728 = vadd.f32 %v515, %v727
        %v729 = vpop.f32.mrf.mxu0
        %v730 = vpop.f32.mrf.mxu0
        %v731 = vadd.f32 %v515, %v730
        %v732 = vpop.f32.mrf.mxu0
        %733 = vmatprep.mubr.bf16.mxu0 0
        %734 = vmatmul.mubr.bf16.gmra.mxu0 %v617
        %v735 = vpop.f32.mrf.mxu0
        %v736 = vadd.f32 %v515, %v735
        %v737 = vpop.f32.mrf.mxu0
        %v738 = vpop.f32.mrf.mxu0
        %v739 = vadd.f32 %v515, %v738
        %v740 = vpop.f32.mrf.mxu0
        %741 = vmatprep.mubr.bf16.mxu0 0
        %742 = vmatmul.mubr.bf16.gmra.mxu0 %v620
        %v743 = vpop.f32.mrf.mxu0
        %v744 = vadd.f32 %v515, %v743
        %v745 = vpop.f32.mrf.mxu0
        %v746 = vpop.f32.mrf.mxu0
        %v747 = vadd.f32 %v515, %v746
        %v748 = vpop.f32.mrf.mxu0
        %749 = vmatprep.mubr.bf16.mxu0 0
        %750 = vmatmul.mubr.bf16.gmra.mxu0 %v623
        %v751 = vpop.f32.mrf.mxu0
        %v752 = vadd.f32 %v515, %v751
        %v753 = vpop.f32.mrf.mxu0
        %v754 = vpop.f32.mrf.mxu0
        %v755 = vadd.f32 %v515, %v754
        %v756 = vpop.f32.mrf.mxu0
        %757 = vmatprep.mubr.bf16.mxu0 0
        %758 = vmatmul.mubr.bf16.gmra.mxu0 %v626
        %v759 = vpop.f32.mrf.mxu0
        %v760 = vadd.f32 %v515, %v759
        %v761 = vpop.f32.mrf.mxu0
        %v762 = vpop.f32.mrf.mxu0
        %v763 = vadd.f32 %v515, %v762
        %v764 = vpop.f32.mrf.mxu0
        %765 = vmatprep.mubr.bf16.mxu0 0
        %766 = vmatmul.mubr.bf16.gmra.mxu0 %v629
        %v767 = vpop.f32.mrf.mxu0
        %v768 = vadd.f32 %v515, %v767
        %v769 = vpop.f32.mrf.mxu0
        %v770 = vpop.f32.mrf.mxu0
        %v771 = vadd.f32 %v515, %v770
        %v772 = vpop.f32.mrf.mxu0
        %773 = vmatprep.mubr.bf16.mxu0 0
        %774 = vmatmul.mubr.bf16.gmra.mxu0 %v632
        %v775 = vpop.f32.mrf.mxu0
        %v776 = vadd.f32 %v515, %v775
        %v777 = vpop.f32.mrf.mxu0
        %v778 = vpop.f32.mrf.mxu0
        %v779 = vadd.f32 %v515, %v778
        %v780 = vpop.f32.mrf.mxu0
        %781 = vmatprep.mubr.bf16.mxu0 0
        %782 = vmatmul.mubr.bf16.gmra.mxu0 %v635
        %v783 = vpop.f32.mrf.mxu0
        %v784 = vadd.f32 %v515, %v783
        %v785 = vpop.f32.mrf.mxu0
        %v786 = vpop.f32.mrf.mxu0
        %v787 = vadd.f32 %v515, %v786
        %v788 = vpop.f32.mrf.mxu0
        %789 = vmatprep.mubr.bf16.mxu0 0
        %790 = vmatmul.mubr.bf16.gmra.mxu0 %v638
        %v791 = vpop.f32.mrf.mxu0
        %v792 = vadd.f32 %v515, %v791
        %v793 = vpop.f32.mrf.mxu0
        %v794 = vpop.f32.mrf.mxu0
        %v795 = vadd.f32 %v515, %v794
        %v796 = vpop.f32.mrf.mxu0
        %797 = vmatprep.mubr.bf16.mxu0 0
        %798 = vmatmul.mubr.bf16.gmra.mxu0 %v641
        %v799 = vpop.f32.mrf.mxu0
        %v800 = vadd.f32 %v515, %v799
        %v801 = vpop.f32.mrf.mxu0
        %v802 = vpop.f32.mrf.mxu0
        %v803 = vadd.f32 %v515, %v802
        %v804 = vpop.f32.mrf.mxu0
        %805 = vmatprep.mubr.bf16.mxu0 0
        %806 = vmatmul.mubr.bf16.gmra.mxu0 %v644
        %v807 = vpop.f32.mrf.mxu0
        %v808 = vadd.f32 %v515, %v807
        %v809 = vpop.f32.mrf.mxu0
        %v810 = vpop.f32.mrf.mxu0
        %v811 = vadd.f32 %v515, %v810
        %v812 = vpop.f32.mrf.mxu0
        %813 = vdwg.mxu0
        %v814 = vmul.f32 %v688, 1.4142135
        %v815 = vmul.f32 %v691, 1.4142135
        %v816 = vmul.f32 %v696, 1.4142135
        %v817 = vmul.f32 %v699, 1.4142135
        %v818 = vmul.f32 %v704, 1.4142135
        %v819 = vmul.f32 %v707, 1.4142135
        %v820 = vmul.f32 %v712, 1.4142135
        %v821 = vmul.f32 %v715, 1.4142135
        %v822 = vmul.f32 %v720, 1.4142135
        %v823 = vmul.f32 %v723, 1.4142135
        %v824 = vmul.f32 %v728, 1.4142135
        %v825 = vmul.f32 %v731, 1.4142135
        %v826 = vmul.f32 %v736, 1.4142135
        %v827 = vmul.f32 %v739, 1.4142135
        %v828 = vmul.f32 %v744, 1.4142135
        %v829 = vmul.f32 %v747, 1.4142135
        %v830 = vmul.f32 %v752, 1.4142135
        %v831 = vmul.f32 %v755, 1.4142135
        %v832 = vmul.f32 %v760, 1.4142135
        %v833 = vmul.f32 %v763, 1.4142135
        %v834 = vmul.f32 %v768, 1.4142135
        %v835 = vmul.f32 %v771, 1.4142135
        %v836 = vmul.f32 %v776, 1.4142135
        %v837 = vmul.f32 %v779, 1.4142135
        %v838 = vmul.f32 %v784, 1.4142135
        %v839 = vmul.f32 %v787, 1.4142135
        %v840 = vmul.f32 %v792, 1.4142135
        %v841 = vmul.f32 %v795, 1.4142135
        %v842 = vmul.f32 %v800, 1.4142135
        %v843 = vmul.f32 %v803, 1.4142135
        %v844 = vmul.f32 %v808, 1.4142135
        %v845 = vmul.f32 %v811, 1.4142135
        %vm846 = vcmask 27648
        %847 = vst.msk [vmem:[#allocation2] sm:$0xf] %vm846, 0
        %848 = vst.msk [vmem:[#allocation2 + $0x4] sm:$0xf] %vm846, 0
        %849 = vst.msk [vmem:[#allocation2 + $0x8] sm:$0xf] %vm846, 0
        %850 = vst.msk [vmem:[#allocation2 + $0xc] sm:$0xf] %vm846, 0
        %851 = vst.msk [vmem:[#allocation2 + $0x10] sm:$0xf] %vm846, 0
        %852 = vst.msk [vmem:[#allocation2 + $0x14] sm:$0xf] %vm846, 0
        %853 = vst.msk [vmem:[#allocation2 + $0x18] sm:$0xf] %vm846, 0
        %854 = vst.msk [vmem:[#allocation2 + $0x1c] sm:$0xf] %vm846, 0
        %855 = vst.msk [vmem:[#allocation2 + $0x20] sm:$0xf] %vm846, 0
        %856 = vst.msk [vmem:[#allocation2 + $0x24] sm:$0xf] %vm846, 0
        %857 = vst.msk [vmem:[#allocation2 + $0x28] sm:$0xf] %vm846, 0
        %858 = vst.msk [vmem:[#allocation2 + $0x2c] sm:$0xf] %vm846, 0
        %859 = vst.msk [vmem:[#allocation2 + $0x30] sm:$0xf] %vm846, 0
        %860 = vst.msk [vmem:[#allocation2 + $0x34] sm:$0xf] %vm846, 0
        %861 = vst.msk [vmem:[#allocation2 + $0x38] sm:$0xf] %vm846, 0
        %862 = vst.msk [vmem:[#allocation2 + $0x3c] sm:$0xf] %vm846, 0
        %863 = vst.msk [vmem:[#allocation2 + $0x40] sm:$0xf] %vm846, 0
        %864 = vst.msk [vmem:[#allocation2 + $0x44] sm:$0xf] %vm846, 0
        %865 = vst.msk [vmem:[#allocation2 + $0x48] sm:$0xf] %vm846, 0
        %866 = vst.msk [vmem:[#allocation2 + $0x4c] sm:$0xf] %vm846, 0
        %867 = vst.msk [vmem:[#allocation2 + $0x50] sm:$0xf] %vm846, 0
        %868 = vst.msk [vmem:[#allocation2 + $0x54] sm:$0xf] %vm846, 0
        %869 = vst.msk [vmem:[#allocation2 + $0x58] sm:$0xf] %vm846, 0
        %870 = vst.msk [vmem:[#allocation2 + $0x5c] sm:$0xf] %vm846, 0
        %871 = vst.msk [vmem:[#allocation2 + $0x60] sm:$0xf] %vm846, 0
        %872 = vst.msk [vmem:[#allocation2 + $0x64] sm:$0xf] %vm846, 0
        %873 = vst.msk [vmem:[#allocation2 + $0x68] sm:$0xf] %vm846, 0
        %874 = vst.msk [vmem:[#allocation2 + $0x6c] sm:$0xf] %vm846, 0
        %875 = vst.msk [vmem:[#allocation2 + $0x70] sm:$0xf] %vm846, 0
        %876 = vst.msk [vmem:[#allocation2 + $0x74] sm:$0xf] %vm846, 0
        %877 = vst.msk [vmem:[#allocation2 + $0x78] sm:$0xf] %vm846, 0
        %878 = vst.msk [vmem:[#allocation2 + $0x7c] sm:$0xf] %vm846, 0
        %879 = vst.msk [vmem:[#allocation2 + $0x80] sm:$0xf] %vm846, 0
        %880 = vst.msk [vmem:[#allocation2 + $0x84] sm:$0xf] %vm846, 0
        %881 = vst.msk [vmem:[#allocation2 + $0x88] sm:$0xf] %vm846, 0
        %882 = vst.msk [vmem:[#allocation2 + $0x8c] sm:$0xf] %vm846, 0
        %883 = vst.msk [vmem:[#allocation2 + $0x90] sm:$0xf] %vm846, 0
        %884 = vst.msk [vmem:[#allocation2 + $0x94] sm:$0xf] %vm846, 0
        %885 = vst.msk [vmem:[#allocation2 + $0x98] sm:$0xf] %vm846, 0
        %886 = vst.msk [vmem:[#allocation2 + $0x9c] sm:$0xf] %vm846, 0
        %887 = vst.msk [vmem:[#allocation2 + $0xa0] sm:$0xf] %vm846, 0
        %888 = vst.msk [vmem:[#allocation2 + $0xa4] sm:$0xf] %vm846, 0
        %889 = vst.msk [vmem:[#allocation2 + $0xa8] sm:$0xf] %vm846, 0
        %890 = vst.msk [vmem:[#allocation2 + $0xac] sm:$0xf] %vm846, 0
        %891 = vst.msk [vmem:[#allocation2 + $0xb0] sm:$0xf] %vm846, 0
        %892 = vst.msk [vmem:[#allocation2 + $0xb4] sm:$0xf] %vm846, 0
        %893 = vst.msk [vmem:[#allocation2 + $0xb8] sm:$0xf] %vm846, 0
        %894 = vst.msk [vmem:[#allocation2 + $0xbc] sm:$0xf] %vm846, 0
        %895 = vst.msk [vmem:[#allocation2 + $0xc0] sm:$0xf] %vm846, 0
        %896 = vst.msk [vmem:[#allocation2 + $0xc4] sm:$0xf] %vm846, 0
        %897 = vst.msk [vmem:[#allocation2 + $0xc8] sm:$0xf] %vm846, 0
        %898 = vst.msk [vmem:[#allocation2 + $0xcc] sm:$0xf] %vm846, 0
        %899 = vst.msk [vmem:[#allocation2 + $0xd0] sm:$0xf] %vm846, 0
        %900 = vst.msk [vmem:[#allocation2 + $0xd4] sm:$0xf] %vm846, 0
        %901 = vst.msk [vmem:[#allocation2 + $0xd8] sm:$0xf] %vm846, 0
        %902 = vst.msk [vmem:[#allocation2 + $0xdc] sm:$0xf] %vm846, 0
        %903 = vst.msk [vmem:[#allocation2 + $0xe0] sm:$0xf] %vm846, 0
        %904 = vst.msk [vmem:[#allocation2 + $0xe4] sm:$0xf] %vm846, 0
        %905 = vst.msk [vmem:[#allocation2 + $0xe8] sm:$0xf] %vm846, 0
        %906 = vst.msk [vmem:[#allocation2 + $0xec] sm:$0xf] %vm846, 0
        %907 = vst.msk [vmem:[#allocation2 + $0xf0] sm:$0xf] %vm846, 0
        %908 = vst.msk [vmem:[#allocation2 + $0xf4] sm:$0xf] %vm846, 0
        %909 = vst.msk [vmem:[#allocation2 + $0xf8] sm:$0xf] %vm846, 0
        %910 = vst.msk [vmem:[#allocation2 + $0xfc] sm:$0xf] %vm846, 0
        %911 = vst.msk [vmem:[#allocation2 + $0x100] sm:$0xf] %vm846, 0
        %912 = vst.msk [vmem:[#allocation2 + $0x104] sm:$0xf] %vm846, 0
        %913 = vst.msk [vmem:[#allocation2 + $0x108] sm:$0xf] %vm846, 0
        %914 = vst.msk [vmem:[#allocation2 + $0x10c] sm:$0xf] %vm846, 0
        %915 = vst.msk [vmem:[#allocation2 + $0x110] sm:$0xf] %vm846, 0
        %916 = vst.msk [vmem:[#allocation2 + $0x114] sm:$0xf] %vm846, 0
        %917 = vst.msk [vmem:[#allocation2 + $0x118] sm:$0xf] %vm846, 0
        %918 = vst.msk [vmem:[#allocation2 + $0x11c] sm:$0xf] %vm846, 0
        %v919 = vpack.c.bf16 %v815, %v814
        %v920 = vpack.c.bf16 %v817, %v816
        %v921 = vpack.c.bf16 %v819, %v818
        %v922 = vpack.c.bf16 %v821, %v820
        %v923 = vpack.c.bf16 %v823, %v822
        %v924 = vpack.c.bf16 %v825, %v824
        %v925 = vpack.c.bf16 %v827, %v826
        %v926 = vpack.c.bf16 %v829, %v828
        %v927 = vpack.c.bf16 %v831, %v830
        %v928 = vpack.c.bf16 %v833, %v832
        %v929 = vpack.c.bf16 %v835, %v834
        %v930 = vpack.c.bf16 %v837, %v836
        %v931 = vpack.c.bf16 %v839, %v838
        %v932 = vpack.c.bf16 %v841, %v840
        %v933 = vpack.c.bf16 %v843, %v842
        %v934 = vpack.c.bf16 %v845, %v844
        %v951 = vunpack.c.l.b16 %v919
        %v952 = vunpack.c.h.b16 %v919
        %v953 = vunpack.c.l.b16 %v920
        %v954 = vunpack.c.h.b16 %v920
        %v955 = vunpack.c.l.b16 %v921
        %v956 = vunpack.c.h.b16 %v921
        %v957 = vunpack.c.l.b16 %v922
        %v958 = vunpack.c.h.b16 %v922
        %v959 = vunpack.c.l.b16 %v923
        %v960 = vunpack.c.h.b16 %v923
        %v961 = vunpack.c.l.b16 %v924
        %v962 = vunpack.c.h.b16 %v924
        %v963 = vunpack.c.l.b16 %v925
        %v964 = vunpack.c.h.b16 %v925
        %v965 = vunpack.c.l.b16 %v926
        %v966 = vunpack.c.h.b16 %v926
        %v967 = vunpack.c.l.b16 %v927
        %v968 = vunpack.c.h.b16 %v927
        %v969 = vunpack.c.l.b16 %v928
        %v970 = vunpack.c.h.b16 %v928
        %v971 = vunpack.c.l.b16 %v929
        %v972 = vunpack.c.h.b16 %v929
        %v973 = vunpack.c.l.b16 %v930
        %v974 = vunpack.c.h.b16 %v930
        %v975 = vunpack.c.l.b16 %v931
        %v976 = vunpack.c.h.b16 %v931
        %v977 = vunpack.c.l.b16 %v932
        %v978 = vunpack.c.h.b16 %v932
        %v979 = vunpack.c.l.b16 %v933
        %v980 = vunpack.c.h.b16 %v933
        %v981 = vunpack.c.l.b16 %v934
        %v982 = vunpack.c.h.b16 %v934
        %v983 = vpack.c.b16 %v951, %v951
        %v984 = vpack.c.b16 %v952, %v952
        %v985 = vpack.c.b16 %v953, %v953
        %v986 = vpack.c.b16 %v954, %v954
        %v987 = vpack.c.b16 %v955, %v955
        %v988 = vpack.c.b16 %v956, %v956
        %v989 = vpack.c.b16 %v957, %v957
        %v990 = vpack.c.b16 %v958, %v958
        %v991 = vpack.c.b16 %v959, %v959
        %v992 = vpack.c.b16 %v960, %v960
        %v993 = vpack.c.b16 %v961, %v961
        %v994 = vpack.c.b16 %v962, %v962
        %v995 = vpack.c.b16 %v963, %v963
        %v996 = vpack.c.b16 %v964, %v964
        %v997 = vpack.c.b16 %v965, %v965
        %v998 = vpack.c.b16 %v966, %v966
        %v999 = vpack.c.b16 %v967, %v967
        %v1000 = vpack.c.b16 %v968, %v968
        %v1001 = vpack.c.b16 %v969, %v969
        %v1002 = vpack.c.b16 %v970, %v970
        %v1003 = vpack.c.b16 %v971, %v971
        %v1004 = vpack.c.b16 %v972, %v972
        %v1005 = vpack.c.b16 %v973, %v973
        %v1006 = vpack.c.b16 %v974, %v974
        %v1007 = vpack.c.b16 %v975, %v975
        %v1008 = vpack.c.b16 %v976, %v976
        %v1009 = vpack.c.b16 %v977, %v977
        %v1010 = vpack.c.b16 %v978, %v978
        %v1011 = vpack.c.b16 %v979, %v979
        %v1012 = vpack.c.b16 %v980, %v980
        %v1013 = vpack.c.b16 %v981, %v981
        %v1014 = vpack.c.b16 %v982, %v982
        %s1047 = scalar_lea.vmem [#allocation2], 16
        %1048 = vst.msk [vmem:[%s1047 + $0x4] sm:$0xf] %vm846, %v983
        %1049 = vst.msk [vmem:[%s1047 + $0x8] sm:$0xf] %vm846, %v984
        %1050 = vst.msk [vmem:[%s1047 + $0x14] sm:$0xf] %vm846, %v985
        %1051 = vst.msk [vmem:[%s1047 + $0x18] sm:$0xf] %vm846, %v986
        %1052 = vst.msk [vmem:[%s1047 + $0x24] sm:$0xf] %vm846, %v987
        %1053 = vst.msk [vmem:[%s1047 + $0x28] sm:$0xf] %vm846, %v988
        %1054 = vst.msk [vmem:[%s1047 + $0x34] sm:$0xf] %vm846, %v989
        %1055 = vst.msk [vmem:[%s1047 + $0x38] sm:$0xf] %vm846, %v990
        %1056 = vst.msk [vmem:[%s1047 + $0x44] sm:$0xf] %vm846, %v991
        %1057 = vst.msk [vmem:[%s1047 + $0x48] sm:$0xf] %vm846, %v992
        %1058 = vst.msk [vmem:[%s1047 + $0x54] sm:$0xf] %vm846, %v993
        %1059 = vst.msk [vmem:[%s1047 + $0x58] sm:$0xf] %vm846, %v994
        %1060 = vst.msk [vmem:[%s1047 + $0x64] sm:$0xf] %vm846, %v995
        %1061 = vst.msk [vmem:[%s1047 + $0x68] sm:$0xf] %vm846, %v996
        %1062 = vst.msk [vmem:[%s1047 + $0x74] sm:$0xf] %vm846, %v997
        %1063 = vst.msk [vmem:[%s1047 + $0x78] sm:$0xf] %vm846, %v998
        %1064 = vst.msk [vmem:[%s1047 + $0x84] sm:$0xf] %vm846, %v999
        %1065 = vst.msk [vmem:[%s1047 + $0x88] sm:$0xf] %vm846, %v1000
        %1066 = vst.msk [vmem:[%s1047 + $0x94] sm:$0xf] %vm846, %v1001
        %1067 = vst.msk [vmem:[%s1047 + $0x98] sm:$0xf] %vm846, %v1002
        %1068 = vst.msk [vmem:[%s1047 + $0xa4] sm:$0xf] %vm846, %v1003
        %1069 = vst.msk [vmem:[%s1047 + $0xa8] sm:$0xf] %vm846, %v1004
        %1070 = vst.msk [vmem:[%s1047 + $0xb4] sm:$0xf] %vm846, %v1005
        %1071 = vst.msk [vmem:[%s1047 + $0xb8] sm:$0xf] %vm846, %v1006
        %1072 = vst.msk [vmem:[%s1047 + $0xc4] sm:$0xf] %vm846, %v1007
        %1073 = vst.msk [vmem:[%s1047 + $0xc8] sm:$0xf] %vm846, %v1008
        %1074 = vst.msk [vmem:[%s1047 + $0xd4] sm:$0xf] %vm846, %v1009
        %1075 = vst.msk [vmem:[%s1047 + $0xd8] sm:$0xf] %vm846, %v1010
        %1076 = vst.msk [vmem:[%s1047 + $0xe4] sm:$0xf] %vm846, %v1011
        %1077 = vst.msk [vmem:[%s1047 + $0xe8] sm:$0xf] %vm846, %v1012
        %1078 = vst.msk [vmem:[%s1047 + $0xf4] sm:$0xf] %vm846, %v1013
        %1079 = vst.msk [vmem:[%s1047 + $0xf8] sm:$0xf] %vm846, %v1014
        %v1080 = vld [vmem:[#allocation2] sm:$0x8]
        %v1081 = vld [vmem:[#allocation2 + $0x4] sm:$0xf]
        %v1082 = vld [vmem:[#allocation2 + $0x8] sm:$0xf]
        %v1083 = vld [vmem:[#allocation2 + $0x10] sm:$0x8]
        %v1084 = vld [vmem:[#allocation2 + $0x14] sm:$0xf]
        %v1085 = vld [vmem:[#allocation2 + $0x18] sm:$0xf]
        %v1086 = vld [vmem:[#allocation2 + $0x20] sm:$0x8]
        %v1087 = vld [vmem:[#allocation2 + $0x24] sm:$0xf]
        %v1088 = vld [vmem:[#allocation2 + $0x28] sm:$0xf]
        %v1089 = vld [vmem:[#allocation2 + $0x30] sm:$0x8]
        %v1090 = vld [vmem:[#allocation2 + $0x34] sm:$0xf]
        %v1091 = vld [vmem:[#allocation2 + $0x38] sm:$0xf]
        %v1092 = vld [vmem:[#allocation2 + $0x40] sm:$0x8]
        %v1093 = vld [vmem:[#allocation2 + $0x44] sm:$0xf]
        %v1094 = vld [vmem:[#allocation2 + $0x48] sm:$0xf]
        %v1095 = vld [vmem:[#allocation2 + $0x50] sm:$0x8]
        %v1096 = vld [vmem:[#allocation2 + $0x54] sm:$0xf]
        %v1097 = vld [vmem:[#allocation2 + $0x58] sm:$0xf]
        %v1098 = vld [vmem:[#allocation2 + $0x60] sm:$0x8]
        %v1099 = vld [vmem:[#allocation2 + $0x64] sm:$0xf]
        %v1100 = vld [vmem:[#allocation2 + $0x68] sm:$0xf]
        %v1101 = vld [vmem:[#allocation2 + $0x70] sm:$0x8]
        %v1102 = vld [vmem:[#allocation2 + $0x74] sm:$0xf]
        %v1103 = vld [vmem:[#allocation2 + $0x78] sm:$0xf]
        %v1104 = vld [vmem:[#allocation2 + $0x80] sm:$0x8]
        %v1105 = vld [vmem:[#allocation2 + $0x84] sm:$0xf]
        %v1106 = vld [vmem:[#allocation2 + $0x88] sm:$0xf]
        %v1107 = vld [vmem:[#allocation2 + $0x90] sm:$0x8]
        %v1108 = vld [vmem:[#allocation2 + $0x94] sm:$0xf]
        %v1109 = vld [vmem:[#allocation2 + $0x98] sm:$0xf]
        %v1110 = vld [vmem:[#allocation2 + $0xa0] sm:$0x8]
        %v1111 = vld [vmem:[#allocation2 + $0xa4] sm:$0xf]
        %v1112 = vld [vmem:[#allocation2 + $0xa8] sm:$0xf]
        %v1113 = vld [vmem:[#allocation2 + $0xb0] sm:$0x8]
        %v1114 = vld [vmem:[#allocation2 + $0xb4] sm:$0xf]
        %v1115 = vld [vmem:[#allocation2 + $0xb8] sm:$0xf]
        %v1116 = vld [vmem:[#allocation2 + $0xc0] sm:$0x8]
        %v1117 = vld [vmem:[#allocation2 + $0xc4] sm:$0xf]
        %v1118 = vld [vmem:[#allocation2 + $0xc8] sm:$0xf]
        %v1119 = vld [vmem:[#allocation2 + $0xd0] sm:$0x8]
        %v1120 = vld [vmem:[#allocation2 + $0xd4] sm:$0xf]
        %v1121 = vld [vmem:[#allocation2 + $0xd8] sm:$0xf]
        %v1122 = vld [vmem:[#allocation2 + $0xe0] sm:$0x8]
        %v1123 = vld [vmem:[#allocation2 + $0xe4] sm:$0xf]
        %v1124 = vld [vmem:[#allocation2 + $0xe8] sm:$0xf]
        %v1125 = vld [vmem:[#allocation2 + $0xf0] sm:$0x8]
        %v1126 = vld [vmem:[#allocation2 + $0xf4] sm:$0xf]
        %v1127 = vld [vmem:[#allocation2 + $0xf8] sm:$0xf]
        %v1128 = vld [vmem:[#allocation2 + $0xc] sm:$0x1]
        %v1129 = vld [vmem:[#allocation2 + $0x1c] sm:$0x1]
        %v1130 = vld [vmem:[#allocation2 + $0x2c] sm:$0x1]
        %v1131 = vld [vmem:[#allocation2 + $0x3c] sm:$0x1]
        %v1132 = vld [vmem:[#allocation2 + $0x4c] sm:$0x1]
        %v1133 = vld [vmem:[#allocation2 + $0x5c] sm:$0x1]
        %v1134 = vld [vmem:[#allocation2 + $0x6c] sm:$0x1]
        %v1135 = vld [vmem:[#allocation2 + $0x7c] sm:$0x1]
        %v1136 = vld [vmem:[#allocation2 + $0x8c] sm:$0x1]
        %v1137 = vld [vmem:[#allocation2 + $0x9c] sm:$0x1]
        %v1138 = vld [vmem:[#allocation2 + $0xac] sm:$0x1]
        %v1139 = vld [vmem:[#allocation2 + $0xbc] sm:$0x1]
        %v1140 = vld [vmem:[#allocation2 + $0xcc] sm:$0x1]
        %v1141 = vld [vmem:[#allocation2 + $0xdc] sm:$0x1]
        %v1142 = vld [vmem:[#allocation2 + $0xec] sm:$0x1]
        %v1143 = vld [vmem:[#allocation2 + $0xfc] sm:$0x1]
        %v1144 = vld [vmem:[%s1047] sm:$0x8]
        %v1145 = vld [vmem:[%s1047 + $0x4] sm:$0xf]
        %v1146 = vld [vmem:[%s1047 + $0x8] sm:$0xf]
        %v1147 = vld [vmem:[%s1047 + $0x10] sm:$0x8]
        %v1148 = vld [vmem:[%s1047 + $0x14] sm:$0xf]
        %v1149 = vld [vmem:[%s1047 + $0x18] sm:$0xf]
        %v1150 = vld [vmem:[%s1047 + $0x20] sm:$0x8]
        %v1151 = vld [vmem:[%s1047 + $0x24] sm:$0xf]
        %v1152 = vld [vmem:[%s1047 + $0x28] sm:$0xf]
        %v1153 = vld [vmem:[%s1047 + $0x30] sm:$0x8]
        %v1154 = vld [vmem:[%s1047 + $0x34] sm:$0xf]
        %v1155 = vld [vmem:[%s1047 + $0x38] sm:$0xf]
        %v1156 = vld [vmem:[%s1047 + $0x40] sm:$0x8]
        %v1157 = vld [vmem:[%s1047 + $0x44] sm:$0xf]
        %v1158 = vld [vmem:[%s1047 + $0x48] sm:$0xf]
        %v1159 = vld [vmem:[%s1047 + $0x50] sm:$0x8]
        %v1160 = vld [vmem:[%s1047 + $0x54] sm:$0xf]
        %v1161 = vld [vmem:[%s1047 + $0x58] sm:$0xf]
        %v1162 = vld [vmem:[%s1047 + $0x60] sm:$0x8]
        %v1163 = vld [vmem:[%s1047 + $0x64] sm:$0xf]
        %v1164 = vld [vmem:[%s1047 + $0x68] sm:$0xf]
        %v1165 = vld [vmem:[%s1047 + $0x70] sm:$0x8]
        %v1166 = vld [vmem:[%s1047 + $0x74] sm:$0xf]
        %v1167 = vld [vmem:[%s1047 + $0x78] sm:$0xf]
        %v1168 = vld [vmem:[%s1047 + $0x80] sm:$0x8]
        %v1169 = vld [vmem:[%s1047 + $0x84] sm:$0xf]
        %v1170 = vld [vmem:[%s1047 + $0x88] sm:$0xf]
        %v1171 = vld [vmem:[%s1047 + $0x90] sm:$0x8]
        %v1172 = vld [vmem:[%s1047 + $0x94] sm:$0xf]
        %v1173 = vld [vmem:[%s1047 + $0x98] sm:$0xf]
        %v1174 = vld [vmem:[%s1047 + $0xa0] sm:$0x8]
        %v1175 = vld [vmem:[%s1047 + $0xa4] sm:$0xf]
        %v1176 = vld [vmem:[%s1047 + $0xa8] sm:$0xf]
        %v1177 = vld [vmem:[%s1047 + $0xb0] sm:$0x8]
        %v1178 = vld [vmem:[%s1047 + $0xb4] sm:$0xf]
        %v1179 = vld [vmem:[%s1047 + $0xb8] sm:$0xf]
        %v1180 = vld [vmem:[%s1047 + $0xc0] sm:$0x8]
        %v1181 = vld [vmem:[%s1047 + $0xc4] sm:$0xf]
        %v1182 = vld [vmem:[%s1047 + $0xc8] sm:$0xf]
        %v1183 = vld [vmem:[%s1047 + $0xd0] sm:$0x8]
        %v1184 = vld [vmem:[%s1047 + $0xd4] sm:$0xf]
        %v1185 = vld [vmem:[%s1047 + $0xd8] sm:$0xf]
        %v1186 = vld [vmem:[%s1047 + $0xe0] sm:$0x8]
        %v1187 = vld [vmem:[%s1047 + $0xe4] sm:$0xf]
        %v1188 = vld [vmem:[%s1047 + $0xe8] sm:$0xf]
        %v1189 = vld [vmem:[%s1047 + $0xf0] sm:$0x8]
        %v1190 = vld [vmem:[%s1047 + $0xf4] sm:$0xf]
        %v1191 = vld [vmem:[%s1047 + $0xf8] sm:$0xf]
        %v1192 = vld [vmem:[%s1047 + $0xc] sm:$0x1]
        %v1193 = vld [vmem:[%s1047 + $0x1c] sm:$0x1]
        %v1194 = vld [vmem:[%s1047 + $0x2c] sm:$0x1]
        %v1195 = vld [vmem:[%s1047 + $0x3c] sm:$0x1]
        %v1196 = vld [vmem:[%s1047 + $0x4c] sm:$0x1]
        %v1197 = vld [vmem:[%s1047 + $0x5c] sm:$0x1]
        %v1198 = vld [vmem:[%s1047 + $0x6c] sm:$0x1]
        %v1199 = vld [vmem:[%s1047 + $0x7c] sm:$0x1]
        %v1200 = vld [vmem:[%s1047 + $0x8c] sm:$0x1]
        %v1201 = vld [vmem:[%s1047 + $0x9c] sm:$0x1]
        %v1202 = vld [vmem:[%s1047 + $0xac] sm:$0x1]
        %v1203 = vld [vmem:[%s1047 + $0xbc] sm:$0x1]
        %v1204 = vld [vmem:[%s1047 + $0xcc] sm:$0x1]
        %v1205 = vld [vmem:[%s1047 + $0xdc] sm:$0x1]
        %v1206 = vld [vmem:[%s1047 + $0xec] sm:$0x1]
        %v1207 = vld [vmem:[%s1047 + $0xfc] sm:$0x1]
        %s1208 = scalar_lea.vmem [#allocation2], 32
        %v1209 = vld [vmem:[%s1208] sm:$0x8]
        %v1210 = vld [vmem:[%s1208 + $0x4] sm:$0xf]
        %v1211 = vld [vmem:[%s1208 + $0x8] sm:$0xf]
        %v1212 = vld [vmem:[%s1208 + $0x10] sm:$0x8]
        %v1213 = vld [vmem:[%s1208 + $0x14] sm:$0xf]
        %v1214 = vld [vmem:[%s1208 + $0x18] sm:$0xf]
        %v1215 = vld [vmem:[%s1208 + $0x20] sm:$0x8]
        %v1216 = vld [vmem:[%s1208 + $0x24] sm:$0xf]
        %v1217 = vld [vmem:[%s1208 + $0x28] sm:$0xf]
        %v1218 = vld [vmem:[%s1208 + $0x30] sm:$0x8]
        %v1219 = vld [vmem:[%s1208 + $0x34] sm:$0xf]
        %v1220 = vld [vmem:[%s1208 + $0x38] sm:$0xf]
        %v1221 = vld [vmem:[%s1208 + $0x40] sm:$0x8]
        %v1222 = vld [vmem:[%s1208 + $0x44] sm:$0xf]
        %v1223 = vld [vmem:[%s1208 + $0x48] sm:$0xf]
        %v1224 = vld [vmem:[%s1208 + $0x50] sm:$0x8]
        %v1225 = vld [vmem:[%s1208 + $0x54] sm:$0xf]
        %v1226 = vld [vmem:[%s1208 + $0x58] sm:$0xf]
        %v1227 = vld [vmem:[%s1208 + $0x60] sm:$0x8]
        %v1228 = vld [vmem:[%s1208 + $0x64] sm:$0xf]
        %v1229 = vld [vmem:[%s1208 + $0x68] sm:$0xf]
        %v1230 = vld [vmem:[%s1208 + $0x70] sm:$0x8]
        %v1231 = vld [vmem:[%s1208 + $0x74] sm:$0xf]
        %v1232 = vld [vmem:[%s1208 + $0x78] sm:$0xf]
        %v1233 = vld [vmem:[%s1208 + $0x80] sm:$0x8]
        %v1234 = vld [vmem:[%s1208 + $0x84] sm:$0xf]
        %v1235 = vld [vmem:[%s1208 + $0x88] sm:$0xf]
        %v1236 = vld [vmem:[%s1208 + $0x90] sm:$0x8]
        %v1237 = vld [vmem:[%s1208 + $0x94] sm:$0xf]
        %v1238 = vld [vmem:[%s1208 + $0x98] sm:$0xf]
        %v1239 = vld [vmem:[%s1208 + $0xa0] sm:$0x8]
        %v1240 = vld [vmem:[%s1208 + $0xa4] sm:$0xf]
        %v1241 = vld [vmem:[%s1208 + $0xa8] sm:$0xf]
        %v1242 = vld [vmem:[%s1208 + $0xb0] sm:$0x8]
        %v1243 = vld [vmem:[%s1208 + $0xb4] sm:$0xf]
        %v1244 = vld [vmem:[%s1208 + $0xb8] sm:$0xf]
        %v1245 = vld [vmem:[%s1208 + $0xc0] sm:$0x8]
        %v1246 = vld [vmem:[%s1208 + $0xc4] sm:$0xf]
        %v1247 = vld [vmem:[%s1208 + $0xc8] sm:$0xf]
        %v1248 = vld [vmem:[%s1208 + $0xd0] sm:$0x8]
        %v1249 = vld [vmem:[%s1208 + $0xd4] sm:$0xf]
        %v1250 = vld [vmem:[%s1208 + $0xd8] sm:$0xf]
        %v1251 = vld [vmem:[%s1208 + $0xe0] sm:$0x8]
        %v1252 = vld [vmem:[%s1208 + $0xe4] sm:$0xf]
        %v1253 = vld [vmem:[%s1208 + $0xe8] sm:$0xf]
        %v1254 = vld [vmem:[%s1208 + $0xf0] sm:$0x8]
        %v1255 = vld [vmem:[%s1208 + $0xf4] sm:$0xf]
        %v1256 = vld [vmem:[%s1208 + $0xf8] sm:$0xf]
        %v1257 = vld [vmem:[%s1208 + $0xc] sm:$0x1]
        %v1258 = vld [vmem:[%s1208 + $0x1c] sm:$0x1]
        %v1259 = vld [vmem:[%s1208 + $0x2c] sm:$0x1]
        %v1260 = vld [vmem:[%s1208 + $0x3c] sm:$0x1]
        %v1261 = vld [vmem:[%s1208 + $0x4c] sm:$0x1]
        %v1262 = vld [vmem:[%s1208 + $0x5c] sm:$0x1]
        %v1263 = vld [vmem:[%s1208 + $0x6c] sm:$0x1]
        %v1264 = vld [vmem:[%s1208 + $0x7c] sm:$0x1]
        %v1265 = vld [vmem:[%s1208 + $0x8c] sm:$0x1]
        %v1266 = vld [vmem:[%s1208 + $0x9c] sm:$0x1]
        %v1267 = vld [vmem:[%s1208 + $0xac] sm:$0x1]
        %v1268 = vld [vmem:[%s1208 + $0xbc] sm:$0x1]
        %v1269 = vld [vmem:[%s1208 + $0xcc] sm:$0x1]
        %v1270 = vld [vmem:[%s1208 + $0xdc] sm:$0x1]
        %v1271 = vld [vmem:[%s1208 + $0xec] sm:$0x1]
        %v1272 = vld [vmem:[%s1208 + $0xfc] sm:$0x1]
        %v1321 = vunpack.c.l.b16 %v1080
        %v1322 = vunpack.c.l.b16 %v1081
        %v1323 = vunpack.c.l.b16 %v1082
        %v1324 = vunpack.c.l.b16 %v1083
        %v1325 = vunpack.c.l.b16 %v1084
        %v1326 = vunpack.c.l.b16 %v1085
        %v1327 = vunpack.c.l.b16 %v1086
        %v1328 = vunpack.c.l.b16 %v1087
        %v1329 = vunpack.c.l.b16 %v1088
        %v1330 = vunpack.c.l.b16 %v1089
        %v1331 = vunpack.c.l.b16 %v1090
        %v1332 = vunpack.c.l.b16 %v1091
        %v1333 = vunpack.c.l.b16 %v1092
        %v1334 = vunpack.c.l.b16 %v1093
        %v1335 = vunpack.c.l.b16 %v1094
        %v1336 = vunpack.c.l.b16 %v1095
        %v1337 = vunpack.c.l.b16 %v1096
        %v1338 = vunpack.c.l.b16 %v1097
        %v1339 = vunpack.c.l.b16 %v1098
        %v1340 = vunpack.c.l.b16 %v1099
        %v1341 = vunpack.c.l.b16 %v1100
        %v1342 = vunpack.c.l.b16 %v1101
        %v1343 = vunpack.c.l.b16 %v1102
        %v1344 = vunpack.c.l.b16 %v1103
        %v1345 = vunpack.c.l.b16 %v1104
        %v1346 = vunpack.c.l.b16 %v1105
        %v1347 = vunpack.c.l.b16 %v1106
        %v1348 = vunpack.c.l.b16 %v1107
        %v1349 = vunpack.c.l.b16 %v1108
        %v1350 = vunpack.c.l.b16 %v1109
        %v1351 = vunpack.c.l.b16 %v1110
        %v1352 = vunpack.c.l.b16 %v1111
        %v1353 = vunpack.c.l.b16 %v1112
        %v1354 = vunpack.c.l.b16 %v1113
        %v1355 = vunpack.c.l.b16 %v1114
        %v1356 = vunpack.c.l.b16 %v1115
        %v1357 = vunpack.c.l.b16 %v1116
        %v1358 = vunpack.c.l.b16 %v1117
        %v1359 = vunpack.c.l.b16 %v1118
        %v1360 = vunpack.c.l.b16 %v1119
        %v1361 = vunpack.c.l.b16 %v1120
        %v1362 = vunpack.c.l.b16 %v1121
        %v1363 = vunpack.c.l.b16 %v1122
        %v1364 = vunpack.c.l.b16 %v1123
        %v1365 = vunpack.c.l.b16 %v1124
        %v1366 = vunpack.c.l.b16 %v1125
        %v1367 = vunpack.c.l.b16 %v1126
        %v1368 = vunpack.c.l.b16 %v1127
        %v1369 = vpack.c.b16 %v1322, %v1321
        %v1370 = vpack.c.b16 %v1323, %v1323
        %v1371 = vpack.c.b16 %v1325, %v1324
        %v1372 = vpack.c.b16 %v1326, %v1326
        %v1373 = vpack.c.b16 %v1328, %v1327
        %v1374 = vpack.c.b16 %v1329, %v1329
        %v1375 = vpack.c.b16 %v1331, %v1330
        %v1376 = vpack.c.b16 %v1332, %v1332
        %v1377 = vpack.c.b16 %v1334, %v1333
        %v1378 = vpack.c.b16 %v1335, %v1335
        %v1379 = vpack.c.b16 %v1337, %v1336
        %v1380 = vpack.c.b16 %v1338, %v1338
        %v1381 = vpack.c.b16 %v1340, %v1339
        %v1382 = vpack.c.b16 %v1341, %v1341
        %v1383 = vpack.c.b16 %v1343, %v1342
        %v1384 = vpack.c.b16 %v1344, %v1344
        %v1385 = vpack.c.b16 %v1346, %v1345
        %v1386 = vpack.c.b16 %v1347, %v1347
        %v1387 = vpack.c.b16 %v1349, %v1348
        %v1388 = vpack.c.b16 %v1350, %v1350
        %v1389 = vpack.c.b16 %v1352, %v1351
        %v1390 = vpack.c.b16 %v1353, %v1353
        %v1391 = vpack.c.b16 %v1355, %v1354
        %v1392 = vpack.c.b16 %v1356, %v1356
        %v1393 = vpack.c.b16 %v1358, %v1357
        %v1394 = vpack.c.b16 %v1359, %v1359
        %v1395 = vpack.c.b16 %v1361, %v1360
        %v1396 = vpack.c.b16 %v1362, %v1362
        %v1397 = vpack.c.b16 %v1364, %v1363
        %v1398 = vpack.c.b16 %v1365, %v1365
        %v1399 = vpack.c.b16 %v1367, %v1366
        %v1400 = vpack.c.b16 %v1368, %v1368
        %v1401 = vpack.c.b16 %v1323, %v1322
        %v1402 = vpack.c.b16 %v1326, %v1325
        %v1403 = vpack.c.b16 %v1329, %v1328
        %v1404 = vpack.c.b16 %v1332, %v1331
        %v1405 = vpack.c.b16 %v1335, %v1334
        %v1406 = vpack.c.b16 %v1338, %v1337
        %v1407 = vpack.c.b16 %v1341, %v1340
        %v1408 = vpack.c.b16 %v1344, %v1343
        %v1409 = vpack.c.b16 %v1347, %v1346
        %v1410 = vpack.c.b16 %v1350, %v1349
        %v1411 = vpack.c.b16 %v1353, %v1352
        %v1412 = vpack.c.b16 %v1356, %v1355
        %v1413 = vpack.c.b16 %v1359, %v1358
        %v1414 = vpack.c.b16 %v1362, %v1361
        %v1415 = vpack.c.b16 %v1365, %v1364
        %v1416 = vpack.c.b16 %v1368, %v1367
        %v1418 = vshrl.u32 %v1401, 16
        %v1420 = vrot.slane %v1418, 4
        %v1421 = vshll.u32 %v1401, 16
        %v1423 = vrot.slane %v1421, 5
        %v1424 = vor.u32 %v1420, %v1423
        %v1426 = vshrl.u32 %v1402, 16
        %v1428 = vrot.slane %v1426, 4
        %v1429 = vshll.u32 %v1402, 16
        %v1431 = vrot.slane %v1429, 5
        %v1432 = vor.u32 %v1428, %v1431
        %v1434 = vshrl.u32 %v1403, 16
        %v1436 = vrot.slane %v1434, 4
        %v1437 = vshll.u32 %v1403, 16
        %v1439 = vrot.slane %v1437, 5
        %v1440 = vor.u32 %v1436, %v1439
        %v1442 = vshrl.u32 %v1404, 16
        %v1444 = vrot.slane %v1442, 4
        %v1445 = vshll.u32 %v1404, 16
        %v1447 = vrot.slane %v1445, 5
        %v1448 = vor.u32 %v1444, %v1447
        %v1450 = vshrl.u32 %v1405, 16
        %v1452 = vrot.slane %v1450, 4
        %v1453 = vshll.u32 %v1405, 16
        %v1455 = vrot.slane %v1453, 5
        %v1456 = vor.u32 %v1452, %v1455
        %v1458 = vshrl.u32 %v1406, 16
        %v1460 = vrot.slane %v1458, 4
        %v1461 = vshll.u32 %v1406, 16
        %v1463 = vrot.slane %v1461, 5
        %v1464 = vor.u32 %v1460, %v1463
        %v1466 = vshrl.u32 %v1407, 16
        %v1468 = vrot.slane %v1466, 4
        %v1469 = vshll.u32 %v1407, 16
        %v1471 = vrot.slane %v1469, 5
        %v1472 = vor.u32 %v1468, %v1471
        %v1474 = vshrl.u32 %v1408, 16
        %v1476 = vrot.slane %v1474, 4
        %v1477 = vshll.u32 %v1408, 16
        %v1479 = vrot.slane %v1477, 5
        %v1480 = vor.u32 %v1476, %v1479
        %v1482 = vshrl.u32 %v1409, 16
        %v1484 = vrot.slane %v1482, 4
        %v1485 = vshll.u32 %v1409, 16
        %v1487 = vrot.slane %v1485, 5
        %v1488 = vor.u32 %v1484, %v1487
        %v1490 = vshrl.u32 %v1410, 16
        %v1492 = vrot.slane %v1490, 4
        %v1493 = vshll.u32 %v1410, 16
        %v1495 = vrot.slane %v1493, 5
        %v1496 = vor.u32 %v1492, %v1495
        %v1498 = vshrl.u32 %v1411, 16
        %v1500 = vrot.slane %v1498, 4
        %v1501 = vshll.u32 %v1411, 16
        %v1503 = vrot.slane %v1501, 5
        %v1504 = vor.u32 %v1500, %v1503
        %v1506 = vshrl.u32 %v1412, 16
        %v1508 = vrot.slane %v1506, 4
        %v1509 = vshll.u32 %v1412, 16
        %v1511 = vrot.slane %v1509, 5
        %v1512 = vor.u32 %v1508, %v1511
        %v1514 = vshrl.u32 %v1413, 16
        %v1516 = vrot.slane %v1514, 4
        %v1517 = vshll.u32 %v1413, 16
        %v1519 = vrot.slane %v1517, 5
        %v1520 = vor.u32 %v1516, %v1519
        %v1522 = vshrl.u32 %v1414, 16
        %v1524 = vrot.slane %v1522, 4
        %v1525 = vshll.u32 %v1414, 16
        %v1527 = vrot.slane %v1525, 5
        %v1528 = vor.u32 %v1524, %v1527
        %v1530 = vshrl.u32 %v1415, 16
        %v1532 = vrot.slane %v1530, 4
        %v1533 = vshll.u32 %v1415, 16
        %v1535 = vrot.slane %v1533, 5
        %v1536 = vor.u32 %v1532, %v1535
        %v1538 = vshrl.u32 %v1416, 16
        %v1540 = vrot.slane %v1538, 4
        %v1541 = vshll.u32 %v1416, 16
        %v1543 = vrot.slane %v1541, 5
        %v1544 = vor.u32 %v1540, %v1543
        %1545 = vrot.lane.b32.xlu0 %v1424, 4
        %v1546 = vpop.permute.xlu0 %1545
        %1547 = vrot.lane.b32.xlu0 %v1432, 4
        %v1548 = vpop.permute.xlu0 %1547
        %1549 = vrot.lane.b32.xlu0 %v1440, 4
        %v1550 = vpop.permute.xlu0 %1549
        %1551 = vrot.lane.b32.xlu0 %v1448, 4
        %v1552 = vpop.permute.xlu0 %1551
        %1553 = vrot.lane.b32.xlu0 %v1456, 4
        %v1554 = vpop.permute.xlu0 %1553
        %1555 = vrot.lane.b32.xlu0 %v1464, 4
        %v1556 = vpop.permute.xlu0 %1555
        %1557 = vrot.lane.b32.xlu0 %v1472, 4
        %v1558 = vpop.permute.xlu0 %1557
        %1559 = vrot.lane.b32.xlu0 %v1480, 4
        %v1560 = vpop.permute.xlu0 %1559
        %1561 = vrot.lane.b32.xlu0 %v1488, 4
        %v1562 = vpop.permute.xlu0 %1561
        %1563 = vrot.lane.b32.xlu0 %v1496, 4
        %v1564 = vpop.permute.xlu0 %1563
        %1565 = vrot.lane.b32.xlu0 %v1504, 4
        %v1566 = vpop.permute.xlu0 %1565
        %1567 = vrot.lane.b32.xlu0 %v1512, 4
        %v1568 = vpop.permute.xlu0 %1567
        %1569 = vrot.lane.b32.xlu0 %v1520, 4
        %v1570 = vpop.permute.xlu0 %1569
        %1571 = vrot.lane.b32.xlu0 %v1528, 4
        %v1572 = vpop.permute.xlu0 %1571
        %1573 = vrot.lane.b32.xlu0 %v1536, 4
        %v1574 = vpop.permute.xlu0 %1573
        %1575 = vrot.lane.b32.xlu0 %v1544, 4
        %v1576 = vpop.permute.xlu0 %1575
        %v1593 = vunpack.c.l.b16 %v1128
        %v1594 = vunpack.c.l.b16 %v1129
        %v1595 = vunpack.c.l.b16 %v1130
        %v1596 = vunpack.c.l.b16 %v1131
        %v1597 = vunpack.c.l.b16 %v1132
        %v1598 = vunpack.c.l.b16 %v1133
        %v1599 = vunpack.c.l.b16 %v1134
        %v1600 = vunpack.c.l.b16 %v1135
        %v1601 = vunpack.c.l.b16 %v1136
        %v1602 = vunpack.c.l.b16 %v1137
        %v1603 = vunpack.c.l.b16 %v1138
        %v1604 = vunpack.c.l.b16 %v1139
        %v1605 = vunpack.c.l.b16 %v1140
        %v1606 = vunpack.c.l.b16 %v1141
        %v1607 = vunpack.c.l.b16 %v1142
        %v1608 = vunpack.c.l.b16 %v1143
        %v1609 = vpack.c.b16 %v1593, %v1593
        %v1610 = vpack.c.b16 %v1594, %v1594
        %v1611 = vpack.c.b16 %v1595, %v1595
        %v1612 = vpack.c.b16 %v1596, %v1596
        %v1613 = vpack.c.b16 %v1597, %v1597
        %v1614 = vpack.c.b16 %v1598, %v1598
        %v1615 = vpack.c.b16 %v1599, %v1599
        %v1616 = vpack.c.b16 %v1600, %v1600
        %v1617 = vpack.c.b16 %v1601, %v1601
        %v1618 = vpack.c.b16 %v1602, %v1602
        %v1619 = vpack.c.b16 %v1603, %v1603
        %v1620 = vpack.c.b16 %v1604, %v1604
        %v1621 = vpack.c.b16 %v1605, %v1605
        %v1622 = vpack.c.b16 %v1606, %v1606
        %v1623 = vpack.c.b16 %v1607, %v1607
        %v1624 = vpack.c.b16 %v1608, %v1608
        %vm1625 = vcmask 1042432
        %v1626 = vrot.slane %v1401, 5
        %v1627 = vrot.slane %v1609, 5
        %v1628 = vsel %vm1625, %v1626, %v1627
        %v1629 = vrot.slane %v1402, 5
        %v1630 = vrot.slane %v1610, 5
        %v1631 = vsel %vm1625, %v1629, %v1630
        %v1632 = vrot.slane %v1403, 5
        %v1633 = vrot.slane %v1611, 5
        %v1634 = vsel %vm1625, %v1632, %v1633
        %v1635 = vrot.slane %v1404, 5
        %v1636 = vrot.slane %v1612, 5
        %v1637 = vsel %vm1625, %v1635, %v1636
        %v1638 = vrot.slane %v1405, 5
        %v1639 = vrot.slane %v1613, 5
        %v1640 = vsel %vm1625, %v1638, %v1639
        %v1641 = vrot.slane %v1406, 5
        %v1642 = vrot.slane %v1614, 5
        %v1643 = vsel %vm1625, %v1641, %v1642
        %v1644 = vrot.slane %v1407, 5
        %v1645 = vrot.slane %v1615, 5
        %v1646 = vsel %vm1625, %v1644, %v1645
        %v1647 = vrot.slane %v1408, 5
        %v1648 = vrot.slane %v1616, 5
        %v1649 = vsel %vm1625, %v1647, %v1648
        %v1650 = vrot.slane %v1409, 5
        %v1651 = vrot.slane %v1617, 5
        %v1652 = vsel %vm1625, %v1650, %v1651
        %v1653 = vrot.slane %v1410, 5
        %v1654 = vrot.slane %v1618, 5
        %v1655 = vsel %vm1625, %v1653, %v1654
        %v1656 = vrot.slane %v1411, 5
        %v1657 = vrot.slane %v1619, 5
        %v1658 = vsel %vm1625, %v1656, %v1657
        %v1659 = vrot.slane %v1412, 5
        %v1660 = vrot.slane %v1620, 5
        %v1661 = vsel %vm1625, %v1659, %v1660
        %v1662 = vrot.slane %v1413, 5
        %v1663 = vrot.slane %v1621, 5
        %v1664 = vsel %vm1625, %v1662, %v1663
        %v1665 = vrot.slane %v1414, 5
        %v1666 = vrot.slane %v1622, 5
        %v1667 = vsel %vm1625, %v1665, %v1666
        %v1668 = vrot.slane %v1415, 5
        %v1669 = vrot.slane %v1623, 5
        %v1670 = vsel %vm1625, %v1668, %v1669
        %v1671 = vrot.slane %v1416, 5
        %v1672 = vrot.slane %v1624, 5
        %v1673 = vsel %vm1625, %v1671, %v1672
        %1674 = vrot.lane.b32.xlu0 %v1626, 8
        %v1675 = vpop.permute.xlu0 %1674
        %1676 = vrot.lane.b32.xlu0 %v1628, 8
        %v1677 = vpop.permute.xlu0 %1676
        %1678 = vrot.lane.b32.xlu0 %v1629, 8
        %v1679 = vpop.permute.xlu0 %1678
        %1680 = vrot.lane.b32.xlu0 %v1631, 8
        %v1681 = vpop.permute.xlu0 %1680
        %1682 = vrot.lane.b32.xlu0 %v1632, 8
        %v1683 = vpop.permute.xlu0 %1682
        %1684 = vrot.lane.b32.xlu0 %v1634, 8
        %v1685 = vpop.permute.xlu0 %1684
        %1686 = vrot.lane.b32.xlu0 %v1635, 8
        %v1687 = vpop.permute.xlu0 %1686
        %1688 = vrot.lane.b32.xlu0 %v1637, 8
        %v1689 = vpop.permute.xlu0 %1688
        %1690 = vrot.lane.b32.xlu0 %v1638, 8
        %v1691 = vpop.permute.xlu0 %1690
        %1692 = vrot.lane.b32.xlu0 %v1640, 8
        %v1693 = vpop.permute.xlu0 %1692
        %1694 = vrot.lane.b32.xlu0 %v1641, 8
        %v1695 = vpop.permute.xlu0 %1694
        %1696 = vrot.lane.b32.xlu0 %v1643, 8
        %v1697 = vpop.permute.xlu0 %1696
        %1698 = vrot.lane.b32.xlu0 %v1644, 8
        %v1699 = vpop.permute.xlu0 %1698
        %1700 = vrot.lane.b32.xlu0 %v1646, 8
        %v1701 = vpop.permute.xlu0 %1700
        %1702 = vrot.lane.b32.xlu0 %v1647, 8
        %v1703 = vpop.permute.xlu0 %1702
        %1704 = vrot.lane.b32.xlu0 %v1649, 8
        %v1705 = vpop.permute.xlu0 %1704
        %1706 = vrot.lane.b32.xlu0 %v1650, 8
        %v1707 = vpop.permute.xlu0 %1706
        %1708 = vrot.lane.b32.xlu0 %v1652, 8
        %v1709 = vpop.permute.xlu0 %1708
        %1710 = vrot.lane.b32.xlu0 %v1653, 8
        %v1711 = vpop.permute.xlu0 %1710
        %1712 = vrot.lane.b32.xlu0 %v1655, 8
        %v1713 = vpop.permute.xlu0 %1712
        %1714 = vrot.lane.b32.xlu0 %v1656, 8
        %v1715 = vpop.permute.xlu0 %1714
        %1716 = vrot.lane.b32.xlu0 %v1658, 8
        %v1717 = vpop.permute.xlu0 %1716
        %1718 = vrot.lane.b32.xlu0 %v1659, 8
        %v1719 = vpop.permute.xlu0 %1718
        %1720 = vrot.lane.b32.xlu0 %v1661, 8
        %v1721 = vpop.permute.xlu0 %1720
        %1722 = vrot.lane.b32.xlu0 %v1662, 8
        %v1723 = vpop.permute.xlu0 %1722
        %1724 = vrot.lane.b32.xlu0 %v1664, 8
        %v1725 = vpop.permute.xlu0 %1724
        %1726 = vrot.lane.b32.xlu0 %v1665, 8
        %v1727 = vpop.permute.xlu0 %1726
        %1728 = vrot.lane.b32.xlu0 %v1667, 8
        %v1729 = vpop.permute.xlu0 %1728
        %1730 = vrot.lane.b32.xlu0 %v1668, 8
        %v1731 = vpop.permute.xlu0 %1730
        %1732 = vrot.lane.b32.xlu0 %v1670, 8
        %v1733 = vpop.permute.xlu0 %1732
        %1734 = vrot.lane.b32.xlu0 %v1671, 8
        %v1735 = vpop.permute.xlu0 %1734
        %1736 = vrot.lane.b32.xlu0 %v1673, 8
        %v1737 = vpop.permute.xlu0 %1736
        %v1786 = vunpack.c.l.b16 %v1144
        %v1787 = vunpack.c.l.b16 %v1145
        %v1788 = vunpack.c.l.b16 %v1146
        %v1789 = vunpack.c.l.b16 %v1147
        %v1790 = vunpack.c.l.b16 %v1148
        %v1791 = vunpack.c.l.b16 %v1149
        %v1792 = vunpack.c.l.b16 %v1150
        %v1793 = vunpack.c.l.b16 %v1151
        %v1794 = vunpack.c.l.b16 %v1152
        %v1795 = vunpack.c.l.b16 %v1153
        %v1796 = vunpack.c.l.b16 %v1154
        %v1797 = vunpack.c.l.b16 %v1155
        %v1798 = vunpack.c.l.b16 %v1156
        %v1799 = vunpack.c.l.b16 %v1157
        %v1800 = vunpack.c.l.b16 %v1158
        %v1801 = vunpack.c.l.b16 %v1159
        %v1802 = vunpack.c.l.b16 %v1160
        %v1803 = vunpack.c.l.b16 %v1161
        %v1804 = vunpack.c.l.b16 %v1162
        %v1805 = vunpack.c.l.b16 %v1163
        %v1806 = vunpack.c.l.b16 %v1164
        %v1807 = vunpack.c.l.b16 %v1165
        %v1808 = vunpack.c.l.b16 %v1166
        %v1809 = vunpack.c.l.b16 %v1167
        %v1810 = vunpack.c.l.b16 %v1168
        %v1811 = vunpack.c.l.b16 %v1169
        %v1812 = vunpack.c.l.b16 %v1170
        %v1813 = vunpack.c.l.b16 %v1171
        %v1814 = vunpack.c.l.b16 %v1172
        %v1815 = vunpack.c.l.b16 %v1173
        %v1816 = vunpack.c.l.b16 %v1174
        %v1817 = vunpack.c.l.b16 %v1175
        %v1818 = vunpack.c.l.b16 %v1176
        %v1819 = vunpack.c.l.b16 %v1177
        %v1820 = vunpack.c.l.b16 %v1178
        %v1821 = vunpack.c.l.b16 %v1179
        %v1822 = vunpack.c.l.b16 %v1180
        %v1823 = vunpack.c.l.b16 %v1181
        %v1824 = vunpack.c.l.b16 %v1182
        %v1825 = vunpack.c.l.b16 %v1183
        %v1826 = vunpack.c.l.b16 %v1184
        %v1827 = vunpack.c.l.b16 %v1185
        %v1828 = vunpack.c.l.b16 %v1186
        %v1829 = vunpack.c.l.b16 %v1187
        %v1830 = vunpack.c.l.b16 %v1188
        %v1831 = vunpack.c.l.b16 %v1189
        %v1832 = vunpack.c.l.b16 %v1190
        %v1833 = vunpack.c.l.b16 %v1191
        %v1834 = vpack.c.b16 %v1787, %v1786
        %v1835 = vpack.c.b16 %v1788, %v1788
        %v1836 = vpack.c.b16 %v1790, %v1789
        %v1837 = vpack.c.b16 %v1791, %v1791
        %v1838 = vpack.c.b16 %v1793, %v1792
        %v1839 = vpack.c.b16 %v1794, %v1794
        %v1840 = vpack.c.b16 %v1796, %v1795
        %v1841 = vpack.c.b16 %v1797, %v1797
        %v1842 = vpack.c.b16 %v1799, %v1798
        %v1843 = vpack.c.b16 %v1800, %v1800
        %v1844 = vpack.c.b16 %v1802, %v1801
        %v1845 = vpack.c.b16 %v1803, %v1803
        %v1846 = vpack.c.b16 %v1805, %v1804
        %v1847 = vpack.c.b16 %v1806, %v1806
        %v1848 = vpack.c.b16 %v1808, %v1807
        %v1849 = vpack.c.b16 %v1809, %v1809
        %v1850 = vpack.c.b16 %v1811, %v1810
        %v1851 = vpack.c.b16 %v1812, %v1812
        %v1852 = vpack.c.b16 %v1814, %v1813
        %v1853 = vpack.c.b16 %v1815, %v1815
        %v1854 = vpack.c.b16 %v1817, %v1816
        %v1855 = vpack.c.b16 %v1818, %v1818
        %v1856 = vpack.c.b16 %v1820, %v1819
        %v1857 = vpack.c.b16 %v1821, %v1821
        %v1858 = vpack.c.b16 %v1823, %v1822
        %v1859 = vpack.c.b16 %v1824, %v1824
        %v1860 = vpack.c.b16 %v1826, %v1825
        %v1861 = vpack.c.b16 %v1827, %v1827
        %v1862 = vpack.c.b16 %v1829, %v1828
        %v1863 = vpack.c.b16 %v1830, %v1830
        %v1864 = vpack.c.b16 %v1832, %v1831
        %v1865 = vpack.c.b16 %v1833, %v1833
        %1866 = vrot.lane.b32.xlu0 %v1834, 12
        %v1867 = vpop.permute.xlu0 %1866
        %1868 = vrot.lane.b32.xlu0 %v1835, 12
        %v1869 = vpop.permute.xlu0 %1868
        %1870 = vrot.lane.b32.xlu0 %v1836, 12
        %v1871 = vpop.permute.xlu0 %1870
        %1872 = vrot.lane.b32.xlu0 %v1837, 12
        %v1873 = vpop.permute.xlu0 %1872
        %1874 = vrot.lane.b32.xlu0 %v1838, 12
        %v1875 = vpop.permute.xlu0 %1874
        %1876 = vrot.lane.b32.xlu0 %v1839, 12
        %v1877 = vpop.permute.xlu0 %1876
        %1878 = vrot.lane.b32.xlu0 %v1840, 12
        %v1879 = vpop.permute.xlu0 %1878
        %1880 = vrot.lane.b32.xlu0 %v1841, 12
        %v1881 = vpop.permute.xlu0 %1880
        %1882 = vrot.lane.b32.xlu0 %v1842, 12
        %v1883 = vpop.permute.xlu0 %1882
        %1884 = vrot.lane.b32.xlu0 %v1843, 12
        %v1885 = vpop.permute.xlu0 %1884
        %1886 = vrot.lane.b32.xlu0 %v1844, 12
        %v1887 = vpop.permute.xlu0 %1886
        %1888 = vrot.lane.b32.xlu0 %v1845, 12
        %v1889 = vpop.permute.xlu0 %1888
        %1890 = vrot.lane.b32.xlu0 %v1846, 12
        %v1891 = vpop.permute.xlu0 %1890
        %1892 = vrot.lane.b32.xlu0 %v1847, 12
        %v1893 = vpop.permute.xlu0 %1892
        %1894 = vrot.lane.b32.xlu0 %v1848, 12
        %v1895 = vpop.permute.xlu0 %1894
        %1896 = vrot.lane.b32.xlu0 %v1849, 12
        %v1897 = vpop.permute.xlu0 %1896
        %1898 = vrot.lane.b32.xlu0 %v1850, 12
        %v1899 = vpop.permute.xlu0 %1898
        %1900 = vrot.lane.b32.xlu0 %v1851, 12
        %v1901 = vpop.permute.xlu0 %1900
        %1902 = vrot.lane.b32.xlu0 %v1852, 12
        %v1903 = vpop.permute.xlu0 %1902
        %1904 = vrot.lane.b32.xlu0 %v1853, 12
        %v1905 = vpop.permute.xlu0 %1904
        %1906 = vrot.lane.b32.xlu0 %v1854, 12
        %v1907 = vpop.permute.xlu0 %1906
        %1908 = vrot.lane.b32.xlu0 %v1855, 12
        %v1909 = vpop.permute.xlu0 %1908
        %1910 = vrot.lane.b32.xlu0 %v1856, 12
        %v1911 = vpop.permute.xlu0 %1910
        %1912 = vrot.lane.b32.xlu0 %v1857, 12
        %v1913 = vpop.permute.xlu0 %1912
        %1914 = vrot.lane.b32.xlu0 %v1858, 12
        %v1915 = vpop.permute.xlu0 %1914
        %1916 = vrot.lane.b32.xlu0 %v1859, 12
        %v1917 = vpop.permute.xlu0 %1916
        %1918 = vrot.lane.b32.xlu0 %v1860, 12
        %v1919 = vpop.permute.xlu0 %1918
        %1920 = vrot.lane.b32.xlu0 %v1861, 12
        %v1921 = vpop.permute.xlu0 %1920
        %1922 = vrot.lane.b32.xlu0 %v1862, 12
        %v1923 = vpop.permute.xlu0 %1922
        %1924 = vrot.lane.b32.xlu0 %v1863, 12
        %v1925 = vpop.permute.xlu0 %1924
        %1926 = vrot.lane.b32.xlu0 %v1864, 12
        %v1927 = vpop.permute.xlu0 %1926
        %1928 = vrot.lane.b32.xlu0 %v1865, 12
        %v1929 = vpop.permute.xlu0 %1928
        %v1930 = vpack.c.b16 %v1788, %v1787
        %v1931 = vpack.c.b16 %v1791, %v1790
        %v1932 = vpack.c.b16 %v1794, %v1793
        %v1933 = vpack.c.b16 %v1797, %v1796
        %v1934 = vpack.c.b16 %v1800, %v1799
        %v1935 = vpack.c.b16 %v1803, %v1802
        %v1936 = vpack.c.b16 %v1806, %v1805
        %v1937 = vpack.c.b16 %v1809, %v1808
        %v1938 = vpack.c.b16 %v1812, %v1811
        %v1939 = vpack.c.b16 %v1815, %v1814
        %v1940 = vpack.c.b16 %v1818, %v1817
        %v1941 = vpack.c.b16 %v1821, %v1820
        %v1942 = vpack.c.b16 %v1824, %v1823
        %v1943 = vpack.c.b16 %v1827, %v1826
        %v1944 = vpack.c.b16 %v1830, %v1829
        %v1945 = vpack.c.b16 %v1833, %v1832
        %v1947 = vshrl.u32 %v1930, 16
        %v1949 = vrot.slane %v1947, 4
        %v1950 = vshll.u32 %v1930, 16
        %v1952 = vrot.slane %v1950, 5
        %v1953 = vor.u32 %v1949, %v1952
        %v1955 = vshrl.u32 %v1931, 16
        %v1957 = vrot.slane %v1955, 4
        %v1958 = vshll.u32 %v1931, 16
        %v1960 = vrot.slane %v1958, 5
        %v1961 = vor.u32 %v1957, %v1960
        %v1963 = vshrl.u32 %v1932, 16
        %v1965 = vrot.slane %v1963, 4
        %v1966 = vshll.u32 %v1932, 16
        %v1968 = vrot.slane %v1966, 5
        %v1969 = vor.u32 %v1965, %v1968
        %v1971 = vshrl.u32 %v1933, 16
        %v1973 = vrot.slane %v1971, 4
        %v1974 = vshll.u32 %v1933, 16
        %v1976 = vrot.slane %v1974, 5
        %v1977 = vor.u32 %v1973, %v1976
        %v1979 = vshrl.u32 %v1934, 16
        %v1981 = vrot.slane %v1979, 4
        %v1982 = vshll.u32 %v1934, 16
        %v1984 = vrot.slane %v1982, 5
        %v1985 = vor.u32 %v1981, %v1984
        %v1987 = vshrl.u32 %v1935, 16
        %v1989 = vrot.slane %v1987, 4
        %v1990 = vshll.u32 %v1935, 16
        %v1992 = vrot.slane %v1990, 5
        %v1993 = vor.u32 %v1989, %v1992
        %v1995 = vshrl.u32 %v1936, 16
        %v1997 = vrot.slane %v1995, 4
        %v1998 = vshll.u32 %v1936, 16
        %v2000 = vrot.slane %v1998, 5
        %v2001 = vor.u32 %v1997, %v2000
        %v2003 = vshrl.u32 %v1937, 16
        %v2005 = vrot.slane %v2003, 4
        %v2006 = vshll.u32 %v1937, 16
        %v2008 = vrot.slane %v2006, 5
        %v2009 = vor.u32 %v2005, %v2008
        %v2011 = vshrl.u32 %v1938, 16
        %v2013 = vrot.slane %v2011, 4
        %v2014 = vshll.u32 %v1938, 16
        %v2016 = vrot.slane %v2014, 5
        %v2017 = vor.u32 %v2013, %v2016
        %v2019 = vshrl.u32 %v1939, 16
        %v2021 = vrot.slane %v2019, 4
        %v2022 = vshll.u32 %v1939, 16
        %v2024 = vrot.slane %v2022, 5
        %v2025 = vor.u32 %v2021, %v2024
        %v2027 = vshrl.u32 %v1940, 16
        %v2029 = vrot.slane %v2027, 4
        %v2030 = vshll.u32 %v1940, 16
        %v2032 = vrot.slane %v2030, 5
        %v2033 = vor.u32 %v2029, %v2032
        %v2035 = vshrl.u32 %v1941, 16
        %v2037 = vrot.slane %v2035, 4
        %v2038 = vshll.u32 %v1941, 16
        %v2040 = vrot.slane %v2038, 5
        %v2041 = vor.u32 %v2037, %v2040
        %v2043 = vshrl.u32 %v1942, 16
        %v2045 = vrot.slane %v2043, 4
        %v2046 = vshll.u32 %v1942, 16
        %v2048 = vrot.slane %v2046, 5
        %v2049 = vor.u32 %v2045, %v2048
        %v2051 = vshrl.u32 %v1943, 16
        %v2053 = vrot.slane %v2051, 4
        %v2054 = vshll.u32 %v1943, 16
        %v2056 = vrot.slane %v2054, 5
        %v2057 = vor.u32 %v2053, %v2056
        %v2059 = vshrl.u32 %v1944, 16
        %v2061 = vrot.slane %v2059, 4
        %v2062 = vshll.u32 %v1944, 16
        %v2064 = vrot.slane %v2062, 5
        %v2065 = vor.u32 %v2061, %v2064
        %v2067 = vshrl.u32 %v1945, 16
        %v2069 = vrot.slane %v2067, 4
        %v2070 = vshll.u32 %v1945, 16
        %v2072 = vrot.slane %v2070, 5
        %v2073 = vor.u32 %v2069, %v2072
        %2074 = vrot.lane.b32.xlu0 %v1953, 16
        %v2075 = vpop.permute.xlu0 %2074
        %2076 = vrot.lane.b32.xlu0 %v1961, 16
        %v2077 = vpop.permute.xlu0 %2076
        %2078 = vrot.lane.b32.xlu0 %v1969, 16
        %v2079 = vpop.permute.xlu0 %2078
        %2080 = vrot.lane.b32.xlu0 %v1977, 16
        %v2081 = vpop.permute.xlu0 %2080
        %2082 = vrot.lane.b32.xlu0 %v1985, 16
        %v2083 = vpop.permute.xlu0 %2082
        %2084 = vrot.lane.b32.xlu0 %v1993, 16
        %v2085 = vpop.permute.xlu0 %2084
        %2086 = vrot.lane.b32.xlu0 %v2001, 16
        %v2087 = vpop.permute.xlu0 %2086
        %2088 = vrot.lane.b32.xlu0 %v2009, 16
        %v2089 = vpop.permute.xlu0 %2088
        %2090 = vrot.lane.b32.xlu0 %v2017, 16
        %v2091 = vpop.permute.xlu0 %2090
        %2092 = vrot.lane.b32.xlu0 %v2025, 16
        %v2093 = vpop.permute.xlu0 %2092
        %2094 = vrot.lane.b32.xlu0 %v2033, 16
        %v2095 = vpop.permute.xlu0 %2094
        %2096 = vrot.lane.b32.xlu0 %v2041, 16
        %v2097 = vpop.permute.xlu0 %2096
        %2098 = vrot.lane.b32.xlu0 %v2049, 16
        %v2099 = vpop.permute.xlu0 %2098
        %2100 = vrot.lane.b32.xlu0 %v2057, 16
        %v2101 = vpop.permute.xlu0 %2100
        %2102 = vrot.lane.b32.xlu0 %v2065, 16
        %v2103 = vpop.permute.xlu0 %2102
        %2104 = vrot.lane.b32.xlu0 %v2073, 16
        %v2105 = vpop.permute.xlu0 %2104
        %v2122 = vunpack.c.l.b16 %v1192
        %v2123 = vunpack.c.l.b16 %v1193
        %v2124 = vunpack.c.l.b16 %v1194
        %v2125 = vunpack.c.l.b16 %v1195
        %v2126 = vunpack.c.l.b16 %v1196
        %v2127 = vunpack.c.l.b16 %v1197
        %v2128 = vunpack.c.l.b16 %v1198
        %v2129 = vunpack.c.l.b16 %v1199
        %v2130 = vunpack.c.l.b16 %v1200
        %v2131 = vunpack.c.l.b16 %v1201
        %v2132 = vunpack.c.l.b16 %v1202
        %v2133 = vunpack.c.l.b16 %v1203
        %v2134 = vunpack.c.l.b16 %v1204
        %v2135 = vunpack.c.l.b16 %v1205
        %v2136 = vunpack.c.l.b16 %v1206
        %v2137 = vunpack.c.l.b16 %v1207
        %v2138 = vpack.c.b16 %v2122, %v2122
        %v2139 = vpack.c.b16 %v2123, %v2123
        %v2140 = vpack.c.b16 %v2124, %v2124
        %v2141 = vpack.c.b16 %v2125, %v2125
        %v2142 = vpack.c.b16 %v2126, %v2126
        %v2143 = vpack.c.b16 %v2127, %v2127
        %v2144 = vpack.c.b16 %v2128, %v2128
        %v2145 = vpack.c.b16 %v2129, %v2129
        %v2146 = vpack.c.b16 %v2130, %v2130
        %v2147 = vpack.c.b16 %v2131, %v2131
        %v2148 = vpack.c.b16 %v2132, %v2132
        %v2149 = vpack.c.b16 %v2133, %v2133
        %v2150 = vpack.c.b16 %v2134, %v2134
        %v2151 = vpack.c.b16 %v2135, %v2135
        %v2152 = vpack.c.b16 %v2136, %v2136
        %v2153 = vpack.c.b16 %v2137, %v2137
        %v2154 = vrot.slane %v1930, 5
        %v2155 = vrot.slane %v2138, 5
        %v2156 = vsel %vm1625, %v2154, %v2155
        %v2157 = vrot.slane %v1931, 5
        %v2158 = vrot.slane %v2139, 5
        %v2159 = vsel %vm1625, %v2157, %v2158
        %v2160 = vrot.slane %v1932, 5
        %v2161 = vrot.slane %v2140, 5
        %v2162 = vsel %vm1625, %v2160, %v2161
        %v2163 = vrot.slane %v1933, 5
        %v2164 = vrot.slane %v2141, 5
        %v2165 = vsel %vm1625, %v2163, %v2164
        %v2166 = vrot.slane %v1934, 5
        %v2167 = vrot.slane %v2142, 5
        %v2168 = vsel %vm1625, %v2166, %v2167
        %v2169 = vrot.slane %v1935, 5
        %v2170 = vrot.slane %v2143, 5
        %v2171 = vsel %vm1625, %v2169, %v2170
        %v2172 = vrot.slane %v1936, 5
        %v2173 = vrot.slane %v2144, 5
        %v2174 = vsel %vm1625, %v2172, %v2173
        %v2175 = vrot.slane %v1937, 5
        %v2176 = vrot.slane %v2145, 5
        %v2177 = vsel %vm1625, %v2175, %v2176
        %v2178 = vrot.slane %v1938, 5
        %v2179 = vrot.slane %v2146, 5
        %v2180 = vsel %vm1625, %v2178, %v2179
        %v2181 = vrot.slane %v1939, 5
        %v2182 = vrot.slane %v2147, 5
        %v2183 = vsel %vm1625, %v2181, %v2182
        %v2184 = vrot.slane %v1940, 5
        %v2185 = vrot.slane %v2148, 5
        %v2186 = vsel %vm1625, %v2184, %v2185
        %v2187 = vrot.slane %v1941, 5
        %v2188 = vrot.slane %v2149, 5
        %v2189 = vsel %vm1625, %v2187, %v2188
        %v2190 = vrot.slane %v1942, 5
        %v2191 = vrot.slane %v2150, 5
        %v2192 = vsel %vm1625, %v2190, %v2191
        %v2193 = vrot.slane %v1943, 5
        %v2194 = vrot.slane %v2151, 5
        %v2195 = vsel %vm1625, %v2193, %v2194
        %v2196 = vrot.slane %v1944, 5
        %v2197 = vrot.slane %v2152, 5
        %v2198 = vsel %vm1625, %v2196, %v2197
        %v2199 = vrot.slane %v1945, 5
        %v2200 = vrot.slane %v2153, 5
        %v2201 = vsel %vm1625, %v2199, %v2200
        %2202 = vrot.lane.b32.xlu0 %v2154, 20
        %v2203 = vpop.permute.xlu0 %2202
        %2204 = vrot.lane.b32.xlu0 %v2156, 20
        %v2205 = vpop.permute.xlu0 %2204
        %2206 = vrot.lane.b32.xlu0 %v2157, 20
        %v2207 = vpop.permute.xlu0 %2206
        %2208 = vrot.lane.b32.xlu0 %v2159, 20
        %v2209 = vpop.permute.xlu0 %2208
        %2210 = vrot.lane.b32.xlu0 %v2160, 20
        %v2211 = vpop.permute.xlu0 %2210
        %2212 = vrot.lane.b32.xlu0 %v2162, 20
        %v2213 = vpop.permute.xlu0 %2212
        %2214 = vrot.lane.b32.xlu0 %v2163, 20
        %v2215 = vpop.permute.xlu0 %2214
        %2216 = vrot.lane.b32.xlu0 %v2165, 20
        %v2217 = vpop.permute.xlu0 %2216
        %2218 = vrot.lane.b32.xlu0 %v2166, 20
        %v2219 = vpop.permute.xlu0 %2218
        %2220 = vrot.lane.b32.xlu0 %v2168, 20
        %v2221 = vpop.permute.xlu0 %2220
        %2222 = vrot.lane.b32.xlu0 %v2169, 20
        %v2223 = vpop.permute.xlu0 %2222
        %2224 = vrot.lane.b32.xlu0 %v2171, 20
        %v2225 = vpop.permute.xlu0 %2224
        %2226 = vrot.lane.b32.xlu0 %v2172, 20
        %v2227 = vpop.permute.xlu0 %2226
        %2228 = vrot.lane.b32.xlu0 %v2174, 20
        %v2229 = vpop.permute.xlu0 %2228
        %2230 = vrot.lane.b32.xlu0 %v2175, 20
        %v2231 = vpop.permute.xlu0 %2230
        %2232 = vrot.lane.b32.xlu0 %v2177, 20
        %v2233 = vpop.permute.xlu0 %2232
        %2234 = vrot.lane.b32.xlu0 %v2178, 20
        %v2235 = vpop.permute.xlu0 %2234
        %2236 = vrot.lane.b32.xlu0 %v2180, 20
        %v2237 = vpop.permute.xlu0 %2236
        %2238 = vrot.lane.b32.xlu0 %v2181, 20
        %v2239 = vpop.permute.xlu0 %2238
        %2240 = vrot.lane.b32.xlu0 %v2183, 20
        %v2241 = vpop.permute.xlu0 %2240
        %2242 = vrot.lane.b32.xlu0 %v2184, 20
        %v2243 = vpop.permute.xlu0 %2242
        %2244 = vrot.lane.b32.xlu0 %v2186, 20
        %v2245 = vpop.permute.xlu0 %2244
        %2246 = vrot.lane.b32.xlu0 %v2187, 20
        %v2247 = vpop.permute.xlu0 %2246
        %2248 = vrot.lane.b32.xlu0 %v2189, 20
        %v2249 = vpop.permute.xlu0 %2248
        %2250 = vrot.lane.b32.xlu0 %v2190, 20
        %v2251 = vpop.permute.xlu0 %2250
        %2252 = vrot.lane.b32.xlu0 %v2192, 20
        %v2253 = vpop.permute.xlu0 %2252
        %2254 = vrot.lane.b32.xlu0 %v2193, 20
        %v2255 = vpop.permute.xlu0 %2254
        %2256 = vrot.lane.b32.xlu0 %v2195, 20
        %v2257 = vpop.permute.xlu0 %2256
        %2258 = vrot.lane.b32.xlu0 %v2196, 20
        %v2259 = vpop.permute.xlu0 %2258
        %2260 = vrot.lane.b32.xlu0 %v2198, 20
        %v2261 = vpop.permute.xlu0 %2260
        %2262 = vrot.lane.b32.xlu0 %v2199, 20
        %v2263 = vpop.permute.xlu0 %2262
        %2264 = vrot.lane.b32.xlu0 %v2201, 20
        %v2265 = vpop.permute.xlu0 %2264
        %v2314 = vunpack.c.l.b16 %v1209
        %v2315 = vunpack.c.l.b16 %v1210
        %v2316 = vunpack.c.l.b16 %v1211
        %v2317 = vunpack.c.l.b16 %v1212
        %v2318 = vunpack.c.l.b16 %v1213
        %v2319 = vunpack.c.l.b16 %v1214
        %v2320 = vunpack.c.l.b16 %v1215
        %v2321 = vunpack.c.l.b16 %v1216
        %v2322 = vunpack.c.l.b16 %v1217
        %v2323 = vunpack.c.l.b16 %v1218
        %v2324 = vunpack.c.l.b16 %v1219
        %v2325 = vunpack.c.l.b16 %v1220
        %v2326 = vunpack.c.l.b16 %v1221
        %v2327 = vunpack.c.l.b16 %v1222
        %v2328 = vunpack.c.l.b16 %v1223
        %v2329 = vunpack.c.l.b16 %v1224
        %v2330 = vunpack.c.l.b16 %v1225
        %v2331 = vunpack.c.l.b16 %v1226
        %v2332 = vunpack.c.l.b16 %v1227
        %v2333 = vunpack.c.l.b16 %v1228
        %v2334 = vunpack.c.l.b16 %v1229
        %v2335 = vunpack.c.l.b16 %v1230
        %v2336 = vunpack.c.l.b16 %v1231
        %v2337 = vunpack.c.l.b16 %v1232
        %v2338 = vunpack.c.l.b16 %v1233
        %v2339 = vunpack.c.l.b16 %v1234
        %v2340 = vunpack.c.l.b16 %v1235
        %v2341 = vunpack.c.l.b16 %v1236
        %v2342 = vunpack.c.l.b16 %v1237
        %v2343 = vunpack.c.l.b16 %v1238
        %v2344 = vunpack.c.l.b16 %v1239
        %v2345 = vunpack.c.l.b16 %v1240
        %v2346 = vunpack.c.l.b16 %v1241
        %v2347 = vunpack.c.l.b16 %v1242
        %v2348 = vunpack.c.l.b16 %v1243
        %v2349 = vunpack.c.l.b16 %v1244
        %v2350 = vunpack.c.l.b16 %v1245
        %v2351 = vunpack.c.l.b16 %v1246
        %v2352 = vunpack.c.l.b16 %v1247
        %v2353 = vunpack.c.l.b16 %v1248
        %v2354 = vunpack.c.l.b16 %v1249
        %v2355 = vunpack.c.l.b16 %v1250
        %v2356 = vunpack.c.l.b16 %v1251
        %v2357 = vunpack.c.l.b16 %v1252
        %v2358 = vunpack.c.l.b16 %v1253
        %v2359 = vunpack.c.l.b16 %v1254
        %v2360 = vunpack.c.l.b16 %v1255
        %v2361 = vunpack.c.l.b16 %v1256
        %v2362 = vpack.c.b16 %v2315, %v2314
        %v2363 = vpack.c.b16 %v2316, %v2316
        %v2364 = vpack.c.b16 %v2318, %v2317
        %v2365 = vpack.c.b16 %v2319, %v2319
        %v2366 = vpack.c.b16 %v2321, %v2320
        %v2367 = vpack.c.b16 %v2322, %v2322
        %v2368 = vpack.c.b16 %v2324, %v2323
        %v2369 = vpack.c.b16 %v2325, %v2325
        %v2370 = vpack.c.b16 %v2327, %v2326
        %v2371 = vpack.c.b16 %v2328, %v2328
        %v2372 = vpack.c.b16 %v2330, %v2329
        %v2373 = vpack.c.b16 %v2331, %v2331
        %v2374 = vpack.c.b16 %v2333, %v2332
        %v2375 = vpack.c.b16 %v2334, %v2334
        %v2376 = vpack.c.b16 %v2336, %v2335
        %v2377 = vpack.c.b16 %v2337, %v2337
        %v2378 = vpack.c.b16 %v2339, %v2338
        %v2379 = vpack.c.b16 %v2340, %v2340
        %v2380 = vpack.c.b16 %v2342, %v2341
        %v2381 = vpack.c.b16 %v2343, %v2343
        %v2382 = vpack.c.b16 %v2345, %v2344
        %v2383 = vpack.c.b16 %v2346, %v2346
        %v2384 = vpack.c.b16 %v2348, %v2347
        %v2385 = vpack.c.b16 %v2349, %v2349
        %v2386 = vpack.c.b16 %v2351, %v2350
        %v2387 = vpack.c.b16 %v2352, %v2352
        %v2388 = vpack.c.b16 %v2354, %v2353
        %v2389 = vpack.c.b16 %v2355, %v2355
        %v2390 = vpack.c.b16 %v2357, %v2356
        %v2391 = vpack.c.b16 %v2358, %v2358
        %v2392 = vpack.c.b16 %v2360, %v2359
        %v2393 = vpack.c.b16 %v2361, %v2361
        %2394 = vrot.lane.b32.xlu0 %v2362, 24
        %v2395 = vpop.permute.xlu0 %2394
        %2396 = vrot.lane.b32.xlu0 %v2363, 24
        %v2397 = vpop.permute.xlu0 %2396
        %2398 = vrot.lane.b32.xlu0 %v2364, 24
        %v2399 = vpop.permute.xlu0 %2398
        %2400 = vrot.lane.b32.xlu0 %v2365, 24
        %v2401 = vpop.permute.xlu0 %2400
        %2402 = vrot.lane.b32.xlu0 %v2366, 24
        %v2403 = vpop.permute.xlu0 %2402
        %2404 = vrot.lane.b32.xlu0 %v2367, 24
        %v2405 = vpop.permute.xlu0 %2404
        %2406 = vrot.lane.b32.xlu0 %v2368, 24
        %v2407 = vpop.permute.xlu0 %2406
        %2408 = vrot.lane.b32.xlu0 %v2369, 24
        %v2409 = vpop.permute.xlu0 %2408
        %2410 = vrot.lane.b32.xlu0 %v2370, 24
        %v2411 = vpop.permute.xlu0 %2410
        %2412 = vrot.lane.b32.xlu0 %v2371, 24
        %v2413 = vpop.permute.xlu0 %2412
        %2414 = vrot.lane.b32.xlu0 %v2372, 24
        %v2415 = vpop.permute.xlu0 %2414
        %2416 = vrot.lane.b32.xlu0 %v2373, 24
        %v2417 = vpop.permute.xlu0 %2416
        %2418 = vrot.lane.b32.xlu0 %v2374, 24
        %v2419 = vpop.permute.xlu0 %2418
        %2420 = vrot.lane.b32.xlu0 %v2375, 24
        %v2421 = vpop.permute.xlu0 %2420
        %2422 = vrot.lane.b32.xlu0 %v2376, 24
        %v2423 = vpop.permute.xlu0 %2422
        %2424 = vrot.lane.b32.xlu0 %v2377, 24
        %v2425 = vpop.permute.xlu0 %2424
        %2426 = vrot.lane.b32.xlu0 %v2378, 24
        %v2427 = vpop.permute.xlu0 %2426
        %2428 = vrot.lane.b32.xlu0 %v2379, 24
        %v2429 = vpop.permute.xlu0 %2428
        %2430 = vrot.lane.b32.xlu0 %v2380, 24
        %v2431 = vpop.permute.xlu0 %2430
        %2432 = vrot.lane.b32.xlu0 %v2381, 24
        %v2433 = vpop.permute.xlu0 %2432
        %2434 = vrot.lane.b32.xlu0 %v2382, 24
        %v2435 = vpop.permute.xlu0 %2434
        %2436 = vrot.lane.b32.xlu0 %v2383, 24
        %v2437 = vpop.permute.xlu0 %2436
        %2438 = vrot.lane.b32.xlu0 %v2384, 24
        %v2439 = vpop.permute.xlu0 %2438
        %2440 = vrot.lane.b32.xlu0 %v2385, 24
        %v2441 = vpop.permute.xlu0 %2440
        %2442 = vrot.lane.b32.xlu0 %v2386, 24
        %v2443 = vpop.permute.xlu0 %2442
        %2444 = vrot.lane.b32.xlu0 %v2387, 24
        %v2445 = vpop.permute.xlu0 %2444
        %2446 = vrot.lane.b32.xlu0 %v2388, 24
        %v2447 = vpop.permute.xlu0 %2446
        %2448 = vrot.lane.b32.xlu0 %v2389, 24
        %v2449 = vpop.permute.xlu0 %2448
        %2450 = vrot.lane.b32.xlu0 %v2390, 24
        %v2451 = vpop.permute.xlu0 %2450
        %2452 = vrot.lane.b32.xlu0 %v2391, 24
        %v2453 = vpop.permute.xlu0 %2452
        %2454 = vrot.lane.b32.xlu0 %v2392, 24
        %v2455 = vpop.permute.xlu0 %2454
        %2456 = vrot.lane.b32.xlu0 %v2393, 24
        %v2457 = vpop.permute.xlu0 %2456
        %v2458 = vpack.c.b16 %v2316, %v2315
        %v2459 = vpack.c.b16 %v2319, %v2318
        %v2460 = vpack.c.b16 %v2322, %v2321
        %v2461 = vpack.c.b16 %v2325, %v2324
        %v2462 = vpack.c.b16 %v2328, %v2327
        %v2463 = vpack.c.b16 %v2331, %v2330
        %v2464 = vpack.c.b16 %v2334, %v2333
        %v2465 = vpack.c.b16 %v2337, %v2336
        %v2466 = vpack.c.b16 %v2340, %v2339
        %v2467 = vpack.c.b16 %v2343, %v2342
        %v2468 = vpack.c.b16 %v2346, %v2345
        %v2469 = vpack.c.b16 %v2349, %v2348
        %v2470 = vpack.c.b16 %v2352, %v2351
        %v2471 = vpack.c.b16 %v2355, %v2354
        %v2472 = vpack.c.b16 %v2358, %v2357
        %v2473 = vpack.c.b16 %v2361, %v2360
        %v2475 = vshrl.u32 %v2458, 16
        %v2477 = vrot.slane %v2475, 4
        %v2478 = vshll.u32 %v2458, 16
        %v2480 = vrot.slane %v2478, 5
        %v2481 = vor.u32 %v2477, %v2480
        %v2483 = vshrl.u32 %v2459, 16
        %v2485 = vrot.slane %v2483, 4
        %v2486 = vshll.u32 %v2459, 16
        %v2488 = vrot.slane %v2486, 5
        %v2489 = vor.u32 %v2485, %v2488
        %v2491 = vshrl.u32 %v2460, 16
        %v2493 = vrot.slane %v2491, 4
        %v2494 = vshll.u32 %v2460, 16
        %v2496 = vrot.slane %v2494, 5
        %v2497 = vor.u32 %v2493, %v2496
        %v2499 = vshrl.u32 %v2461, 16
        %v2501 = vrot.slane %v2499, 4
        %v2502 = vshll.u32 %v2461, 16
        %v2504 = vrot.slane %v2502, 5
        %v2505 = vor.u32 %v2501, %v2504
        %v2507 = vshrl.u32 %v2462, 16
        %v2509 = vrot.slane %v2507, 4
        %v2510 = vshll.u32 %v2462, 16
        %v2512 = vrot.slane %v2510, 5
        %v2513 = vor.u32 %v2509, %v2512
        %v2515 = vshrl.u32 %v2463, 16
        %v2517 = vrot.slane %v2515, 4
        %v2518 = vshll.u32 %v2463, 16
        %v2520 = vrot.slane %v2518, 5
        %v2521 = vor.u32 %v2517, %v2520
        %v2523 = vshrl.u32 %v2464, 16
        %v2525 = vrot.slane %v2523, 4
        %v2526 = vshll.u32 %v2464, 16
        %v2528 = vrot.slane %v2526, 5
        %v2529 = vor.u32 %v2525, %v2528
        %v2531 = vshrl.u32 %v2465, 16
        %v2533 = vrot.slane %v2531, 4
        %v2534 = vshll.u32 %v2465, 16
        %v2536 = vrot.slane %v2534, 5
        %v2537 = vor.u32 %v2533, %v2536
        %v2539 = vshrl.u32 %v2466, 16
        %v2541 = vrot.slane %v2539, 4
        %v2542 = vshll.u32 %v2466, 16
        %v2544 = vrot.slane %v2542, 5
        %v2545 = vor.u32 %v2541, %v2544
        %v2547 = vshrl.u32 %v2467, 16
        %v2549 = vrot.slane %v2547, 4
        %v2550 = vshll.u32 %v2467, 16
        %v2552 = vrot.slane %v2550, 5
        %v2553 = vor.u32 %v2549, %v2552
        %v2555 = vshrl.u32 %v2468, 16
        %v2557 = vrot.slane %v2555, 4
        %v2558 = vshll.u32 %v2468, 16
        %v2560 = vrot.slane %v2558, 5
        %v2561 = vor.u32 %v2557, %v2560
        %v2563 = vshrl.u32 %v2469, 16
        %v2565 = vrot.slane %v2563, 4
        %v2566 = vshll.u32 %v2469, 16
        %v2568 = vrot.slane %v2566, 5
        %v2569 = vor.u32 %v2565, %v2568
        %v2571 = vshrl.u32 %v2470, 16
        %v2573 = vrot.slane %v2571, 4
        %v2574 = vshll.u32 %v2470, 16
        %v2576 = vrot.slane %v2574, 5
        %v2577 = vor.u32 %v2573, %v2576
        %v2579 = vshrl.u32 %v2471, 16
        %v2581 = vrot.slane %v2579, 4
        %v2582 = vshll.u32 %v2471, 16
        %v2584 = vrot.slane %v2582, 5
        %v2585 = vor.u32 %v2581, %v2584
        %v2587 = vshrl.u32 %v2472, 16
        %v2589 = vrot.slane %v2587, 4
        %v2590 = vshll.u32 %v2472, 16
        %v2592 = vrot.slane %v2590, 5
        %v2593 = vor.u32 %v2589, %v2592
        %v2595 = vshrl.u32 %v2473, 16
        %v2597 = vrot.slane %v2595, 4
        %v2598 = vshll.u32 %v2473, 16
        %v2600 = vrot.slane %v2598, 5
        %v2601 = vor.u32 %v2597, %v2600
        %2602 = vrot.lane.b32.xlu0 %v2481, 28
        %v2603 = vpop.permute.xlu0 %2602
        %2604 = vrot.lane.b32.xlu0 %v2489, 28
        %v2605 = vpop.permute.xlu0 %2604
        %2606 = vrot.lane.b32.xlu0 %v2497, 28
        %v2607 = vpop.permute.xlu0 %2606
        %2608 = vrot.lane.b32.xlu0 %v2505, 28
        %v2609 = vpop.permute.xlu0 %2608
        %2610 = vrot.lane.b32.xlu0 %v2513, 28
        %v2611 = vpop.permute.xlu0 %2610
        %2612 = vrot.lane.b32.xlu0 %v2521, 28
        %v2613 = vpop.permute.xlu0 %2612
        %2614 = vrot.lane.b32.xlu0 %v2529, 28
        %v2615 = vpop.permute.xlu0 %2614
        %2616 = vrot.lane.b32.xlu0 %v2537, 28
        %v2617 = vpop.permute.xlu0 %2616
        %2618 = vrot.lane.b32.xlu0 %v2545, 28
        %v2619 = vpop.permute.xlu0 %2618
        %2620 = vrot.lane.b32.xlu0 %v2553, 28
        %v2621 = vpop.permute.xlu0 %2620
        %2622 = vrot.lane.b32.xlu0 %v2561, 28
        %v2623 = vpop.permute.xlu0 %2622
        %2624 = vrot.lane.b32.xlu0 %v2569, 28
        %v2625 = vpop.permute.xlu0 %2624
        %2626 = vrot.lane.b32.xlu0 %v2577, 28
        %v2627 = vpop.permute.xlu0 %2626
        %2628 = vrot.lane.b32.xlu0 %v2585, 28
        %v2629 = vpop.permute.xlu0 %2628
        %2630 = vrot.lane.b32.xlu0 %v2593, 28
        %v2631 = vpop.permute.xlu0 %2630
        %2632 = vrot.lane.b32.xlu0 %v2601, 28
        %v2633 = vpop.permute.xlu0 %2632
        %v2650 = vunpack.c.l.b16 %v1257
        %v2651 = vunpack.c.l.b16 %v1258
        %v2652 = vunpack.c.l.b16 %v1259
        %v2653 = vunpack.c.l.b16 %v1260
        %v2654 = vunpack.c.l.b16 %v1261
        %v2655 = vunpack.c.l.b16 %v1262
        %v2656 = vunpack.c.l.b16 %v1263
        %v2657 = vunpack.c.l.b16 %v1264
        %v2658 = vunpack.c.l.b16 %v1265
        %v2659 = vunpack.c.l.b16 %v1266
        %v2660 = vunpack.c.l.b16 %v1267
        %v2661 = vunpack.c.l.b16 %v1268
        %v2662 = vunpack.c.l.b16 %v1269
        %v2663 = vunpack.c.l.b16 %v1270
        %v2664 = vunpack.c.l.b16 %v1271
        %v2665 = vunpack.c.l.b16 %v1272
        %v2666 = vpack.c.b16 %v2650, %v2650
        %v2667 = vpack.c.b16 %v2651, %v2651
        %v2668 = vpack.c.b16 %v2652, %v2652
        %v2669 = vpack.c.b16 %v2653, %v2653
        %v2670 = vpack.c.b16 %v2654, %v2654
        %v2671 = vpack.c.b16 %v2655, %v2655
        %v2672 = vpack.c.b16 %v2656, %v2656
        %v2673 = vpack.c.b16 %v2657, %v2657
        %v2674 = vpack.c.b16 %v2658, %v2658
        %v2675 = vpack.c.b16 %v2659, %v2659
        %v2676 = vpack.c.b16 %v2660, %v2660
        %v2677 = vpack.c.b16 %v2661, %v2661
        %v2678 = vpack.c.b16 %v2662, %v2662
        %v2679 = vpack.c.b16 %v2663, %v2663
        %v2680 = vpack.c.b16 %v2664, %v2664
        %v2681 = vpack.c.b16 %v2665, %v2665
        %v2682 = vrot.slane %v2458, 5
        %v2683 = vrot.slane %v2666, 5
        %v2684 = vsel %vm1625, %v2682, %v2683
        %v2685 = vrot.slane %v2459, 5
        %v2686 = vrot.slane %v2667, 5
        %v2687 = vsel %vm1625, %v2685, %v2686
        %v2688 = vrot.slane %v2460, 5
        %v2689 = vrot.slane %v2668, 5
        %v2690 = vsel %vm1625, %v2688, %v2689
        %v2691 = vrot.slane %v2461, 5
        %v2692 = vrot.slane %v2669, 5
        %v2693 = vsel %vm1625, %v2691, %v2692
        %v2694 = vrot.slane %v2462, 5
        %v2695 = vrot.slane %v2670, 5
        %v2696 = vsel %vm1625, %v2694, %v2695
        %v2697 = vrot.slane %v2463, 5
        %v2698 = vrot.slane %v2671, 5
        %v2699 = vsel %vm1625, %v2697, %v2698
        %v2700 = vrot.slane %v2464, 5
        %v2701 = vrot.slane %v2672, 5
        %v2702 = vsel %vm1625, %v2700, %v2701
        %v2703 = vrot.slane %v2465, 5
        %v2704 = vrot.slane %v2673, 5
        %v2705 = vsel %vm1625, %v2703, %v2704
        %v2706 = vrot.slane %v2466, 5
        %v2707 = vrot.slane %v2674, 5
        %v2708 = vsel %vm1625, %v2706, %v2707
        %v2709 = vrot.slane %v2467, 5
        %v2710 = vrot.slane %v2675, 5
        %v2711 = vsel %vm1625, %v2709, %v2710
        %v2712 = vrot.slane %v2468, 5
        %v2713 = vrot.slane %v2676, 5
        %v2714 = vsel %vm1625, %v2712, %v2713
        %v2715 = vrot.slane %v2469, 5
        %v2716 = vrot.slane %v2677, 5
        %v2717 = vsel %vm1625, %v2715, %v2716
        %v2718 = vrot.slane %v2470, 5
        %v2719 = vrot.slane %v2678, 5
        %v2720 = vsel %vm1625, %v2718, %v2719
        %v2721 = vrot.slane %v2471, 5
        %v2722 = vrot.slane %v2679, 5
        %v2723 = vsel %vm1625, %v2721, %v2722
        %v2724 = vrot.slane %v2472, 5
        %v2725 = vrot.slane %v2680, 5
        %v2726 = vsel %vm1625, %v2724, %v2725
        %v2727 = vrot.slane %v2473, 5
        %v2728 = vrot.slane %v2681, 5
        %v2729 = vsel %vm1625, %v2727, %v2728
        %2730 = vrot.lane.b32.xlu0 %v2682, 32
        %v2731 = vpop.permute.xlu0 %2730
        %2732 = vrot.lane.b32.xlu0 %v2684, 32
        %v2733 = vpop.permute.xlu0 %2732
        %2734 = vrot.lane.b32.xlu0 %v2685, 32
        %v2735 = vpop.permute.xlu0 %2734
        %2736 = vrot.lane.b32.xlu0 %v2687, 32
        %v2737 = vpop.permute.xlu0 %2736
        %2738 = vrot.lane.b32.xlu0 %v2688, 32
        %v2739 = vpop.permute.xlu0 %2738
        %2740 = vrot.lane.b32.xlu0 %v2690, 32
        %v2741 = vpop.permute.xlu0 %2740
        %2742 = vrot.lane.b32.xlu0 %v2691, 32
        %v2743 = vpop.permute.xlu0 %2742
        %2744 = vrot.lane.b32.xlu0 %v2693, 32
        %v2745 = vpop.permute.xlu0 %2744
        %2746 = vrot.lane.b32.xlu0 %v2694, 32
        %v2747 = vpop.permute.xlu0 %2746
        %2748 = vrot.lane.b32.xlu0 %v2696, 32
        %v2749 = vpop.permute.xlu0 %2748
        %2750 = vrot.lane.b32.xlu0 %v2697, 32
        %v2751 = vpop.permute.xlu0 %2750
        %2752 = vrot.lane.b32.xlu0 %v2699, 32
        %v2753 = vpop.permute.xlu0 %2752
        %2754 = vrot.lane.b32.xlu0 %v2700, 32
        %v2755 = vpop.permute.xlu0 %2754
        %2756 = vrot.lane.b32.xlu0 %v2702, 32
        %v2757 = vpop.permute.xlu0 %2756
        %2758 = vrot.lane.b32.xlu0 %v2703, 32
        %v2759 = vpop.permute.xlu0 %2758
        %2760 = vrot.lane.b32.xlu0 %v2705, 32
        %v2761 = vpop.permute.xlu0 %2760
        %2762 = vrot.lane.b32.xlu0 %v2706, 32
        %v2763 = vpop.permute.xlu0 %2762
        %2764 = vrot.lane.b32.xlu0 %v2708, 32
        %v2765 = vpop.permute.xlu0 %2764
        %2766 = vrot.lane.b32.xlu0 %v2709, 32
        %v2767 = vpop.permute.xlu0 %2766
        %2768 = vrot.lane.b32.xlu0 %v2711, 32
        %v2769 = vpop.permute.xlu0 %2768
        %2770 = vrot.lane.b32.xlu0 %v2712, 32
        %v2771 = vpop.permute.xlu0 %2770
        %2772 = vrot.lane.b32.xlu0 %v2714, 32
        %v2773 = vpop.permute.xlu0 %2772
        %2774 = vrot.lane.b32.xlu0 %v2715, 32
        %v2775 = vpop.permute.xlu0 %2774
        %2776 = vrot.lane.b32.xlu0 %v2717, 32
        %v2777 = vpop.permute.xlu0 %2776
        %2778 = vrot.lane.b32.xlu0 %v2718, 32
        %v2779 = vpop.permute.xlu0 %2778
        %2780 = vrot.lane.b32.xlu0 %v2720, 32
        %v2781 = vpop.permute.xlu0 %2780
        %2782 = vrot.lane.b32.xlu0 %v2721, 32
        %v2783 = vpop.permute.xlu0 %2782
        %2784 = vrot.lane.b32.xlu0 %v2723, 32
        %v2785 = vpop.permute.xlu0 %2784
        %2786 = vrot.lane.b32.xlu0 %v2724, 32
        %v2787 = vpop.permute.xlu0 %2786
        %2788 = vrot.lane.b32.xlu0 %v2726, 32
        %v2789 = vpop.permute.xlu0 %2788
        %2790 = vrot.lane.b32.xlu0 %v2727, 32
        %v2791 = vpop.permute.xlu0 %2790
        %2792 = vrot.lane.b32.xlu0 %v2729, 32
        %v2793 = vpop.permute.xlu0 %2792
        %vm2794 = vcmask 31744
        %v2797 = vsel %vm2794, %v1369, %v1546
        %v2799 = vsel %vm2794, %v1370, %v1546
        %v2802 = vsel %vm2794, %v1371, %v1548
        %v2804 = vsel %vm2794, %v1372, %v1548
        %v2807 = vsel %vm2794, %v1373, %v1550
        %v2809 = vsel %vm2794, %v1374, %v1550
        %v2812 = vsel %vm2794, %v1375, %v1552
        %v2814 = vsel %vm2794, %v1376, %v1552
        %v2817 = vsel %vm2794, %v1377, %v1554
        %v2819 = vsel %vm2794, %v1378, %v1554
        %v2822 = vsel %vm2794, %v1379, %v1556
        %v2824 = vsel %vm2794, %v1380, %v1556
        %v2827 = vsel %vm2794, %v1381, %v1558
        %v2829 = vsel %vm2794, %v1382, %v1558
        %v2832 = vsel %vm2794, %v1383, %v1560
        %v2834 = vsel %vm2794, %v1384, %v1560
        %v2837 = vsel %vm2794, %v1385, %v1562
        %v2839 = vsel %vm2794, %v1386, %v1562
        %v2842 = vsel %vm2794, %v1387, %v1564
        %v2844 = vsel %vm2794, %v1388, %v1564
        %v2847 = vsel %vm2794, %v1389, %v1566
        %v2849 = vsel %vm2794, %v1390, %v1566
        %v2852 = vsel %vm2794, %v1391, %v1568
        %v2854 = vsel %vm2794, %v1392, %v1568
        %v2857 = vsel %vm2794, %v1393, %v1570
        %v2859 = vsel %vm2794, %v1394, %v1570
        %v2862 = vsel %vm2794, %v1395, %v1572
        %v2864 = vsel %vm2794, %v1396, %v1572
        %v2867 = vsel %vm2794, %v1397, %v1574
        %v2869 = vsel %vm2794, %v1398, %v1574
        %v2872 = vsel %vm2794, %v1399, %v1576
        %v2874 = vsel %vm2794, %v1400, %v1576
        %vm2875 = vcmask 64512
        %v2877 = vsel %vm2875, %v2797, %v1675
        %v2879 = vsel %vm2875, %v2799, %v1677
        %v2881 = vsel %vm2875, %v2802, %v1679
        %v2883 = vsel %vm2875, %v2804, %v1681
        %v2885 = vsel %vm2875, %v2807, %v1683
        %v2887 = vsel %vm2875, %v2809, %v1685
        %v2889 = vsel %vm2875, %v2812, %v1687
        %v2891 = vsel %vm2875, %v2814, %v1689
        %v2893 = vsel %vm2875, %v2817, %v1691
        %v2895 = vsel %vm2875, %v2819, %v1693
        %v2897 = vsel %vm2875, %v2822, %v1695
        %v2899 = vsel %vm2875, %v2824, %v1697
        %v2901 = vsel %vm2875, %v2827, %v1699
        %v2903 = vsel %vm2875, %v2829, %v1701
        %v2905 = vsel %vm2875, %v2832, %v1703
        %v2907 = vsel %vm2875, %v2834, %v1705
        %v2909 = vsel %vm2875, %v2837, %v1707
        %v2911 = vsel %vm2875, %v2839, %v1709
        %v2913 = vsel %vm2875, %v2842, %v1711
        %v2915 = vsel %vm2875, %v2844, %v1713
        %v2917 = vsel %vm2875, %v2847, %v1715
        %v2919 = vsel %vm2875, %v2849, %v1717
        %v2921 = vsel %vm2875, %v2852, %v1719
        %v2923 = vsel %vm2875, %v2854, %v1721
        %v2925 = vsel %vm2875, %v2857, %v1723
        %v2927 = vsel %vm2875, %v2859, %v1725
        %v2929 = vsel %vm2875, %v2862, %v1727
        %v2931 = vsel %vm2875, %v2864, %v1729
        %v2933 = vsel %vm2875, %v2867, %v1731
        %v2935 = vsel %vm2875, %v2869, %v1733
        %v2937 = vsel %vm2875, %v2872, %v1735
        %v2939 = vsel %vm2875, %v2874, %v1737
        %vm2940 = vcmask 97280
        %v2942 = vsel %vm2940, %v2877, %v1867
        %v2944 = vsel %vm2940, %v2879, %v1869
        %v2946 = vsel %vm2940, %v2881, %v1871
        %v2948 = vsel %vm2940, %v2883, %v1873
        %v2950 = vsel %vm2940, %v2885, %v1875
        %v2952 = vsel %vm2940, %v2887, %v1877
        %v2954 = vsel %vm2940, %v2889, %v1879
        %v2956 = vsel %vm2940, %v2891, %v1881
        %v2958 = vsel %vm2940, %v2893, %v1883
        %v2960 = vsel %vm2940, %v2895, %v1885
        %v2962 = vsel %vm2940, %v2897, %v1887
        %v2964 = vsel %vm2940, %v2899, %v1889
        %v2966 = vsel %vm2940, %v2901, %v1891
        %v2968 = vsel %vm2940, %v2903, %v1893
        %v2970 = vsel %vm2940, %v2905, %v1895
        %v2972 = vsel %vm2940, %v2907, %v1897
        %v2974 = vsel %vm2940, %v2909, %v1899
        %v2976 = vsel %vm2940, %v2911, %v1901
        %v2978 = vsel %vm2940, %v2913, %v1903
        %v2980 = vsel %vm2940, %v2915, %v1905
        %v2982 = vsel %vm2940, %v2917, %v1907
        %v2984 = vsel %vm2940, %v2919, %v1909
        %v2986 = vsel %vm2940, %v2921, %v1911
        %v2988 = vsel %vm2940, %v2923, %v1913
        %v2990 = vsel %vm2940, %v2925, %v1915
        %v2992 = vsel %vm2940, %v2927, %v1917
        %v2994 = vsel %vm2940, %v2929, %v1919
        %v2996 = vsel %vm2940, %v2931, %v1921
        %v2998 = vsel %vm2940, %v2933, %v1923
        %v3000 = vsel %vm2940, %v2935, %v1925
        %v3002 = vsel %vm2940, %v2937, %v1927
        %v3004 = vsel %vm2940, %v2939, %v1929
        %vm3005 = vcmask 130048
        %v3007 = vsel %vm3005, %v2942, %v2075
        %v3008 = vsel %vm3005, %v2944, %v2075
        %v3010 = vsel %vm3005, %v2946, %v2077
        %v3011 = vsel %vm3005, %v2948, %v2077
        %v3013 = vsel %vm3005, %v2950, %v2079
        %v3014 = vsel %vm3005, %v2952, %v2079
        %v3016 = vsel %vm3005, %v2954, %v2081
        %v3017 = vsel %vm3005, %v2956, %v2081
        %v3019 = vsel %vm3005, %v2958, %v2083
        %v3020 = vsel %vm3005, %v2960, %v2083
        %v3022 = vsel %vm3005, %v2962, %v2085
        %v3023 = vsel %vm3005, %v2964, %v2085
        %v3025 = vsel %vm3005, %v2966, %v2087
        %v3026 = vsel %vm3005, %v2968, %v2087
        %v3028 = vsel %vm3005, %v2970, %v2089
        %v3029 = vsel %vm3005, %v2972, %v2089
        %v3031 = vsel %vm3005, %v2974, %v2091
        %v3032 = vsel %vm3005, %v2976, %v2091
        %v3034 = vsel %vm3005, %v2978, %v2093
        %v3035 = vsel %vm3005, %v2980, %v2093
        %v3037 = vsel %vm3005, %v2982, %v2095
        %v3038 = vsel %vm3005, %v2984, %v2095
        %v3040 = vsel %vm3005, %v2986, %v2097
        %v3041 = vsel %vm3005, %v2988, %v2097
        %v3043 = vsel %vm3005, %v2990, %v2099
        %v3044 = vsel %vm3005, %v2992, %v2099
        %v3046 = vsel %vm3005, %v2994, %v2101
        %v3047 = vsel %vm3005, %v2996, %v2101
        %v3049 = vsel %vm3005, %v2998, %v2103
        %v3050 = vsel %vm3005, %v3000, %v2103
        %v3052 = vsel %vm3005, %v3002, %v2105
        %v3053 = vsel %vm3005, %v3004, %v2105
        %vm3054 = vcmask 162816
        %v3056 = vsel %vm3054, %v3007, %v2203
        %v3058 = vsel %vm3054, %v3008, %v2205
        %v3060 = vsel %vm3054, %v3010, %v2207
        %v3062 = vsel %vm3054, %v3011, %v2209
        %v3064 = vsel %vm3054, %v3013, %v2211
        %v3066 = vsel %vm3054, %v3014, %v2213
        %v3068 = vsel %vm3054, %v3016, %v2215
        %v3070 = vsel %vm3054, %v3017, %v2217
        %v3072 = vsel %vm3054, %v3019, %v2219
        %v3074 = vsel %vm3054, %v3020, %v2221
        %v3076 = vsel %vm3054, %v3022, %v2223
        %v3078 = vsel %vm3054, %v3023, %v2225
        %v3080 = vsel %vm3054, %v3025, %v2227
        %v3082 = vsel %vm3054, %v3026, %v2229
        %v3084 = vsel %vm3054, %v3028, %v2231
        %v3086 = vsel %vm3054, %v3029, %v2233
        %v3088 = vsel %vm3054, %v3031, %v2235
        %v3090 = vsel %vm3054, %v3032, %v2237
        %v3092 = vsel %vm3054, %v3034, %v2239
        %v3094 = vsel %vm3054, %v3035, %v2241
        %v3096 = vsel %vm3054, %v3037, %v2243
        %v3098 = vsel %vm3054, %v3038, %v2245
        %v3100 = vsel %vm3054, %v3040, %v2247
        %v3102 = vsel %vm3054, %v3041, %v2249
        %v3104 = vsel %vm3054, %v3043, %v2251
        %v3106 = vsel %vm3054, %v3044, %v2253
        %v3108 = vsel %vm3054, %v3046, %v2255
        %v3110 = vsel %vm3054, %v3047, %v2257
        %v3112 = vsel %vm3054, %v3049, %v2259
        %v3114 = vsel %vm3054, %v3050, %v2261
        %v3116 = vsel %vm3054, %v3052, %v2263
        %v3118 = vsel %vm3054, %v3053, %v2265
        %vm3119 = vcmask 195584
        %v3121 = vsel %vm3119, %v3056, %v2395
        %v3123 = vsel %vm3119, %v3058, %v2397
        %v3125 = vsel %vm3119, %v3060, %v2399
        %v3127 = vsel %vm3119, %v3062, %v2401
        %v3129 = vsel %vm3119, %v3064, %v2403
        %v3131 = vsel %vm3119, %v3066, %v2405
        %v3133 = vsel %vm3119, %v3068, %v2407
        %v3135 = vsel %vm3119, %v3070, %v2409
        %v3137 = vsel %vm3119, %v3072, %v2411
        %v3139 = vsel %vm3119, %v3074, %v2413
        %v3141 = vsel %vm3119, %v3076, %v2415
        %v3143 = vsel %vm3119, %v3078, %v2417
        %v3145 = vsel %vm3119, %v3080, %v2419
        %v3147 = vsel %vm3119, %v3082, %v2421
        %v3149 = vsel %vm3119, %v3084, %v2423
        %v3151 = vsel %vm3119, %v3086, %v2425
        %v3153 = vsel %vm3119, %v3088, %v2427
        %v3155 = vsel %vm3119, %v3090, %v2429
        %v3157 = vsel %vm3119, %v3092, %v2431
        %v3159 = vsel %vm3119, %v3094, %v2433
        %v3161 = vsel %vm3119, %v3096, %v2435
        %v3163 = vsel %vm3119, %v3098, %v2437
        %v3165 = vsel %vm3119, %v3100, %v2439
        %v3167 = vsel %vm3119, %v3102, %v2441
        %v3169 = vsel %vm3119, %v3104, %v2443
        %v3171 = vsel %vm3119, %v3106, %v2445
        %v3173 = vsel %vm3119, %v3108, %v2447
        %v3175 = vsel %vm3119, %v3110, %v2449
        %v3177 = vsel %vm3119, %v3112, %v2451
        %v3179 = vsel %vm3119, %v3114, %v2453
        %v3181 = vsel %vm3119, %v3116, %v2455
        %v3183 = vsel %vm3119, %v3118, %v2457
        %vm3184 = vcmask 228352
        %v3186 = vsel %vm3184, %v3121, %v2603
        %v3187 = vsel %vm3184, %v3123, %v2603
        %v3189 = vsel %vm3184, %v3125, %v2605
        %v3190 = vsel %vm3184, %v3127, %v2605
        %v3192 = vsel %vm3184, %v3129, %v2607
        %v3193 = vsel %vm3184, %v3131, %v2607
        %v3195 = vsel %vm3184, %v3133, %v2609
        %v3196 = vsel %vm3184, %v3135, %v2609
        %v3198 = vsel %vm3184, %v3137, %v2611
        %v3199 = vsel %vm3184, %v3139, %v2611
        %v3201 = vsel %vm3184, %v3141, %v2613
        %v3202 = vsel %vm3184, %v3143, %v2613
        %v3204 = vsel %vm3184, %v3145, %v2615
        %v3205 = vsel %vm3184, %v3147, %v2615
        %v3207 = vsel %vm3184, %v3149, %v2617
        %v3208 = vsel %vm3184, %v3151, %v2617
        %v3210 = vsel %vm3184, %v3153, %v2619
        %v3211 = vsel %vm3184, %v3155, %v2619
        %v3213 = vsel %vm3184, %v3157, %v2621
        %v3214 = vsel %vm3184, %v3159, %v2621
        %v3216 = vsel %vm3184, %v3161, %v2623
        %v3217 = vsel %vm3184, %v3163, %v2623
        %v3219 = vsel %vm3184, %v3165, %v2625
        %v3220 = vsel %vm3184, %v3167, %v2625
        %v3222 = vsel %vm3184, %v3169, %v2627
        %v3223 = vsel %vm3184, %v3171, %v2627
        %v3225 = vsel %vm3184, %v3173, %v2629
        %v3226 = vsel %vm3184, %v3175, %v2629
        %v3228 = vsel %vm3184, %v3177, %v2631
        %v3229 = vsel %vm3184, %v3179, %v2631
        %v3231 = vsel %vm3184, %v3181, %v2633
        %v3232 = vsel %vm3184, %v3183, %v2633
        %vm3233 = vcmask 261120
        %v3235 = vsel %vm3233, %v3186, %v2731
        %v3237 = vsel %vm3233, %v3187, %v2733
        %v3239 = vsel %vm3233, %v3189, %v2735
        %v3241 = vsel %vm3233, %v3190, %v2737
        %v3243 = vsel %vm3233, %v3192, %v2739
        %v3245 = vsel %vm3233, %v3193, %v2741
        %v3247 = vsel %vm3233, %v3195, %v2743
        %v3249 = vsel %vm3233, %v3196, %v2745
        %v3251 = vsel %vm3233, %v3198, %v2747
        %v3253 = vsel %vm3233, %v3199, %v2749
        %v3255 = vsel %vm3233, %v3201, %v2751
        %v3257 = vsel %vm3233, %v3202, %v2753
        %v3259 = vsel %vm3233, %v3204, %v2755
        %v3261 = vsel %vm3233, %v3205, %v2757
        %v3263 = vsel %vm3233, %v3207, %v2759
        %v3265 = vsel %vm3233, %v3208, %v2761
        %v3267 = vsel %vm3233, %v3210, %v2763
        %v3269 = vsel %vm3233, %v3211, %v2765
        %v3271 = vsel %vm3233, %v3213, %v2767
        %v3273 = vsel %vm3233, %v3214, %v2769
        %v3275 = vsel %vm3233, %v3216, %v2771
        %v3277 = vsel %vm3233, %v3217, %v2773
        %v3279 = vsel %vm3233, %v3219, %v2775
        %v3281 = vsel %vm3233, %v3220, %v2777
        %v3283 = vsel %vm3233, %v3222, %v2779
        %v3285 = vsel %vm3233, %v3223, %v2781
        %v3287 = vsel %vm3233, %v3225, %v2783
        %v3289 = vsel %vm3233, %v3226, %v2785
        %v3291 = vsel %vm3233, %v3228, %v2787
        %v3293 = vsel %vm3233, %v3229, %v2789
        %v3295 = vsel %vm3233, %v3231, %v2791
        %v3297 = vsel %vm3233, %v3232, %v2793
        %vm3298 = vsmask.f32 4352
        %v3299 = vshrl.u32 %v3235, 16
        %v3301 = vrot.slane %v3299, 3
        %v3302 = vshll.u32 %v3235, 16
        %v3304 = vrot.slane %v3302, 4
        %v3305 = vor.u32 %v3301, %v3304
        %v3306 = vshrl.u32 %v3237, 16
        %v3308 = vrot.slane %v3306, 3
        %v3309 = vshll.u32 %v3237, 16
        %v3311 = vrot.slane %v3309, 4
        %v3312 = vor.u32 %v3308, %v3311
        %v3313 = vsel %vm3298, %v3305, %v3312
        %v3314 = vshrl.u32 %v3239, 16
        %v3316 = vrot.slane %v3314, 3
        %v3317 = vshll.u32 %v3239, 16
        %v3319 = vrot.slane %v3317, 4
        %v3320 = vor.u32 %v3316, %v3319
        %v3321 = vshrl.u32 %v3241, 16
        %v3323 = vrot.slane %v3321, 3
        %v3324 = vshll.u32 %v3241, 16
        %v3326 = vrot.slane %v3324, 4
        %v3327 = vor.u32 %v3323, %v3326
        %v3328 = vsel %vm3298, %v3320, %v3327
        %v3329 = vshrl.u32 %v3243, 16
        %v3331 = vrot.slane %v3329, 3
        %v3332 = vshll.u32 %v3243, 16
        %v3334 = vrot.slane %v3332, 4
        %v3335 = vor.u32 %v3331, %v3334
        %v3336 = vshrl.u32 %v3245, 16
        %v3338 = vrot.slane %v3336, 3
        %v3339 = vshll.u32 %v3245, 16
        %v3341 = vrot.slane %v3339, 4
        %v3342 = vor.u32 %v3338, %v3341
        %v3343 = vsel %vm3298, %v3335, %v3342
        %v3344 = vshrl.u32 %v3247, 16
        %v3346 = vrot.slane %v3344, 3
        %v3347 = vshll.u32 %v3247, 16
        %v3349 = vrot.slane %v3347, 4
        %v3350 = vor.u32 %v3346, %v3349
        %v3351 = vshrl.u32 %v3249, 16
        %v3353 = vrot.slane %v3351, 3
        %v3354 = vshll.u32 %v3249, 16
        %v3356 = vrot.slane %v3354, 4
        %v3357 = vor.u32 %v3353, %v3356
        %v3358 = vsel %vm3298, %v3350, %v3357
        %v3359 = vshrl.u32 %v3251, 16
        %v3361 = vrot.slane %v3359, 3
        %v3362 = vshll.u32 %v3251, 16
        %v3364 = vrot.slane %v3362, 4
        %v3365 = vor.u32 %v3361, %v3364
        %v3366 = vshrl.u32 %v3253, 16
        %v3368 = vrot.slane %v3366, 3
        %v3369 = vshll.u32 %v3253, 16
        %v3371 = vrot.slane %v3369, 4
        %v3372 = vor.u32 %v3368, %v3371
        %v3373 = vsel %vm3298, %v3365, %v3372
        %v3374 = vshrl.u32 %v3255, 16
        %v3376 = vrot.slane %v3374, 3
        %v3377 = vshll.u32 %v3255, 16
        %v3379 = vrot.slane %v3377, 4
        %v3380 = vor.u32 %v3376, %v3379
        %v3381 = vshrl.u32 %v3257, 16
        %v3383 = vrot.slane %v3381, 3
        %v3384 = vshll.u32 %v3257, 16
        %v3386 = vrot.slane %v3384, 4
        %v3387 = vor.u32 %v3383, %v3386
        %v3388 = vsel %vm3298, %v3380, %v3387
        %v3389 = vshrl.u32 %v3259, 16
        %v3391 = vrot.slane %v3389, 3
        %v3392 = vshll.u32 %v3259, 16
        %v3394 = vrot.slane %v3392, 4
        %v3395 = vor.u32 %v3391, %v3394
        %v3396 = vshrl.u32 %v3261, 16
        %v3398 = vrot.slane %v3396, 3
        %v3399 = vshll.u32 %v3261, 16
        %v3401 = vrot.slane %v3399, 4
        %v3402 = vor.u32 %v3398, %v3401
        %v3403 = vsel %vm3298, %v3395, %v3402
        %v3404 = vshrl.u32 %v3263, 16
        %v3406 = vrot.slane %v3404, 3
        %v3407 = vshll.u32 %v3263, 16
        %v3409 = vrot.slane %v3407, 4
        %v3410 = vor.u32 %v3406, %v3409
        %v3411 = vshrl.u32 %v3265, 16
        %v3413 = vrot.slane %v3411, 3
        %v3414 = vshll.u32 %v3265, 16
        %v3416 = vrot.slane %v3414, 4
        %v3417 = vor.u32 %v3413, %v3416
        %v3418 = vsel %vm3298, %v3410, %v3417
        %v3419 = vshrl.u32 %v3267, 16
        %v3421 = vrot.slane %v3419, 3
        %v3422 = vshll.u32 %v3267, 16
        %v3424 = vrot.slane %v3422, 4
        %v3425 = vor.u32 %v3421, %v3424
        %v3426 = vshrl.u32 %v3269, 16
        %v3428 = vrot.slane %v3426, 3
        %v3429 = vshll.u32 %v3269, 16
        %v3431 = vrot.slane %v3429, 4
        %v3432 = vor.u32 %v3428, %v3431
        %v3433 = vsel %vm3298, %v3425, %v3432
        %v3434 = vshrl.u32 %v3271, 16
        %v3436 = vrot.slane %v3434, 3
        %v3437 = vshll.u32 %v3271, 16
        %v3439 = vrot.slane %v3437, 4
        %v3440 = vor.u32 %v3436, %v3439
        %v3441 = vshrl.u32 %v3273, 16
        %v3443 = vrot.slane %v3441, 3
        %v3444 = vshll.u32 %v3273, 16
        %v3446 = vrot.slane %v3444, 4
        %v3447 = vor.u32 %v3443, %v3446
        %v3448 = vsel %vm3298, %v3440, %v3447
        %v3449 = vshrl.u32 %v3275, 16
        %v3451 = vrot.slane %v3449, 3
        %v3452 = vshll.u32 %v3275, 16
        %v3454 = vrot.slane %v3452, 4
        %v3455 = vor.u32 %v3451, %v3454
        %v3456 = vshrl.u32 %v3277, 16
        %v3458 = vrot.slane %v3456, 3
        %v3459 = vshll.u32 %v3277, 16
        %v3461 = vrot.slane %v3459, 4
        %v3462 = vor.u32 %v3458, %v3461
        %v3463 = vsel %vm3298, %v3455, %v3462
        %v3464 = vshrl.u32 %v3279, 16
        %v3466 = vrot.slane %v3464, 3
        %v3467 = vshll.u32 %v3279, 16
        %v3469 = vrot.slane %v3467, 4
        %v3470 = vor.u32 %v3466, %v3469
        %v3471 = vshrl.u32 %v3281, 16
        %v3473 = vrot.slane %v3471, 3
        %v3474 = vshll.u32 %v3281, 16
        %v3476 = vrot.slane %v3474, 4
        %v3477 = vor.u32 %v3473, %v3476
        %v3478 = vsel %vm3298, %v3470, %v3477
        %v3479 = vshrl.u32 %v3283, 16
        %v3481 = vrot.slane %v3479, 3
        %v3482 = vshll.u32 %v3283, 16
        %v3484 = vrot.slane %v3482, 4
        %v3485 = vor.u32 %v3481, %v3484
        %v3486 = vshrl.u32 %v3285, 16
        %v3488 = vrot.slane %v3486, 3
        %v3489 = vshll.u32 %v3285, 16
        %v3491 = vrot.slane %v3489, 4
        %v3492 = vor.u32 %v3488, %v3491
        %v3493 = vsel %vm3298, %v3485, %v3492
        %v3494 = vshrl.u32 %v3287, 16
        %v3496 = vrot.slane %v3494, 3
        %v3497 = vshll.u32 %v3287, 16
        %v3499 = vrot.slane %v3497, 4
        %v3500 = vor.u32 %v3496, %v3499
        %v3501 = vshrl.u32 %v3289, 16
        %v3503 = vrot.slane %v3501, 3
        %v3504 = vshll.u32 %v3289, 16
        %v3506 = vrot.slane %v3504, 4
        %v3507 = vor.u32 %v3503, %v3506
        %v3508 = vsel %vm3298, %v3500, %v3507
        %v3509 = vshrl.u32 %v3291, 16
        %v3511 = vrot.slane %v3509, 3
        %v3512 = vshll.u32 %v3291, 16
        %v3514 = vrot.slane %v3512, 4
        %v3515 = vor.u32 %v3511, %v3514
        %v3516 = vshrl.u32 %v3293, 16
        %v3518 = vrot.slane %v3516, 3
        %v3519 = vshll.u32 %v3293, 16
        %v3521 = vrot.slane %v3519, 4
        %v3522 = vor.u32 %v3518, %v3521
        %v3523 = vsel %vm3298, %v3515, %v3522
        %v3524 = vshrl.u32 %v3295, 16
        %v3526 = vrot.slane %v3524, 3
        %v3527 = vshll.u32 %v3295, 16
        %v3529 = vrot.slane %v3527, 4
        %v3530 = vor.u32 %v3526, %v3529
        %v3531 = vshrl.u32 %v3297, 16
        %v3533 = vrot.slane %v3531, 3
        %v3534 = vshll.u32 %v3297, 16
        %v3536 = vrot.slane %v3534, 4
        %v3537 = vor.u32 %v3533, %v3536
        %v3538 = vsel %vm3298, %v3530, %v3537
        %v3539 = vld [vmem:[%s3] sm:$0xf]
        %v3540 = vld [vmem:[%s3 + $0x4] sm:$0xf]
        %v3541 = vld [vmem:[%s3 + $0x8] sm:$0xf]
        %v3542 = vld [vmem:[%s3 + $0xc] sm:$0xf]
        %v3543 = vld [vmem:[%s3 + $0x10] sm:$0x3]
        %v3544 = vld [vmem:[%s4] sm:$0x1]
        %v3546 = vlaneseq
        %v3547 = vshrl.u32 %v3546, 7
        %v3548 = vsub.s32 0, %v3547
        %v3549 = vrot.slane %v3544, %v3548
        %v3556 = vunpack.c.l.b16 %v3539
        %v3557 = vunpack.c.l.b16 %v3540
        %v3558 = vunpack.c.l.b16 %v3541
        %v3559 = vunpack.c.l.b16 %v3542
        %v3560 = vunpack.c.l.b16 %v3543
        %v3561 = vpack.c.b16 %v3557, %v3556
        %v3562 = vpack.c.b16 %v3559, %v3558
        %v3563 = vpack.c.b16 %v3560, %v3560
        %vm3566 = vcmask 293888
        %v3568 = vsel %vm3566, %v3313, 0
        %v3571 = vsel %vm3566, %v3328, 0
        %v3574 = vsel %vm3566, %v3343, 0
        %v3577 = vsel %vm3566, %v3358, 0
        %v3580 = vsel %vm3566, %v3373, 0
        %v3583 = vsel %vm3566, %v3388, 0
        %v3586 = vsel %vm3566, %v3403, 0
        %v3589 = vsel %vm3566, %v3418, 0
        %v3592 = vsel %vm3566, %v3433, 0
        %v3595 = vsel %vm3566, %v3448, 0
        %v3598 = vsel %vm3566, %v3463, 0
        %v3601 = vsel %vm3566, %v3478, 0
        %v3604 = vsel %vm3566, %v3493, 0
        %v3607 = vsel %vm3566, %v3508, 0
        %v3610 = vsel %vm3566, %v3523, 0
        %v3613 = vsel %vm3566, %v3538, 0
        %v3616 = vsel %vm647, %v3563, 0
        %3618 = vmatprep.subr.bf16.mxu0 0
        %3619 = vmatpush1.bf16.msra.mxu0 0
        %3620 = vmatprep.subr.bf16.mxu0 0
        %3621 = vmatpush1.bf16.msra.mxu0 0
        %3622 = vmatprep.subr.bf16.mxu0 0
        %3623 = vmatpush1.bf16.msra.mxu0 0
        %3624 = vmatprep.subr.bf16.mxu0 0
        %3625 = vmatpush1.bf16.msra.mxu0 0
        %3626 = vmatprep.subr.bf16.mxu0 0
        %3627 = vmatpush1.bf16.msra.mxu0 0
        %3628 = vmatprep.subr.bf16.mxu0 0
        %3629 = vmatpush1.bf16.msra.mxu0 %v3616
        %3630 = vmatprep.subr.bf16.mxu0 0
        %3631 = vmatpush1.bf16.msra.mxu0 %v3562
        %3632 = vmatprep.subr.bf16.mxu0 0
        %3633 = vmatpush1.bf16.msra.mxu0 %v3561
        %3634 = vmatprep.subr.bf16.mxu0 0
        %3635 = vmatpush2.bf16.msra.mxu0 0
        %3636 = vmatprep.subr.bf16.mxu0 0
        %3637 = vmatpush2.bf16.msra.mxu0 0
        %3638 = vmatprep.subr.bf16.mxu0 0
        %3639 = vmatpush2.bf16.msra.mxu0 0
        %3640 = vmatprep.subr.bf16.mxu0 0
        %3641 = vmatpush2.bf16.msra.mxu0 0
        %3642 = vmatprep.subr.bf16.mxu0 0
        %3643 = vmatpush2.bf16.msra.mxu0 0
        %3644 = vmatprep.subr.bf16.mxu0 0
        %3645 = vmatpush2.bf16.msra.mxu0 0
        %3646 = vmatprep.subr.bf16.mxu0 0
        %3647 = vmatpush2.bf16.msra.mxu0 0
        %3648 = vmatprep.subr.bf16.mxu0 0
        %3649 = vmatpush2.bf16.msra.mxu0 0
        %3650 = vmatprep.mubr.bf16.mxu0 0
        %3651 = vmatmul.mubr.bf16.gmra.mxu0 %v3568
        %v3652 = vpop.f32.mrf.mxu0
        %v3653 = vadd.f32 %v3549, %v3652
        %v3654 = vpop.f32.mrf.mxu0
        %v3655 = vpop.f32.mrf.mxu0
        %v3656 = vadd.f32 %v3549, %v3655
        %v3657 = vpop.f32.mrf.mxu0
        %3658 = vmatprep.mubr.bf16.mxu0 0
        %3659 = vmatmul.mubr.bf16.gmra.mxu0 %v3571
        %v3660 = vpop.f32.mrf.mxu0
        %v3661 = vadd.f32 %v3549, %v3660
        %v3662 = vpop.f32.mrf.mxu0
        %v3663 = vpop.f32.mrf.mxu0
        %v3664 = vadd.f32 %v3549, %v3663
        %v3665 = vpop.f32.mrf.mxu0
        %3666 = vmatprep.mubr.bf16.mxu0 0
        %3667 = vmatmul.mubr.bf16.gmra.mxu0 %v3574
        %v3668 = vpop.f32.mrf.mxu0
        %v3669 = vadd.f32 %v3549, %v3668
        %v3670 = vpop.f32.mrf.mxu0
        %v3671 = vpop.f32.mrf.mxu0
        %v3672 = vadd.f32 %v3549, %v3671
        %v3673 = vpop.f32.mrf.mxu0
        %3674 = vmatprep.mubr.bf16.mxu0 0
        %3675 = vmatmul.mubr.bf16.gmra.mxu0 %v3577
        %v3676 = vpop.f32.mrf.mxu0
        %v3677 = vadd.f32 %v3549, %v3676
        %v3678 = vpop.f32.mrf.mxu0
        %v3679 = vpop.f32.mrf.mxu0
        %v3680 = vadd.f32 %v3549, %v3679
        %v3681 = vpop.f32.mrf.mxu0
        %3682 = vmatprep.mubr.bf16.mxu0 0
        %3683 = vmatmul.mubr.bf16.gmra.mxu0 %v3580
        %v3684 = vpop.f32.mrf.mxu0
        %v3685 = vadd.f32 %v3549, %v3684
        %v3686 = vpop.f32.mrf.mxu0
        %v3687 = vpop.f32.mrf.mxu0
        %v3688 = vadd.f32 %v3549, %v3687
        %v3689 = vpop.f32.mrf.mxu0
        %3690 = vmatprep.mubr.bf16.mxu0 0
        %3691 = vmatmul.mubr.bf16.gmra.mxu0 %v3583
        %v3692 = vpop.f32.mrf.mxu0
        %v3693 = vadd.f32 %v3549, %v3692
        %v3694 = vpop.f32.mrf.mxu0
        %v3695 = vpop.f32.mrf.mxu0
        %v3696 = vadd.f32 %v3549, %v3695
        %v3697 = vpop.f32.mrf.mxu0
        %3698 = vmatprep.mubr.bf16.mxu0 0
        %3699 = vmatmul.mubr.bf16.gmra.mxu0 %v3586
        %v3700 = vpop.f32.mrf.mxu0
        %v3701 = vadd.f32 %v3549, %v3700
        %v3702 = vpop.f32.mrf.mxu0
        %v3703 = vpop.f32.mrf.mxu0
        %v3704 = vadd.f32 %v3549, %v3703
        %v3705 = vpop.f32.mrf.mxu0
        %3706 = vmatprep.mubr.bf16.mxu0 0
        %3707 = vmatmul.mubr.bf16.gmra.mxu0 %v3589
        %v3708 = vpop.f32.mrf.mxu0
        %v3709 = vadd.f32 %v3549, %v3708
        %v3710 = vpop.f32.mrf.mxu0
        %v3711 = vpop.f32.mrf.mxu0
        %v3712 = vadd.f32 %v3549, %v3711
        %v3713 = vpop.f32.mrf.mxu0
        %3714 = vmatprep.mubr.bf16.mxu0 0
        %3715 = vmatmul.mubr.bf16.gmra.mxu0 %v3592
        %v3716 = vpop.f32.mrf.mxu0
        %v3717 = vadd.f32 %v3549, %v3716
        %v3718 = vpop.f32.mrf.mxu0
        %v3719 = vpop.f32.mrf.mxu0
        %v3720 = vadd.f32 %v3549, %v3719
        %v3721 = vpop.f32.mrf.mxu0
        %3722 = vmatprep.mubr.bf16.mxu0 0
        %3723 = vmatmul.mubr.bf16.gmra.mxu0 %v3595
        %v3724 = vpop.f32.mrf.mxu0
        %v3725 = vadd.f32 %v3549, %v3724
        %v3726 = vpop.f32.mrf.mxu0
        %v3727 = vpop.f32.mrf.mxu0
        %v3728 = vadd.f32 %v3549, %v3727
        %v3729 = vpop.f32.mrf.mxu0
        %3730 = vmatprep.mubr.bf16.mxu0 0
        %3731 = vmatmul.mubr.bf16.gmra.mxu0 %v3598
        %v3732 = vpop.f32.mrf.mxu0
        %v3733 = vadd.f32 %v3549, %v3732
        %v3734 = vpop.f32.mrf.mxu0
        %v3735 = vpop.f32.mrf.mxu0
        %v3736 = vadd.f32 %v3549, %v3735
        %v3737 = vpop.f32.mrf.mxu0
        %3738 = vmatprep.mubr.bf16.mxu0 0
        %3739 = vmatmul.mubr.bf16.gmra.mxu0 %v3601
        %v3740 = vpop.f32.mrf.mxu0
        %v3741 = vadd.f32 %v3549, %v3740
        %v3742 = vpop.f32.mrf.mxu0
        %v3743 = vpop.f32.mrf.mxu0
        %v3744 = vadd.f32 %v3549, %v3743
        %v3745 = vpop.f32.mrf.mxu0
        %3746 = vmatprep.mubr.bf16.mxu0 0
        %3747 = vmatmul.mubr.bf16.gmra.mxu0 %v3604
        %v3748 = vpop.f32.mrf.mxu0
        %v3749 = vadd.f32 %v3549, %v3748
        %v3750 = vpop.f32.mrf.mxu0
        %v3751 = vpop.f32.mrf.mxu0
        %v3752 = vadd.f32 %v3549, %v3751
        %v3753 = vpop.f32.mrf.mxu0
        %3754 = vmatprep.mubr.bf16.mxu0 0
        %3755 = vmatmul.mubr.bf16.gmra.mxu0 %v3607
        %v3756 = vpop.f32.mrf.mxu0
        %v3757 = vadd.f32 %v3549, %v3756
        %v3758 = vpop.f32.mrf.mxu0
        %v3759 = vpop.f32.mrf.mxu0
        %v3760 = vadd.f32 %v3549, %v3759
        %v3761 = vpop.f32.mrf.mxu0
        %3762 = vmatprep.mubr.bf16.mxu0 0
        %3763 = vmatmul.mubr.bf16.gmra.mxu0 %v3610
        %v3764 = vpop.f32.mrf.mxu0
        %v3765 = vadd.f32 %v3549, %v3764
        %v3766 = vpop.f32.mrf.mxu0
        %v3767 = vpop.f32.mrf.mxu0
        %v3768 = vadd.f32 %v3549, %v3767
        %v3769 = vpop.f32.mrf.mxu0
        %3770 = vmatprep.mubr.bf16.mxu0 0
        %3771 = vmatmul.mubr.bf16.gmra.mxu0 %v3613
        %v3772 = vpop.f32.mrf.mxu0
        %v3773 = vadd.f32 %v3549, %v3772
        %v3774 = vpop.f32.mrf.mxu0
        %v3775 = vpop.f32.mrf.mxu0
        %v3776 = vadd.f32 %v3549, %v3775
        %v3777 = vpop.f32.mrf.mxu0
        %3778 = vdwg.mxu0
        %vm3779 = vcmp.ge.f32.partialorder %v3653, 0.0
        %vm3780 = vcmp.ge.f32.partialorder %v3656, 0.0
        %vm3781 = vcmp.ge.f32.partialorder %v3661, 0.0
        %vm3782 = vcmp.ge.f32.partialorder %v3664, 0.0
        %vm3783 = vcmp.ge.f32.partialorder %v3669, 0.0
        %vm3784 = vcmp.ge.f32.partialorder %v3672, 0.0
        %vm3785 = vcmp.ge.f32.partialorder %v3677, 0.0
        %vm3786 = vcmp.ge.f32.partialorder %v3680, 0.0
        %vm3787 = vcmp.ge.f32.partialorder %v3685, 0.0
        %vm3788 = vcmp.ge.f32.partialorder %v3688, 0.0
        %vm3789 = vcmp.ge.f32.partialorder %v3693, 0.0
        %vm3790 = vcmp.ge.f32.partialorder %v3696, 0.0
        %vm3791 = vcmp.ge.f32.partialorder %v3701, 0.0
        %vm3792 = vcmp.ge.f32.partialorder %v3704, 0.0
        %vm3793 = vcmp.ge.f32.partialorder %v3709, 0.0
        %vm3794 = vcmp.ge.f32.partialorder %v3712, 0.0
        %vm3795 = vcmp.ge.f32.partialorder %v3717, 0.0
        %vm3796 = vcmp.ge.f32.partialorder %v3720, 0.0
        %vm3797 = vcmp.ge.f32.partialorder %v3725, 0.0
        %vm3798 = vcmp.ge.f32.partialorder %v3728, 0.0
        %vm3799 = vcmp.ge.f32.partialorder %v3733, 0.0
        %vm3800 = vcmp.ge.f32.partialorder %v3736, 0.0
        %vm3801 = vcmp.ge.f32.partialorder %v3741, 0.0
        %vm3802 = vcmp.ge.f32.partialorder %v3744, 0.0
        %vm3803 = vcmp.ge.f32.partialorder %v3749, 0.0
        %vm3804 = vcmp.ge.f32.partialorder %v3752, 0.0
        %vm3805 = vcmp.ge.f32.partialorder %v3757, 0.0
        %vm3806 = vcmp.ge.f32.partialorder %v3760, 0.0
        %vm3807 = vcmp.ge.f32.partialorder %v3765, 0.0
        %vm3808 = vcmp.ge.f32.partialorder %v3768, 0.0
        %vm3809 = vcmp.ge.f32.partialorder %v3773, 0.0
        %vm3810 = vcmp.ge.f32.partialorder %v3776, 0.0
        %v3811 = vmul.f32 %v3653, 0.2
        %v3812 = vmul.f32 %v3656, 0.2
        %v3813 = vmul.f32 %v3661, 0.2
        %v3814 = vmul.f32 %v3664, 0.2
        %v3815 = vmul.f32 %v3669, 0.2
        %v3816 = vmul.f32 %v3672, 0.2
        %v3817 = vmul.f32 %v3677, 0.2
        %v3818 = vmul.f32 %v3680, 0.2
        %v3819 = vmul.f32 %v3685, 0.2
        %v3820 = vmul.f32 %v3688, 0.2
        %v3821 = vmul.f32 %v3693, 0.2
        %v3822 = vmul.f32 %v3696, 0.2
        %v3823 = vmul.f32 %v3701, 0.2
        %v3824 = vmul.f32 %v3704, 0.2
        %v3825 = vmul.f32 %v3709, 0.2
        %v3826 = vmul.f32 %v3712, 0.2
        %v3827 = vmul.f32 %v3717, 0.2
        %v3828 = vmul.f32 %v3720, 0.2
        %v3829 = vmul.f32 %v3725, 0.2
        %v3830 = vmul.f32 %v3728, 0.2
        %v3831 = vmul.f32 %v3733, 0.2
        %v3832 = vmul.f32 %v3736, 0.2
        %v3833 = vmul.f32 %v3741, 0.2
        %v3834 = vmul.f32 %v3744, 0.2
        %v3835 = vmul.f32 %v3749, 0.2
        %v3836 = vmul.f32 %v3752, 0.2
        %v3837 = vmul.f32 %v3757, 0.2
        %v3838 = vmul.f32 %v3760, 0.2
        %v3839 = vmul.f32 %v3765, 0.2
        %v3840 = vmul.f32 %v3768, 0.2
        %v3841 = vmul.f32 %v3773, 0.2
        %v3842 = vmul.f32 %v3776, 0.2
        %v3843 = vsel %vm3779, %v3653, %v3811
        %v3844 = vsel %vm3780, %v3656, %v3812
        %v3845 = vsel %vm3781, %v3661, %v3813
        %v3846 = vsel %vm3782, %v3664, %v3814
        %v3847 = vsel %vm3783, %v3669, %v3815
        %v3848 = vsel %vm3784, %v3672, %v3816
        %v3849 = vsel %vm3785, %v3677, %v3817
        %v3850 = vsel %vm3786, %v3680, %v3818
        %v3851 = vsel %vm3787, %v3685, %v3819
        %v3852 = vsel %vm3788, %v3688, %v3820
        %v3853 = vsel %vm3789, %v3693, %v3821
        %v3854 = vsel %vm3790, %v3696, %v3822
        %v3855 = vsel %vm3791, %v3701, %v3823
        %v3856 = vsel %vm3792, %v3704, %v3824
        %v3857 = vsel %vm3793, %v3709, %v3825
        %v3858 = vsel %vm3794, %v3712, %v3826
        %v3859 = vsel %vm3795, %v3717, %v3827
        %v3860 = vsel %vm3796, %v3720, %v3828
        %v3861 = vsel %vm3797, %v3725, %v3829
        %v3862 = vsel %vm3798, %v3728, %v3830
        %v3863 = vsel %vm3799, %v3733, %v3831
        %v3864 = vsel %vm3800, %v3736, %v3832
        %v3865 = vsel %vm3801, %v3741, %v3833
        %v3866 = vsel %vm3802, %v3744, %v3834
        %v3867 = vsel %vm3803, %v3749, %v3835
        %v3868 = vsel %vm3804, %v3752, %v3836
        %v3869 = vsel %vm3805, %v3757, %v3837
        %v3870 = vsel %vm3806, %v3760, %v3838
        %v3871 = vsel %vm3807, %v3765, %v3839
        %v3872 = vsel %vm3808, %v3768, %v3840
        %v3873 = vsel %vm3809, %v3773, %v3841
        %v3874 = vsel %vm3810, %v3776, %v3842
        %v3875 = vsel %vm2875, %v3843, 0.0
        %v3876 = vsel %vm2875, %v3844, 0.0
        %v3877 = vadd.f32 %v3875, %v3876
        %v3878 = vsel %vm2875, %v3845, 0.0
        %v3879 = vadd.f32 %v3877, %v3878
        %v3880 = vsel %vm2875, %v3846, 0.0
        %v3881 = vadd.f32 %v3879, %v3880
        %v3882 = vsel %vm2875, %v3847, 0.0
        %v3883 = vadd.f32 %v3881, %v3882
        %v3884 = vsel %vm2875, %v3848, 0.0
        %v3885 = vadd.f32 %v3883, %v3884
        %v3886 = vsel %vm2875, %v3849, 0.0
        %v3887 = vadd.f32 %v3885, %v3886
        %v3888 = vsel %vm2875, %v3850, 0.0
        %v3889 = vadd.f32 %v3887, %v3888
        %v3890 = vsel %vm2875, %v3851, 0.0
        %v3891 = vadd.f32 %v3889, %v3890
        %v3892 = vsel %vm2875, %v3852, 0.0
        %v3893 = vadd.f32 %v3891, %v3892
        %v3894 = vsel %vm2875, %v3853, 0.0
        %v3895 = vadd.f32 %v3893, %v3894
        %v3896 = vsel %vm2875, %v3854, 0.0
        %v3897 = vadd.f32 %v3895, %v3896
        %v3898 = vsel %vm2875, %v3855, 0.0
        %v3899 = vadd.f32 %v3897, %v3898
        %v3900 = vsel %vm2875, %v3856, 0.0
        %v3901 = vadd.f32 %v3899, %v3900
        %v3902 = vsel %vm2875, %v3857, 0.0
        %v3903 = vadd.f32 %v3901, %v3902
        %v3904 = vsel %vm2875, %v3858, 0.0
        %v3905 = vadd.f32 %v3903, %v3904
        %v3906 = vsel %vm2875, %v3859, 0.0
        %v3907 = vadd.f32 %v3905, %v3906
        %v3908 = vsel %vm2875, %v3860, 0.0
        %v3909 = vadd.f32 %v3907, %v3908
        %v3910 = vsel %vm2875, %v3861, 0.0
        %v3911 = vadd.f32 %v3909, %v3910
        %v3912 = vsel %vm2875, %v3862, 0.0
        %v3913 = vadd.f32 %v3911, %v3912
        %v3914 = vsel %vm2875, %v3863, 0.0
        %v3915 = vadd.f32 %v3913, %v3914
        %v3916 = vsel %vm2875, %v3864, 0.0
        %v3917 = vadd.f32 %v3915, %v3916
        %v3918 = vsel %vm2875, %v3865, 0.0
        %v3919 = vadd.f32 %v3917, %v3918
        %v3920 = vsel %vm2875, %v3866, 0.0
        %v3921 = vadd.f32 %v3919, %v3920
        %v3922 = vsel %vm2875, %v3867, 0.0
        %v3923 = vadd.f32 %v3921, %v3922
        %v3924 = vsel %vm2875, %v3868, 0.0
        %v3925 = vadd.f32 %v3923, %v3924
        %v3926 = vsel %vm2875, %v3869, 0.0
        %v3927 = vadd.f32 %v3925, %v3926
        %v3928 = vsel %vm2875, %v3870, 0.0
        %v3929 = vadd.f32 %v3927, %v3928
        %v3930 = vsel %vm2875, %v3871, 0.0
        %v3931 = vadd.f32 %v3929, %v3930
        %v3932 = vsel %vm2875, %v3872, 0.0
        %v3933 = vadd.f32 %v3931, %v3932
        %v3934 = vsel %vm2875, %v3873, 0.0
        %v3935 = vadd.f32 %v3933, %v3934
        %v3936 = vsel %vm2875, %v3874, 0.0
        %v3937 = vadd.f32 %v3935, %v3936
        %v3938 = vrot.slane %v3937, 4
        %v3939 = vadd.f32 %v3937, %v3938
        %v3940 = vrot.slane %v3939, 2
        %v3941 = vadd.f32 %v3939, %v3940
        %v3942 = vrot.slane %v3941, 1
        %v3943 = vadd.f32 %v3941, %v3942
        %v3944 = vrcp.pop 256.0
        %v3945 = vmul.f32 %v3943, %v3944
        %v3946 = vsub.f32 %v3843, %v3945
        %v3947 = vsub.f32 %v3844, %v3945
        %v3948 = vsub.f32 %v3845, %v3945
        %v3949 = vsub.f32 %v3846, %v3945
        %v3950 = vsub.f32 %v3847, %v3945
        %v3951 = vsub.f32 %v3848, %v3945
        %v3952 = vsub.f32 %v3849, %v3945
        %v3953 = vsub.f32 %v3850, %v3945
        %v3954 = vsub.f32 %v3851, %v3945
        %v3955 = vsub.f32 %v3852, %v3945
        %v3956 = vsub.f32 %v3853, %v3945
        %v3957 = vsub.f32 %v3854, %v3945
        %v3958 = vsub.f32 %v3855, %v3945
        %v3959 = vsub.f32 %v3856, %v3945
        %v3960 = vsub.f32 %v3857, %v3945
        %v3961 = vsub.f32 %v3858, %v3945
        %v3962 = vsub.f32 %v3859, %v3945
        %v3963 = vsub.f32 %v3860, %v3945
        %v3964 = vsub.f32 %v3861, %v3945
        %v3965 = vsub.f32 %v3862, %v3945
        %v3966 = vsub.f32 %v3863, %v3945
        %v3967 = vsub.f32 %v3864, %v3945
        %v3968 = vsub.f32 %v3865, %v3945
        %v3969 = vsub.f32 %v3866, %v3945
        %v3970 = vsub.f32 %v3867, %v3945
        %v3971 = vsub.f32 %v3868, %v3945
        %v3972 = vsub.f32 %v3869, %v3945
        %v3973 = vsub.f32 %v3870, %v3945
        %v3974 = vsub.f32 %v3871, %v3945
        %v3975 = vsub.f32 %v3872, %v3945
        %v3976 = vsub.f32 %v3873, %v3945
        %v3977 = vsub.f32 %v3874, %v3945
        %v3978 = vmul.f32 %v3946, %v3946
        %v3979 = vmul.f32 %v3947, %v3947
        %v3980 = vmul.f32 %v3948, %v3948
        %v3981 = vmul.f32 %v3949, %v3949
        %v3982 = vmul.f32 %v3950, %v3950
        %v3983 = vmul.f32 %v3951, %v3951
        %v3984 = vmul.f32 %v3952, %v3952
        %v3985 = vmul.f32 %v3953, %v3953
        %v3986 = vmul.f32 %v3954, %v3954
        %v3987 = vmul.f32 %v3955, %v3955
        %v3988 = vmul.f32 %v3956, %v3956
        %v3989 = vmul.f32 %v3957, %v3957
        %v3990 = vmul.f32 %v3958, %v3958
        %v3991 = vmul.f32 %v3959, %v3959
        %v3992 = vmul.f32 %v3960, %v3960
        %v3993 = vmul.f32 %v3961, %v3961
        %v3994 = vmul.f32 %v3962, %v3962
        %v3995 = vmul.f32 %v3963, %v3963
        %v3996 = vmul.f32 %v3964, %v3964
        %v3997 = vmul.f32 %v3965, %v3965
        %v3998 = vmul.f32 %v3966, %v3966
        %v3999 = vmul.f32 %v3967, %v3967
        %v4000 = vmul.f32 %v3968, %v3968
        %v4001 = vmul.f32 %v3969, %v3969
        %v4002 = vmul.f32 %v3970, %v3970
        %v4003 = vmul.f32 %v3971, %v3971
        %v4004 = vmul.f32 %v3972, %v3972
        %v4005 = vmul.f32 %v3973, %v3973
        %v4006 = vmul.f32 %v3974, %v3974
        %v4007 = vmul.f32 %v3975, %v3975
        %v4008 = vmul.f32 %v3976, %v3976
        %v4009 = vmul.f32 %v3977, %v3977
        %v4010 = vsel %vm2875, %v3978, 0.0
        %v4011 = vsel %vm2875, %v3979, 0.0
        %v4012 = vadd.f32 %v4010, %v4011
        %v4013 = vsel %vm2875, %v3980, 0.0
        %v4014 = vadd.f32 %v4012, %v4013
        %v4015 = vsel %vm2875, %v3981, 0.0
        %v4016 = vadd.f32 %v4014, %v4015
        %v4017 = vsel %vm2875, %v3982, 0.0
        %v4018 = vadd.f32 %v4016, %v4017
        %v4019 = vsel %vm2875, %v3983, 0.0
        %v4020 = vadd.f32 %v4018, %v4019
        %v4021 = vsel %vm2875, %v3984, 0.0
        %v4022 = vadd.f32 %v4020, %v4021
        %v4023 = vsel %vm2875, %v3985, 0.0
        %v4024 = vadd.f32 %v4022, %v4023
        %v4025 = vsel %vm2875, %v3986, 0.0
        %v4026 = vadd.f32 %v4024, %v4025
        %v4027 = vsel %vm2875, %v3987, 0.0
        %v4028 = vadd.f32 %v4026, %v4027
        %v4029 = vsel %vm2875, %v3988, 0.0
        %v4030 = vadd.f32 %v4028, %v4029
        %v4031 = vsel %vm2875, %v3989, 0.0
        %v4032 = vadd.f32 %v4030, %v4031
        %v4033 = vsel %vm2875, %v3990, 0.0
        %v4034 = vadd.f32 %v4032, %v4033
        %v4035 = vsel %vm2875, %v3991, 0.0
        %v4036 = vadd.f32 %v4034, %v4035
        %v4037 = vsel %vm2875, %v3992, 0.0
        %v4038 = vadd.f32 %v4036, %v4037
        %v4039 = vsel %vm2875, %v3993, 0.0
        %v4040 = vadd.f32 %v4038, %v4039
        %v4041 = vsel %vm2875, %v3994, 0.0
        %v4042 = vadd.f32 %v4040, %v4041
        %v4043 = vsel %vm2875, %v3995, 0.0
        %v4044 = vadd.f32 %v4042, %v4043
        %v4045 = vsel %vm2875, %v3996, 0.0
        %v4046 = vadd.f32 %v4044, %v4045
        %v4047 = vsel %vm2875, %v3997, 0.0
        %v4048 = vadd.f32 %v4046, %v4047
        %v4049 = vsel %vm2875, %v3998, 0.0
        %v4050 = vadd.f32 %v4048, %v4049
        %v4051 = vsel %vm2875, %v3999, 0.0
        %v4052 = vadd.f32 %v4050, %v4051
        %v4053 = vsel %vm2875, %v4000, 0.0
        %v4054 = vadd.f32 %v4052, %v4053
        %v4055 = vsel %vm2875, %v4001, 0.0
        %v4056 = vadd.f32 %v4054, %v4055
        %v4057 = vsel %vm2875, %v4002, 0.0
        %v4058 = vadd.f32 %v4056, %v4057
        %v4059 = vsel %vm2875, %v4003, 0.0
        %v4060 = vadd.f32 %v4058, %v4059
        %v4061 = vsel %vm2875, %v4004, 0.0
        %v4062 = vadd.f32 %v4060, %v4061
        %v4063 = vsel %vm2875, %v4005, 0.0
        %v4064 = vadd.f32 %v4062, %v4063
        %v4065 = vsel %vm2875, %v4006, 0.0
        %v4066 = vadd.f32 %v4064, %v4065
        %v4067 = vsel %vm2875, %v4007, 0.0
        %v4068 = vadd.f32 %v4066, %v4067
        %v4069 = vsel %vm2875, %v4008, 0.0
        %v4070 = vadd.f32 %v4068, %v4069
        %v4071 = vsel %vm2875, %v4009, 0.0
        %v4072 = vadd.f32 %v4070, %v4071
        %v4073 = vrot.slane %v4072, 4
        %v4074 = vadd.f32 %v4072, %v4073
        %v4075 = vrot.slane %v4074, 2
        %v4076 = vadd.f32 %v4074, %v4075
        %v4077 = vrot.slane %v4076, 1
        %v4078 = vadd.f32 %v4076, %v4077
        %v4079 = vmul.f32 %v4078, %v3944
        %v4080 = vadd.f32 %v4079, 1e-08
        %v4081 = vrsqrt.pop %v4080
        %v4082 = vmul.f32 %v4080, %v4081
        %vm4083 = vcmp.eq.f32.partialorder %v4080, inf
        %v4084 = vsel %vm4083, %v4080, %v4082
        %vm4085 = vcmp.eq.f32.partialorder %v4080, 0.0
        %v4086 = vand.u32 %v4080, 2147483648
        %v4087 = vsel %vm4085, %v4086, %v4084
        %v4088 = vrcp.pop %v4087
        %v4089 = vmul.f32 %v3946, %v4088
        %v4090 = vmul.f32 %v3947, %v4088
        %v4091 = vmul.f32 %v3948, %v4088
        %v4092 = vmul.f32 %v3949, %v4088
        %v4093 = vmul.f32 %v3950, %v4088
        %v4094 = vmul.f32 %v3951, %v4088
        %v4095 = vmul.f32 %v3952, %v4088
        %v4096 = vmul.f32 %v3953, %v4088
        %v4097 = vmul.f32 %v3954, %v4088
        %v4098 = vmul.f32 %v3955, %v4088
        %v4099 = vmul.f32 %v3956, %v4088
        %v4100 = vmul.f32 %v3957, %v4088
        %v4101 = vmul.f32 %v3958, %v4088
        %v4102 = vmul.f32 %v3959, %v4088
        %v4103 = vmul.f32 %v3960, %v4088
        %v4104 = vmul.f32 %v3961, %v4088
        %v4105 = vmul.f32 %v3962, %v4088
        %v4106 = vmul.f32 %v3963, %v4088
        %v4107 = vmul.f32 %v3964, %v4088
        %v4108 = vmul.f32 %v3965, %v4088
        %v4109 = vmul.f32 %v3966, %v4088
        %v4110 = vmul.f32 %v3967, %v4088
        %v4111 = vmul.f32 %v3968, %v4088
        %v4112 = vmul.f32 %v3969, %v4088
        %v4113 = vmul.f32 %v3970, %v4088
        %v4114 = vmul.f32 %v3971, %v4088
        %v4115 = vmul.f32 %v3972, %v4088
        %v4116 = vmul.f32 %v3973, %v4088
        %v4117 = vmul.f32 %v3974, %v4088
        %v4118 = vmul.f32 %v3975, %v4088
        %v4119 = vmul.f32 %v3976, %v4088
        %v4120 = vmul.f32 %v3977, %v4088
        %v4121 = vld [vmem:[%s7] sm:$0xff]
        %v4122 = vld [vmem:[%s8] sm:$0xff]
        %v4124 = vsel %vm2875, %v4087, 0
        %4126 = vmatprep.subr.mxu0 0.0
        %4127 = vmatpush1.msra.mxu0 0.0
        %4128 = vmatprep.subr.mxu0 0.0
        %4129 = vmatpush1.msra.mxu0 0.0
        %4130 = vmatprep.subr.mxu0 0.0
        %4131 = vmatpush1.msra.mxu0 0.0
        %4132 = vmatprep.subr.mxu0 0.0
        %4133 = vmatpush1.msra.mxu0 0.0
        %4134 = vmatprep.subr.mxu0 0.0
        %4135 = vmatpush1.msra.mxu0 0.0
        %4136 = vmatprep.subr.mxu0 0.0
        %4137 = vmatpush1.msra.mxu0 0.0
        %4138 = vmatprep.subr.mxu0 0.0
        %4139 = vmatpush1.msra.mxu0 0.0
        %4140 = vmatprep.subr.mxu0 0.0
        %4141 = vmatpush1.msra.mxu0 0.0
        %4142 = vmatprep.subr.mxu0 0.0
        %4143 = vmatpush1.msra.mxu0 0.0
        %4144 = vmatprep.subr.mxu0 0.0
        %4145 = vmatpush1.msra.mxu0 0.0
        %4146 = vmatprep.subr.mxu0 0.0
        %4147 = vmatpush1.msra.mxu0 0.0
        %4148 = vmatprep.subr.mxu0 0.0
        %4149 = vmatpush1.msra.mxu0 0.0
        %4150 = vmatprep.subr.mxu0 0.0
        %4151 = vmatpush1.msra.mxu0 0.0
        %4152 = vmatprep.subr.mxu0 0.0
        %4153 = vmatpush1.msra.mxu0 0.0
        %4154 = vmatprep.subr.mxu0 0.0
        %4155 = vmatpush1.msra.mxu0 0.0
        %4156 = vmatprep.subr.mxu0 0.0
        %4157 = vmatpush1.msra.mxu0 %v4122
        %4158 = vmatprep.subr.mxu0 0.0
        %4159 = vmatpush2.msra.mxu0 0.0
        %4160 = vmatprep.subr.mxu0 0.0
        %4161 = vmatpush2.msra.mxu0 0.0
        %4162 = vmatprep.subr.mxu0 0.0
        %4163 = vmatpush2.msra.mxu0 0.0
        %4164 = vmatprep.subr.mxu0 0.0
        %4165 = vmatpush2.msra.mxu0 0.0
        %4166 = vmatprep.subr.mxu0 0.0
        %4167 = vmatpush2.msra.mxu0 0.0
        %4168 = vmatprep.subr.mxu0 0.0
        %4169 = vmatpush2.msra.mxu0 0.0
        %4170 = vmatprep.subr.mxu0 0.0
        %4171 = vmatpush2.msra.mxu0 0.0
        %4172 = vmatprep.subr.mxu0 0.0
        %4173 = vmatpush2.msra.mxu0 0.0
        %4174 = vmatprep.subr.mxu0 0.0
        %4175 = vmatpush2.msra.mxu0 0.0
        %4176 = vmatprep.subr.mxu0 0.0
        %4177 = vmatpush2.msra.mxu0 0.0
        %4178 = vmatprep.subr.mxu0 0.0
        %4179 = vmatpush2.msra.mxu0 0.0
        %4180 = vmatprep.subr.mxu0 0.0
        %4181 = vmatpush2.msra.mxu0 0.0
        %4182 = vmatprep.subr.mxu0 0.0
        %4183 = vmatpush2.msra.mxu0 0.0
        %4184 = vmatprep.subr.mxu0 0.0
        %4185 = vmatpush2.msra.mxu0 0.0
        %4186 = vmatprep.subr.mxu0 0.0
        %4187 = vmatpush2.msra.mxu0 0.0
        %4188 = vmatprep.subr.mxu0 0.0
        %4189 = vmatpush2.msra.mxu0 0.0
        %4190 = vmatprep.mubr.f32.mxu0 0.0
        %4191 = vmatmul.mubr.f32.gmra.mxu0 %v4124
        %v4192 = vpop.f32.mrf.mxu0
        %v4193 = vadd.f32 0.0, %v4192
        %v4194 = vpop.f32.mrf.mxu0
        %4195 = vdwg.mxu0
        %v4197 = vsel %vm2875, %v3945, 0
        %4199 = vmatprep.subr.mxu0 0.0
        %4200 = vmatpush1.msra.mxu0 0.0
        %4201 = vmatprep.subr.mxu0 0.0
        %4202 = vmatpush1.msra.mxu0 0.0
        %4203 = vmatprep.subr.mxu0 0.0
        %4204 = vmatpush1.msra.mxu0 0.0
        %4205 = vmatprep.subr.mxu0 0.0
        %4206 = vmatpush1.msra.mxu0 0.0
        %4207 = vmatprep.subr.mxu0 0.0
        %4208 = vmatpush1.msra.mxu0 0.0
        %4209 = vmatprep.subr.mxu0 0.0
        %4210 = vmatpush1.msra.mxu0 0.0
        %4211 = vmatprep.subr.mxu0 0.0
        %4212 = vmatpush1.msra.mxu0 0.0
        %4213 = vmatprep.subr.mxu0 0.0
        %4214 = vmatpush1.msra.mxu0 0.0
        %4215 = vmatprep.subr.mxu0 0.0
        %4216 = vmatpush1.msra.mxu0 0.0
        %4217 = vmatprep.subr.mxu0 0.0
        %4218 = vmatpush1.msra.mxu0 0.0
        %4219 = vmatprep.subr.mxu0 0.0
        %4220 = vmatpush1.msra.mxu0 0.0
        %4221 = vmatprep.subr.mxu0 0.0
        %4222 = vmatpush1.msra.mxu0 0.0
        %4223 = vmatprep.subr.mxu0 0.0
        %4224 = vmatpush1.msra.mxu0 0.0
        %4225 = vmatprep.subr.mxu0 0.0
        %4226 = vmatpush1.msra.mxu0 0.0
        %4227 = vmatprep.subr.mxu0 0.0
        %4228 = vmatpush1.msra.mxu0 0.0
        %4229 = vmatprep.subr.mxu0 0.0
        %4230 = vmatpush1.msra.mxu0 %v4121
        %4231 = vmatprep.subr.mxu0 0.0
        %4232 = vmatpush2.msra.mxu0 0.0
        %4233 = vmatprep.subr.mxu0 0.0
        %4234 = vmatpush2.msra.mxu0 0.0
        %4235 = vmatprep.subr.mxu0 0.0
        %4236 = vmatpush2.msra.mxu0 0.0
        %4237 = vmatprep.subr.mxu0 0.0
        %4238 = vmatpush2.msra.mxu0 0.0
        %4239 = vmatprep.subr.mxu0 0.0
        %4240 = vmatpush2.msra.mxu0 0.0
        %4241 = vmatprep.subr.mxu0 0.0
        %4242 = vmatpush2.msra.mxu0 0.0
        %4243 = vmatprep.subr.mxu0 0.0
        %4244 = vmatpush2.msra.mxu0 0.0
        %4245 = vmatprep.subr.mxu0 0.0
        %4246 = vmatpush2.msra.mxu0 0.0
        %4247 = vmatprep.subr.mxu0 0.0
        %4248 = vmatpush2.msra.mxu0 0.0
        %4249 = vmatprep.subr.mxu0 0.0
        %4250 = vmatpush2.msra.mxu0 0.0
        %4251 = vmatprep.subr.mxu0 0.0
        %4252 = vmatpush2.msra.mxu0 0.0
        %4253 = vmatprep.subr.mxu0 0.0
        %4254 = vmatpush2.msra.mxu0 0.0
        %4255 = vmatprep.subr.mxu0 0.0
        %4256 = vmatpush2.msra.mxu0 0.0
        %4257 = vmatprep.subr.mxu0 0.0
        %4258 = vmatpush2.msra.mxu0 0.0
        %4259 = vmatprep.subr.mxu0 0.0
        %4260 = vmatpush2.msra.mxu0 0.0
        %4261 = vmatprep.subr.mxu0 0.0
        %4262 = vmatpush2.msra.mxu0 0.0
        %4263 = vmatprep.mubr.f32.mxu0 0.0
        %4264 = vmatmul.mubr.f32.gmra.mxu0 %v4197
        %v4265 = vpop.f32.mrf.mxu0
        %v4266 = vadd.f32 %v4193, %v4265
        %v4267 = vpop.f32.mrf.mxu0
        %4268 = vdwg.mxu0
        %v4269 = vld [vmem:[%s9] sm:$0x1]
        %v4270 = vadd.f32 %v4266, %v4269
        %vm4271 = vcmask 60416
        %4272 = vst.msk [vmem:[#allocation3] sm:$0xf] %vm4271, 0
        %4273 = vst.msk [vmem:[#allocation3 + $0x4] sm:$0xf] %vm4271, 0
        %4274 = vst.msk [vmem:[#allocation3 + $0x8] sm:$0xf] %vm4271, 0
        %4275 = vst.msk [vmem:[#allocation3 + $0xc] sm:$0xf] %vm4271, 0
        %4276 = vst.msk [vmem:[#allocation3 + $0x10] sm:$0xf] %vm4271, 0
        %4277 = vst.msk [vmem:[#allocation3 + $0x14] sm:$0xf] %vm4271, 0
        %4278 = vst.msk [vmem:[#allocation3 + $0x18] sm:$0xf] %vm4271, 0
        %4279 = vst.msk [vmem:[#allocation3 + $0x1c] sm:$0xf] %vm4271, 0
        %4280 = vst.msk [vmem:[#allocation3 + $0x20] sm:$0xf] %vm4271, 0
        %4281 = vst.msk [vmem:[#allocation3 + $0x24] sm:$0xf] %vm4271, 0
        %4282 = vst.msk [vmem:[#allocation3 + $0x28] sm:$0xf] %vm4271, 0
        %4283 = vst.msk [vmem:[#allocation3 + $0x2c] sm:$0xf] %vm4271, 0
        %4284 = vst.msk [vmem:[#allocation3 + $0x30] sm:$0xf] %vm4271, 0
        %4285 = vst.msk [vmem:[#allocation3 + $0x34] sm:$0xf] %vm4271, 0
        %4286 = vst.msk [vmem:[#allocation3 + $0x38] sm:$0xf] %vm4271, 0
        %4287 = vst.msk [vmem:[#allocation3 + $0x3c] sm:$0xf] %vm4271, 0
        %4288 = vst.msk [vmem:[#allocation3 + $0x40] sm:$0xf] %vm4271, 0
        %4289 = vst.msk [vmem:[#allocation3 + $0x44] sm:$0xf] %vm4271, 0
        %4290 = vst.msk [vmem:[#allocation3 + $0x48] sm:$0xf] %vm4271, 0
        %4291 = vst.msk [vmem:[#allocation3 + $0x4c] sm:$0xf] %vm4271, 0
        %4292 = vst.msk [vmem:[#allocation3 + $0x50] sm:$0xf] %vm4271, 0
        %4293 = vst.msk [vmem:[#allocation3 + $0x54] sm:$0xf] %vm4271, 0
        %4294 = vst.msk [vmem:[#allocation3 + $0x58] sm:$0xf] %vm4271, 0
        %4295 = vst.msk [vmem:[#allocation3 + $0x5c] sm:$0xf] %vm4271, 0
        %4296 = vst.msk [vmem:[#allocation3 + $0x60] sm:$0xf] %vm4271, 0
        %4297 = vst.msk [vmem:[#allocation3 + $0x64] sm:$0xf] %vm4271, 0
        %4298 = vst.msk [vmem:[#allocation3 + $0x68] sm:$0xf] %vm4271, 0
        %4299 = vst.msk [vmem:[#allocation3 + $0x6c] sm:$0xf] %vm4271, 0
        %4300 = vst.msk [vmem:[#allocation3 + $0x70] sm:$0xf] %vm4271, 0
        %4301 = vst.msk [vmem:[#allocation3 + $0x74] sm:$0xf] %vm4271, 0
        %4302 = vst.msk [vmem:[#allocation3 + $0x78] sm:$0xf] %vm4271, 0
        %4303 = vst.msk [vmem:[#allocation3 + $0x7c] sm:$0xf] %vm4271, 0
        %4304 = vst.msk [vmem:[#allocation3 + $0x80] sm:$0xf] %vm4271, 0
        %4305 = vst.msk [vmem:[#allocation3 + $0x84] sm:$0xf] %vm4271, 0
        %4306 = vst.msk [vmem:[#allocation3 + $0x88] sm:$0xf] %vm4271, 0
        %4307 = vst.msk [vmem:[#allocation3 + $0x8c] sm:$0xf] %vm4271, 0
        %4308 = vst.msk [vmem:[#allocation3 + $0x90] sm:$0xf] %vm4271, 0
        %4309 = vst.msk [vmem:[#allocation3 + $0x94] sm:$0xf] %vm4271, 0
        %4310 = vst.msk [vmem:[#allocation3 + $0x98] sm:$0xf] %vm4271, 0
        %4311 = vst.msk [vmem:[#allocation3 + $0x9c] sm:$0xf] %vm4271, 0
        %4312 = vst.msk [vmem:[#allocation3 + $0xa0] sm:$0xf] %vm4271, 0
        %4313 = vst.msk [vmem:[#allocation3 + $0xa4] sm:$0xf] %vm4271, 0
        %4314 = vst.msk [vmem:[#allocation3 + $0xa8] sm:$0xf] %vm4271, 0
        %4315 = vst.msk [vmem:[#allocation3 + $0xac] sm:$0xf] %vm4271, 0
        %4316 = vst.msk [vmem:[#allocation3 + $0xb0] sm:$0xf] %vm4271, 0
        %4317 = vst.msk [vmem:[#allocation3 + $0xb4] sm:$0xf] %vm4271, 0
        %4318 = vst.msk [vmem:[#allocation3 + $0xb8] sm:$0xf] %vm4271, 0
        %4319 = vst.msk [vmem:[#allocation3 + $0xbc] sm:$0xf] %vm4271, 0
        %4320 = vst.msk [vmem:[#allocation3 + $0xc0] sm:$0xf] %vm4271, 0
        %4321 = vst.msk [vmem:[#allocation3 + $0xc4] sm:$0xf] %vm4271, 0
        %4322 = vst.msk [vmem:[#allocation3 + $0xc8] sm:$0xf] %vm4271, 0
        %4323 = vst.msk [vmem:[#allocation3 + $0xcc] sm:$0xf] %vm4271, 0
        %4324 = vst.msk [vmem:[#allocation3 + $0xd0] sm:$0xf] %vm4271, 0
        %4325 = vst.msk [vmem:[#allocation3 + $0xd4] sm:$0xf] %vm4271, 0
        %4326 = vst.msk [vmem:[#allocation3 + $0xd8] sm:$0xf] %vm4271, 0
        %4327 = vst.msk [vmem:[#allocation3 + $0xdc] sm:$0xf] %vm4271, 0
        %4328 = vst.msk [vmem:[#allocation3 + $0xe0] sm:$0xf] %vm4271, 0
        %4329 = vst.msk [vmem:[#allocation3 + $0xe4] sm:$0xf] %vm4271, 0
        %4330 = vst.msk [vmem:[#allocation3 + $0xe8] sm:$0xf] %vm4271, 0
        %4331 = vst.msk [vmem:[#allocation3 + $0xec] sm:$0xf] %vm4271, 0
        %4332 = vst.msk [vmem:[#allocation3 + $0xf0] sm:$0xf] %vm4271, 0
        %4333 = vst.msk [vmem:[#allocation3 + $0xf4] sm:$0xf] %vm4271, 0
        %4334 = vst.msk [vmem:[#allocation3 + $0xf8] sm:$0xf] %vm4271, 0
        %4335 = vst.msk [vmem:[#allocation3 + $0xfc] sm:$0xf] %vm4271, 0
        %4336 = vst.msk [vmem:[#allocation3 + $0x100] sm:$0xf] %vm4271, 0
        %4337 = vst.msk [vmem:[#allocation3 + $0x104] sm:$0xf] %vm4271, 0
        %4338 = vst.msk [vmem:[#allocation3 + $0x108] sm:$0xf] %vm4271, 0
        %4339 = vst.msk [vmem:[#allocation3 + $0x10c] sm:$0xf] %vm4271, 0
        %4340 = vst.msk [vmem:[#allocation3 + $0x110] sm:$0xf] %vm4271, 0
        %4341 = vst.msk [vmem:[#allocation3 + $0x114] sm:$0xf] %vm4271, 0
        %4342 = vst.msk [vmem:[#allocation3 + $0x118] sm:$0xf] %vm4271, 0
        %4343 = vst.msk [vmem:[#allocation3 + $0x11c] sm:$0xf] %vm4271, 0
        %v4344 = vpack.c.bf16 %v4090, %v4089
        %v4345 = vpack.c.bf16 %v4092, %v4091
        %v4346 = vpack.c.bf16 %v4094, %v4093
        %v4347 = vpack.c.bf16 %v4096, %v4095
        %v4348 = vpack.c.bf16 %v4098, %v4097
        %v4349 = vpack.c.bf16 %v4100, %v4099
        %v4350 = vpack.c.bf16 %v4102, %v4101
        %v4351 = vpack.c.bf16 %v4104, %v4103
        %v4352 = vpack.c.bf16 %v4106, %v4105
        %v4353 = vpack.c.bf16 %v4108, %v4107
        %v4354 = vpack.c.bf16 %v4110, %v4109
        %v4355 = vpack.c.bf16 %v4112, %v4111
        %v4356 = vpack.c.bf16 %v4114, %v4113
        %v4357 = vpack.c.bf16 %v4116, %v4115
        %v4358 = vpack.c.bf16 %v4118, %v4117
        %v4359 = vpack.c.bf16 %v4120, %v4119
        %v4376 = vunpack.c.l.b16 %v4344
        %v4377 = vunpack.c.h.b16 %v4344
        %v4378 = vunpack.c.l.b16 %v4345
        %v4379 = vunpack.c.h.b16 %v4345
        %v4380 = vunpack.c.l.b16 %v4346
        %v4381 = vunpack.c.h.b16 %v4346
        %v4382 = vunpack.c.l.b16 %v4347
        %v4383 = vunpack.c.h.b16 %v4347
        %v4384 = vunpack.c.l.b16 %v4348
        %v4385 = vunpack.c.h.b16 %v4348
        %v4386 = vunpack.c.l.b16 %v4349
        %v4387 = vunpack.c.h.b16 %v4349
        %v4388 = vunpack.c.l.b16 %v4350
        %v4389 = vunpack.c.h.b16 %v4350
        %v4390 = vunpack.c.l.b16 %v4351
        %v4391 = vunpack.c.h.b16 %v4351
        %v4392 = vunpack.c.l.b16 %v4352
        %v4393 = vunpack.c.h.b16 %v4352
        %v4394 = vunpack.c.l.b16 %v4353
        %v4395 = vunpack.c.h.b16 %v4353
        %v4396 = vunpack.c.l.b16 %v4354
        %v4397 = vunpack.c.h.b16 %v4354
        %v4398 = vunpack.c.l.b16 %v4355
        %v4399 = vunpack.c.h.b16 %v4355
        %v4400 = vunpack.c.l.b16 %v4356
        %v4401 = vunpack.c.h.b16 %v4356
        %v4402 = vunpack.c.l.b16 %v4357
        %v4403 = vunpack.c.h.b16 %v4357
        %v4404 = vunpack.c.l.b16 %v4358
        %v4405 = vunpack.c.h.b16 %v4358
        %v4406 = vunpack.c.l.b16 %v4359
        %v4407 = vunpack.c.h.b16 %v4359
        %v4408 = vpack.c.b16 %v4376, %v4376
        %v4409 = vpack.c.b16 %v4377, %v4377
        %v4410 = vpack.c.b16 %v4378, %v4378
        %v4411 = vpack.c.b16 %v4379, %v4379
        %v4412 = vpack.c.b16 %v4380, %v4380
        %v4413 = vpack.c.b16 %v4381, %v4381
        %v4414 = vpack.c.b16 %v4382, %v4382
        %v4415 = vpack.c.b16 %v4383, %v4383
        %v4416 = vpack.c.b16 %v4384, %v4384
        %v4417 = vpack.c.b16 %v4385, %v4385
        %v4418 = vpack.c.b16 %v4386, %v4386
        %v4419 = vpack.c.b16 %v4387, %v4387
        %v4420 = vpack.c.b16 %v4388, %v4388
        %v4421 = vpack.c.b16 %v4389, %v4389
        %v4422 = vpack.c.b16 %v4390, %v4390
        %v4423 = vpack.c.b16 %v4391, %v4391
        %v4424 = vpack.c.b16 %v4392, %v4392
        %v4425 = vpack.c.b16 %v4393, %v4393
        %v4426 = vpack.c.b16 %v4394, %v4394
        %v4427 = vpack.c.b16 %v4395, %v4395
        %v4428 = vpack.c.b16 %v4396, %v4396
        %v4429 = vpack.c.b16 %v4397, %v4397
        %v4430 = vpack.c.b16 %v4398, %v4398
        %v4431 = vpack.c.b16 %v4399, %v4399
        %v4432 = vpack.c.b16 %v4400, %v4400
        %v4433 = vpack.c.b16 %v4401, %v4401
        %v4434 = vpack.c.b16 %v4402, %v4402
        %v4435 = vpack.c.b16 %v4403, %v4403
        %v4436 = vpack.c.b16 %v4404, %v4404
        %v4437 = vpack.c.b16 %v4405, %v4405
        %v4438 = vpack.c.b16 %v4406, %v4406
        %v4439 = vpack.c.b16 %v4407, %v4407
        %s4472 = scalar_lea.vmem [#allocation3], 16
        %4473 = vst.msk [vmem:[%s4472 + $0x4] sm:$0xf] %vm4271, %v4408
        %4474 = vst.msk [vmem:[%s4472 + $0x8] sm:$0xf] %vm4271, %v4409
        %4475 = vst.msk [vmem:[%s4472 + $0x14] sm:$0xf] %vm4271, %v4410
        %4476 = vst.msk [vmem:[%s4472 + $0x18] sm:$0xf] %vm4271, %v4411
        %4477 = vst.msk [vmem:[%s4472 + $0x24] sm:$0xf] %vm4271, %v4412
        %4478 = vst.msk [vmem:[%s4472 + $0x28] sm:$0xf] %vm4271, %v4413
        %4479 = vst.msk [vmem:[%s4472 + $0x34] sm:$0xf] %vm4271, %v4414
        %4480 = vst.msk [vmem:[%s4472 + $0x38] sm:$0xf] %vm4271, %v4415
        %4481 = vst.msk [vmem:[%s4472 + $0x44] sm:$0xf] %vm4271, %v4416
        %4482 = vst.msk [vmem:[%s4472 + $0x48] sm:$0xf] %vm4271, %v4417
        %4483 = vst.msk [vmem:[%s4472 + $0x54] sm:$0xf] %vm4271, %v4418
        %4484 = vst.msk [vmem:[%s4472 + $0x58] sm:$0xf] %vm4271, %v4419
        %4485 = vst.msk [vmem:[%s4472 + $0x64] sm:$0xf] %vm4271, %v4420
        %4486 = vst.msk [vmem:[%s4472 + $0x68] sm:$0xf] %vm4271, %v4421
        %4487 = vst.msk [vmem:[%s4472 + $0x74] sm:$0xf] %vm4271, %v4422
        %4488 = vst.msk [vmem:[%s4472 + $0x78] sm:$0xf] %vm4271, %v4423
        %4489 = vst.msk [vmem:[%s4472 + $0x84] sm:$0xf] %vm4271, %v4424
        %4490 = vst.msk [vmem:[%s4472 + $0x88] sm:$0xf] %vm4271, %v4425
        %4491 = vst.msk [vmem:[%s4472 + $0x94] sm:$0xf] %vm4271, %v4426
        %4492 = vst.msk [vmem:[%s4472 + $0x98] sm:$0xf] %vm4271, %v4427
        %4493 = vst.msk [vmem:[%s4472 + $0xa4] sm:$0xf] %vm4271, %v4428
        %4494 = vst.msk [vmem:[%s4472 + $0xa8] sm:$0xf] %vm4271, %v4429
        %4495 = vst.msk [vmem:[%s4472 + $0xb4] sm:$0xf] %vm4271, %v4430
        %4496 = vst.msk [vmem:[%s4472 + $0xb8] sm:$0xf] %vm4271, %v4431
        %4497 = vst.msk [vmem:[%s4472 + $0xc4] sm:$0xf] %vm4271, %v4432
        %4498 = vst.msk [vmem:[%s4472 + $0xc8] sm:$0xf] %vm4271, %v4433
        %4499 = vst.msk [vmem:[%s4472 + $0xd4] sm:$0xf] %vm4271, %v4434
        %4500 = vst.msk [vmem:[%s4472 + $0xd8] sm:$0xf] %vm4271, %v4435
        %4501 = vst.msk [vmem:[%s4472 + $0xe4] sm:$0xf] %vm4271, %v4436
        %4502 = vst.msk [vmem:[%s4472 + $0xe8] sm:$0xf] %vm4271, %v4437
        %4503 = vst.msk [vmem:[%s4472 + $0xf4] sm:$0xf] %vm4271, %v4438
        %4504 = vst.msk [vmem:[%s4472 + $0xf8] sm:$0xf] %vm4271, %v4439
        %v4505 = vld [vmem:[#allocation3] sm:$0x8]
        %v4506 = vld [vmem:[#allocation3 + $0x4] sm:$0xf]
        %v4507 = vld [vmem:[#allocation3 + $0x8] sm:$0xf]
        %v4508 = vld [vmem:[#allocation3 + $0x10] sm:$0x8]
        %v4509 = vld [vmem:[#allocation3 + $0x14] sm:$0xf]
        %v4510 = vld [vmem:[#allocation3 + $0x18] sm:$0xf]
        %v4511 = vld [vmem:[#allocation3 + $0x20] sm:$0x8]
        %v4512 = vld [vmem:[#allocation3 + $0x24] sm:$0xf]
        %v4513 = vld [vmem:[#allocation3 + $0x28] sm:$0xf]
        %v4514 = vld [vmem:[#allocation3 + $0x30] sm:$0x8]
        %v4515 = vld [vmem:[#allocation3 + $0x34] sm:$0xf]
        %v4516 = vld [vmem:[#allocation3 + $0x38] sm:$0xf]
        %v4517 = vld [vmem:[#allocation3 + $0x40] sm:$0x8]
        %v4518 = vld [vmem:[#allocation3 + $0x44] sm:$0xf]
        %v4519 = vld [vmem:[#allocation3 + $0x48] sm:$0xf]
        %v4520 = vld [vmem:[#allocation3 + $0x50] sm:$0x8]
        %v4521 = vld [vmem:[#allocation3 + $0x54] sm:$0xf]
        %v4522 = vld [vmem:[#allocation3 + $0x58] sm:$0xf]
        %v4523 = vld [vmem:[#allocation3 + $0x60] sm:$0x8]
        %v4524 = vld [vmem:[#allocation3 + $0x64] sm:$0xf]
        %v4525 = vld [vmem:[#allocation3 + $0x68] sm:$0xf]
        %v4526 = vld [vmem:[#allocation3 + $0x70] sm:$0x8]
        %v4527 = vld [vmem:[#allocation3 + $0x74] sm:$0xf]
        %v4528 = vld [vmem:[#allocation3 + $0x78] sm:$0xf]
        %v4529 = vld [vmem:[#allocation3 + $0x80] sm:$0x8]
        %v4530 = vld [vmem:[#allocation3 + $0x84] sm:$0xf]
        %v4531 = vld [vmem:[#allocation3 + $0x88] sm:$0xf]
        %v4532 = vld [vmem:[#allocation3 + $0x90] sm:$0x8]
        %v4533 = vld [vmem:[#allocation3 + $0x94] sm:$0xf]
        %v4534 = vld [vmem:[#allocation3 + $0x98] sm:$0xf]
        %v4535 = vld [vmem:[#allocation3 + $0xa0] sm:$0x8]
        %v4536 = vld [vmem:[#allocation3 + $0xa4] sm:$0xf]
        %v4537 = vld [vmem:[#allocation3 + $0xa8] sm:$0xf]
        %v4538 = vld [vmem:[#allocation3 + $0xb0] sm:$0x8]
        %v4539 = vld [vmem:[#allocation3 + $0xb4] sm:$0xf]
        %v4540 = vld [vmem:[#allocation3 + $0xb8] sm:$0xf]
        %v4541 = vld [vmem:[#allocation3 + $0xc0] sm:$0x8]
        %v4542 = vld [vmem:[#allocation3 + $0xc4] sm:$0xf]
        %v4543 = vld [vmem:[#allocation3 + $0xc8] sm:$0xf]
        %v4544 = vld [vmem:[#allocation3 + $0xd0] sm:$0x8]
        %v4545 = vld [vmem:[#allocation3 + $0xd4] sm:$0xf]
        %v4546 = vld [vmem:[#allocation3 + $0xd8] sm:$0xf]
        %v4547 = vld [vmem:[#allocation3 + $0xe0] sm:$0x8]
        %v4548 = vld [vmem:[#allocation3 + $0xe4] sm:$0xf]
        %v4549 = vld [vmem:[#allocation3 + $0xe8] sm:$0xf]
        %v4550 = vld [vmem:[#allocation3 + $0xf0] sm:$0x8]
        %v4551 = vld [vmem:[#allocation3 + $0xf4] sm:$0xf]
        %v4552 = vld [vmem:[#allocation3 + $0xf8] sm:$0xf]
        %v4553 = vld [vmem:[#allocation3 + $0xc] sm:$0x1]
        %v4554 = vld [vmem:[#allocation3 + $0x1c] sm:$0x1]
        %v4555 = vld [vmem:[#allocation3 + $0x2c] sm:$0x1]
        %v4556 = vld [vmem:[#allocation3 + $0x3c] sm:$0x1]
        %v4557 = vld [vmem:[#allocation3 + $0x4c] sm:$0x1]
        %v4558 = vld [vmem:[#allocation3 + $0x5c] sm:$0x1]
        %v4559 = vld [vmem:[#allocation3 + $0x6c] sm:$0x1]
        %v4560 = vld [vmem:[#allocation3 + $0x7c] sm:$0x1]
        %v4561 = vld [vmem:[#allocation3 + $0x8c] sm:$0x1]
        %v4562 = vld [vmem:[#allocation3 + $0x9c] sm:$0x1]
        %v4563 = vld [vmem:[#allocation3 + $0xac] sm:$0x1]
        %v4564 = vld [vmem:[#allocation3 + $0xbc] sm:$0x1]
        %v4565 = vld [vmem:[#allocation3 + $0xcc] sm:$0x1]
        %v4566 = vld [vmem:[#allocation3 + $0xdc] sm:$0x1]
        %v4567 = vld [vmem:[#allocation3 + $0xec] sm:$0x1]
        %v4568 = vld [vmem:[#allocation3 + $0xfc] sm:$0x1]
        %v4569 = vld [vmem:[%s4472] sm:$0x8]
        %v4570 = vld [vmem:[%s4472 + $0x4] sm:$0xf]
        %v4571 = vld [vmem:[%s4472 + $0x8] sm:$0xf]
        %v4572 = vld [vmem:[%s4472 + $0x10] sm:$0x8]
        %v4573 = vld [vmem:[%s4472 + $0x14] sm:$0xf]
        %v4574 = vld [vmem:[%s4472 + $0x18] sm:$0xf]
        %v4575 = vld [vmem:[%s4472 + $0x20] sm:$0x8]
        %v4576 = vld [vmem:[%s4472 + $0x24] sm:$0xf]
        %v4577 = vld [vmem:[%s4472 + $0x28] sm:$0xf]
        %v4578 = vld [vmem:[%s4472 + $0x30] sm:$0x8]
        %v4579 = vld [vmem:[%s4472 + $0x34] sm:$0xf]
        %v4580 = vld [vmem:[%s4472 + $0x38] sm:$0xf]
        %v4581 = vld [vmem:[%s4472 + $0x40] sm:$0x8]
        %v4582 = vld [vmem:[%s4472 + $0x44] sm:$0xf]
        %v4583 = vld [vmem:[%s4472 + $0x48] sm:$0xf]
        %v4584 = vld [vmem:[%s4472 + $0x50] sm:$0x8]
        %v4585 = vld [vmem:[%s4472 + $0x54] sm:$0xf]
        %v4586 = vld [vmem:[%s4472 + $0x58] sm:$0xf]
        %v4587 = vld [vmem:[%s4472 + $0x60] sm:$0x8]
        %v4588 = vld [vmem:[%s4472 + $0x64] sm:$0xf]
        %v4589 = vld [vmem:[%s4472 + $0x68] sm:$0xf]
        %v4590 = vld [vmem:[%s4472 + $0x70] sm:$0x8]
        %v4591 = vld [vmem:[%s4472 + $0x74] sm:$0xf]
        %v4592 = vld [vmem:[%s4472 + $0x78] sm:$0xf]
        %v4593 = vld [vmem:[%s4472 + $0x80] sm:$0x8]
        %v4594 = vld [vmem:[%s4472 + $0x84] sm:$0xf]
        %v4595 = vld [vmem:[%s4472 + $0x88] sm:$0xf]
        %v4596 = vld [vmem:[%s4472 + $0x90] sm:$0x8]
        %v4597 = vld [vmem:[%s4472 + $0x94] sm:$0xf]
        %v4598 = vld [vmem:[%s4472 + $0x98] sm:$0xf]
        %v4599 = vld [vmem:[%s4472 + $0xa0] sm:$0x8]
        %v4600 = vld [vmem:[%s4472 + $0xa4] sm:$0xf]
        %v4601 = vld [vmem:[%s4472 + $0xa8] sm:$0xf]
        %v4602 = vld [vmem:[%s4472 + $0xb0] sm:$0x8]
        %v4603 = vld [vmem:[%s4472 + $0xb4] sm:$0xf]
        %v4604 = vld [vmem:[%s4472 + $0xb8] sm:$0xf]
        %v4605 = vld [vmem:[%s4472 + $0xc0] sm:$0x8]
        %v4606 = vld [vmem:[%s4472 + $0xc4] sm:$0xf]
        %v4607 = vld [vmem:[%s4472 + $0xc8] sm:$0xf]
        %v4608 = vld [vmem:[%s4472 + $0xd0] sm:$0x8]
        %v4609 = vld [vmem:[%s4472 + $0xd4] sm:$0xf]
        %v4610 = vld [vmem:[%s4472 + $0xd8] sm:$0xf]
        %v4611 = vld [vmem:[%s4472 + $0xe0] sm:$0x8]
        %v4612 = vld [vmem:[%s4472 + $0xe4] sm:$0xf]
        %v4613 = vld [vmem:[%s4472 + $0xe8] sm:$0xf]
        %v4614 = vld [vmem:[%s4472 + $0xf0] sm:$0x8]
        %v4615 = vld [vmem:[%s4472 + $0xf4] sm:$0xf]
        %v4616 = vld [vmem:[%s4472 + $0xf8] sm:$0xf]
        %v4617 = vld [vmem:[%s4472 + $0xc] sm:$0x1]
        %v4618 = vld [vmem:[%s4472 + $0x1c] sm:$0x1]
        %v4619 = vld [vmem:[%s4472 + $0x2c] sm:$0x1]
        %v4620 = vld [vmem:[%s4472 + $0x3c] sm:$0x1]
        %v4621 = vld [vmem:[%s4472 + $0x4c] sm:$0x1]
        %v4622 = vld [vmem:[%s4472 + $0x5c] sm:$0x1]
        %v4623 = vld [vmem:[%s4472 + $0x6c] sm:$0x1]
        %v4624 = vld [vmem:[%s4472 + $0x7c] sm:$0x1]
        %v4625 = vld [vmem:[%s4472 + $0x8c] sm:$0x1]
        %v4626 = vld [vmem:[%s4472 + $0x9c] sm:$0x1]
        %v4627 = vld [vmem:[%s4472 + $0xac] sm:$0x1]
        %v4628 = vld [vmem:[%s4472 + $0xbc] sm:$0x1]
        %v4629 = vld [vmem:[%s4472 + $0xcc] sm:$0x1]
        %v4630 = vld [vmem:[%s4472 + $0xdc] sm:$0x1]
        %v4631 = vld [vmem:[%s4472 + $0xec] sm:$0x1]
        %v4632 = vld [vmem:[%s4472 + $0xfc] sm:$0x1]
        %s4633 = scalar_lea.vmem [#allocation3], 32
        %v4634 = vld [vmem:[%s4633] sm:$0x8]
        %v4635 = vld [vmem:[%s4633 + $0x4] sm:$0xf]
        %v4636 = vld [vmem:[%s4633 + $0x8] sm:$0xf]
        %v4637 = vld [vmem:[%s4633 + $0x10] sm:$0x8]
        %v4638 = vld [vmem:[%s4633 + $0x14] sm:$0xf]
        %v4639 = vld [vmem:[%s4633 + $0x18] sm:$0xf]
        %v4640 = vld [vmem:[%s4633 + $0x20] sm:$0x8]
        %v4641 = vld [vmem:[%s4633 + $0x24] sm:$0xf]
        %v4642 = vld [vmem:[%s4633 + $0x28] sm:$0xf]
        %v4643 = vld [vmem:[%s4633 + $0x30] sm:$0x8]
        %v4644 = vld [vmem:[%s4633 + $0x34] sm:$0xf]
        %v4645 = vld [vmem:[%s4633 + $0x38] sm:$0xf]
        %v4646 = vld [vmem:[%s4633 + $0x40] sm:$0x8]
        %v4647 = vld [vmem:[%s4633 + $0x44] sm:$0xf]
        %v4648 = vld [vmem:[%s4633 + $0x48] sm:$0xf]
        %v4649 = vld [vmem:[%s4633 + $0x50] sm:$0x8]
        %v4650 = vld [vmem:[%s4633 + $0x54] sm:$0xf]
        %v4651 = vld [vmem:[%s4633 + $0x58] sm:$0xf]
        %v4652 = vld [vmem:[%s4633 + $0x60] sm:$0x8]
        %v4653 = vld [vmem:[%s4633 + $0x64] sm:$0xf]
        %v4654 = vld [vmem:[%s4633 + $0x68] sm:$0xf]
        %v4655 = vld [vmem:[%s4633 + $0x70] sm:$0x8]
        %v4656 = vld [vmem:[%s4633 + $0x74] sm:$0xf]
        %v4657 = vld [vmem:[%s4633 + $0x78] sm:$0xf]
        %v4658 = vld [vmem:[%s4633 + $0x80] sm:$0x8]
        %v4659 = vld [vmem:[%s4633 + $0x84] sm:$0xf]
        %v4660 = vld [vmem:[%s4633 + $0x88] sm:$0xf]
        %v4661 = vld [vmem:[%s4633 + $0x90] sm:$0x8]
        %v4662 = vld [vmem:[%s4633 + $0x94] sm:$0xf]
        %v4663 = vld [vmem:[%s4633 + $0x98] sm:$0xf]
        %v4664 = vld [vmem:[%s4633 + $0xa0] sm:$0x8]
        %v4665 = vld [vmem:[%s4633 + $0xa4] sm:$0xf]
        %v4666 = vld [vmem:[%s4633 + $0xa8] sm:$0xf]
        %v4667 = vld [vmem:[%s4633 + $0xb0] sm:$0x8]
        %v4668 = vld [vmem:[%s4633 + $0xb4] sm:$0xf]
        %v4669 = vld [vmem:[%s4633 + $0xb8] sm:$0xf]
        %v4670 = vld [vmem:[%s4633 + $0xc0] sm:$0x8]
        %v4671 = vld [vmem:[%s4633 + $0xc4] sm:$0xf]
        %v4672 = vld [vmem:[%s4633 + $0xc8] sm:$0xf]
        %v4673 = vld [vmem:[%s4633 + $0xd0] sm:$0x8]
        %v4674 = vld [vmem:[%s4633 + $0xd4] sm:$0xf]
        %v4675 = vld [vmem:[%s4633 + $0xd8] sm:$0xf]
        %v4676 = vld [vmem:[%s4633 + $0xe0] sm:$0x8]
        %v4677 = vld [vmem:[%s4633 + $0xe4] sm:$0xf]
        %v4678 = vld [vmem:[%s4633 + $0xe8] sm:$0xf]
        %v4679 = vld [vmem:[%s4633 + $0xf0] sm:$0x8]
        %v4680 = vld [vmem:[%s4633 + $0xf4] sm:$0xf]
        %v4681 = vld [vmem:[%s4633 + $0xf8] sm:$0xf]
        %v4682 = vld [vmem:[%s4633 + $0xc] sm:$0x1]
        %v4683 = vld [vmem:[%s4633 + $0x1c] sm:$0x1]
        %v4684 = vld [vmem:[%s4633 + $0x2c] sm:$0x1]
        %v4685 = vld [vmem:[%s4633 + $0x3c] sm:$0x1]
        %v4686 = vld [vmem:[%s4633 + $0x4c] sm:$0x1]
        %v4687 = vld [vmem:[%s4633 + $0x5c] sm:$0x1]
        %v4688 = vld [vmem:[%s4633 + $0x6c] sm:$0x1]
        %v4689 = vld [vmem:[%s4633 + $0x7c] sm:$0x1]
        %v4690 = vld [vmem:[%s4633 + $0x8c] sm:$0x1]
        %v4691 = vld [vmem:[%s4633 + $0x9c] sm:$0x1]
        %v4692 = vld [vmem:[%s4633 + $0xac] sm:$0x1]
        %v4693 = vld [vmem:[%s4633 + $0xbc] sm:$0x1]
        %v4694 = vld [vmem:[%s4633 + $0xcc] sm:$0x1]
        %v4695 = vld [vmem:[%s4633 + $0xdc] sm:$0x1]
        %v4696 = vld [vmem:[%s4633 + $0xec] sm:$0x1]
        %v4697 = vld [vmem:[%s4633 + $0xfc] sm:$0x1]
        %v4746 = vunpack.c.l.b16 %v4505
        %v4747 = vunpack.c.l.b16 %v4506
        %v4748 = vunpack.c.l.b16 %v4507
        %v4749 = vunpack.c.l.b16 %v4508
        %v4750 = vunpack.c.l.b16 %v4509
        %v4751 = vunpack.c.l.b16 %v4510
        %v4752 = vunpack.c.l.b16 %v4511
        %v4753 = vunpack.c.l.b16 %v4512
        %v4754 = vunpack.c.l.b16 %v4513
        %v4755 = vunpack.c.l.b16 %v4514
        %v4756 = vunpack.c.l.b16 %v4515
        %v4757 = vunpack.c.l.b16 %v4516
        %v4758 = vunpack.c.l.b16 %v4517
        %v4759 = vunpack.c.l.b16 %v4518
        %v4760 = vunpack.c.l.b16 %v4519
        %v4761 = vunpack.c.l.b16 %v4520
        %v4762 = vunpack.c.l.b16 %v4521
        %v4763 = vunpack.c.l.b16 %v4522
        %v4764 = vunpack.c.l.b16 %v4523
        %v4765 = vunpack.c.l.b16 %v4524
        %v4766 = vunpack.c.l.b16 %v4525
        %v4767 = vunpack.c.l.b16 %v4526
        %v4768 = vunpack.c.l.b16 %v4527
        %v4769 = vunpack.c.l.b16 %v4528
        %v4770 = vunpack.c.l.b16 %v4529
        %v4771 = vunpack.c.l.b16 %v4530
        %v4772 = vunpack.c.l.b16 %v4531
        %v4773 = vunpack.c.l.b16 %v4532
        %v4774 = vunpack.c.l.b16 %v4533
        %v4775 = vunpack.c.l.b16 %v4534
        %v4776 = vunpack.c.l.b16 %v4535
        %v4777 = vunpack.c.l.b16 %v4536
        %v4778 = vunpack.c.l.b16 %v4537
        %v4779 = vunpack.c.l.b16 %v4538
        %v4780 = vunpack.c.l.b16 %v4539
        %v4781 = vunpack.c.l.b16 %v4540
        %v4782 = vunpack.c.l.b16 %v4541
        %v4783 = vunpack.c.l.b16 %v4542
        %v4784 = vunpack.c.l.b16 %v4543
        %v4785 = vunpack.c.l.b16 %v4544
        %v4786 = vunpack.c.l.b16 %v4545
        %v4787 = vunpack.c.l.b16 %v4546
        %v4788 = vunpack.c.l.b16 %v4547
        %v4789 = vunpack.c.l.b16 %v4548
        %v4790 = vunpack.c.l.b16 %v4549
        %v4791 = vunpack.c.l.b16 %v4550
        %v4792 = vunpack.c.l.b16 %v4551
        %v4793 = vunpack.c.l.b16 %v4552
        %v4794 = vpack.c.b16 %v4747, %v4746
        %v4795 = vpack.c.b16 %v4748, %v4748
        %v4796 = vpack.c.b16 %v4750, %v4749
        %v4797 = vpack.c.b16 %v4751, %v4751
        %v4798 = vpack.c.b16 %v4753, %v4752
        %v4799 = vpack.c.b16 %v4754, %v4754
        %v4800 = vpack.c.b16 %v4756, %v4755
        %v4801 = vpack.c.b16 %v4757, %v4757
        %v4802 = vpack.c.b16 %v4759, %v4758
        %v4803 = vpack.c.b16 %v4760, %v4760
        %v4804 = vpack.c.b16 %v4762, %v4761
        %v4805 = vpack.c.b16 %v4763, %v4763
        %v4806 = vpack.c.b16 %v4765, %v4764
        %v4807 = vpack.c.b16 %v4766, %v4766
        %v4808 = vpack.c.b16 %v4768, %v4767
        %v4809 = vpack.c.b16 %v4769, %v4769
        %v4810 = vpack.c.b16 %v4771, %v4770
        %v4811 = vpack.c.b16 %v4772, %v4772
        %v4812 = vpack.c.b16 %v4774, %v4773
        %v4813 = vpack.c.b16 %v4775, %v4775
        %v4814 = vpack.c.b16 %v4777, %v4776
        %v4815 = vpack.c.b16 %v4778, %v4778
        %v4816 = vpack.c.b16 %v4780, %v4779
        %v4817 = vpack.c.b16 %v4781, %v4781
        %v4818 = vpack.c.b16 %v4783, %v4782
        %v4819 = vpack.c.b16 %v4784, %v4784
        %v4820 = vpack.c.b16 %v4786, %v4785
        %v4821 = vpack.c.b16 %v4787, %v4787
        %v4822 = vpack.c.b16 %v4789, %v4788
        %v4823 = vpack.c.b16 %v4790, %v4790
        %v4824 = vpack.c.b16 %v4792, %v4791
        %v4825 = vpack.c.b16 %v4793, %v4793
        %v4826 = vpack.c.b16 %v4748, %v4747
        %v4827 = vpack.c.b16 %v4751, %v4750
        %v4828 = vpack.c.b16 %v4754, %v4753
        %v4829 = vpack.c.b16 %v4757, %v4756
        %v4830 = vpack.c.b16 %v4760, %v4759
        %v4831 = vpack.c.b16 %v4763, %v4762
        %v4832 = vpack.c.b16 %v4766, %v4765
        %v4833 = vpack.c.b16 %v4769, %v4768
        %v4834 = vpack.c.b16 %v4772, %v4771
        %v4835 = vpack.c.b16 %v4775, %v4774
        %v4836 = vpack.c.b16 %v4778, %v4777
        %v4837 = vpack.c.b16 %v4781, %v4780
        %v4838 = vpack.c.b16 %v4784, %v4783
        %v4839 = vpack.c.b16 %v4787, %v4786
        %v4840 = vpack.c.b16 %v4790, %v4789
        %v4841 = vpack.c.b16 %v4793, %v4792
        %v4843 = vshrl.u32 %v4826, 16
        %v4845 = vrot.slane %v4843, 4
        %v4846 = vshll.u32 %v4826, 16
        %v4848 = vrot.slane %v4846, 5
        %v4849 = vor.u32 %v4845, %v4848
        %v4851 = vshrl.u32 %v4827, 16
        %v4853 = vrot.slane %v4851, 4
        %v4854 = vshll.u32 %v4827, 16
        %v4856 = vrot.slane %v4854, 5
        %v4857 = vor.u32 %v4853, %v4856
        %v4859 = vshrl.u32 %v4828, 16
        %v4861 = vrot.slane %v4859, 4
        %v4862 = vshll.u32 %v4828, 16
        %v4864 = vrot.slane %v4862, 5
        %v4865 = vor.u32 %v4861, %v4864
        %v4867 = vshrl.u32 %v4829, 16
        %v4869 = vrot.slane %v4867, 4
        %v4870 = vshll.u32 %v4829, 16
        %v4872 = vrot.slane %v4870, 5
        %v4873 = vor.u32 %v4869, %v4872
        %v4875 = vshrl.u32 %v4830, 16
        %v4877 = vrot.slane %v4875, 4
        %v4878 = vshll.u32 %v4830, 16
        %v4880 = vrot.slane %v4878, 5
        %v4881 = vor.u32 %v4877, %v4880
        %v4883 = vshrl.u32 %v4831, 16
        %v4885 = vrot.slane %v4883, 4
        %v4886 = vshll.u32 %v4831, 16
        %v4888 = vrot.slane %v4886, 5
        %v4889 = vor.u32 %v4885, %v4888
        %v4891 = vshrl.u32 %v4832, 16
        %v4893 = vrot.slane %v4891, 4
        %v4894 = vshll.u32 %v4832, 16
        %v4896 = vrot.slane %v4894, 5
        %v4897 = vor.u32 %v4893, %v4896
        %v4899 = vshrl.u32 %v4833, 16
        %v4901 = vrot.slane %v4899, 4
        %v4902 = vshll.u32 %v4833, 16
        %v4904 = vrot.slane %v4902, 5
        %v4905 = vor.u32 %v4901, %v4904
        %v4907 = vshrl.u32 %v4834, 16
        %v4909 = vrot.slane %v4907, 4
        %v4910 = vshll.u32 %v4834, 16
        %v4912 = vrot.slane %v4910, 5
        %v4913 = vor.u32 %v4909, %v4912
        %v4915 = vshrl.u32 %v4835, 16
        %v4917 = vrot.slane %v4915, 4
        %v4918 = vshll.u32 %v4835, 16
        %v4920 = vrot.slane %v4918, 5
        %v4921 = vor.u32 %v4917, %v4920
        %v4923 = vshrl.u32 %v4836, 16
        %v4925 = vrot.slane %v4923, 4
        %v4926 = vshll.u32 %v4836, 16
        %v4928 = vrot.slane %v4926, 5
        %v4929 = vor.u32 %v4925, %v4928
        %v4931 = vshrl.u32 %v4837, 16
        %v4933 = vrot.slane %v4931, 4
        %v4934 = vshll.u32 %v4837, 16
        %v4936 = vrot.slane %v4934, 5
        %v4937 = vor.u32 %v4933, %v4936
        %v4939 = vshrl.u32 %v4838, 16
        %v4941 = vrot.slane %v4939, 4
        %v4942 = vshll.u32 %v4838, 16
        %v4944 = vrot.slane %v4942, 5
        %v4945 = vor.u32 %v4941, %v4944
        %v4947 = vshrl.u32 %v4839, 16
        %v4949 = vrot.slane %v4947, 4
        %v4950 = vshll.u32 %v4839, 16
        %v4952 = vrot.slane %v4950, 5
        %v4953 = vor.u32 %v4949, %v4952
        %v4955 = vshrl.u32 %v4840, 16
        %v4957 = vrot.slane %v4955, 4
        %v4958 = vshll.u32 %v4840, 16
        %v4960 = vrot.slane %v4958, 5
        %v4961 = vor.u32 %v4957, %v4960
        %v4963 = vshrl.u32 %v4841, 16
        %v4965 = vrot.slane %v4963, 4
        %v4966 = vshll.u32 %v4841, 16
        %v4968 = vrot.slane %v4966, 5
        %v4969 = vor.u32 %v4965, %v4968
        %4970 = vrot.lane.b32.xlu0 %v4849, 8
        %v4971 = vpop.permute.xlu0 %4970
        %4972 = vrot.lane.b32.xlu0 %v4857, 8
        %v4973 = vpop.permute.xlu0 %4972
        %4974 = vrot.lane.b32.xlu0 %v4865, 8
        %v4975 = vpop.permute.xlu0 %4974
        %4976 = vrot.lane.b32.xlu0 %v4873, 8
        %v4977 = vpop.permute.xlu0 %4976
        %4978 = vrot.lane.b32.xlu0 %v4881, 8
        %v4979 = vpop.permute.xlu0 %4978
        %4980 = vrot.lane.b32.xlu0 %v4889, 8
        %v4981 = vpop.permute.xlu0 %4980
        %4982 = vrot.lane.b32.xlu0 %v4897, 8
        %v4983 = vpop.permute.xlu0 %4982
        %4984 = vrot.lane.b32.xlu0 %v4905, 8
        %v4985 = vpop.permute.xlu0 %4984
        %4986 = vrot.lane.b32.xlu0 %v4913, 8
        %v4987 = vpop.permute.xlu0 %4986
        %4988 = vrot.lane.b32.xlu0 %v4921, 8
        %v4989 = vpop.permute.xlu0 %4988
        %4990 = vrot.lane.b32.xlu0 %v4929, 8
        %v4991 = vpop.permute.xlu0 %4990
        %4992 = vrot.lane.b32.xlu0 %v4937, 8
        %v4993 = vpop.permute.xlu0 %4992
        %4994 = vrot.lane.b32.xlu0 %v4945, 8
        %v4995 = vpop.permute.xlu0 %4994
        %4996 = vrot.lane.b32.xlu0 %v4953, 8
        %v4997 = vpop.permute.xlu0 %4996
        %4998 = vrot.lane.b32.xlu0 %v4961, 8
        %v4999 = vpop.permute.xlu0 %4998
        %5000 = vrot.lane.b32.xlu0 %v4969, 8
        %v5001 = vpop.permute.xlu0 %5000
        %v5018 = vunpack.c.l.b16 %v4553
        %v5019 = vunpack.c.l.b16 %v4554
        %v5020 = vunpack.c.l.b16 %v4555
        %v5021 = vunpack.c.l.b16 %v4556
        %v5022 = vunpack.c.l.b16 %v4557
        %v5023 = vunpack.c.l.b16 %v4558
        %v5024 = vunpack.c.l.b16 %v4559
        %v5025 = vunpack.c.l.b16 %v4560
        %v5026 = vunpack.c.l.b16 %v4561
        %v5027 = vunpack.c.l.b16 %v4562
        %v5028 = vunpack.c.l.b16 %v4563
        %v5029 = vunpack.c.l.b16 %v4564
        %v5030 = vunpack.c.l.b16 %v4565
        %v5031 = vunpack.c.l.b16 %v4566
        %v5032 = vunpack.c.l.b16 %v4567
        %v5033 = vunpack.c.l.b16 %v4568
        %v5034 = vpack.c.b16 %v5018, %v5018
        %v5035 = vpack.c.b16 %v5019, %v5019
        %v5036 = vpack.c.b16 %v5020, %v5020
        %v5037 = vpack.c.b16 %v5021, %v5021
        %v5038 = vpack.c.b16 %v5022, %v5022
        %v5039 = vpack.c.b16 %v5023, %v5023
        %v5040 = vpack.c.b16 %v5024, %v5024
        %v5041 = vpack.c.b16 %v5025, %v5025
        %v5042 = vpack.c.b16 %v5026, %v5026
        %v5043 = vpack.c.b16 %v5027, %v5027
        %v5044 = vpack.c.b16 %v5028, %v5028
        %v5045 = vpack.c.b16 %v5029, %v5029
        %v5046 = vpack.c.b16 %v5030, %v5030
        %v5047 = vpack.c.b16 %v5031, %v5031
        %v5048 = vpack.c.b16 %v5032, %v5032
        %v5049 = vpack.c.b16 %v5033, %v5033
        %v5050 = vrot.slane %v4826, 5
        %v5051 = vrot.slane %v5034, 5
        %v5052 = vsel %vm1625, %v5050, %v5051
        %v5053 = vrot.slane %v4827, 5
        %v5054 = vrot.slane %v5035, 5
        %v5055 = vsel %vm1625, %v5053, %v5054
        %v5056 = vrot.slane %v4828, 5
        %v5057 = vrot.slane %v5036, 5
        %v5058 = vsel %vm1625, %v5056, %v5057
        %v5059 = vrot.slane %v4829, 5
        %v5060 = vrot.slane %v5037, 5
        %v5061 = vsel %vm1625, %v5059, %v5060
        %v5062 = vrot.slane %v4830, 5
        %v5063 = vrot.slane %v5038, 5
        %v5064 = vsel %vm1625, %v5062, %v5063
        %v5065 = vrot.slane %v4831, 5
        %v5066 = vrot.slane %v5039, 5
        %v5067 = vsel %vm1625, %v5065, %v5066
        %v5068 = vrot.slane %v4832, 5
        %v5069 = vrot.slane %v5040, 5
        %v5070 = vsel %vm1625, %v5068, %v5069
        %v5071 = vrot.slane %v4833, 5
        %v5072 = vrot.slane %v5041, 5
        %v5073 = vsel %vm1625, %v5071, %v5072
        %v5074 = vrot.slane %v4834, 5
        %v5075 = vrot.slane %v5042, 5
        %v5076 = vsel %vm1625, %v5074, %v5075
        %v5077 = vrot.slane %v4835, 5
        %v5078 = vrot.slane %v5043, 5
        %v5079 = vsel %vm1625, %v5077, %v5078
        %v5080 = vrot.slane %v4836, 5
        %v5081 = vrot.slane %v5044, 5
        %v5082 = vsel %vm1625, %v5080, %v5081
        %v5083 = vrot.slane %v4837, 5
        %v5084 = vrot.slane %v5045, 5
        %v5085 = vsel %vm1625, %v5083, %v5084
        %v5086 = vrot.slane %v4838, 5
        %v5087 = vrot.slane %v5046, 5
        %v5088 = vsel %vm1625, %v5086, %v5087
        %v5089 = vrot.slane %v4839, 5
        %v5090 = vrot.slane %v5047, 5
        %v5091 = vsel %vm1625, %v5089, %v5090
        %v5092 = vrot.slane %v4840, 5
        %v5093 = vrot.slane %v5048, 5
        %v5094 = vsel %vm1625, %v5092, %v5093
        %v5095 = vrot.slane %v4841, 5
        %v5096 = vrot.slane %v5049, 5
        %v5097 = vsel %vm1625, %v5095, %v5096
        %5098 = vrot.lane.b32.xlu0 %v5050, 16
        %v5099 = vpop.permute.xlu0 %5098
        %5100 = vrot.lane.b32.xlu0 %v5052, 16
        %v5101 = vpop.permute.xlu0 %5100
        %5102 = vrot.lane.b32.xlu0 %v5053, 16
        %v5103 = vpop.permute.xlu0 %5102
        %5104 = vrot.lane.b32.xlu0 %v5055, 16
        %v5105 = vpop.permute.xlu0 %5104
        %5106 = vrot.lane.b32.xlu0 %v5056, 16
        %v5107 = vpop.permute.xlu0 %5106
        %5108 = vrot.lane.b32.xlu0 %v5058, 16
        %v5109 = vpop.permute.xlu0 %5108
        %5110 = vrot.lane.b32.xlu0 %v5059, 16
        %v5111 = vpop.permute.xlu0 %5110
        %5112 = vrot.lane.b32.xlu0 %v5061, 16
        %v5113 = vpop.permute.xlu0 %5112
        %5114 = vrot.lane.b32.xlu0 %v5062, 16
        %v5115 = vpop.permute.xlu0 %5114
        %5116 = vrot.lane.b32.xlu0 %v5064, 16
        %v5117 = vpop.permute.xlu0 %5116
        %5118 = vrot.lane.b32.xlu0 %v5065, 16
        %v5119 = vpop.permute.xlu0 %5118
        %5120 = vrot.lane.b32.xlu0 %v5067, 16
        %v5121 = vpop.permute.xlu0 %5120
        %5122 = vrot.lane.b32.xlu0 %v5068, 16
        %v5123 = vpop.permute.xlu0 %5122
        %5124 = vrot.lane.b32.xlu0 %v5070, 16
        %v5125 = vpop.permute.xlu0 %5124
        %5126 = vrot.lane.b32.xlu0 %v5071, 16
        %v5127 = vpop.permute.xlu0 %5126
        %5128 = vrot.lane.b32.xlu0 %v5073, 16
        %v5129 = vpop.permute.xlu0 %5128
        %5130 = vrot.lane.b32.xlu0 %v5074, 16
        %v5131 = vpop.permute.xlu0 %5130
        %5132 = vrot.lane.b32.xlu0 %v5076, 16
        %v5133 = vpop.permute.xlu0 %5132
        %5134 = vrot.lane.b32.xlu0 %v5077, 16
        %v5135 = vpop.permute.xlu0 %5134
        %5136 = vrot.lane.b32.xlu0 %v5079, 16
        %v5137 = vpop.permute.xlu0 %5136
        %5138 = vrot.lane.b32.xlu0 %v5080, 16
        %v5139 = vpop.permute.xlu0 %5138
        %5140 = vrot.lane.b32.xlu0 %v5082, 16
        %v5141 = vpop.permute.xlu0 %5140
        %5142 = vrot.lane.b32.xlu0 %v5083, 16
        %v5143 = vpop.permute.xlu0 %5142
        %5144 = vrot.lane.b32.xlu0 %v5085, 16
        %v5145 = vpop.permute.xlu0 %5144
        %5146 = vrot.lane.b32.xlu0 %v5086, 16
        %v5147 = vpop.permute.xlu0 %5146
        %5148 = vrot.lane.b32.xlu0 %v5088, 16
        %v5149 = vpop.permute.xlu0 %5148
        %5150 = vrot.lane.b32.xlu0 %v5089, 16
        %v5151 = vpop.permute.xlu0 %5150
        %5152 = vrot.lane.b32.xlu0 %v5091, 16
        %v5153 = vpop.permute.xlu0 %5152
        %5154 = vrot.lane.b32.xlu0 %v5092, 16
        %v5155 = vpop.permute.xlu0 %5154
        %5156 = vrot.lane.b32.xlu0 %v5094, 16
        %v5157 = vpop.permute.xlu0 %5156
        %5158 = vrot.lane.b32.xlu0 %v5095, 16
        %v5159 = vpop.permute.xlu0 %5158
        %5160 = vrot.lane.b32.xlu0 %v5097, 16
        %v5161 = vpop.permute.xlu0 %5160
        %v5210 = vunpack.c.l.b16 %v4569
        %v5211 = vunpack.c.l.b16 %v4570
        %v5212 = vunpack.c.l.b16 %v4571
        %v5213 = vunpack.c.l.b16 %v4572
        %v5214 = vunpack.c.l.b16 %v4573
        %v5215 = vunpack.c.l.b16 %v4574
        %v5216 = vunpack.c.l.b16 %v4575
        %v5217 = vunpack.c.l.b16 %v4576
        %v5218 = vunpack.c.l.b16 %v4577
        %v5219 = vunpack.c.l.b16 %v4578
        %v5220 = vunpack.c.l.b16 %v4579
        %v5221 = vunpack.c.l.b16 %v4580
        %v5222 = vunpack.c.l.b16 %v4581
        %v5223 = vunpack.c.l.b16 %v4582
        %v5224 = vunpack.c.l.b16 %v4583
        %v5225 = vunpack.c.l.b16 %v4584
        %v5226 = vunpack.c.l.b16 %v4585
        %v5227 = vunpack.c.l.b16 %v4586
        %v5228 = vunpack.c.l.b16 %v4587
        %v5229 = vunpack.c.l.b16 %v4588
        %v5230 = vunpack.c.l.b16 %v4589
        %v5231 = vunpack.c.l.b16 %v4590
        %v5232 = vunpack.c.l.b16 %v4591
        %v5233 = vunpack.c.l.b16 %v4592
        %v5234 = vunpack.c.l.b16 %v4593
        %v5235 = vunpack.c.l.b16 %v4594
        %v5236 = vunpack.c.l.b16 %v4595
        %v5237 = vunpack.c.l.b16 %v4596
        %v5238 = vunpack.c.l.b16 %v4597
        %v5239 = vunpack.c.l.b16 %v4598
        %v5240 = vunpack.c.l.b16 %v4599
        %v5241 = vunpack.c.l.b16 %v4600
        %v5242 = vunpack.c.l.b16 %v4601
        %v5243 = vunpack.c.l.b16 %v4602
        %v5244 = vunpack.c.l.b16 %v4603
        %v5245 = vunpack.c.l.b16 %v4604
        %v5246 = vunpack.c.l.b16 %v4605
        %v5247 = vunpack.c.l.b16 %v4606
        %v5248 = vunpack.c.l.b16 %v4607
        %v5249 = vunpack.c.l.b16 %v4608
        %v5250 = vunpack.c.l.b16 %v4609
        %v5251 = vunpack.c.l.b16 %v4610
        %v5252 = vunpack.c.l.b16 %v4611
        %v5253 = vunpack.c.l.b16 %v4612
        %v5254 = vunpack.c.l.b16 %v4613
        %v5255 = vunpack.c.l.b16 %v4614
        %v5256 = vunpack.c.l.b16 %v4615
        %v5257 = vunpack.c.l.b16 %v4616
        %v5258 = vpack.c.b16 %v5211, %v5210
        %v5259 = vpack.c.b16 %v5212, %v5212
        %v5260 = vpack.c.b16 %v5214, %v5213
        %v5261 = vpack.c.b16 %v5215, %v5215
        %v5262 = vpack.c.b16 %v5217, %v5216
        %v5263 = vpack.c.b16 %v5218, %v5218
        %v5264 = vpack.c.b16 %v5220, %v5219
        %v5265 = vpack.c.b16 %v5221, %v5221
        %v5266 = vpack.c.b16 %v5223, %v5222
        %v5267 = vpack.c.b16 %v5224, %v5224
        %v5268 = vpack.c.b16 %v5226, %v5225
        %v5269 = vpack.c.b16 %v5227, %v5227
        %v5270 = vpack.c.b16 %v5229, %v5228
        %v5271 = vpack.c.b16 %v5230, %v5230
        %v5272 = vpack.c.b16 %v5232, %v5231
        %v5273 = vpack.c.b16 %v5233, %v5233
        %v5274 = vpack.c.b16 %v5235, %v5234
        %v5275 = vpack.c.b16 %v5236, %v5236
        %v5276 = vpack.c.b16 %v5238, %v5237
        %v5277 = vpack.c.b16 %v5239, %v5239
        %v5278 = vpack.c.b16 %v5241, %v5240
        %v5279 = vpack.c.b16 %v5242, %v5242
        %v5280 = vpack.c.b16 %v5244, %v5243
        %v5281 = vpack.c.b16 %v5245, %v5245
        %v5282 = vpack.c.b16 %v5247, %v5246
        %v5283 = vpack.c.b16 %v5248, %v5248
        %v5284 = vpack.c.b16 %v5250, %v5249
        %v5285 = vpack.c.b16 %v5251, %v5251
        %v5286 = vpack.c.b16 %v5253, %v5252
        %v5287 = vpack.c.b16 %v5254, %v5254
        %v5288 = vpack.c.b16 %v5256, %v5255
        %v5289 = vpack.c.b16 %v5257, %v5257
        %5290 = vrot.lane.b32.xlu0 %v5258, 24
        %v5291 = vpop.permute.xlu0 %5290
        %5292 = vrot.lane.b32.xlu0 %v5259, 24
        %v5293 = vpop.permute.xlu0 %5292
        %5294 = vrot.lane.b32.xlu0 %v5260, 24
        %v5295 = vpop.permute.xlu0 %5294
        %5296 = vrot.lane.b32.xlu0 %v5261, 24
        %v5297 = vpop.permute.xlu0 %5296
        %5298 = vrot.lane.b32.xlu0 %v5262, 24
        %v5299 = vpop.permute.xlu0 %5298
        %5300 = vrot.lane.b32.xlu0 %v5263, 24
        %v5301 = vpop.permute.xlu0 %5300
        %5302 = vrot.lane.b32.xlu0 %v5264, 24
        %v5303 = vpop.permute.xlu0 %5302
        %5304 = vrot.lane.b32.xlu0 %v5265, 24
        %v5305 = vpop.permute.xlu0 %5304
        %5306 = vrot.lane.b32.xlu0 %v5266, 24
        %v5307 = vpop.permute.xlu0 %5306
        %5308 = vrot.lane.b32.xlu0 %v5267, 24
        %v5309 = vpop.permute.xlu0 %5308
        %5310 = vrot.lane.b32.xlu0 %v5268, 24
        %v5311 = vpop.permute.xlu0 %5310
        %5312 = vrot.lane.b32.xlu0 %v5269, 24
        %v5313 = vpop.permute.xlu0 %5312
        %5314 = vrot.lane.b32.xlu0 %v5270, 24
        %v5315 = vpop.permute.xlu0 %5314
        %5316 = vrot.lane.b32.xlu0 %v5271, 24
        %v5317 = vpop.permute.xlu0 %5316
        %5318 = vrot.lane.b32.xlu0 %v5272, 24
        %v5319 = vpop.permute.xlu0 %5318
        %5320 = vrot.lane.b32.xlu0 %v5273, 24
        %v5321 = vpop.permute.xlu0 %5320
        %5322 = vrot.lane.b32.xlu0 %v5274, 24
        %v5323 = vpop.permute.xlu0 %5322
        %5324 = vrot.lane.b32.xlu0 %v5275, 24
        %v5325 = vpop.permute.xlu0 %5324
        %5326 = vrot.lane.b32.xlu0 %v5276, 24
        %v5327 = vpop.permute.xlu0 %5326
        %5328 = vrot.lane.b32.xlu0 %v5277, 24
        %v5329 = vpop.permute.xlu0 %5328
        %5330 = vrot.lane.b32.xlu0 %v5278, 24
        %v5331 = vpop.permute.xlu0 %5330
        %5332 = vrot.lane.b32.xlu0 %v5279, 24
        %v5333 = vpop.permute.xlu0 %5332
        %5334 = vrot.lane.b32.xlu0 %v5280, 24
        %v5335 = vpop.permute.xlu0 %5334
        %5336 = vrot.lane.b32.xlu0 %v5281, 24
        %v5337 = vpop.permute.xlu0 %5336
        %5338 = vrot.lane.b32.xlu0 %v5282, 24
        %v5339 = vpop.permute.xlu0 %5338
        %5340 = vrot.lane.b32.xlu0 %v5283, 24
        %v5341 = vpop.permute.xlu0 %5340
        %5342 = vrot.lane.b32.xlu0 %v5284, 24
        %v5343 = vpop.permute.xlu0 %5342
        %5344 = vrot.lane.b32.xlu0 %v5285, 24
        %v5345 = vpop.permute.xlu0 %5344
        %5346 = vrot.lane.b32.xlu0 %v5286, 24
        %v5347 = vpop.permute.xlu0 %5346
        %5348 = vrot.lane.b32.xlu0 %v5287, 24
        %v5349 = vpop.permute.xlu0 %5348
        %5350 = vrot.lane.b32.xlu0 %v5288, 24
        %v5351 = vpop.permute.xlu0 %5350
        %5352 = vrot.lane.b32.xlu0 %v5289, 24
        %v5353 = vpop.permute.xlu0 %5352
        %v5354 = vpack.c.b16 %v5212, %v5211
        %v5355 = vpack.c.b16 %v5215, %v5214
        %v5356 = vpack.c.b16 %v5218, %v5217
        %v5357 = vpack.c.b16 %v5221, %v5220
        %v5358 = vpack.c.b16 %v5224, %v5223
        %v5359 = vpack.c.b16 %v5227, %v5226
        %v5360 = vpack.c.b16 %v5230, %v5229
        %v5361 = vpack.c.b16 %v5233, %v5232
        %v5362 = vpack.c.b16 %v5236, %v5235
        %v5363 = vpack.c.b16 %v5239, %v5238
        %v5364 = vpack.c.b16 %v5242, %v5241
        %v5365 = vpack.c.b16 %v5245, %v5244
        %v5366 = vpack.c.b16 %v5248, %v5247
        %v5367 = vpack.c.b16 %v5251, %v5250
        %v5368 = vpack.c.b16 %v5254, %v5253
        %v5369 = vpack.c.b16 %v5257, %v5256
        %v5371 = vshrl.u32 %v5354, 16
        %v5373 = vrot.slane %v5371, 4
        %v5374 = vshll.u32 %v5354, 16
        %v5376 = vrot.slane %v5374, 5
        %v5377 = vor.u32 %v5373, %v5376
        %v5379 = vshrl.u32 %v5355, 16
        %v5381 = vrot.slane %v5379, 4
        %v5382 = vshll.u32 %v5355, 16
        %v5384 = vrot.slane %v5382, 5
        %v5385 = vor.u32 %v5381, %v5384
        %v5387 = vshrl.u32 %v5356, 16
        %v5389 = vrot.slane %v5387, 4
        %v5390 = vshll.u32 %v5356, 16
        %v5392 = vrot.slane %v5390, 5
        %v5393 = vor.u32 %v5389, %v5392
        %v5395 = vshrl.u32 %v5357, 16
        %v5397 = vrot.slane %v5395, 4
        %v5398 = vshll.u32 %v5357, 16
        %v5400 = vrot.slane %v5398, 5
        %v5401 = vor.u32 %v5397, %v5400
        %v5403 = vshrl.u32 %v5358, 16
        %v5405 = vrot.slane %v5403, 4
        %v5406 = vshll.u32 %v5358, 16
        %v5408 = vrot.slane %v5406, 5
        %v5409 = vor.u32 %v5405, %v5408
        %v5411 = vshrl.u32 %v5359, 16
        %v5413 = vrot.slane %v5411, 4
        %v5414 = vshll.u32 %v5359, 16
        %v5416 = vrot.slane %v5414, 5
        %v5417 = vor.u32 %v5413, %v5416
        %v5419 = vshrl.u32 %v5360, 16
        %v5421 = vrot.slane %v5419, 4
        %v5422 = vshll.u32 %v5360, 16
        %v5424 = vrot.slane %v5422, 5
        %v5425 = vor.u32 %v5421, %v5424
        %v5427 = vshrl.u32 %v5361, 16
        %v5429 = vrot.slane %v5427, 4
        %v5430 = vshll.u32 %v5361, 16
        %v5432 = vrot.slane %v5430, 5
        %v5433 = vor.u32 %v5429, %v5432
        %v5435 = vshrl.u32 %v5362, 16
        %v5437 = vrot.slane %v5435, 4
        %v5438 = vshll.u32 %v5362, 16
        %v5440 = vrot.slane %v5438, 5
        %v5441 = vor.u32 %v5437, %v5440
        %v5443 = vshrl.u32 %v5363, 16
        %v5445 = vrot.slane %v5443, 4
        %v5446 = vshll.u32 %v5363, 16
        %v5448 = vrot.slane %v5446, 5
        %v5449 = vor.u32 %v5445, %v5448
        %v5451 = vshrl.u32 %v5364, 16
        %v5453 = vrot.slane %v5451, 4
        %v5454 = vshll.u32 %v5364, 16
        %v5456 = vrot.slane %v5454, 5
        %v5457 = vor.u32 %v5453, %v5456
        %v5459 = vshrl.u32 %v5365, 16
        %v5461 = vrot.slane %v5459, 4
        %v5462 = vshll.u32 %v5365, 16
        %v5464 = vrot.slane %v5462, 5
        %v5465 = vor.u32 %v5461, %v5464
        %v5467 = vshrl.u32 %v5366, 16
        %v5469 = vrot.slane %v5467, 4
        %v5470 = vshll.u32 %v5366, 16
        %v5472 = vrot.slane %v5470, 5
        %v5473 = vor.u32 %v5469, %v5472
        %v5475 = vshrl.u32 %v5367, 16
        %v5477 = vrot.slane %v5475, 4
        %v5478 = vshll.u32 %v5367, 16
        %v5480 = vrot.slane %v5478, 5
        %v5481 = vor.u32 %v5477, %v5480
        %v5483 = vshrl.u32 %v5368, 16
        %v5485 = vrot.slane %v5483, 4
        %v5486 = vshll.u32 %v5368, 16
        %v5488 = vrot.slane %v5486, 5
        %v5489 = vor.u32 %v5485, %v5488
        %v5491 = vshrl.u32 %v5369, 16
        %v5493 = vrot.slane %v5491, 4
        %v5494 = vshll.u32 %v5369, 16
        %v5496 = vrot.slane %v5494, 5
        %v5497 = vor.u32 %v5493, %v5496
        %5498 = vrot.lane.b32.xlu0 %v5377, 32
        %v5499 = vpop.permute.xlu0 %5498
        %5500 = vrot.lane.b32.xlu0 %v5385, 32
        %v5501 = vpop.permute.xlu0 %5500
        %5502 = vrot.lane.b32.xlu0 %v5393, 32
        %v5503 = vpop.permute.xlu0 %5502
        %5504 = vrot.lane.b32.xlu0 %v5401, 32
        %v5505 = vpop.permute.xlu0 %5504
        %5506 = vrot.lane.b32.xlu0 %v5409, 32
        %v5507 = vpop.permute.xlu0 %5506
        %5508 = vrot.lane.b32.xlu0 %v5417, 32
        %v5509 = vpop.permute.xlu0 %5508
        %5510 = vrot.lane.b32.xlu0 %v5425, 32
        %v5511 = vpop.permute.xlu0 %5510
        %5512 = vrot.lane.b32.xlu0 %v5433, 32
        %v5513 = vpop.permute.xlu0 %5512
        %5514 = vrot.lane.b32.xlu0 %v5441, 32
        %v5515 = vpop.permute.xlu0 %5514
        %5516 = vrot.lane.b32.xlu0 %v5449, 32
        %v5517 = vpop.permute.xlu0 %5516
        %5518 = vrot.lane.b32.xlu0 %v5457, 32
        %v5519 = vpop.permute.xlu0 %5518
        %5520 = vrot.lane.b32.xlu0 %v5465, 32
        %v5521 = vpop.permute.xlu0 %5520
        %5522 = vrot.lane.b32.xlu0 %v5473, 32
        %v5523 = vpop.permute.xlu0 %5522
        %5524 = vrot.lane.b32.xlu0 %v5481, 32
        %v5525 = vpop.permute.xlu0 %5524
        %5526 = vrot.lane.b32.xlu0 %v5489, 32
        %v5527 = vpop.permute.xlu0 %5526
        %5528 = vrot.lane.b32.xlu0 %v5497, 32
        %v5529 = vpop.permute.xlu0 %5528
        %v5546 = vunpack.c.l.b16 %v4617
        %v5547 = vunpack.c.l.b16 %v4618
        %v5548 = vunpack.c.l.b16 %v4619
        %v5549 = vunpack.c.l.b16 %v4620
        %v5550 = vunpack.c.l.b16 %v4621
        %v5551 = vunpack.c.l.b16 %v4622
        %v5552 = vunpack.c.l.b16 %v4623
        %v5553 = vunpack.c.l.b16 %v4624
        %v5554 = vunpack.c.l.b16 %v4625
        %v5555 = vunpack.c.l.b16 %v4626
        %v5556 = vunpack.c.l.b16 %v4627
        %v5557 = vunpack.c.l.b16 %v4628
        %v5558 = vunpack.c.l.b16 %v4629
        %v5559 = vunpack.c.l.b16 %v4630
        %v5560 = vunpack.c.l.b16 %v4631
        %v5561 = vunpack.c.l.b16 %v4632
        %v5562 = vpack.c.b16 %v5546, %v5546
        %v5563 = vpack.c.b16 %v5547, %v5547
        %v5564 = vpack.c.b16 %v5548, %v5548
        %v5565 = vpack.c.b16 %v5549, %v5549
        %v5566 = vpack.c.b16 %v5550, %v5550
        %v5567 = vpack.c.b16 %v5551, %v5551
        %v5568 = vpack.c.b16 %v5552, %v5552
        %v5569 = vpack.c.b16 %v5553, %v5553
        %v5570 = vpack.c.b16 %v5554, %v5554
        %v5571 = vpack.c.b16 %v5555, %v5555
        %v5572 = vpack.c.b16 %v5556, %v5556
        %v5573 = vpack.c.b16 %v5557, %v5557
        %v5574 = vpack.c.b16 %v5558, %v5558
        %v5575 = vpack.c.b16 %v5559, %v5559
        %v5576 = vpack.c.b16 %v5560, %v5560
        %v5577 = vpack.c.b16 %v5561, %v5561
        %v5578 = vrot.slane %v5354, 5
        %v5579 = vrot.slane %v5562, 5
        %v5580 = vsel %vm1625, %v5578, %v5579
        %v5581 = vrot.slane %v5355, 5
        %v5582 = vrot.slane %v5563, 5
        %v5583 = vsel %vm1625, %v5581, %v5582
        %v5584 = vrot.slane %v5356, 5
        %v5585 = vrot.slane %v5564, 5
        %v5586 = vsel %vm1625, %v5584, %v5585
        %v5587 = vrot.slane %v5357, 5
        %v5588 = vrot.slane %v5565, 5
        %v5589 = vsel %vm1625, %v5587, %v5588
        %v5590 = vrot.slane %v5358, 5
        %v5591 = vrot.slane %v5566, 5
        %v5592 = vsel %vm1625, %v5590, %v5591
        %v5593 = vrot.slane %v5359, 5
        %v5594 = vrot.slane %v5567, 5
        %v5595 = vsel %vm1625, %v5593, %v5594
        %v5596 = vrot.slane %v5360, 5
        %v5597 = vrot.slane %v5568, 5
        %v5598 = vsel %vm1625, %v5596, %v5597
        %v5599 = vrot.slane %v5361, 5
        %v5600 = vrot.slane %v5569, 5
        %v5601 = vsel %vm1625, %v5599, %v5600
        %v5602 = vrot.slane %v5362, 5
        %v5603 = vrot.slane %v5570, 5
        %v5604 = vsel %vm1625, %v5602, %v5603
        %v5605 = vrot.slane %v5363, 5
        %v5606 = vrot.slane %v5571, 5
        %v5607 = vsel %vm1625, %v5605, %v5606
        %v5608 = vrot.slane %v5364, 5
        %v5609 = vrot.slane %v5572, 5
        %v5610 = vsel %vm1625, %v5608, %v5609
        %v5611 = vrot.slane %v5365, 5
        %v5612 = vrot.slane %v5573, 5
        %v5613 = vsel %vm1625, %v5611, %v5612
        %v5614 = vrot.slane %v5366, 5
        %v5615 = vrot.slane %v5574, 5
        %v5616 = vsel %vm1625, %v5614, %v5615
        %v5617 = vrot.slane %v5367, 5
        %v5618 = vrot.slane %v5575, 5
        %v5619 = vsel %vm1625, %v5617, %v5618
        %v5620 = vrot.slane %v5368, 5
        %v5621 = vrot.slane %v5576, 5
        %v5622 = vsel %vm1625, %v5620, %v5621
        %v5623 = vrot.slane %v5369, 5
        %v5624 = vrot.slane %v5577, 5
        %v5625 = vsel %vm1625, %v5623, %v5624
        %5626 = vrot.lane.b32.xlu0 %v5578, 40
        %v5627 = vpop.permute.xlu0 %5626
        %5628 = vrot.lane.b32.xlu0 %v5580, 40
        %v5629 = vpop.permute.xlu0 %5628
        %5630 = vrot.lane.b32.xlu0 %v5581, 40
        %v5631 = vpop.permute.xlu0 %5630
        %5632 = vrot.lane.b32.xlu0 %v5583, 40
        %v5633 = vpop.permute.xlu0 %5632
        %5634 = vrot.lane.b32.xlu0 %v5584, 40
        %v5635 = vpop.permute.xlu0 %5634
        %5636 = vrot.lane.b32.xlu0 %v5586, 40
        %v5637 = vpop.permute.xlu0 %5636
        %5638 = vrot.lane.b32.xlu0 %v5587, 40
        %v5639 = vpop.permute.xlu0 %5638
        %5640 = vrot.lane.b32.xlu0 %v5589, 40
        %v5641 = vpop.permute.xlu0 %5640
        %5642 = vrot.lane.b32.xlu0 %v5590, 40
        %v5643 = vpop.permute.xlu0 %5642
        %5644 = vrot.lane.b32.xlu0 %v5592, 40
        %v5645 = vpop.permute.xlu0 %5644
        %5646 = vrot.lane.b32.xlu0 %v5593, 40
        %v5647 = vpop.permute.xlu0 %5646
        %5648 = vrot.lane.b32.xlu0 %v5595, 40
        %v5649 = vpop.permute.xlu0 %5648
        %5650 = vrot.lane.b32.xlu0 %v5596, 40
        %v5651 = vpop.permute.xlu0 %5650
        %5652 = vrot.lane.b32.xlu0 %v5598, 40
        %v5653 = vpop.permute.xlu0 %5652
        %5654 = vrot.lane.b32.xlu0 %v5599, 40
        %v5655 = vpop.permute.xlu0 %5654
        %5656 = vrot.lane.b32.xlu0 %v5601, 40
        %v5657 = vpop.permute.xlu0 %5656
        %5658 = vrot.lane.b32.xlu0 %v5602, 40
        %v5659 = vpop.permute.xlu0 %5658
        %5660 = vrot.lane.b32.xlu0 %v5604, 40
        %v5661 = vpop.permute.xlu0 %5660
        %5662 = vrot.lane.b32.xlu0 %v5605, 40
        %v5663 = vpop.permute.xlu0 %5662
        %5664 = vrot.lane.b32.xlu0 %v5607, 40
        %v5665 = vpop.permute.xlu0 %5664
        %5666 = vrot.lane.b32.xlu0 %v5608, 40
        %v5667 = vpop.permute.xlu0 %5666
        %5668 = vrot.lane.b32.xlu0 %v5610, 40
        %v5669 = vpop.permute.xlu0 %5668
        %5670 = vrot.lane.b32.xlu0 %v5611, 40
        %v5671 = vpop.permute.xlu0 %5670
        %5672 = vrot.lane.b32.xlu0 %v5613, 40
        %v5673 = vpop.permute.xlu0 %5672
        %5674 = vrot.lane.b32.xlu0 %v5614, 40
        %v5675 = vpop.permute.xlu0 %5674
        %5676 = vrot.lane.b32.xlu0 %v5616, 40
        %v5677 = vpop.permute.xlu0 %5676
        %5678 = vrot.lane.b32.xlu0 %v5617, 40
        %v5679 = vpop.permute.xlu0 %5678
        %5680 = vrot.lane.b32.xlu0 %v5619, 40
        %v5681 = vpop.permute.xlu0 %5680
        %5682 = vrot.lane.b32.xlu0 %v5620, 40
        %v5683 = vpop.permute.xlu0 %5682
        %5684 = vrot.lane.b32.xlu0 %v5622, 40
        %v5685 = vpop.permute.xlu0 %5684
        %5686 = vrot.lane.b32.xlu0 %v5623, 40
        %v5687 = vpop.permute.xlu0 %5686
        %5688 = vrot.lane.b32.xlu0 %v5625, 40
        %v5689 = vpop.permute.xlu0 %5688
        %v5738 = vunpack.c.l.b16 %v4634
        %v5739 = vunpack.c.l.b16 %v4635
        %v5740 = vunpack.c.l.b16 %v4636
        %v5741 = vunpack.c.l.b16 %v4637
        %v5742 = vunpack.c.l.b16 %v4638
        %v5743 = vunpack.c.l.b16 %v4639
        %v5744 = vunpack.c.l.b16 %v4640
        %v5745 = vunpack.c.l.b16 %v4641
        %v5746 = vunpack.c.l.b16 %v4642
        %v5747 = vunpack.c.l.b16 %v4643
        %v5748 = vunpack.c.l.b16 %v4644
        %v5749 = vunpack.c.l.b16 %v4645
        %v5750 = vunpack.c.l.b16 %v4646
        %v5751 = vunpack.c.l.b16 %v4647
        %v5752 = vunpack.c.l.b16 %v4648
        %v5753 = vunpack.c.l.b16 %v4649
        %v5754 = vunpack.c.l.b16 %v4650
        %v5755 = vunpack.c.l.b16 %v4651
        %v5756 = vunpack.c.l.b16 %v4652
        %v5757 = vunpack.c.l.b16 %v4653
        %v5758 = vunpack.c.l.b16 %v4654
        %v5759 = vunpack.c.l.b16 %v4655
        %v5760 = vunpack.c.l.b16 %v4656
        %v5761 = vunpack.c.l.b16 %v4657
        %v5762 = vunpack.c.l.b16 %v4658
        %v5763 = vunpack.c.l.b16 %v4659
        %v5764 = vunpack.c.l.b16 %v4660
        %v5765 = vunpack.c.l.b16 %v4661
        %v5766 = vunpack.c.l.b16 %v4662
        %v5767 = vunpack.c.l.b16 %v4663
        %v5768 = vunpack.c.l.b16 %v4664
        %v5769 = vunpack.c.l.b16 %v4665
        %v5770 = vunpack.c.l.b16 %v4666
        %v5771 = vunpack.c.l.b16 %v4667
        %v5772 = vunpack.c.l.b16 %v4668
        %v5773 = vunpack.c.l.b16 %v4669
        %v5774 = vunpack.c.l.b16 %v4670
        %v5775 = vunpack.c.l.b16 %v4671
        %v5776 = vunpack.c.l.b16 %v4672
        %v5777 = vunpack.c.l.b16 %v4673
        %v5778 = vunpack.c.l.b16 %v4674
        %v5779 = vunpack.c.l.b16 %v4675
        %v5780 = vunpack.c.l.b16 %v4676
        %v5781 = vunpack.c.l.b16 %v4677
        %v5782 = vunpack.c.l.b16 %v4678
        %v5783 = vunpack.c.l.b16 %v4679
        %v5784 = vunpack.c.l.b16 %v4680
        %v5785 = vunpack.c.l.b16 %v4681
        %v5786 = vpack.c.b16 %v5739, %v5738
        %v5787 = vpack.c.b16 %v5740, %v5740
        %v5788 = vpack.c.b16 %v5742, %v5741
        %v5789 = vpack.c.b16 %v5743, %v5743
        %v5790 = vpack.c.b16 %v5745, %v5744
        %v5791 = vpack.c.b16 %v5746, %v5746
        %v5792 = vpack.c.b16 %v5748, %v5747
        %v5793 = vpack.c.b16 %v5749, %v5749
        %v5794 = vpack.c.b16 %v5751, %v5750
        %v5795 = vpack.c.b16 %v5752, %v5752
        %v5796 = vpack.c.b16 %v5754, %v5753
        %v5797 = vpack.c.b16 %v5755, %v5755
        %v5798 = vpack.c.b16 %v5757, %v5756
        %v5799 = vpack.c.b16 %v5758, %v5758
        %v5800 = vpack.c.b16 %v5760, %v5759
        %v5801 = vpack.c.b16 %v5761, %v5761
        %v5802 = vpack.c.b16 %v5763, %v5762
        %v5803 = vpack.c.b16 %v5764, %v5764
        %v5804 = vpack.c.b16 %v5766, %v5765
        %v5805 = vpack.c.b16 %v5767, %v5767
        %v5806 = vpack.c.b16 %v5769, %v5768
        %v5807 = vpack.c.b16 %v5770, %v5770
        %v5808 = vpack.c.b16 %v5772, %v5771
        %v5809 = vpack.c.b16 %v5773, %v5773
        %v5810 = vpack.c.b16 %v5775, %v5774
        %v5811 = vpack.c.b16 %v5776, %v5776
        %v5812 = vpack.c.b16 %v5778, %v5777
        %v5813 = vpack.c.b16 %v5779, %v5779
        %v5814 = vpack.c.b16 %v5781, %v5780
        %v5815 = vpack.c.b16 %v5782, %v5782
        %v5816 = vpack.c.b16 %v5784, %v5783
        %v5817 = vpack.c.b16 %v5785, %v5785
        %5818 = vrot.lane.b32.xlu0 %v5786, 48
        %v5819 = vpop.permute.xlu0 %5818
        %5820 = vrot.lane.b32.xlu0 %v5787, 48
        %v5821 = vpop.permute.xlu0 %5820
        %5822 = vrot.lane.b32.xlu0 %v5788, 48
        %v5823 = vpop.permute.xlu0 %5822
        %5824 = vrot.lane.b32.xlu0 %v5789, 48
        %v5825 = vpop.permute.xlu0 %5824
        %5826 = vrot.lane.b32.xlu0 %v5790, 48
        %v5827 = vpop.permute.xlu0 %5826
        %5828 = vrot.lane.b32.xlu0 %v5791, 48
        %v5829 = vpop.permute.xlu0 %5828
        %5830 = vrot.lane.b32.xlu0 %v5792, 48
        %v5831 = vpop.permute.xlu0 %5830
        %5832 = vrot.lane.b32.xlu0 %v5793, 48
        %v5833 = vpop.permute.xlu0 %5832
        %5834 = vrot.lane.b32.xlu0 %v5794, 48
        %v5835 = vpop.permute.xlu0 %5834
        %5836 = vrot.lane.b32.xlu0 %v5795, 48
        %v5837 = vpop.permute.xlu0 %5836
        %5838 = vrot.lane.b32.xlu0 %v5796, 48
        %v5839 = vpop.permute.xlu0 %5838
        %5840 = vrot.lane.b32.xlu0 %v5797, 48
        %v5841 = vpop.permute.xlu0 %5840
        %5842 = vrot.lane.b32.xlu0 %v5798, 48
        %v5843 = vpop.permute.xlu0 %5842
        %5844 = vrot.lane.b32.xlu0 %v5799, 48
        %v5845 = vpop.permute.xlu0 %5844
        %5846 = vrot.lane.b32.xlu0 %v5800, 48
        %v5847 = vpop.permute.xlu0 %5846
        %5848 = vrot.lane.b32.xlu0 %v5801, 48
        %v5849 = vpop.permute.xlu0 %5848
        %5850 = vrot.lane.b32.xlu0 %v5802, 48
        %v5851 = vpop.permute.xlu0 %5850
        %5852 = vrot.lane.b32.xlu0 %v5803, 48
        %v5853 = vpop.permute.xlu0 %5852
        %5854 = vrot.lane.b32.xlu0 %v5804, 48
        %v5855 = vpop.permute.xlu0 %5854
        %5856 = vrot.lane.b32.xlu0 %v5805, 48
        %v5857 = vpop.permute.xlu0 %5856
        %5858 = vrot.lane.b32.xlu0 %v5806, 48
        %v5859 = vpop.permute.xlu0 %5858
        %5860 = vrot.lane.b32.xlu0 %v5807, 48
        %v5861 = vpop.permute.xlu0 %5860
        %5862 = vrot.lane.b32.xlu0 %v5808, 48
        %v5863 = vpop.permute.xlu0 %5862
        %5864 = vrot.lane.b32.xlu0 %v5809, 48
        %v5865 = vpop.permute.xlu0 %5864
        %5866 = vrot.lane.b32.xlu0 %v5810, 48
        %v5867 = vpop.permute.xlu0 %5866
        %5868 = vrot.lane.b32.xlu0 %v5811, 48
        %v5869 = vpop.permute.xlu0 %5868
        %5870 = vrot.lane.b32.xlu0 %v5812, 48
        %v5871 = vpop.permute.xlu0 %5870
        %5872 = vrot.lane.b32.xlu0 %v5813, 48
        %v5873 = vpop.permute.xlu0 %5872
        %5874 = vrot.lane.b32.xlu0 %v5814, 48
        %v5875 = vpop.permute.xlu0 %5874
        %5876 = vrot.lane.b32.xlu0 %v5815, 48
        %v5877 = vpop.permute.xlu0 %5876
        %5878 = vrot.lane.b32.xlu0 %v5816, 48
        %v5879 = vpop.permute.xlu0 %5878
        %5880 = vrot.lane.b32.xlu0 %v5817, 48
        %v5881 = vpop.permute.xlu0 %5880
        %v5882 = vpack.c.b16 %v5740, %v5739
        %v5883 = vpack.c.b16 %v5743, %v5742
        %v5884 = vpack.c.b16 %v5746, %v5745
        %v5885 = vpack.c.b16 %v5749, %v5748
        %v5886 = vpack.c.b16 %v5752, %v5751
        %v5887 = vpack.c.b16 %v5755, %v5754
        %v5888 = vpack.c.b16 %v5758, %v5757
        %v5889 = vpack.c.b16 %v5761, %v5760
        %v5890 = vpack.c.b16 %v5764, %v5763
        %v5891 = vpack.c.b16 %v5767, %v5766
        %v5892 = vpack.c.b16 %v5770, %v5769
        %v5893 = vpack.c.b16 %v5773, %v5772
        %v5894 = vpack.c.b16 %v5776, %v5775
        %v5895 = vpack.c.b16 %v5779, %v5778
        %v5896 = vpack.c.b16 %v5782, %v5781
        %v5897 = vpack.c.b16 %v5785, %v5784
        %v5899 = vshrl.u32 %v5882, 16
        %v5901 = vrot.slane %v5899, 4
        %v5902 = vshll.u32 %v5882, 16
        %v5904 = vrot.slane %v5902, 5
        %v5905 = vor.u32 %v5901, %v5904
        %v5907 = vshrl.u32 %v5883, 16
        %v5909 = vrot.slane %v5907, 4
        %v5910 = vshll.u32 %v5883, 16
        %v5912 = vrot.slane %v5910, 5
        %v5913 = vor.u32 %v5909, %v5912
        %v5915 = vshrl.u32 %v5884, 16
        %v5917 = vrot.slane %v5915, 4
        %v5918 = vshll.u32 %v5884, 16
        %v5920 = vrot.slane %v5918, 5
        %v5921 = vor.u32 %v5917, %v5920
        %v5923 = vshrl.u32 %v5885, 16
        %v5925 = vrot.slane %v5923, 4
        %v5926 = vshll.u32 %v5885, 16
        %v5928 = vrot.slane %v5926, 5
        %v5929 = vor.u32 %v5925, %v5928
        %v5931 = vshrl.u32 %v5886, 16
        %v5933 = vrot.slane %v5931, 4
        %v5934 = vshll.u32 %v5886, 16
        %v5936 = vrot.slane %v5934, 5
        %v5937 = vor.u32 %v5933, %v5936
        %v5939 = vshrl.u32 %v5887, 16
        %v5941 = vrot.slane %v5939, 4
        %v5942 = vshll.u32 %v5887, 16
        %v5944 = vrot.slane %v5942, 5
        %v5945 = vor.u32 %v5941, %v5944
        %v5947 = vshrl.u32 %v5888, 16
        %v5949 = vrot.slane %v5947, 4
        %v5950 = vshll.u32 %v5888, 16
        %v5952 = vrot.slane %v5950, 5
        %v5953 = vor.u32 %v5949, %v5952
        %v5955 = vshrl.u32 %v5889, 16
        %v5957 = vrot.slane %v5955, 4
        %v5958 = vshll.u32 %v5889, 16
        %v5960 = vrot.slane %v5958, 5
        %v5961 = vor.u32 %v5957, %v5960
        %v5963 = vshrl.u32 %v5890, 16
        %v5965 = vrot.slane %v5963, 4
        %v5966 = vshll.u32 %v5890, 16
        %v5968 = vrot.slane %v5966, 5
        %v5969 = vor.u32 %v5965, %v5968
        %v5971 = vshrl.u32 %v5891, 16
        %v5973 = vrot.slane %v5971, 4
        %v5974 = vshll.u32 %v5891, 16
        %v5976 = vrot.slane %v5974, 5
        %v5977 = vor.u32 %v5973, %v5976
        %v5979 = vshrl.u32 %v5892, 16
        %v5981 = vrot.slane %v5979, 4
        %v5982 = vshll.u32 %v5892, 16
        %v5984 = vrot.slane %v5982, 5
        %v5985 = vor.u32 %v5981, %v5984
        %v5987 = vshrl.u32 %v5893, 16
        %v5989 = vrot.slane %v5987, 4
        %v5990 = vshll.u32 %v5893, 16
        %v5992 = vrot.slane %v5990, 5
        %v5993 = vor.u32 %v5989, %v5992
        %v5995 = vshrl.u32 %v5894, 16
        %v5997 = vrot.slane %v5995, 4
        %v5998 = vshll.u32 %v5894, 16
        %v6000 = vrot.slane %v5998, 5
        %v6001 = vor.u32 %v5997, %v6000
        %v6003 = vshrl.u32 %v5895, 16
        %v6005 = vrot.slane %v6003, 4
        %v6006 = vshll.u32 %v5895, 16
        %v6008 = vrot.slane %v6006, 5
        %v6009 = vor.u32 %v6005, %v6008
        %v6011 = vshrl.u32 %v5896, 16
        %v6013 = vrot.slane %v6011, 4
        %v6014 = vshll.u32 %v5896, 16
        %v6016 = vrot.slane %v6014, 5
        %v6017 = vor.u32 %v6013, %v6016
        %v6019 = vshrl.u32 %v5897, 16
        %v6021 = vrot.slane %v6019, 4
        %v6022 = vshll.u32 %v5897, 16
        %v6024 = vrot.slane %v6022, 5
        %v6025 = vor.u32 %v6021, %v6024
        %6026 = vrot.lane.b32.xlu0 %v5905, 56
        %v6027 = vpop.permute.xlu0 %6026
        %6028 = vrot.lane.b32.xlu0 %v5913, 56
        %v6029 = vpop.permute.xlu0 %6028
        %6030 = vrot.lane.b32.xlu0 %v5921, 56
        %v6031 = vpop.permute.xlu0 %6030
        %6032 = vrot.lane.b32.xlu0 %v5929, 56
        %v6033 = vpop.permute.xlu0 %6032
        %6034 = vrot.lane.b32.xlu0 %v5937, 56
        %v6035 = vpop.permute.xlu0 %6034
        %6036 = vrot.lane.b32.xlu0 %v5945, 56
        %v6037 = vpop.permute.xlu0 %6036
        %6038 = vrot.lane.b32.xlu0 %v5953, 56
        %v6039 = vpop.permute.xlu0 %6038
        %6040 = vrot.lane.b32.xlu0 %v5961, 56
        %v6041 = vpop.permute.xlu0 %6040
        %6042 = vrot.lane.b32.xlu0 %v5969, 56
        %v6043 = vpop.permute.xlu0 %6042
        %6044 = vrot.lane.b32.xlu0 %v5977, 56
        %v6045 = vpop.permute.xlu0 %6044
        %6046 = vrot.lane.b32.xlu0 %v5985, 56
        %v6047 = vpop.permute.xlu0 %6046
        %6048 = vrot.lane.b32.xlu0 %v5993, 56
        %v6049 = vpop.permute.xlu0 %6048
        %6050 = vrot.lane.b32.xlu0 %v6001, 56
        %v6051 = vpop.permute.xlu0 %6050
        %6052 = vrot.lane.b32.xlu0 %v6009, 56
        %v6053 = vpop.permute.xlu0 %6052
        %6054 = vrot.lane.b32.xlu0 %v6017, 56
        %v6055 = vpop.permute.xlu0 %6054
        %6056 = vrot.lane.b32.xlu0 %v6025, 56
        %v6057 = vpop.permute.xlu0 %6056
        %v6074 = vunpack.c.l.b16 %v4682
        %v6075 = vunpack.c.l.b16 %v4683
        %v6076 = vunpack.c.l.b16 %v4684
        %v6077 = vunpack.c.l.b16 %v4685
        %v6078 = vunpack.c.l.b16 %v4686
        %v6079 = vunpack.c.l.b16 %v4687
        %v6080 = vunpack.c.l.b16 %v4688
        %v6081 = vunpack.c.l.b16 %v4689
        %v6082 = vunpack.c.l.b16 %v4690
        %v6083 = vunpack.c.l.b16 %v4691
        %v6084 = vunpack.c.l.b16 %v4692
        %v6085 = vunpack.c.l.b16 %v4693
        %v6086 = vunpack.c.l.b16 %v4694
        %v6087 = vunpack.c.l.b16 %v4695
        %v6088 = vunpack.c.l.b16 %v4696
        %v6089 = vunpack.c.l.b16 %v4697
        %v6090 = vpack.c.b16 %v6074, %v6074
        %v6091 = vpack.c.b16 %v6075, %v6075
        %v6092 = vpack.c.b16 %v6076, %v6076
        %v6093 = vpack.c.b16 %v6077, %v6077
        %v6094 = vpack.c.b16 %v6078, %v6078
        %v6095 = vpack.c.b16 %v6079, %v6079
        %v6096 = vpack.c.b16 %v6080, %v6080
        %v6097 = vpack.c.b16 %v6081, %v6081
        %v6098 = vpack.c.b16 %v6082, %v6082
        %v6099 = vpack.c.b16 %v6083, %v6083
        %v6100 = vpack.c.b16 %v6084, %v6084
        %v6101 = vpack.c.b16 %v6085, %v6085
        %v6102 = vpack.c.b16 %v6086, %v6086
        %v6103 = vpack.c.b16 %v6087, %v6087
        %v6104 = vpack.c.b16 %v6088, %v6088
        %v6105 = vpack.c.b16 %v6089, %v6089
        %v6106 = vrot.slane %v5882, 5
        %v6107 = vrot.slane %v6090, 5
        %v6108 = vsel %vm1625, %v6106, %v6107
        %v6109 = vrot.slane %v5883, 5
        %v6110 = vrot.slane %v6091, 5
        %v6111 = vsel %vm1625, %v6109, %v6110
        %v6112 = vrot.slane %v5884, 5
        %v6113 = vrot.slane %v6092, 5
        %v6114 = vsel %vm1625, %v6112, %v6113
        %v6115 = vrot.slane %v5885, 5
        %v6116 = vrot.slane %v6093, 5
        %v6117 = vsel %vm1625, %v6115, %v6116
        %v6118 = vrot.slane %v5886, 5
        %v6119 = vrot.slane %v6094, 5
        %v6120 = vsel %vm1625, %v6118, %v6119
        %v6121 = vrot.slane %v5887, 5
        %v6122 = vrot.slane %v6095, 5
        %v6123 = vsel %vm1625, %v6121, %v6122
        %v6124 = vrot.slane %v5888, 5
        %v6125 = vrot.slane %v6096, 5
        %v6126 = vsel %vm1625, %v6124, %v6125
        %v6127 = vrot.slane %v5889, 5
        %v6128 = vrot.slane %v6097, 5
        %v6129 = vsel %vm1625, %v6127, %v6128
        %v6130 = vrot.slane %v5890, 5
        %v6131 = vrot.slane %v6098, 5
        %v6132 = vsel %vm1625, %v6130, %v6131
        %v6133 = vrot.slane %v5891, 5
        %v6134 = vrot.slane %v6099, 5
        %v6135 = vsel %vm1625, %v6133, %v6134
        %v6136 = vrot.slane %v5892, 5
        %v6137 = vrot.slane %v6100, 5
        %v6138 = vsel %vm1625, %v6136, %v6137
        %v6139 = vrot.slane %v5893, 5
        %v6140 = vrot.slane %v6101, 5
        %v6141 = vsel %vm1625, %v6139, %v6140
        %v6142 = vrot.slane %v5894, 5
        %v6143 = vrot.slane %v6102, 5
        %v6144 = vsel %vm1625, %v6142, %v6143
        %v6145 = vrot.slane %v5895, 5
        %v6146 = vrot.slane %v6103, 5
        %v6147 = vsel %vm1625, %v6145, %v6146
        %v6148 = vrot.slane %v5896, 5
        %v6149 = vrot.slane %v6104, 5
        %v6150 = vsel %vm1625, %v6148, %v6149
        %v6151 = vrot.slane %v5897, 5
        %v6152 = vrot.slane %v6105, 5
        %v6153 = vsel %vm1625, %v6151, %v6152
        %6154 = vrot.lane.b32.xlu0 %v6106, 64
        %v6155 = vpop.permute.xlu0 %6154
        %6156 = vrot.lane.b32.xlu0 %v6108, 64
        %v6157 = vpop.permute.xlu0 %6156
        %6158 = vrot.lane.b32.xlu0 %v6109, 64
        %v6159 = vpop.permute.xlu0 %6158
        %6160 = vrot.lane.b32.xlu0 %v6111, 64
        %v6161 = vpop.permute.xlu0 %6160
        %6162 = vrot.lane.b32.xlu0 %v6112, 64
        %v6163 = vpop.permute.xlu0 %6162
        %6164 = vrot.lane.b32.xlu0 %v6114, 64
        %v6165 = vpop.permute.xlu0 %6164
        %6166 = vrot.lane.b32.xlu0 %v6115, 64
        %v6167 = vpop.permute.xlu0 %6166
        %6168 = vrot.lane.b32.xlu0 %v6117, 64
        %v6169 = vpop.permute.xlu0 %6168
        %6170 = vrot.lane.b32.xlu0 %v6118, 64
        %v6171 = vpop.permute.xlu0 %6170
        %6172 = vrot.lane.b32.xlu0 %v6120, 64
        %v6173 = vpop.permute.xlu0 %6172
        %6174 = vrot.lane.b32.xlu0 %v6121, 64
        %v6175 = vpop.permute.xlu0 %6174
        %6176 = vrot.lane.b32.xlu0 %v6123, 64
        %v6177 = vpop.permute.xlu0 %6176
        %6178 = vrot.lane.b32.xlu0 %v6124, 64
        %v6179 = vpop.permute.xlu0 %6178
        %6180 = vrot.lane.b32.xlu0 %v6126, 64
        %v6181 = vpop.permute.xlu0 %6180
        %6182 = vrot.lane.b32.xlu0 %v6127, 64
        %v6183 = vpop.permute.xlu0 %6182
        %6184 = vrot.lane.b32.xlu0 %v6129, 64
        %v6185 = vpop.permute.xlu0 %6184
        %6186 = vrot.lane.b32.xlu0 %v6130, 64
        %v6187 = vpop.permute.xlu0 %6186
        %6188 = vrot.lane.b32.xlu0 %v6132, 64
        %v6189 = vpop.permute.xlu0 %6188
        %6190 = vrot.lane.b32.xlu0 %v6133, 64
        %v6191 = vpop.permute.xlu0 %6190
        %6192 = vrot.lane.b32.xlu0 %v6135, 64
        %v6193 = vpop.permute.xlu0 %6192
        %6194 = vrot.lane.b32.xlu0 %v6136, 64
        %v6195 = vpop.permute.xlu0 %6194
        %6196 = vrot.lane.b32.xlu0 %v6138, 64
        %v6197 = vpop.permute.xlu0 %6196
        %6198 = vrot.lane.b32.xlu0 %v6139, 64
        %v6199 = vpop.permute.xlu0 %6198
        %6200 = vrot.lane.b32.xlu0 %v6141, 64
        %v6201 = vpop.permute.xlu0 %6200
        %6202 = vrot.lane.b32.xlu0 %v6142, 64
        %v6203 = vpop.permute.xlu0 %6202
        %6204 = vrot.lane.b32.xlu0 %v6144, 64
        %v6205 = vpop.permute.xlu0 %6204
        %6206 = vrot.lane.b32.xlu0 %v6145, 64
        %v6207 = vpop.permute.xlu0 %6206
        %6208 = vrot.lane.b32.xlu0 %v6147, 64
        %v6209 = vpop.permute.xlu0 %6208
        %6210 = vrot.lane.b32.xlu0 %v6148, 64
        %v6211 = vpop.permute.xlu0 %6210
        %6212 = vrot.lane.b32.xlu0 %v6150, 64
        %v6213 = vpop.permute.xlu0 %6212
        %6214 = vrot.lane.b32.xlu0 %v6151, 64
        %v6215 = vpop.permute.xlu0 %6214
        %6216 = vrot.lane.b32.xlu0 %v6153, 64
        %v6217 = vpop.permute.xlu0 %6216
        %v6220 = vsel %vm2875, %v4794, %v4971
        %v6222 = vsel %vm2875, %v4795, %v4971
        %v6225 = vsel %vm2875, %v4796, %v4973
        %v6227 = vsel %vm2875, %v4797, %v4973
        %v6230 = vsel %vm2875, %v4798, %v4975
        %v6232 = vsel %vm2875, %v4799, %v4975
        %v6235 = vsel %vm2875, %v4800, %v4977
        %v6237 = vsel %vm2875, %v4801, %v4977
        %v6240 = vsel %vm2875, %v4802, %v4979
        %v6242 = vsel %vm2875, %v4803, %v4979
        %v6245 = vsel %vm2875, %v4804, %v4981
        %v6247 = vsel %vm2875, %v4805, %v4981
        %v6250 = vsel %vm2875, %v4806, %v4983
        %v6252 = vsel %vm2875, %v4807, %v4983
        %v6255 = vsel %vm2875, %v4808, %v4985
        %v6257 = vsel %vm2875, %v4809, %v4985
        %v6260 = vsel %vm2875, %v4810, %v4987
        %v6262 = vsel %vm2875, %v4811, %v4987
        %v6265 = vsel %vm2875, %v4812, %v4989
        %v6267 = vsel %vm2875, %v4813, %v4989
        %v6270 = vsel %vm2875, %v4814, %v4991
        %v6272 = vsel %vm2875, %v4815, %v4991
        %v6275 = vsel %vm2875, %v4816, %v4993
        %v6277 = vsel %vm2875, %v4817, %v4993
        %v6280 = vsel %vm2875, %v4818, %v4995
        %v6282 = vsel %vm2875, %v4819, %v4995
        %v6285 = vsel %vm2875, %v4820, %v4997
        %v6287 = vsel %vm2875, %v4821, %v4997
        %v6290 = vsel %vm2875, %v4822, %v4999
        %v6292 = vsel %vm2875, %v4823, %v4999
        %v6295 = vsel %vm2875, %v4824, %v5001
        %v6297 = vsel %vm2875, %v4825, %v5001
        %v6299 = vsel %vm3005, %v6220, %v5099
        %v6301 = vsel %vm3005, %v6222, %v5101
        %v6303 = vsel %vm3005, %v6225, %v5103
        %v6305 = vsel %vm3005, %v6227, %v5105
        %v6307 = vsel %vm3005, %v6230, %v5107
        %v6309 = vsel %vm3005, %v6232, %v5109
        %v6311 = vsel %vm3005, %v6235, %v5111
        %v6313 = vsel %vm3005, %v6237, %v5113
        %v6315 = vsel %vm3005, %v6240, %v5115
        %v6317 = vsel %vm3005, %v6242, %v5117
        %v6319 = vsel %vm3005, %v6245, %v5119
        %v6321 = vsel %vm3005, %v6247, %v5121
        %v6323 = vsel %vm3005, %v6250, %v5123
        %v6325 = vsel %vm3005, %v6252, %v5125
        %v6327 = vsel %vm3005, %v6255, %v5127
        %v6329 = vsel %vm3005, %v6257, %v5129
        %v6331 = vsel %vm3005, %v6260, %v5131
        %v6333 = vsel %vm3005, %v6262, %v5133
        %v6335 = vsel %vm3005, %v6265, %v5135
        %v6337 = vsel %vm3005, %v6267, %v5137
        %v6339 = vsel %vm3005, %v6270, %v5139
        %v6341 = vsel %vm3005, %v6272, %v5141
        %v6343 = vsel %vm3005, %v6275, %v5143
        %v6345 = vsel %vm3005, %v6277, %v5145
        %v6347 = vsel %vm3005, %v6280, %v5147
        %v6349 = vsel %vm3005, %v6282, %v5149
        %v6351 = vsel %vm3005, %v6285, %v5151
        %v6353 = vsel %vm3005, %v6287, %v5153
        %v6355 = vsel %vm3005, %v6290, %v5155
        %v6357 = vsel %vm3005, %v6292, %v5157
        %v6359 = vsel %vm3005, %v6295, %v5159
        %v6361 = vsel %vm3005, %v6297, %v5161
        %v6363 = vsel %vm3119, %v6299, %v5291
        %v6365 = vsel %vm3119, %v6301, %v5293
        %v6367 = vsel %vm3119, %v6303, %v5295
        %v6369 = vsel %vm3119, %v6305, %v5297
        %v6371 = vsel %vm3119, %v6307, %v5299
        %v6373 = vsel %vm3119, %v6309, %v5301
        %v6375 = vsel %vm3119, %v6311, %v5303
        %v6377 = vsel %vm3119, %v6313, %v5305
        %v6379 = vsel %vm3119, %v6315, %v5307
        %v6381 = vsel %vm3119, %v6317, %v5309
        %v6383 = vsel %vm3119, %v6319, %v5311
        %v6385 = vsel %vm3119, %v6321, %v5313
        %v6387 = vsel %vm3119, %v6323, %v5315
        %v6389 = vsel %vm3119, %v6325, %v5317
        %v6391 = vsel %vm3119, %v6327, %v5319
        %v6393 = vsel %vm3119, %v6329, %v5321
        %v6395 = vsel %vm3119, %v6331, %v5323
        %v6397 = vsel %vm3119, %v6333, %v5325
        %v6399 = vsel %vm3119, %v6335, %v5327
        %v6401 = vsel %vm3119, %v6337, %v5329
        %v6403 = vsel %vm3119, %v6339, %v5331
        %v6405 = vsel %vm3119, %v6341, %v5333
        %v6407 = vsel %vm3119, %v6343, %v5335
        %v6409 = vsel %vm3119, %v6345, %v5337
        %v6411 = vsel %vm3119, %v6347, %v5339
        %v6413 = vsel %vm3119, %v6349, %v5341
        %v6415 = vsel %vm3119, %v6351, %v5343
        %v6417 = vsel %vm3119, %v6353, %v5345
        %v6419 = vsel %vm3119, %v6355, %v5347
        %v6421 = vsel %vm3119, %v6357, %v5349
        %v6423 = vsel %vm3119, %v6359, %v5351
        %v6425 = vsel %vm3119, %v6361, %v5353
        %v6427 = vsel %vm3233, %v6363, %v5499
        %v6428 = vsel %vm3233, %v6365, %v5499
        %v6430 = vsel %vm3233, %v6367, %v5501
        %v6431 = vsel %vm3233, %v6369, %v5501
        %v6433 = vsel %vm3233, %v6371, %v5503
        %v6434 = vsel %vm3233, %v6373, %v5503
        %v6436 = vsel %vm3233, %v6375, %v5505
        %v6437 = vsel %vm3233, %v6377, %v5505
        %v6439 = vsel %vm3233, %v6379, %v5507
        %v6440 = vsel %vm3233, %v6381, %v5507
        %v6442 = vsel %vm3233, %v6383, %v5509
        %v6443 = vsel %vm3233, %v6385, %v5509
        %v6445 = vsel %vm3233, %v6387, %v5511
        %v6446 = vsel %vm3233, %v6389, %v5511
        %v6448 = vsel %vm3233, %v6391, %v5513
        %v6449 = vsel %vm3233, %v6393, %v5513
        %v6451 = vsel %vm3233, %v6395, %v5515
        %v6452 = vsel %vm3233, %v6397, %v5515
        %v6454 = vsel %vm3233, %v6399, %v5517
        %v6455 = vsel %vm3233, %v6401, %v5517
        %v6457 = vsel %vm3233, %v6403, %v5519
        %v6458 = vsel %vm3233, %v6405, %v5519
        %v6460 = vsel %vm3233, %v6407, %v5521
        %v6461 = vsel %vm3233, %v6409, %v5521
        %v6463 = vsel %vm3233, %v6411, %v5523
        %v6464 = vsel %vm3233, %v6413, %v5523
        %v6466 = vsel %vm3233, %v6415, %v5525
        %v6467 = vsel %vm3233, %v6417, %v5525
        %v6469 = vsel %vm3233, %v6419, %v5527
        %v6470 = vsel %vm3233, %v6421, %v5527
        %v6472 = vsel %vm3233, %v6423, %v5529
        %v6473 = vsel %vm3233, %v6425, %v5529
        %vm6474 = vcmask 326656
        %v6476 = vsel %vm6474, %v6427, %v5627
        %v6478 = vsel %vm6474, %v6428, %v5629
        %v6480 = vsel %vm6474, %v6430, %v5631
        %v6482 = vsel %vm6474, %v6431, %v5633
        %v6484 = vsel %vm6474, %v6433, %v5635
        %v6486 = vsel %vm6474, %v6434, %v5637
        %v6488 = vsel %vm6474, %v6436, %v5639
        %v6490 = vsel %vm6474, %v6437, %v5641
        %v6492 = vsel %vm6474, %v6439, %v5643
        %v6494 = vsel %vm6474, %v6440, %v5645
        %v6496 = vsel %vm6474, %v6442, %v5647
        %v6498 = vsel %vm6474, %v6443, %v5649
        %v6500 = vsel %vm6474, %v6445, %v5651
        %v6502 = vsel %vm6474, %v6446, %v5653
        %v6504 = vsel %vm6474, %v6448, %v5655
        %v6506 = vsel %vm6474, %v6449, %v5657
        %v6508 = vsel %vm6474, %v6451, %v5659
        %v6510 = vsel %vm6474, %v6452, %v5661
        %v6512 = vsel %vm6474, %v6454, %v5663
        %v6514 = vsel %vm6474, %v6455, %v5665
        %v6516 = vsel %vm6474, %v6457, %v5667
        %v6518 = vsel %vm6474, %v6458, %v5669
        %v6520 = vsel %vm6474, %v6460, %v5671
        %v6522 = vsel %vm6474, %v6461, %v5673
        %v6524 = vsel %vm6474, %v6463, %v5675
        %v6526 = vsel %vm6474, %v6464, %v5677
        %v6528 = vsel %vm6474, %v6466, %v5679
        %v6530 = vsel %vm6474, %v6467, %v5681
        %v6532 = vsel %vm6474, %v6469, %v5683
        %v6534 = vsel %vm6474, %v6470, %v5685
        %v6536 = vsel %vm6474, %v6472, %v5687
        %v6538 = vsel %vm6474, %v6473, %v5689
        %vm6539 = vcmask 392192
        %v6541 = vsel %vm6539, %v6476, %v5819
        %v6543 = vsel %vm6539, %v6478, %v5821
        %v6545 = vsel %vm6539, %v6480, %v5823
        %v6547 = vsel %vm6539, %v6482, %v5825
        %v6549 = vsel %vm6539, %v6484, %v5827
        %v6551 = vsel %vm6539, %v6486, %v5829
        %v6553 = vsel %vm6539, %v6488, %v5831
        %v6555 = vsel %vm6539, %v6490, %v5833
        %v6557 = vsel %vm6539, %v6492, %v5835
        %v6559 = vsel %vm6539, %v6494, %v5837
        %v6561 = vsel %vm6539, %v6496, %v5839
        %v6563 = vsel %vm6539, %v6498, %v5841
        %v6565 = vsel %vm6539, %v6500, %v5843
        %v6567 = vsel %vm6539, %v6502, %v5845
        %v6569 = vsel %vm6539, %v6504, %v5847
        %v6571 = vsel %vm6539, %v6506, %v5849
        %v6573 = vsel %vm6539, %v6508, %v5851
        %v6575 = vsel %vm6539, %v6510, %v5853
        %v6577 = vsel %vm6539, %v6512, %v5855
        %v6579 = vsel %vm6539, %v6514, %v5857
        %v6581 = vsel %vm6539, %v6516, %v5859
        %v6583 = vsel %vm6539, %v6518, %v5861
        %v6585 = vsel %vm6539, %v6520, %v5863
        %v6587 = vsel %vm6539, %v6522, %v5865
        %v6589 = vsel %vm6539, %v6524, %v5867
        %v6591 = vsel %vm6539, %v6526, %v5869
        %v6593 = vsel %vm6539, %v6528, %v5871
        %v6595 = vsel %vm6539, %v6530, %v5873
        %v6597 = vsel %vm6539, %v6532, %v5875
        %v6599 = vsel %vm6539, %v6534, %v5877
        %v6601 = vsel %vm6539, %v6536, %v5879
        %v6603 = vsel %vm6539, %v6538, %v5881
        %vm6604 = vcmask 457728
        %v6606 = vsel %vm6604, %v6541, %v6027
        %v6607 = vsel %vm6604, %v6543, %v6027
        %v6609 = vsel %vm6604, %v6545, %v6029
        %v6610 = vsel %vm6604, %v6547, %v6029
        %v6612 = vsel %vm6604, %v6549, %v6031
        %v6613 = vsel %vm6604, %v6551, %v6031
        %v6615 = vsel %vm6604, %v6553, %v6033
        %v6616 = vsel %vm6604, %v6555, %v6033
        %v6618 = vsel %vm6604, %v6557, %v6035
        %v6619 = vsel %vm6604, %v6559, %v6035
        %v6621 = vsel %vm6604, %v6561, %v6037
        %v6622 = vsel %vm6604, %v6563, %v6037
        %v6624 = vsel %vm6604, %v6565, %v6039
        %v6625 = vsel %vm6604, %v6567, %v6039
        %v6627 = vsel %vm6604, %v6569, %v6041
        %v6628 = vsel %vm6604, %v6571, %v6041
        %v6630 = vsel %vm6604, %v6573, %v6043
        %v6631 = vsel %vm6604, %v6575, %v6043
        %v6633 = vsel %vm6604, %v6577, %v6045
        %v6634 = vsel %vm6604, %v6579, %v6045
        %v6636 = vsel %vm6604, %v6581, %v6047
        %v6637 = vsel %vm6604, %v6583, %v6047
        %v6639 = vsel %vm6604, %v6585, %v6049
        %v6640 = vsel %vm6604, %v6587, %v6049
        %v6642 = vsel %vm6604, %v6589, %v6051
        %v6643 = vsel %vm6604, %v6591, %v6051
        %v6645 = vsel %vm6604, %v6593, %v6053
        %v6646 = vsel %vm6604, %v6595, %v6053
        %v6648 = vsel %vm6604, %v6597, %v6055
        %v6649 = vsel %vm6604, %v6599, %v6055
        %v6651 = vsel %vm6604, %v6601, %v6057
        %v6652 = vsel %vm6604, %v6603, %v6057
        %vm6653 = vcmask 523264
        %v6655 = vsel %vm6653, %v6606, %v6155
        %v6657 = vsel %vm6653, %v6607, %v6157
        %v6659 = vsel %vm6653, %v6609, %v6159
        %v6661 = vsel %vm6653, %v6610, %v6161
        %v6663 = vsel %vm6653, %v6612, %v6163
        %v6665 = vsel %vm6653, %v6613, %v6165
        %v6667 = vsel %vm6653, %v6615, %v6167
        %v6669 = vsel %vm6653, %v6616, %v6169
        %v6671 = vsel %vm6653, %v6618, %v6171
        %v6673 = vsel %vm6653, %v6619, %v6173
        %v6675 = vsel %vm6653, %v6621, %v6175
        %v6677 = vsel %vm6653, %v6622, %v6177
        %v6679 = vsel %vm6653, %v6624, %v6179
        %v6681 = vsel %vm6653, %v6625, %v6181
        %v6683 = vsel %vm6653, %v6627, %v6183
        %v6685 = vsel %vm6653, %v6628, %v6185
        %v6687 = vsel %vm6653, %v6630, %v6187
        %v6689 = vsel %vm6653, %v6631, %v6189
        %v6691 = vsel %vm6653, %v6633, %v6191
        %v6693 = vsel %vm6653, %v6634, %v6193
        %v6695 = vsel %vm6653, %v6636, %v6195
        %v6697 = vsel %vm6653, %v6637, %v6197
        %v6699 = vsel %vm6653, %v6639, %v6199
        %v6701 = vsel %vm6653, %v6640, %v6201
        %v6703 = vsel %vm6653, %v6642, %v6203
        %v6705 = vsel %vm6653, %v6643, %v6205
        %v6707 = vsel %vm6653, %v6645, %v6207
        %v6709 = vsel %vm6653, %v6646, %v6209
        %v6711 = vsel %vm6653, %v6648, %v6211
        %v6713 = vsel %vm6653, %v6649, %v6213
        %v6715 = vsel %vm6653, %v6651, %v6215
        %v6717 = vsel %vm6653, %v6652, %v6217
        %v6718 = vshrl.u32 %v6655, 16
        %v6720 = vrot.slane %v6718, 3
        %v6721 = vshll.u32 %v6655, 16
        %v6723 = vrot.slane %v6721, 4
        %v6724 = vor.u32 %v6720, %v6723
        %v6725 = vshrl.u32 %v6657, 16
        %v6727 = vrot.slane %v6725, 3
        %v6728 = vshll.u32 %v6657, 16
        %v6730 = vrot.slane %v6728, 4
        %v6731 = vor.u32 %v6727, %v6730
        %v6732 = vsel %vm3298, %v6724, %v6731
        %v6733 = vshrl.u32 %v6659, 16
        %v6735 = vrot.slane %v6733, 3
        %v6736 = vshll.u32 %v6659, 16
        %v6738 = vrot.slane %v6736, 4
        %v6739 = vor.u32 %v6735, %v6738
        %v6740 = vshrl.u32 %v6661, 16
        %v6742 = vrot.slane %v6740, 3
        %v6743 = vshll.u32 %v6661, 16
        %v6745 = vrot.slane %v6743, 4
        %v6746 = vor.u32 %v6742, %v6745
        %v6747 = vsel %vm3298, %v6739, %v6746
        %v6748 = vshrl.u32 %v6663, 16
        %v6750 = vrot.slane %v6748, 3
        %v6751 = vshll.u32 %v6663, 16
        %v6753 = vrot.slane %v6751, 4
        %v6754 = vor.u32 %v6750, %v6753
        %v6755 = vshrl.u32 %v6665, 16
        %v6757 = vrot.slane %v6755, 3
        %v6758 = vshll.u32 %v6665, 16
        %v6760 = vrot.slane %v6758, 4
        %v6761 = vor.u32 %v6757, %v6760
        %v6762 = vsel %vm3298, %v6754, %v6761
        %v6763 = vshrl.u32 %v6667, 16
        %v6765 = vrot.slane %v6763, 3
        %v6766 = vshll.u32 %v6667, 16
        %v6768 = vrot.slane %v6766, 4
        %v6769 = vor.u32 %v6765, %v6768
        %v6770 = vshrl.u32 %v6669, 16
        %v6772 = vrot.slane %v6770, 3
        %v6773 = vshll.u32 %v6669, 16
        %v6775 = vrot.slane %v6773, 4
        %v6776 = vor.u32 %v6772, %v6775
        %v6777 = vsel %vm3298, %v6769, %v6776
        %v6778 = vshrl.u32 %v6671, 16
        %v6780 = vrot.slane %v6778, 3
        %v6781 = vshll.u32 %v6671, 16
        %v6783 = vrot.slane %v6781, 4
        %v6784 = vor.u32 %v6780, %v6783
        %v6785 = vshrl.u32 %v6673, 16
        %v6787 = vrot.slane %v6785, 3
        %v6788 = vshll.u32 %v6673, 16
        %v6790 = vrot.slane %v6788, 4
        %v6791 = vor.u32 %v6787, %v6790
        %v6792 = vsel %vm3298, %v6784, %v6791
        %v6793 = vshrl.u32 %v6675, 16
        %v6795 = vrot.slane %v6793, 3
        %v6796 = vshll.u32 %v6675, 16
        %v6798 = vrot.slane %v6796, 4
        %v6799 = vor.u32 %v6795, %v6798
        %v6800 = vshrl.u32 %v6677, 16
        %v6802 = vrot.slane %v6800, 3
        %v6803 = vshll.u32 %v6677, 16
        %v6805 = vrot.slane %v6803, 4
        %v6806 = vor.u32 %v6802, %v6805
        %v6807 = vsel %vm3298, %v6799, %v6806
        %v6808 = vshrl.u32 %v6679, 16
        %v6810 = vrot.slane %v6808, 3
        %v6811 = vshll.u32 %v6679, 16
        %v6813 = vrot.slane %v6811, 4
        %v6814 = vor.u32 %v6810, %v6813
        %v6815 = vshrl.u32 %v6681, 16
        %v6817 = vrot.slane %v6815, 3
        %v6818 = vshll.u32 %v6681, 16
        %v6820 = vrot.slane %v6818, 4
        %v6821 = vor.u32 %v6817, %v6820
        %v6822 = vsel %vm3298, %v6814, %v6821
        %v6823 = vshrl.u32 %v6683, 16
        %v6825 = vrot.slane %v6823, 3
        %v6826 = vshll.u32 %v6683, 16
        %v6828 = vrot.slane %v6826, 4
        %v6829 = vor.u32 %v6825, %v6828
        %v6830 = vshrl.u32 %v6685, 16
        %v6832 = vrot.slane %v6830, 3
        %v6833 = vshll.u32 %v6685, 16
        %v6835 = vrot.slane %v6833, 4
        %v6836 = vor.u32 %v6832, %v6835
        %v6837 = vsel %vm3298, %v6829, %v6836
        %v6838 = vshrl.u32 %v6687, 16
        %v6840 = vrot.slane %v6838, 3
        %v6841 = vshll.u32 %v6687, 16
        %v6843 = vrot.slane %v6841, 4
        %v6844 = vor.u32 %v6840, %v6843
        %v6845 = vshrl.u32 %v6689, 16
        %v6847 = vrot.slane %v6845, 3
        %v6848 = vshll.u32 %v6689, 16
        %v6850 = vrot.slane %v6848, 4
        %v6851 = vor.u32 %v6847, %v6850
        %v6852 = vsel %vm3298, %v6844, %v6851
        %v6853 = vshrl.u32 %v6691, 16
        %v6855 = vrot.slane %v6853, 3
        %v6856 = vshll.u32 %v6691, 16
        %v6858 = vrot.slane %v6856, 4
        %v6859 = vor.u32 %v6855, %v6858
        %v6860 = vshrl.u32 %v6693, 16
        %v6862 = vrot.slane %v6860, 3
        %v6863 = vshll.u32 %v6693, 16
        %v6865 = vrot.slane %v6863, 4
        %v6866 = vor.u32 %v6862, %v6865
        %v6867 = vsel %vm3298, %v6859, %v6866
        %v6868 = vshrl.u32 %v6695, 16
        %v6870 = vrot.slane %v6868, 3
        %v6871 = vshll.u32 %v6695, 16
        %v6873 = vrot.slane %v6871, 4
        %v6874 = vor.u32 %v6870, %v6873
        %v6875 = vshrl.u32 %v6697, 16
        %v6877 = vrot.slane %v6875, 3
        %v6878 = vshll.u32 %v6697, 16
        %v6880 = vrot.slane %v6878, 4
        %v6881 = vor.u32 %v6877, %v6880
        %v6882 = vsel %vm3298, %v6874, %v6881
        %v6883 = vshrl.u32 %v6699, 16
        %v6885 = vrot.slane %v6883, 3
        %v6886 = vshll.u32 %v6699, 16
        %v6888 = vrot.slane %v6886, 4
        %v6889 = vor.u32 %v6885, %v6888
        %v6890 = vshrl.u32 %v6701, 16
        %v6892 = vrot.slane %v6890, 3
        %v6893 = vshll.u32 %v6701, 16
        %v6895 = vrot.slane %v6893, 4
        %v6896 = vor.u32 %v6892, %v6895
        %v6897 = vsel %vm3298, %v6889, %v6896
        %v6898 = vshrl.u32 %v6703, 16
        %v6900 = vrot.slane %v6898, 3
        %v6901 = vshll.u32 %v6703, 16
        %v6903 = vrot.slane %v6901, 4
        %v6904 = vor.u32 %v6900, %v6903
        %v6905 = vshrl.u32 %v6705, 16
        %v6907 = vrot.slane %v6905, 3
        %v6908 = vshll.u32 %v6705, 16
        %v6910 = vrot.slane %v6908, 4
        %v6911 = vor.u32 %v6907, %v6910
        %v6912 = vsel %vm3298, %v6904, %v6911
        %v6913 = vshrl.u32 %v6707, 16
        %v6915 = vrot.slane %v6913, 3
        %v6916 = vshll.u32 %v6707, 16
        %v6918 = vrot.slane %v6916, 4
        %v6919 = vor.u32 %v6915, %v6918
        %v6920 = vshrl.u32 %v6709, 16
        %v6922 = vrot.slane %v6920, 3
        %v6923 = vshll.u32 %v6709, 16
        %v6925 = vrot.slane %v6923, 4
        %v6926 = vor.u32 %v6922, %v6925
        %v6927 = vsel %vm3298, %v6919, %v6926
        %v6928 = vshrl.u32 %v6711, 16
        %v6930 = vrot.slane %v6928, 3
        %v6931 = vshll.u32 %v6711, 16
        %v6933 = vrot.slane %v6931, 4
        %v6934 = vor.u32 %v6930, %v6933
        %v6935 = vshrl.u32 %v6713, 16
        %v6937 = vrot.slane %v6935, 3
        %v6938 = vshll.u32 %v6713, 16
        %v6940 = vrot.slane %v6938, 4
        %v6941 = vor.u32 %v6937, %v6940
        %v6942 = vsel %vm3298, %v6934, %v6941
        %v6943 = vshrl.u32 %v6715, 16
        %v6945 = vrot.slane %v6943, 3
        %v6946 = vshll.u32 %v6715, 16
        %v6948 = vrot.slane %v6946, 4
        %v6949 = vor.u32 %v6945, %v6948
        %v6950 = vshrl.u32 %v6717, 16
        %v6952 = vrot.slane %v6950, 3
        %v6953 = vshll.u32 %v6717, 16
        %v6955 = vrot.slane %v6953, 4
        %v6956 = vor.u32 %v6952, %v6955
        %v6957 = vsel %vm3298, %v6949, %v6956
        %v6958 = vld [vmem:[%s5] sm:$0xf]
        %v6959 = vld [vmem:[%s5 + $0x4] sm:$0xf]
        %v6960 = vld [vmem:[%s5 + $0x8] sm:$0xf]
        %v6961 = vld [vmem:[%s5 + $0xc] sm:$0xf]
        %v6962 = vld [vmem:[%s5 + $0x10] sm:$0xf]
        %v6963 = vld [vmem:[%s5 + $0x14] sm:$0xf]
        %v6964 = vld [vmem:[%s5 + $0x18] sm:$0xf]
        %v6965 = vld [vmem:[%s5 + $0x1c] sm:$0xf]
        %v6966 = vld [vmem:[%s5 + $0x20] sm:$0xf]
        %v6967 = vld [vmem:[%s6] sm:$0x1]
        %v6969 = vlaneseq
        %v6970 = vshrl.u32 %v6969, 7
        %v6971 = vsub.s32 0, %v6970
        %v6972 = vrot.slane %v6967, %v6971
        %v6983 = vunpack.c.l.b16 %v6958
        %v6984 = vunpack.c.l.b16 %v6959
        %v6985 = vunpack.c.l.b16 %v6960
        %v6986 = vunpack.c.l.b16 %v6961
        %v6987 = vunpack.c.l.b16 %v6962
        %v6988 = vunpack.c.l.b16 %v6963
        %v6989 = vunpack.c.l.b16 %v6964
        %v6990 = vunpack.c.l.b16 %v6965
        %v6991 = vunpack.c.l.b16 %v6966
        %v6992 = vpack.c.b16 %v6984, %v6983
        %v6993 = vpack.c.b16 %v6986, %v6985
        %v6994 = vpack.c.b16 %v6988, %v6987
        %v6995 = vpack.c.b16 %v6990, %v6989
        %v6996 = vpack.c.b16 %v6991, %v6991
        %vm7001 = vcmask 588800
        %v7003 = vsel %vm7001, %v6732, 0
        %v7006 = vsel %vm7001, %v6747, 0
        %v7009 = vsel %vm7001, %v6762, 0
        %v7012 = vsel %vm7001, %v6777, 0
        %v7015 = vsel %vm7001, %v6792, 0
        %v7018 = vsel %vm7001, %v6807, 0
        %v7021 = vsel %vm7001, %v6822, 0
        %v7024 = vsel %vm7001, %v6837, 0
        %v7027 = vsel %vm7001, %v6852, 0
        %v7030 = vsel %vm7001, %v6867, 0
        %v7033 = vsel %vm7001, %v6882, 0
        %v7036 = vsel %vm7001, %v6897, 0
        %v7039 = vsel %vm7001, %v6912, 0
        %v7042 = vsel %vm7001, %v6927, 0
        %v7045 = vsel %vm7001, %v6942, 0
        %v7048 = vsel %vm7001, %v6957, 0
        %vm7050 = vcmask 1043456
        %v7052 = vsel %vm7050, %v6996, 0
        %7054 = vmatprep.subr.bf16.mxu0 0
        %7055 = vmatpush1.bf16.msra.mxu0 0
        %7056 = vmatprep.subr.bf16.mxu0 0
        %7057 = vmatpush1.bf16.msra.mxu0 0
        %7058 = vmatprep.subr.bf16.mxu0 0
        %7059 = vmatpush1.bf16.msra.mxu0 0
        %7060 = vmatprep.subr.bf16.mxu0 0
        %7061 = vmatpush1.bf16.msra.mxu0 %v7052
        %7062 = vmatprep.subr.bf16.mxu0 0
        %7063 = vmatpush1.bf16.msra.mxu0 %v6995
        %7064 = vmatprep.subr.bf16.mxu0 0
        %7065 = vmatpush1.bf16.msra.mxu0 %v6994
        %7066 = vmatprep.subr.bf16.mxu0 0
        %7067 = vmatpush1.bf16.msra.mxu0 %v6993
        %7068 = vmatprep.subr.bf16.mxu0 0
        %7069 = vmatpush1.bf16.msra.mxu0 %v6992
        %7070 = vmatprep.subr.bf16.mxu0 0
        %7071 = vmatpush2.bf16.msra.mxu0 0
        %7072 = vmatprep.subr.bf16.mxu0 0
        %7073 = vmatpush2.bf16.msra.mxu0 0
        %7074 = vmatprep.subr.bf16.mxu0 0
        %7075 = vmatpush2.bf16.msra.mxu0 0
        %7076 = vmatprep.subr.bf16.mxu0 0
        %7077 = vmatpush2.bf16.msra.mxu0 0
        %7078 = vmatprep.subr.bf16.mxu0 0
        %7079 = vmatpush2.bf16.msra.mxu0 0
        %7080 = vmatprep.subr.bf16.mxu0 0
        %7081 = vmatpush2.bf16.msra.mxu0 0
        %7082 = vmatprep.subr.bf16.mxu0 0
        %7083 = vmatpush2.bf16.msra.mxu0 0
        %7084 = vmatprep.subr.bf16.mxu0 0
        %7085 = vmatpush2.bf16.msra.mxu0 0
        %7086 = vmatprep.mubr.bf16.mxu0 0
        %7087 = vmatmul.mubr.bf16.gmra.mxu0 %v7003
        %v7088 = vpop.f32.mrf.mxu0
        %v7089 = vadd.f32 %v6972, %v7088
        %v7090 = vpop.f32.mrf.mxu0
        %v7091 = vpop.f32.mrf.mxu0
        %v7092 = vadd.f32 %v6972, %v7091
        %v7093 = vpop.f32.mrf.mxu0
        %7094 = vmatprep.mubr.bf16.mxu0 0
        %7095 = vmatmul.mubr.bf16.gmra.mxu0 %v7006
        %v7096 = vpop.f32.mrf.mxu0
        %v7097 = vadd.f32 %v6972, %v7096
        %v7098 = vpop.f32.mrf.mxu0
        %v7099 = vpop.f32.mrf.mxu0
        %v7100 = vadd.f32 %v6972, %v7099
        %v7101 = vpop.f32.mrf.mxu0
        %7102 = vmatprep.mubr.bf16.mxu0 0
        %7103 = vmatmul.mubr.bf16.gmra.mxu0 %v7009
        %v7104 = vpop.f32.mrf.mxu0
        %v7105 = vadd.f32 %v6972, %v7104
        %v7106 = vpop.f32.mrf.mxu0
        %v7107 = vpop.f32.mrf.mxu0
        %v7108 = vadd.f32 %v6972, %v7107
        %v7109 = vpop.f32.mrf.mxu0
        %7110 = vmatprep.mubr.bf16.mxu0 0
        %7111 = vmatmul.mubr.bf16.gmra.mxu0 %v7012
        %v7112 = vpop.f32.mrf.mxu0
        %v7113 = vadd.f32 %v6972, %v7112
        %v7114 = vpop.f32.mrf.mxu0
        %v7115 = vpop.f32.mrf.mxu0
        %v7116 = vadd.f32 %v6972, %v7115
        %v7117 = vpop.f32.mrf.mxu0
        %7118 = vmatprep.mubr.bf16.mxu0 0
        %7119 = vmatmul.mubr.bf16.gmra.mxu0 %v7015
        %v7120 = vpop.f32.mrf.mxu0
        %v7121 = vadd.f32 %v6972, %v7120
        %v7122 = vpop.f32.mrf.mxu0
        %v7123 = vpop.f32.mrf.mxu0
        %v7124 = vadd.f32 %v6972, %v7123
        %v7125 = vpop.f32.mrf.mxu0
        %7126 = vmatprep.mubr.bf16.mxu0 0
        %7127 = vmatmul.mubr.bf16.gmra.mxu0 %v7018
        %v7128 = vpop.f32.mrf.mxu0
        %v7129 = vadd.f32 %v6972, %v7128
        %v7130 = vpop.f32.mrf.mxu0
        %v7131 = vpop.f32.mrf.mxu0
        %v7132 = vadd.f32 %v6972, %v7131
        %v7133 = vpop.f32.mrf.mxu0
        %7134 = vmatprep.mubr.bf16.mxu0 0
        %7135 = vmatmul.mubr.bf16.gmra.mxu0 %v7021
        %v7136 = vpop.f32.mrf.mxu0
        %v7137 = vadd.f32 %v6972, %v7136
        %v7138 = vpop.f32.mrf.mxu0
        %v7139 = vpop.f32.mrf.mxu0
        %v7140 = vadd.f32 %v6972, %v7139
        %v7141 = vpop.f32.mrf.mxu0
        %7142 = vmatprep.mubr.bf16.mxu0 0
        %7143 = vmatmul.mubr.bf16.gmra.mxu0 %v7024
        %v7144 = vpop.f32.mrf.mxu0
        %v7145 = vadd.f32 %v6972, %v7144
        %v7146 = vpop.f32.mrf.mxu0
        %v7147 = vpop.f32.mrf.mxu0
        %v7148 = vadd.f32 %v6972, %v7147
        %v7149 = vpop.f32.mrf.mxu0
        %7150 = vmatprep.mubr.bf16.mxu0 0
        %7151 = vmatmul.mubr.bf16.gmra.mxu0 %v7027
        %v7152 = vpop.f32.mrf.mxu0
        %v7153 = vadd.f32 %v6972, %v7152
        %v7154 = vpop.f32.mrf.mxu0
        %v7155 = vpop.f32.mrf.mxu0
        %v7156 = vadd.f32 %v6972, %v7155
        %v7157 = vpop.f32.mrf.mxu0
        %7158 = vmatprep.mubr.bf16.mxu0 0
        %7159 = vmatmul.mubr.bf16.gmra.mxu0 %v7030
        %v7160 = vpop.f32.mrf.mxu0
        %v7161 = vadd.f32 %v6972, %v7160
        %v7162 = vpop.f32.mrf.mxu0
        %v7163 = vpop.f32.mrf.mxu0
        %v7164 = vadd.f32 %v6972, %v7163
        %v7165 = vpop.f32.mrf.mxu0
        %7166 = vmatprep.mubr.bf16.mxu0 0
        %7167 = vmatmul.mubr.bf16.gmra.mxu0 %v7033
        %v7168 = vpop.f32.mrf.mxu0
        %v7169 = vadd.f32 %v6972, %v7168
        %v7170 = vpop.f32.mrf.mxu0
        %v7171 = vpop.f32.mrf.mxu0
        %v7172 = vadd.f32 %v6972, %v7171
        %v7173 = vpop.f32.mrf.mxu0
        %7174 = vmatprep.mubr.bf16.mxu0 0
        %7175 = vmatmul.mubr.bf16.gmra.mxu0 %v7036
        %v7176 = vpop.f32.mrf.mxu0
        %v7177 = vadd.f32 %v6972, %v7176
        %v7178 = vpop.f32.mrf.mxu0
        %v7179 = vpop.f32.mrf.mxu0
        %v7180 = vadd.f32 %v6972, %v7179
        %v7181 = vpop.f32.mrf.mxu0
        %7182 = vmatprep.mubr.bf16.mxu0 0
        %7183 = vmatmul.mubr.bf16.gmra.mxu0 %v7039
        %v7184 = vpop.f32.mrf.mxu0
        %v7185 = vadd.f32 %v6972, %v7184
        %v7186 = vpop.f32.mrf.mxu0
        %v7187 = vpop.f32.mrf.mxu0
        %v7188 = vadd.f32 %v6972, %v7187
        %v7189 = vpop.f32.mrf.mxu0
        %7190 = vmatprep.mubr.bf16.mxu0 0
        %7191 = vmatmul.mubr.bf16.gmra.mxu0 %v7042
        %v7192 = vpop.f32.mrf.mxu0
        %v7193 = vadd.f32 %v6972, %v7192
        %v7194 = vpop.f32.mrf.mxu0
        %v7195 = vpop.f32.mrf.mxu0
        %v7196 = vadd.f32 %v6972, %v7195
        %v7197 = vpop.f32.mrf.mxu0
        %7198 = vmatprep.mubr.bf16.mxu0 0
        %7199 = vmatmul.mubr.bf16.gmra.mxu0 %v7045
        %v7200 = vpop.f32.mrf.mxu0
        %v7201 = vadd.f32 %v6972, %v7200
        %v7202 = vpop.f32.mrf.mxu0
        %v7203 = vpop.f32.mrf.mxu0
        %v7204 = vadd.f32 %v6972, %v7203
        %v7205 = vpop.f32.mrf.mxu0
        %7206 = vmatprep.mubr.bf16.mxu0 0
        %7207 = vmatmul.mubr.bf16.gmra.mxu0 %v7048
        %v7208 = vpop.f32.mrf.mxu0
        %v7209 = vadd.f32 %v6972, %v7208
        %v7210 = vpop.f32.mrf.mxu0
        %v7211 = vpop.f32.mrf.mxu0
        %v7212 = vadd.f32 %v6972, %v7211
        %v7213 = vpop.f32.mrf.mxu0
        %7214 = vdwg.mxu0
        %vm7215 = vcmp.ge.f32.partialorder %v7089, 0.0
        %vm7216 = vcmp.ge.f32.partialorder %v7092, 0.0
        %vm7217 = vcmp.ge.f32.partialorder %v7097, 0.0
        %vm7218 = vcmp.ge.f32.partialorder %v7100, 0.0
        %vm7219 = vcmp.ge.f32.partialorder %v7105, 0.0
        %vm7220 = vcmp.ge.f32.partialorder %v7108, 0.0
        %vm7221 = vcmp.ge.f32.partialorder %v7113, 0.0
        %vm7222 = vcmp.ge.f32.partialorder %v7116, 0.0
        %vm7223 = vcmp.ge.f32.partialorder %v7121, 0.0
        %vm7224 = vcmp.ge.f32.partialorder %v7124, 0.0
        %vm7225 = vcmp.ge.f32.partialorder %v7129, 0.0
        %vm7226 = vcmp.ge.f32.partialorder %v7132, 0.0
        %vm7227 = vcmp.ge.f32.partialorder %v7137, 0.0
        %vm7228 = vcmp.ge.f32.partialorder %v7140, 0.0
        %vm7229 = vcmp.ge.f32.partialorder %v7145, 0.0
        %vm7230 = vcmp.ge.f32.partialorder %v7148, 0.0
        %vm7231 = vcmp.ge.f32.partialorder %v7153, 0.0
        %vm7232 = vcmp.ge.f32.partialorder %v7156, 0.0
        %vm7233 = vcmp.ge.f32.partialorder %v7161, 0.0
        %vm7234 = vcmp.ge.f32.partialorder %v7164, 0.0
        %vm7235 = vcmp.ge.f32.partialorder %v7169, 0.0
        %vm7236 = vcmp.ge.f32.partialorder %v7172, 0.0
        %vm7237 = vcmp.ge.f32.partialorder %v7177, 0.0
        %vm7238 = vcmp.ge.f32.partialorder %v7180, 0.0
        %vm7239 = vcmp.ge.f32.partialorder %v7185, 0.0
        %vm7240 = vcmp.ge.f32.partialorder %v7188, 0.0
        %vm7241 = vcmp.ge.f32.partialorder %v7193, 0.0
        %vm7242 = vcmp.ge.f32.partialorder %v7196, 0.0
        %vm7243 = vcmp.ge.f32.partialorder %v7201, 0.0
        %vm7244 = vcmp.ge.f32.partialorder %v7204, 0.0
        %vm7245 = vcmp.ge.f32.partialorder %v7209, 0.0
        %vm7246 = vcmp.ge.f32.partialorder %v7212, 0.0
        %v7247 = vmul.f32 %v7089, 0.2
        %v7248 = vmul.f32 %v7092, 0.2
        %v7249 = vmul.f32 %v7097, 0.2
        %v7250 = vmul.f32 %v7100, 0.2
        %v7251 = vmul.f32 %v7105, 0.2
        %v7252 = vmul.f32 %v7108, 0.2
        %v7253 = vmul.f32 %v7113, 0.2
        %v7254 = vmul.f32 %v7116, 0.2
        %v7255 = vmul.f32 %v7121, 0.2
        %v7256 = vmul.f32 %v7124, 0.2
        %v7257 = vmul.f32 %v7129, 0.2
        %v7258 = vmul.f32 %v7132, 0.2
        %v7259 = vmul.f32 %v7137, 0.2
        %v7260 = vmul.f32 %v7140, 0.2
        %v7261 = vmul.f32 %v7145, 0.2
        %v7262 = vmul.f32 %v7148, 0.2
        %v7263 = vmul.f32 %v7153, 0.2
        %v7264 = vmul.f32 %v7156, 0.2
        %v7265 = vmul.f32 %v7161, 0.2
        %v7266 = vmul.f32 %v7164, 0.2
        %v7267 = vmul.f32 %v7169, 0.2
        %v7268 = vmul.f32 %v7172, 0.2
        %v7269 = vmul.f32 %v7177, 0.2
        %v7270 = vmul.f32 %v7180, 0.2
        %v7271 = vmul.f32 %v7185, 0.2
        %v7272 = vmul.f32 %v7188, 0.2
        %v7273 = vmul.f32 %v7193, 0.2
        %v7274 = vmul.f32 %v7196, 0.2
        %v7275 = vmul.f32 %v7201, 0.2
        %v7276 = vmul.f32 %v7204, 0.2
        %v7277 = vmul.f32 %v7209, 0.2
        %v7278 = vmul.f32 %v7212, 0.2
        %v7279 = vsel %vm7215, %v7089, %v7247
        %v7280 = vsel %vm7216, %v7092, %v7248
        %v7281 = vsel %vm7217, %v7097, %v7249
        %v7282 = vsel %vm7218, %v7100, %v7250
        %v7283 = vsel %vm7219, %v7105, %v7251
        %v7284 = vsel %vm7220, %v7108, %v7252
        %v7285 = vsel %vm7221, %v7113, %v7253
        %v7286 = vsel %vm7222, %v7116, %v7254
        %v7287 = vsel %vm7223, %v7121, %v7255
        %v7288 = vsel %vm7224, %v7124, %v7256
        %v7289 = vsel %vm7225, %v7129, %v7257
        %v7290 = vsel %vm7226, %v7132, %v7258
        %v7291 = vsel %vm7227, %v7137, %v7259
        %v7292 = vsel %vm7228, %v7140, %v7260
        %v7293 = vsel %vm7229, %v7145, %v7261
        %v7294 = vsel %vm7230, %v7148, %v7262
        %v7295 = vsel %vm7231, %v7153, %v7263
        %v7296 = vsel %vm7232, %v7156, %v7264
        %v7297 = vsel %vm7233, %v7161, %v7265
        %v7298 = vsel %vm7234, %v7164, %v7266
        %v7299 = vsel %vm7235, %v7169, %v7267
        %v7300 = vsel %vm7236, %v7172, %v7268
        %v7301 = vsel %vm7237, %v7177, %v7269
        %v7302 = vsel %vm7238, %v7180, %v7270
        %v7303 = vsel %vm7239, %v7185, %v7271
        %v7304 = vsel %vm7240, %v7188, %v7272
        %v7305 = vsel %vm7241, %v7193, %v7273
        %v7306 = vsel %vm7242, %v7196, %v7274
        %v7307 = vsel %vm7243, %v7201, %v7275
        %v7308 = vsel %vm7244, %v7204, %v7276
        %v7309 = vsel %vm7245, %v7209, %v7277
        %v7310 = vsel %vm7246, %v7212, %v7278
        %v7343 = vcombine.high %v7279, %v7279
        %v7345 = vunpack.c.l.s4 1983009808
        %v7346 = vunpack.c.0.s8 %v7345
        %v7347 = vlaneseq
        %v7348 = vshrl.u32 %v7347, 7
        %v7349 = vsub.s32 %v7346, %v7348
        %v7350 = vrot.slane %v7279, %v7349
        %v7352 = vunpack.c.l.s4 1983009808
        %v7353 = vunpack.c.0.s8 %v7352
        %v7354 = vlaneseq
        %v7355 = vshrl.u32 %v7354, 7
        %v7356 = vsub.s32 %v7353, %v7355
        %v7357 = vrot.slane %v7343, %v7356
        %v7358 = vcombine.high %v7350, %v7350
        %v7359 = vcombine.high %v7357, %v7357
        %v7360 = vcombine.high %v7280, %v7280
        %v7362 = vunpack.c.l.s4 1983009808
        %v7363 = vunpack.c.0.s8 %v7362
        %v7364 = vlaneseq
        %v7365 = vshrl.u32 %v7364, 7
        %v7366 = vsub.s32 %v7363, %v7365
        %v7367 = vrot.slane %v7280, %v7366
        %v7369 = vunpack.c.l.s4 1983009808
        %v7370 = vunpack.c.0.s8 %v7369
        %v7371 = vlaneseq
        %v7372 = vshrl.u32 %v7371, 7
        %v7373 = vsub.s32 %v7370, %v7372
        %v7374 = vrot.slane %v7360, %v7373
        %v7375 = vcombine.high %v7367, %v7367
        %v7376 = vcombine.high %v7374, %v7374
        %v7377 = vcombine.high %v7281, %v7281
        %v7379 = vunpack.c.l.s4 1983009808
        %v7380 = vunpack.c.0.s8 %v7379
        %v7381 = vlaneseq
        %v7382 = vshrl.u32 %v7381, 7
        %v7383 = vsub.s32 %v7380, %v7382
        %v7384 = vrot.slane %v7281, %v7383
        %v7386 = vunpack.c.l.s4 1983009808
        %v7387 = vunpack.c.0.s8 %v7386
        %v7388 = vlaneseq
        %v7389 = vshrl.u32 %v7388, 7
        %v7390 = vsub.s32 %v7387, %v7389
        %v7391 = vrot.slane %v7377, %v7390
        %v7392 = vcombine.high %v7384, %v7384
        %v7393 = vcombine.high %v7391, %v7391
        %v7394 = vcombine.high %v7282, %v7282
        %v7396 = vunpack.c.l.s4 1983009808
        %v7397 = vunpack.c.0.s8 %v7396
        %v7398 = vlaneseq
        %v7399 = vshrl.u32 %v7398, 7
        %v7400 = vsub.s32 %v7397, %v7399
        %v7401 = vrot.slane %v7282, %v7400
        %v7403 = vunpack.c.l.s4 1983009808
        %v7404 = vunpack.c.0.s8 %v7403
        %v7405 = vlaneseq
        %v7406 = vshrl.u32 %v7405, 7
        %v7407 = vsub.s32 %v7404, %v7406
        %v7408 = vrot.slane %v7394, %v7407
        %v7409 = vcombine.high %v7401, %v7401
        %v7410 = vcombine.high %v7408, %v7408
        %v7411 = vcombine.high %v7283, %v7283
        %v7413 = vunpack.c.l.s4 1983009808
        %v7414 = vunpack.c.0.s8 %v7413
        %v7415 = vlaneseq
        %v7416 = vshrl.u32 %v7415, 7
        %v7417 = vsub.s32 %v7414, %v7416
        %v7418 = vrot.slane %v7283, %v7417
        %v7420 = vunpack.c.l.s4 1983009808
        %v7421 = vunpack.c.0.s8 %v7420
        %v7422 = vlaneseq
        %v7423 = vshrl.u32 %v7422, 7
        %v7424 = vsub.s32 %v7421, %v7423
        %v7425 = vrot.slane %v7411, %v7424
        %v7426 = vcombine.high %v7418, %v7418
        %v7427 = vcombine.high %v7425, %v7425
        %v7428 = vcombine.high %v7284, %v7284
        %v7430 = vunpack.c.l.s4 1983009808
        %v7431 = vunpack.c.0.s8 %v7430
        %v7432 = vlaneseq
        %v7433 = vshrl.u32 %v7432, 7
        %v7434 = vsub.s32 %v7431, %v7433
        %v7435 = vrot.slane %v7284, %v7434
        %v7437 = vunpack.c.l.s4 1983009808
        %v7438 = vunpack.c.0.s8 %v7437
        %v7439 = vlaneseq
        %v7440 = vshrl.u32 %v7439, 7
        %v7441 = vsub.s32 %v7438, %v7440
        %v7442 = vrot.slane %v7428, %v7441
        %v7443 = vcombine.high %v7435, %v7435
        %v7444 = vcombine.high %v7442, %v7442
        %v7445 = vcombine.high %v7285, %v7285
        %v7447 = vunpack.c.l.s4 1983009808
        %v7448 = vunpack.c.0.s8 %v7447
        %v7449 = vlaneseq
        %v7450 = vshrl.u32 %v7449, 7
        %v7451 = vsub.s32 %v7448, %v7450
        %v7452 = vrot.slane %v7285, %v7451
        %v7454 = vunpack.c.l.s4 1983009808
        %v7455 = vunpack.c.0.s8 %v7454
        %v7456 = vlaneseq
        %v7457 = vshrl.u32 %v7456, 7
        %v7458 = vsub.s32 %v7455, %v7457
        %v7459 = vrot.slane %v7445, %v7458
        %v7460 = vcombine.high %v7452, %v7452
        %v7461 = vcombine.high %v7459, %v7459
        %v7462 = vcombine.high %v7286, %v7286
        %v7464 = vunpack.c.l.s4 1983009808
        %v7465 = vunpack.c.0.s8 %v7464
        %v7466 = vlaneseq
        %v7467 = vshrl.u32 %v7466, 7
        %v7468 = vsub.s32 %v7465, %v7467
        %v7469 = vrot.slane %v7286, %v7468
        %v7471 = vunpack.c.l.s4 1983009808
        %v7472 = vunpack.c.0.s8 %v7471
        %v7473 = vlaneseq
        %v7474 = vshrl.u32 %v7473, 7
        %v7475 = vsub.s32 %v7472, %v7474
        %v7476 = vrot.slane %v7462, %v7475
        %v7477 = vcombine.high %v7469, %v7469
        %v7478 = vcombine.high %v7476, %v7476
        %v7479 = vcombine.high %v7287, %v7287
        %v7481 = vunpack.c.l.s4 1983009808
        %v7482 = vunpack.c.0.s8 %v7481
        %v7483 = vlaneseq
        %v7484 = vshrl.u32 %v7483, 7
        %v7485 = vsub.s32 %v7482, %v7484
        %v7486 = vrot.slane %v7287, %v7485
        %v7488 = vunpack.c.l.s4 1983009808
        %v7489 = vunpack.c.0.s8 %v7488
        %v7490 = vlaneseq
        %v7491 = vshrl.u32 %v7490, 7
        %v7492 = vsub.s32 %v7489, %v7491
        %v7493 = vrot.slane %v7479, %v7492
        %v7494 = vcombine.high %v7486, %v7486
        %v7495 = vcombine.high %v7493, %v7493
        %v7496 = vcombine.high %v7288, %v7288
        %v7498 = vunpack.c.l.s4 1983009808
        %v7499 = vunpack.c.0.s8 %v7498
        %v7500 = vlaneseq
        %v7501 = vshrl.u32 %v7500, 7
        %v7502 = vsub.s32 %v7499, %v7501
        %v7503 = vrot.slane %v7288, %v7502
        %v7505 = vunpack.c.l.s4 1983009808
        %v7506 = vunpack.c.0.s8 %v7505
        %v7507 = vlaneseq
        %v7508 = vshrl.u32 %v7507, 7
        %v7509 = vsub.s32 %v7506, %v7508
        %v7510 = vrot.slane %v7496, %v7509
        %v7511 = vcombine.high %v7503, %v7503
        %v7512 = vcombine.high %v7510, %v7510
        %v7513 = vcombine.high %v7289, %v7289
        %v7515 = vunpack.c.l.s4 1983009808
        %v7516 = vunpack.c.0.s8 %v7515
        %v7517 = vlaneseq
        %v7518 = vshrl.u32 %v7517, 7
        %v7519 = vsub.s32 %v7516, %v7518
        %v7520 = vrot.slane %v7289, %v7519
        %v7522 = vunpack.c.l.s4 1983009808
        %v7523 = vunpack.c.0.s8 %v7522
        %v7524 = vlaneseq
        %v7525 = vshrl.u32 %v7524, 7
        %v7526 = vsub.s32 %v7523, %v7525
        %v7527 = vrot.slane %v7513, %v7526
        %v7528 = vcombine.high %v7520, %v7520
        %v7529 = vcombine.high %v7527, %v7527
        %v7530 = vcombine.high %v7290, %v7290
        %v7532 = vunpack.c.l.s4 1983009808
        %v7533 = vunpack.c.0.s8 %v7532
        %v7534 = vlaneseq
        %v7535 = vshrl.u32 %v7534, 7
        %v7536 = vsub.s32 %v7533, %v7535
        %v7537 = vrot.slane %v7290, %v7536
        %v7539 = vunpack.c.l.s4 1983009808
        %v7540 = vunpack.c.0.s8 %v7539
        %v7541 = vlaneseq
        %v7542 = vshrl.u32 %v7541, 7
        %v7543 = vsub.s32 %v7540, %v7542
        %v7544 = vrot.slane %v7530, %v7543
        %v7545 = vcombine.high %v7537, %v7537
        %v7546 = vcombine.high %v7544, %v7544
        %v7547 = vcombine.high %v7291, %v7291
        %v7549 = vunpack.c.l.s4 1983009808
        %v7550 = vunpack.c.0.s8 %v7549
        %v7551 = vlaneseq
        %v7552 = vshrl.u32 %v7551, 7
        %v7553 = vsub.s32 %v7550, %v7552
        %v7554 = vrot.slane %v7291, %v7553
        %v7556 = vunpack.c.l.s4 1983009808
        %v7557 = vunpack.c.0.s8 %v7556
        %v7558 = vlaneseq
        %v7559 = vshrl.u32 %v7558, 7
        %v7560 = vsub.s32 %v7557, %v7559
        %v7561 = vrot.slane %v7547, %v7560
        %v7562 = vcombine.high %v7554, %v7554
        %v7563 = vcombine.high %v7561, %v7561
        %v7564 = vcombine.high %v7292, %v7292
        %v7566 = vunpack.c.l.s4 1983009808
        %v7567 = vunpack.c.0.s8 %v7566
        %v7568 = vlaneseq
        %v7569 = vshrl.u32 %v7568, 7
        %v7570 = vsub.s32 %v7567, %v7569
        %v7571 = vrot.slane %v7292, %v7570
        %v7573 = vunpack.c.l.s4 1983009808
        %v7574 = vunpack.c.0.s8 %v7573
        %v7575 = vlaneseq
        %v7576 = vshrl.u32 %v7575, 7
        %v7577 = vsub.s32 %v7574, %v7576
        %v7578 = vrot.slane %v7564, %v7577
        %v7579 = vcombine.high %v7571, %v7571
        %v7580 = vcombine.high %v7578, %v7578
        %v7581 = vcombine.high %v7293, %v7293
        %v7583 = vunpack.c.l.s4 1983009808
        %v7584 = vunpack.c.0.s8 %v7583
        %v7585 = vlaneseq
        %v7586 = vshrl.u32 %v7585, 7
        %v7587 = vsub.s32 %v7584, %v7586
        %v7588 = vrot.slane %v7293, %v7587
        %v7590 = vunpack.c.l.s4 1983009808
        %v7591 = vunpack.c.0.s8 %v7590
        %v7592 = vlaneseq
        %v7593 = vshrl.u32 %v7592, 7
        %v7594 = vsub.s32 %v7591, %v7593
        %v7595 = vrot.slane %v7581, %v7594
        %v7596 = vcombine.high %v7588, %v7588
        %v7597 = vcombine.high %v7595, %v7595
        %v7598 = vcombine.high %v7294, %v7294
        %v7600 = vunpack.c.l.s4 1983009808
        %v7601 = vunpack.c.0.s8 %v7600
        %v7602 = vlaneseq
        %v7603 = vshrl.u32 %v7602, 7
        %v7604 = vsub.s32 %v7601, %v7603
        %v7605 = vrot.slane %v7294, %v7604
        %v7607 = vunpack.c.l.s4 1983009808
        %v7608 = vunpack.c.0.s8 %v7607
        %v7609 = vlaneseq
        %v7610 = vshrl.u32 %v7609, 7
        %v7611 = vsub.s32 %v7608, %v7610
        %v7612 = vrot.slane %v7598, %v7611
        %v7613 = vcombine.high %v7605, %v7605
        %v7614 = vcombine.high %v7612, %v7612
        %v7615 = vcombine.high %v7295, %v7295
        %v7617 = vunpack.c.l.s4 1983009808
        %v7618 = vunpack.c.0.s8 %v7617
        %v7619 = vlaneseq
        %v7620 = vshrl.u32 %v7619, 7
        %v7621 = vsub.s32 %v7618, %v7620
        %v7622 = vrot.slane %v7295, %v7621
        %v7624 = vunpack.c.l.s4 1983009808
        %v7625 = vunpack.c.0.s8 %v7624
        %v7626 = vlaneseq
        %v7627 = vshrl.u32 %v7626, 7
        %v7628 = vsub.s32 %v7625, %v7627
        %v7629 = vrot.slane %v7615, %v7628
        %v7630 = vcombine.high %v7622, %v7622
        %v7631 = vcombine.high %v7629, %v7629
        %v7632 = vcombine.high %v7296, %v7296
        %v7634 = vunpack.c.l.s4 1983009808
        %v7635 = vunpack.c.0.s8 %v7634
        %v7636 = vlaneseq
        %v7637 = vshrl.u32 %v7636, 7
        %v7638 = vsub.s32 %v7635, %v7637
        %v7639 = vrot.slane %v7296, %v7638
        %v7641 = vunpack.c.l.s4 1983009808
        %v7642 = vunpack.c.0.s8 %v7641
        %v7643 = vlaneseq
        %v7644 = vshrl.u32 %v7643, 7
        %v7645 = vsub.s32 %v7642, %v7644
        %v7646 = vrot.slane %v7632, %v7645
        %v7647 = vcombine.high %v7639, %v7639
        %v7648 = vcombine.high %v7646, %v7646
        %v7649 = vcombine.high %v7297, %v7297
        %v7651 = vunpack.c.l.s4 1983009808
        %v7652 = vunpack.c.0.s8 %v7651
        %v7653 = vlaneseq
        %v7654 = vshrl.u32 %v7653, 7
        %v7655 = vsub.s32 %v7652, %v7654
        %v7656 = vrot.slane %v7297, %v7655
        %v7658 = vunpack.c.l.s4 1983009808
        %v7659 = vunpack.c.0.s8 %v7658
        %v7660 = vlaneseq
        %v7661 = vshrl.u32 %v7660, 7
        %v7662 = vsub.s32 %v7659, %v7661
        %v7663 = vrot.slane %v7649, %v7662
        %v7664 = vcombine.high %v7656, %v7656
        %v7665 = vcombine.high %v7663, %v7663
        %v7666 = vcombine.high %v7298, %v7298
        %v7668 = vunpack.c.l.s4 1983009808
        %v7669 = vunpack.c.0.s8 %v7668
        %v7670 = vlaneseq
        %v7671 = vshrl.u32 %v7670, 7
        %v7672 = vsub.s32 %v7669, %v7671
        %v7673 = vrot.slane %v7298, %v7672
        %v7675 = vunpack.c.l.s4 1983009808
        %v7676 = vunpack.c.0.s8 %v7675
        %v7677 = vlaneseq
        %v7678 = vshrl.u32 %v7677, 7
        %v7679 = vsub.s32 %v7676, %v7678
        %v7680 = vrot.slane %v7666, %v7679
        %v7681 = vcombine.high %v7673, %v7673
        %v7682 = vcombine.high %v7680, %v7680
        %v7683 = vcombine.high %v7299, %v7299
        %v7685 = vunpack.c.l.s4 1983009808
        %v7686 = vunpack.c.0.s8 %v7685
        %v7687 = vlaneseq
        %v7688 = vshrl.u32 %v7687, 7
        %v7689 = vsub.s32 %v7686, %v7688
        %v7690 = vrot.slane %v7299, %v7689
        %v7692 = vunpack.c.l.s4 1983009808
        %v7693 = vunpack.c.0.s8 %v7692
        %v7694 = vlaneseq
        %v7695 = vshrl.u32 %v7694, 7
        %v7696 = vsub.s32 %v7693, %v7695
        %v7697 = vrot.slane %v7683, %v7696
        %v7698 = vcombine.high %v7690, %v7690
        %v7699 = vcombine.high %v7697, %v7697
        %v7700 = vcombine.high %v7300, %v7300
        %v7702 = vunpack.c.l.s4 1983009808
        %v7703 = vunpack.c.0.s8 %v7702
        %v7704 = vlaneseq
        %v7705 = vshrl.u32 %v7704, 7
        %v7706 = vsub.s32 %v7703, %v7705
        %v7707 = vrot.slane %v7300, %v7706
        %v7709 = vunpack.c.l.s4 1983009808
        %v7710 = vunpack.c.0.s8 %v7709
        %v7711 = vlaneseq
        %v7712 = vshrl.u32 %v7711, 7
        %v7713 = vsub.s32 %v7710, %v7712
        %v7714 = vrot.slane %v7700, %v7713
        %v7715 = vcombine.high %v7707, %v7707
        %v7716 = vcombine.high %v7714, %v7714
        %v7717 = vcombine.high %v7301, %v7301
        %v7719 = vunpack.c.l.s4 1983009808
        %v7720 = vunpack.c.0.s8 %v7719
        %v7721 = vlaneseq
        %v7722 = vshrl.u32 %v7721, 7
        %v7723 = vsub.s32 %v7720, %v7722
        %v7724 = vrot.slane %v7301, %v7723
        %v7726 = vunpack.c.l.s4 1983009808
        %v7727 = vunpack.c.0.s8 %v7726
        %v7728 = vlaneseq
        %v7729 = vshrl.u32 %v7728, 7
        %v7730 = vsub.s32 %v7727, %v7729
        %v7731 = vrot.slane %v7717, %v7730
        %v7732 = vcombine.high %v7724, %v7724
        %v7733 = vcombine.high %v7731, %v7731
        %v7734 = vcombine.high %v7302, %v7302
        %v7736 = vunpack.c.l.s4 1983009808
        %v7737 = vunpack.c.0.s8 %v7736
        %v7738 = vlaneseq
        %v7739 = vshrl.u32 %v7738, 7
        %v7740 = vsub.s32 %v7737, %v7739
        %v7741 = vrot.slane %v7302, %v7740
        %v7743 = vunpack.c.l.s4 1983009808
        %v7744 = vunpack.c.0.s8 %v7743
        %v7745 = vlaneseq
        %v7746 = vshrl.u32 %v7745, 7
        %v7747 = vsub.s32 %v7744, %v7746
        %v7748 = vrot.slane %v7734, %v7747
        %v7749 = vcombine.high %v7741, %v7741
        %v7750 = vcombine.high %v7748, %v7748
        %v7751 = vcombine.high %v7303, %v7303
        %v7753 = vunpack.c.l.s4 1983009808
        %v7754 = vunpack.c.0.s8 %v7753
        %v7755 = vlaneseq
        %v7756 = vshrl.u32 %v7755, 7
        %v7757 = vsub.s32 %v7754, %v7756
        %v7758 = vrot.slane %v7303, %v7757
        %v7760 = vunpack.c.l.s4 1983009808
        %v7761 = vunpack.c.0.s8 %v7760
        %v7762 = vlaneseq
        %v7763 = vshrl.u32 %v7762, 7
        %v7764 = vsub.s32 %v7761, %v7763
        %v7765 = vrot.slane %v7751, %v7764
        %v7766 = vcombine.high %v7758, %v7758
        %v7767 = vcombine.high %v7765, %v7765
        %v7768 = vcombine.high %v7304, %v7304
        %v7770 = vunpack.c.l.s4 1983009808
        %v7771 = vunpack.c.0.s8 %v7770
        %v7772 = vlaneseq
        %v7773 = vshrl.u32 %v7772, 7
        %v7774 = vsub.s32 %v7771, %v7773
        %v7775 = vrot.slane %v7304, %v7774
        %v7777 = vunpack.c.l.s4 1983009808
        %v7778 = vunpack.c.0.s8 %v7777
        %v7779 = vlaneseq
        %v7780 = vshrl.u32 %v7779, 7
        %v7781 = vsub.s32 %v7778, %v7780
        %v7782 = vrot.slane %v7768, %v7781
        %v7783 = vcombine.high %v7775, %v7775
        %v7784 = vcombine.high %v7782, %v7782
        %v7785 = vcombine.high %v7305, %v7305
        %v7787 = vunpack.c.l.s4 1983009808
        %v7788 = vunpack.c.0.s8 %v7787
        %v7789 = vlaneseq
        %v7790 = vshrl.u32 %v7789, 7
        %v7791 = vsub.s32 %v7788, %v7790
        %v7792 = vrot.slane %v7305, %v7791
        %v7794 = vunpack.c.l.s4 1983009808
        %v7795 = vunpack.c.0.s8 %v7794
        %v7796 = vlaneseq
        %v7797 = vshrl.u32 %v7796, 7
        %v7798 = vsub.s32 %v7795, %v7797
        %v7799 = vrot.slane %v7785, %v7798
        %v7800 = vcombine.high %v7792, %v7792
        %v7801 = vcombine.high %v7799, %v7799
        %v7802 = vcombine.high %v7306, %v7306
        %v7804 = vunpack.c.l.s4 1983009808
        %v7805 = vunpack.c.0.s8 %v7804
        %v7806 = vlaneseq
        %v7807 = vshrl.u32 %v7806, 7
        %v7808 = vsub.s32 %v7805, %v7807
        %v7809 = vrot.slane %v7306, %v7808
        %v7811 = vunpack.c.l.s4 1983009808
        %v7812 = vunpack.c.0.s8 %v7811
        %v7813 = vlaneseq
        %v7814 = vshrl.u32 %v7813, 7
        %v7815 = vsub.s32 %v7812, %v7814
        %v7816 = vrot.slane %v7802, %v7815
        %v7817 = vcombine.high %v7809, %v7809
        %v7818 = vcombine.high %v7816, %v7816
        %v7819 = vcombine.high %v7307, %v7307
        %v7821 = vunpack.c.l.s4 1983009808
        %v7822 = vunpack.c.0.s8 %v7821
        %v7823 = vlaneseq
        %v7824 = vshrl.u32 %v7823, 7
        %v7825 = vsub.s32 %v7822, %v7824
        %v7826 = vrot.slane %v7307, %v7825
        %v7828 = vunpack.c.l.s4 1983009808
        %v7829 = vunpack.c.0.s8 %v7828
        %v7830 = vlaneseq
        %v7831 = vshrl.u32 %v7830, 7
        %v7832 = vsub.s32 %v7829, %v7831
        %v7833 = vrot.slane %v7819, %v7832
        %v7834 = vcombine.high %v7826, %v7826
        %v7835 = vcombine.high %v7833, %v7833
        %v7836 = vcombine.high %v7308, %v7308
        %v7838 = vunpack.c.l.s4 1983009808
        %v7839 = vunpack.c.0.s8 %v7838
        %v7840 = vlaneseq
        %v7841 = vshrl.u32 %v7840, 7
        %v7842 = vsub.s32 %v7839, %v7841
        %v7843 = vrot.slane %v7308, %v7842
        %v7845 = vunpack.c.l.s4 1983009808
        %v7846 = vunpack.c.0.s8 %v7845
        %v7847 = vlaneseq
        %v7848 = vshrl.u32 %v7847, 7
        %v7849 = vsub.s32 %v7846, %v7848
        %v7850 = vrot.slane %v7836, %v7849
        %v7851 = vcombine.high %v7843, %v7843
        %v7852 = vcombine.high %v7850, %v7850
        %v7853 = vcombine.high %v7309, %v7309
        %v7855 = vunpack.c.l.s4 1983009808
        %v7856 = vunpack.c.0.s8 %v7855
        %v7857 = vlaneseq
        %v7858 = vshrl.u32 %v7857, 7
        %v7859 = vsub.s32 %v7856, %v7858
        %v7860 = vrot.slane %v7309, %v7859
        %v7862 = vunpack.c.l.s4 1983009808
        %v7863 = vunpack.c.0.s8 %v7862
        %v7864 = vlaneseq
        %v7865 = vshrl.u32 %v7864, 7
        %v7866 = vsub.s32 %v7863, %v7865
        %v7867 = vrot.slane %v7853, %v7866
        %v7868 = vcombine.high %v7860, %v7860
        %v7869 = vcombine.high %v7867, %v7867
        %v7870 = vcombine.high %v7310, %v7310
        %v7872 = vunpack.c.l.s4 1983009808
        %v7873 = vunpack.c.0.s8 %v7872
        %v7874 = vlaneseq
        %v7875 = vshrl.u32 %v7874, 7
        %v7876 = vsub.s32 %v7873, %v7875
        %v7877 = vrot.slane %v7310, %v7876
        %v7879 = vunpack.c.l.s4 1983009808
        %v7880 = vunpack.c.0.s8 %v7879
        %v7881 = vlaneseq
        %v7882 = vshrl.u32 %v7881, 7
        %v7883 = vsub.s32 %v7880, %v7882
        %v7884 = vrot.slane %v7870, %v7883
        %v7885 = vcombine.high %v7877, %v7877
        %v7886 = vcombine.high %v7884, %v7884
        %v8015 = vrot.slane %v7350, 7
        %v8016 = vrot.slane %v8015, 2
        %v8017 = vrot.slane %v7358, 7
        %v8018 = vrot.slane %v8017, 2
        %v8019 = vrot.slane %v7357, 7
        %v8020 = vrot.slane %v8019, 2
        %v8021 = vrot.slane %v7359, 7
        %v8022 = vrot.slane %v8021, 2
        %v8023 = vrot.slane %v7367, 7
        %v8024 = vrot.slane %v8023, 2
        %v8025 = vrot.slane %v7375, 7
        %v8026 = vrot.slane %v8025, 2
        %v8027 = vrot.slane %v7374, 7
        %v8028 = vrot.slane %v8027, 2
        %v8029 = vrot.slane %v7376, 7
        %v8030 = vrot.slane %v8029, 2
        %v8031 = vrot.slane %v7384, 7
        %v8032 = vrot.slane %v8031, 2
        %v8033 = vrot.slane %v7392, 7
        %v8034 = vrot.slane %v8033, 2
        %v8035 = vrot.slane %v7391, 7
        %v8036 = vrot.slane %v8035, 2
        %v8037 = vrot.slane %v7393, 7
        %v8038 = vrot.slane %v8037, 2
        %v8039 = vrot.slane %v7401, 7
        %v8040 = vrot.slane %v8039, 2
        %v8041 = vrot.slane %v7409, 7
        %v8042 = vrot.slane %v8041, 2
        %v8043 = vrot.slane %v7408, 7
        %v8044 = vrot.slane %v8043, 2
        %v8045 = vrot.slane %v7410, 7
        %v8046 = vrot.slane %v8045, 2
        %v8047 = vrot.slane %v7418, 7
        %v8048 = vrot.slane %v8047, 2
        %v8049 = vrot.slane %v7426, 7
        %v8050 = vrot.slane %v8049, 2
        %v8051 = vrot.slane %v7425, 7
        %v8052 = vrot.slane %v8051, 2
        %v8053 = vrot.slane %v7427, 7
        %v8054 = vrot.slane %v8053, 2
        %v8055 = vrot.slane %v7435, 7
        %v8056 = vrot.slane %v8055, 2
        %v8057 = vrot.slane %v7443, 7
        %v8058 = vrot.slane %v8057, 2
        %v8059 = vrot.slane %v7442, 7
        %v8060 = vrot.slane %v8059, 2
        %v8061 = vrot.slane %v7444, 7
        %v8062 = vrot.slane %v8061, 2
        %v8063 = vrot.slane %v7452, 7
        %v8064 = vrot.slane %v8063, 2
        %v8065 = vrot.slane %v7460, 7
        %v8066 = vrot.slane %v8065, 2
        %v8067 = vrot.slane %v7459, 7
        %v8068 = vrot.slane %v8067, 2
        %v8069 = vrot.slane %v7461, 7
        %v8070 = vrot.slane %v8069, 2
        %v8071 = vrot.slane %v7469, 7
        %v8072 = vrot.slane %v8071, 2
        %v8073 = vrot.slane %v7477, 7
        %v8074 = vrot.slane %v8073, 2
        %v8075 = vrot.slane %v7476, 7
        %v8076 = vrot.slane %v8075, 2
        %v8077 = vrot.slane %v7478, 7
        %v8078 = vrot.slane %v8077, 2
        %v8079 = vrot.slane %v7486, 7
        %v8080 = vrot.slane %v8079, 2
        %v8081 = vrot.slane %v7494, 7
        %v8082 = vrot.slane %v8081, 2
        %v8083 = vrot.slane %v7493, 7
        %v8084 = vrot.slane %v8083, 2
        %v8085 = vrot.slane %v7495, 7
        %v8086 = vrot.slane %v8085, 2
        %v8087 = vrot.slane %v7503, 7
        %v8088 = vrot.slane %v8087, 2
        %v8089 = vrot.slane %v7511, 7
        %v8090 = vrot.slane %v8089, 2
        %v8091 = vrot.slane %v7510, 7
        %v8092 = vrot.slane %v8091, 2
        %v8093 = vrot.slane %v7512, 7
        %v8094 = vrot.slane %v8093, 2
        %v8095 = vrot.slane %v7520, 7
        %v8096 = vrot.slane %v8095, 2
        %v8097 = vrot.slane %v7528, 7
        %v8098 = vrot.slane %v8097, 2
        %v8099 = vrot.slane %v7527, 7
        %v8100 = vrot.slane %v8099, 2
        %v8101 = vrot.slane %v7529, 7
        %v8102 = vrot.slane %v8101, 2
        %v8103 = vrot.slane %v7537, 7
        %v8104 = vrot.slane %v8103, 2
        %v8105 = vrot.slane %v7545, 7
        %v8106 = vrot.slane %v8105, 2
        %v8107 = vrot.slane %v7544, 7
        %v8108 = vrot.slane %v8107, 2
        %v8109 = vrot.slane %v7546, 7
        %v8110 = vrot.slane %v8109, 2
        %v8111 = vrot.slane %v7554, 7
        %v8112 = vrot.slane %v8111, 2
        %v8113 = vrot.slane %v7562, 7
        %v8114 = vrot.slane %v8113, 2
        %v8115 = vrot.slane %v7561, 7
        %v8116 = vrot.slane %v8115, 2
        %v8117 = vrot.slane %v7563, 7
        %v8118 = vrot.slane %v8117, 2
        %v8119 = vrot.slane %v7571, 7
        %v8120 = vrot.slane %v8119, 2
        %v8121 = vrot.slane %v7579, 7
        %v8122 = vrot.slane %v8121, 2
        %v8123 = vrot.slane %v7578, 7
        %v8124 = vrot.slane %v8123, 2
        %v8125 = vrot.slane %v7580, 7
        %v8126 = vrot.slane %v8125, 2
        %v8127 = vrot.slane %v7588, 7
        %v8128 = vrot.slane %v8127, 2
        %v8129 = vrot.slane %v7596, 7
        %v8130 = vrot.slane %v8129, 2
        %v8131 = vrot.slane %v7595, 7
        %v8132 = vrot.slane %v8131, 2
        %v8133 = vrot.slane %v7597, 7
        %v8134 = vrot.slane %v8133, 2
        %v8135 = vrot.slane %v7605, 7
        %v8136 = vrot.slane %v8135, 2
        %v8137 = vrot.slane %v7613, 7
        %v8138 = vrot.slane %v8137, 2
        %v8139 = vrot.slane %v7612, 7
        %v8140 = vrot.slane %v8139, 2
        %v8141 = vrot.slane %v7614, 7
        %v8142 = vrot.slane %v8141, 2
        %v8143 = vrot.slane %v7622, 7
        %v8144 = vrot.slane %v8143, 2
        %v8145 = vrot.slane %v7630, 7
        %v8146 = vrot.slane %v8145, 2
        %v8147 = vrot.slane %v7629, 7
        %v8148 = vrot.slane %v8147, 2
        %v8149 = vrot.slane %v7631, 7
        %v8150 = vrot.slane %v8149, 2
        %v8151 = vrot.slane %v7639, 7
        %v8152 = vrot.slane %v8151, 2
        %v8153 = vrot.slane %v7647, 7
        %v8154 = vrot.slane %v8153, 2
        %v8155 = vrot.slane %v7646, 7
        %v8156 = vrot.slane %v8155, 2
        %v8157 = vrot.slane %v7648, 7
        %v8158 = vrot.slane %v8157, 2
        %v8159 = vrot.slane %v7656, 7
        %v8160 = vrot.slane %v8159, 2
        %v8161 = vrot.slane %v7664, 7
        %v8162 = vrot.slane %v8161, 2
        %v8163 = vrot.slane %v7663, 7
        %v8164 = vrot.slane %v8163, 2
        %v8165 = vrot.slane %v7665, 7
        %v8166 = vrot.slane %v8165, 2
        %v8167 = vrot.slane %v7673, 7
        %v8168 = vrot.slane %v8167, 2
        %v8169 = vrot.slane %v7681, 7
        %v8170 = vrot.slane %v8169, 2
        %v8171 = vrot.slane %v7680, 7
        %v8172 = vrot.slane %v8171, 2
        %v8173 = vrot.slane %v7682, 7
        %v8174 = vrot.slane %v8173, 2
        %v8175 = vrot.slane %v7690, 7
        %v8176 = vrot.slane %v8175, 2
        %v8177 = vrot.slane %v7698, 7
        %v8178 = vrot.slane %v8177, 2
        %v8179 = vrot.slane %v7697, 7
        %v8180 = vrot.slane %v8179, 2
        %v8181 = vrot.slane %v7699, 7
        %v8182 = vrot.slane %v8181, 2
        %v8183 = vrot.slane %v7707, 7
        %v8184 = vrot.slane %v8183, 2
        %v8185 = vrot.slane %v7715, 7
        %v8186 = vrot.slane %v8185, 2
        %v8187 = vrot.slane %v7714, 7
        %v8188 = vrot.slane %v8187, 2
        %v8189 = vrot.slane %v7716, 7
        %v8190 = vrot.slane %v8189, 2
        %v8191 = vrot.slane %v7724, 7
        %v8192 = vrot.slane %v8191, 2
        %v8193 = vrot.slane %v7732, 7
        %v8194 = vrot.slane %v8193, 2
        %v8195 = vrot.slane %v7731, 7
        %v8196 = vrot.slane %v8195, 2
        %v8197 = vrot.slane %v7733, 7
        %v8198 = vrot.slane %v8197, 2
        %v8199 = vrot.slane %v7741, 7
        %v8200 = vrot.slane %v8199, 2
        %v8201 = vrot.slane %v7749, 7
        %v8202 = vrot.slane %v8201, 2
        %v8203 = vrot.slane %v7748, 7
        %v8204 = vrot.slane %v8203, 2
        %v8205 = vrot.slane %v7750, 7
        %v8206 = vrot.slane %v8205, 2
        %v8207 = vrot.slane %v7758, 7
        %v8208 = vrot.slane %v8207, 2
        %v8209 = vrot.slane %v7766, 7
        %v8210 = vrot.slane %v8209, 2
        %v8211 = vrot.slane %v7765, 7
        %v8212 = vrot.slane %v8211, 2
        %v8213 = vrot.slane %v7767, 7
        %v8214 = vrot.slane %v8213, 2
        %v8215 = vrot.slane %v7775, 7
        %v8216 = vrot.slane %v8215, 2
        %v8217 = vrot.slane %v7783, 7
        %v8218 = vrot.slane %v8217, 2
        %v8219 = vrot.slane %v7782, 7
        %v8220 = vrot.slane %v8219, 2
        %v8221 = vrot.slane %v7784, 7
        %v8222 = vrot.slane %v8221, 2
        %v8223 = vrot.slane %v7792, 7
        %v8224 = vrot.slane %v8223, 2
        %v8225 = vrot.slane %v7800, 7
        %v8226 = vrot.slane %v8225, 2
        %v8227 = vrot.slane %v7799, 7
        %v8228 = vrot.slane %v8227, 2
        %v8229 = vrot.slane %v7801, 7
        %v8230 = vrot.slane %v8229, 2
        %v8231 = vrot.slane %v7809, 7
        %v8232 = vrot.slane %v8231, 2
        %v8233 = vrot.slane %v7817, 7
        %v8234 = vrot.slane %v8233, 2
        %v8235 = vrot.slane %v7816, 7
        %v8236 = vrot.slane %v8235, 2
        %v8237 = vrot.slane %v7818, 7
        %v8238 = vrot.slane %v8237, 2
        %v8239 = vrot.slane %v7826, 7
        %v8240 = vrot.slane %v8239, 2
        %v8241 = vrot.slane %v7834, 7
        %v8242 = vrot.slane %v8241, 2
        %v8243 = vrot.slane %v7833, 7
        %v8244 = vrot.slane %v8243, 2
        %v8245 = vrot.slane %v7835, 7
        %v8246 = vrot.slane %v8245, 2
        %v8247 = vrot.slane %v7843, 7
        %v8248 = vrot.slane %v8247, 2
        %v8249 = vrot.slane %v7851, 7
        %v8250 = vrot.slane %v8249, 2
        %v8251 = vrot.slane %v7850, 7
        %v8252 = vrot.slane %v8251, 2
        %v8253 = vrot.slane %v7852, 7
        %v8254 = vrot.slane %v8253, 2
        %v8255 = vrot.slane %v7860, 7
        %v8256 = vrot.slane %v8255, 2
        %v8257 = vrot.slane %v7868, 7
        %v8258 = vrot.slane %v8257, 2
        %v8259 = vrot.slane %v7867, 7
        %v8260 = vrot.slane %v8259, 2
        %v8261 = vrot.slane %v7869, 7
        %v8262 = vrot.slane %v8261, 2
        %v8263 = vrot.slane %v7877, 7
        %v8264 = vrot.slane %v8263, 2
        %v8265 = vrot.slane %v7885, 7
        %v8266 = vrot.slane %v8265, 2
        %v8267 = vrot.slane %v7884, 7
        %v8268 = vrot.slane %v8267, 2
        %v8269 = vrot.slane %v7886, 7
        %v8270 = vrot.slane %v8269, 2
        %v8399 = vadd.f32 %v7350, %v8016
        %v8400 = vadd.f32 %v7358, %v8018
        %v8401 = vadd.f32 %v7357, %v8020
        %v8402 = vadd.f32 %v7359, %v8022
        %v8403 = vadd.f32 %v7367, %v8024
        %v8404 = vadd.f32 %v7375, %v8026
        %v8405 = vadd.f32 %v7374, %v8028
        %v8406 = vadd.f32 %v7376, %v8030
        %v8407 = vadd.f32 %v7384, %v8032
        %v8408 = vadd.f32 %v7392, %v8034
        %v8409 = vadd.f32 %v7391, %v8036
        %v8410 = vadd.f32 %v7393, %v8038
        %v8411 = vadd.f32 %v7401, %v8040
        %v8412 = vadd.f32 %v7409, %v8042
        %v8413 = vadd.f32 %v7408, %v8044
        %v8414 = vadd.f32 %v7410, %v8046
        %v8415 = vadd.f32 %v7418, %v8048
        %v8416 = vadd.f32 %v7426, %v8050
        %v8417 = vadd.f32 %v7425, %v8052
        %v8418 = vadd.f32 %v7427, %v8054
        %v8419 = vadd.f32 %v7435, %v8056
        %v8420 = vadd.f32 %v7443, %v8058
        %v8421 = vadd.f32 %v7442, %v8060
        %v8422 = vadd.f32 %v7444, %v8062
        %v8423 = vadd.f32 %v7452, %v8064
        %v8424 = vadd.f32 %v7460, %v8066
        %v8425 = vadd.f32 %v7459, %v8068
        %v8426 = vadd.f32 %v7461, %v8070
        %v8427 = vadd.f32 %v7469, %v8072
        %v8428 = vadd.f32 %v7477, %v8074
        %v8429 = vadd.f32 %v7476, %v8076
        %v8430 = vadd.f32 %v7478, %v8078
        %v8431 = vadd.f32 %v7486, %v8080
        %v8432 = vadd.f32 %v7494, %v8082
        %v8433 = vadd.f32 %v7493, %v8084
        %v8434 = vadd.f32 %v7495, %v8086
        %v8435 = vadd.f32 %v7503, %v8088
        %v8436 = vadd.f32 %v7511, %v8090
        %v8437 = vadd.f32 %v7510, %v8092
        %v8438 = vadd.f32 %v7512, %v8094
        %v8439 = vadd.f32 %v7520, %v8096
        %v8440 = vadd.f32 %v7528, %v8098
        %v8441 = vadd.f32 %v7527, %v8100
        %v8442 = vadd.f32 %v7529, %v8102
        %v8443 = vadd.f32 %v7537, %v8104
        %v8444 = vadd.f32 %v7545, %v8106
        %v8445 = vadd.f32 %v7544, %v8108
        %v8446 = vadd.f32 %v7546, %v8110
        %v8447 = vadd.f32 %v7554, %v8112
        %v8448 = vadd.f32 %v7562, %v8114
        %v8449 = vadd.f32 %v7561, %v8116
        %v8450 = vadd.f32 %v7563, %v8118
        %v8451 = vadd.f32 %v7571, %v8120
        %v8452 = vadd.f32 %v7579, %v8122
        %v8453 = vadd.f32 %v7578, %v8124
        %v8454 = vadd.f32 %v7580, %v8126
        %v8455 = vadd.f32 %v7588, %v8128
        %v8456 = vadd.f32 %v7596, %v8130
        %v8457 = vadd.f32 %v7595, %v8132
        %v8458 = vadd.f32 %v7597, %v8134
        %v8459 = vadd.f32 %v7605, %v8136
        %v8460 = vadd.f32 %v7613, %v8138
        %v8461 = vadd.f32 %v7612, %v8140
        %v8462 = vadd.f32 %v7614, %v8142
        %v8463 = vadd.f32 %v7622, %v8144
        %v8464 = vadd.f32 %v7630, %v8146
        %v8465 = vadd.f32 %v7629, %v8148
        %v8466 = vadd.f32 %v7631, %v8150
        %v8467 = vadd.f32 %v7639, %v8152
        %v8468 = vadd.f32 %v7647, %v8154
        %v8469 = vadd.f32 %v7646, %v8156
        %v8470 = vadd.f32 %v7648, %v8158
        %v8471 = vadd.f32 %v7656, %v8160
        %v8472 = vadd.f32 %v7664, %v8162
        %v8473 = vadd.f32 %v7663, %v8164
        %v8474 = vadd.f32 %v7665, %v8166
        %v8475 = vadd.f32 %v7673, %v8168
        %v8476 = vadd.f32 %v7681, %v8170
        %v8477 = vadd.f32 %v7680, %v8172
        %v8478 = vadd.f32 %v7682, %v8174
        %v8479 = vadd.f32 %v7690, %v8176
        %v8480 = vadd.f32 %v7698, %v8178
        %v8481 = vadd.f32 %v7697, %v8180
        %v8482 = vadd.f32 %v7699, %v8182
        %v8483 = vadd.f32 %v7707, %v8184
        %v8484 = vadd.f32 %v7715, %v8186
        %v8485 = vadd.f32 %v7714, %v8188
        %v8486 = vadd.f32 %v7716, %v8190
        %v8487 = vadd.f32 %v7724, %v8192
        %v8488 = vadd.f32 %v7732, %v8194
        %v8489 = vadd.f32 %v7731, %v8196
        %v8490 = vadd.f32 %v7733, %v8198
        %v8491 = vadd.f32 %v7741, %v8200
        %v8492 = vadd.f32 %v7749, %v8202
        %v8493 = vadd.f32 %v7748, %v8204
        %v8494 = vadd.f32 %v7750, %v8206
        %v8495 = vadd.f32 %v7758, %v8208
        %v8496 = vadd.f32 %v7766, %v8210
        %v8497 = vadd.f32 %v7765, %v8212
        %v8498 = vadd.f32 %v7767, %v8214
        %v8499 = vadd.f32 %v7775, %v8216
        %v8500 = vadd.f32 %v7783, %v8218
        %v8501 = vadd.f32 %v7782, %v8220
        %v8502 = vadd.f32 %v7784, %v8222
        %v8503 = vadd.f32 %v7792, %v8224
        %v8504 = vadd.f32 %v7800, %v8226
        %v8505 = vadd.f32 %v7799, %v8228
        %v8506 = vadd.f32 %v7801, %v8230
        %v8507 = vadd.f32 %v7809, %v8232
        %v8508 = vadd.f32 %v7817, %v8234
        %v8509 = vadd.f32 %v7816, %v8236
        %v8510 = vadd.f32 %v7818, %v8238
        %v8511 = vadd.f32 %v7826, %v8240
        %v8512 = vadd.f32 %v7834, %v8242
        %v8513 = vadd.f32 %v7833, %v8244
        %v8514 = vadd.f32 %v7835, %v8246
        %v8515 = vadd.f32 %v7843, %v8248
        %v8516 = vadd.f32 %v7851, %v8250
        %v8517 = vadd.f32 %v7850, %v8252
        %v8518 = vadd.f32 %v7852, %v8254
        %v8519 = vadd.f32 %v7860, %v8256
        %v8520 = vadd.f32 %v7868, %v8258
        %v8521 = vadd.f32 %v7867, %v8260
        %v8522 = vadd.f32 %v7869, %v8262
        %v8523 = vadd.f32 %v7877, %v8264
        %v8524 = vadd.f32 %v7885, %v8266
        %v8525 = vadd.f32 %v7884, %v8268
        %v8526 = vadd.f32 %v7886, %v8270
        %v8527 = vadd.f32 %v8399, %v8407
        %v8528 = vadd.f32 %v8400, %v8408
        %v8529 = vadd.f32 %v8401, %v8409
        %v8530 = vadd.f32 %v8402, %v8410
        %v8531 = vadd.f32 %v8403, %v8411
        %v8532 = vadd.f32 %v8404, %v8412
        %v8533 = vadd.f32 %v8405, %v8413
        %v8534 = vadd.f32 %v8406, %v8414
        %v8535 = vadd.f32 %v8415, %v8423
        %v8536 = vadd.f32 %v8416, %v8424
        %v8537 = vadd.f32 %v8417, %v8425
        %v8538 = vadd.f32 %v8418, %v8426
        %v8539 = vadd.f32 %v8419, %v8427
        %v8540 = vadd.f32 %v8420, %v8428
        %v8541 = vadd.f32 %v8421, %v8429
        %v8542 = vadd.f32 %v8422, %v8430
        %v8543 = vadd.f32 %v8431, %v8439
        %v8544 = vadd.f32 %v8432, %v8440
        %v8545 = vadd.f32 %v8433, %v8441
        %v8546 = vadd.f32 %v8434, %v8442
        %v8547 = vadd.f32 %v8435, %v8443
        %v8548 = vadd.f32 %v8436, %v8444
        %v8549 = vadd.f32 %v8437, %v8445
        %v8550 = vadd.f32 %v8438, %v8446
        %v8551 = vadd.f32 %v8447, %v8455
        %v8552 = vadd.f32 %v8448, %v8456
        %v8553 = vadd.f32 %v8449, %v8457
        %v8554 = vadd.f32 %v8450, %v8458
        %v8555 = vadd.f32 %v8451, %v8459
        %v8556 = vadd.f32 %v8452, %v8460
        %v8557 = vadd.f32 %v8453, %v8461
        %v8558 = vadd.f32 %v8454, %v8462
        %v8559 = vadd.f32 %v8463, %v8471
        %v8560 = vadd.f32 %v8464, %v8472
        %v8561 = vadd.f32 %v8465, %v8473
        %v8562 = vadd.f32 %v8466, %v8474
        %v8563 = vadd.f32 %v8467, %v8475
        %v8564 = vadd.f32 %v8468, %v8476
        %v8565 = vadd.f32 %v8469, %v8477
        %v8566 = vadd.f32 %v8470, %v8478
        %v8567 = vadd.f32 %v8479, %v8487
        %v8568 = vadd.f32 %v8480, %v8488
        %v8569 = vadd.f32 %v8481, %v8489
        %v8570 = vadd.f32 %v8482, %v8490
        %v8571 = vadd.f32 %v8483, %v8491
        %v8572 = vadd.f32 %v8484, %v8492
        %v8573 = vadd.f32 %v8485, %v8493
        %v8574 = vadd.f32 %v8486, %v8494
        %v8575 = vadd.f32 %v8495, %v8503
        %v8576 = vadd.f32 %v8496, %v8504
        %v8577 = vadd.f32 %v8497, %v8505
        %v8578 = vadd.f32 %v8498, %v8506
        %v8579 = vadd.f32 %v8499, %v8507
        %v8580 = vadd.f32 %v8500, %v8508
        %v8581 = vadd.f32 %v8501, %v8509
        %v8582 = vadd.f32 %v8502, %v8510
        %v8583 = vadd.f32 %v8511, %v8519
        %v8584 = vadd.f32 %v8512, %v8520
        %v8585 = vadd.f32 %v8513, %v8521
        %v8586 = vadd.f32 %v8514, %v8522
        %v8587 = vadd.f32 %v8515, %v8523
        %v8588 = vadd.f32 %v8516, %v8524
        %v8589 = vadd.f32 %v8517, %v8525
        %v8590 = vadd.f32 %v8518, %v8526
        %v8591 = vmul.f32 %v8527, 0.25
        %v8592 = vmul.f32 %v8528, 0.25
        %v8593 = vmul.f32 %v8529, 0.25
        %v8594 = vmul.f32 %v8530, 0.25
        %v8595 = vmul.f32 %v8531, 0.25
        %v8596 = vmul.f32 %v8532, 0.25
        %v8597 = vmul.f32 %v8533, 0.25
        %v8598 = vmul.f32 %v8534, 0.25
        %v8599 = vmul.f32 %v8535, 0.25
        %v8600 = vmul.f32 %v8536, 0.25
        %v8601 = vmul.f32 %v8537, 0.25
        %v8602 = vmul.f32 %v8538, 0.25
        %v8603 = vmul.f32 %v8539, 0.25
        %v8604 = vmul.f32 %v8540, 0.25
        %v8605 = vmul.f32 %v8541, 0.25
        %v8606 = vmul.f32 %v8542, 0.25
        %v8607 = vmul.f32 %v8543, 0.25
        %v8608 = vmul.f32 %v8544, 0.25
        %v8609 = vmul.f32 %v8545, 0.25
        %v8610 = vmul.f32 %v8546, 0.25
        %v8611 = vmul.f32 %v8547, 0.25
        %v8612 = vmul.f32 %v8548, 0.25
        %v8613 = vmul.f32 %v8549, 0.25
        %v8614 = vmul.f32 %v8550, 0.25
        %v8615 = vmul.f32 %v8551, 0.25
        %v8616 = vmul.f32 %v8552, 0.25
        %v8617 = vmul.f32 %v8553, 0.25
        %v8618 = vmul.f32 %v8554, 0.25
        %v8619 = vmul.f32 %v8555, 0.25
        %v8620 = vmul.f32 %v8556, 0.25
        %v8621 = vmul.f32 %v8557, 0.25
        %v8622 = vmul.f32 %v8558, 0.25
        %v8623 = vmul.f32 %v8559, 0.25
        %v8624 = vmul.f32 %v8560, 0.25
        %v8625 = vmul.f32 %v8561, 0.25
        %v8626 = vmul.f32 %v8562, 0.25
        %v8627 = vmul.f32 %v8563, 0.25
        %v8628 = vmul.f32 %v8564, 0.25
        %v8629 = vmul.f32 %v8565, 0.25
        %v8630 = vmul.f32 %v8566, 0.25
        %v8631 = vmul.f32 %v8567, 0.25
        %v8632 = vmul.f32 %v8568, 0.25
        %v8633 = vmul.f32 %v8569, 0.25
        %v8634 = vmul.f32 %v8570, 0.25
        %v8635 = vmul.f32 %v8571, 0.25
        %v8636 = vmul.f32 %v8572, 0.25
        %v8637 = vmul.f32 %v8573, 0.25
        %v8638 = vmul.f32 %v8574, 0.25
        %v8639 = vmul.f32 %v8575, 0.25
        %v8640 = vmul.f32 %v8576, 0.25
        %v8641 = vmul.f32 %v8577, 0.25
        %v8642 = vmul.f32 %v8578, 0.25
        %v8643 = vmul.f32 %v8579, 0.25
        %v8644 = vmul.f32 %v8580, 0.25
        %v8645 = vmul.f32 %v8581, 0.25
        %v8646 = vmul.f32 %v8582, 0.25
        %v8647 = vmul.f32 %v8583, 0.25
        %v8648 = vmul.f32 %v8584, 0.25
        %v8649 = vmul.f32 %v8585, 0.25
        %v8650 = vmul.f32 %v8586, 0.25
        %v8651 = vmul.f32 %v8587, 0.25
        %v8652 = vmul.f32 %v8588, 0.25
        %v8653 = vmul.f32 %v8589, 0.25
        %v8654 = vmul.f32 %v8590, 0.25
        %v8719 = vlaneseq
        %v8720 = vshrl.u32 %v8719, 7
        %v8721 = vsub.s32 0, %v8720
        %v8722 = vrot.slane %v8591, %v8721
        %v8723 = vlaneseq
        %v8724 = vshrl.u32 %v8723, 7
        %v8725 = vsub.s32 0, %v8724
        %v8726 = vrot.slane %v8592, %v8725
        %v8727 = vlaneseq
        %v8728 = vshrl.u32 %v8727, 7
        %v8729 = vsub.s32 0, %v8728
        %v8730 = vrot.slane %v8593, %v8729
        %v8731 = vlaneseq
        %v8732 = vshrl.u32 %v8731, 7
        %v8733 = vsub.s32 0, %v8732
        %v8734 = vrot.slane %v8594, %v8733
        %v8735 = vlaneseq
        %v8736 = vshrl.u32 %v8735, 7
        %v8737 = vsub.s32 0, %v8736
        %v8738 = vrot.slane %v8595, %v8737
        %v8739 = vlaneseq
        %v8740 = vshrl.u32 %v8739, 7
        %v8741 = vsub.s32 0, %v8740
        %v8742 = vrot.slane %v8596, %v8741
        %v8743 = vlaneseq
        %v8744 = vshrl.u32 %v8743, 7
        %v8745 = vsub.s32 0, %v8744
        %v8746 = vrot.slane %v8597, %v8745
        %v8747 = vlaneseq
        %v8748 = vshrl.u32 %v8747, 7
        %v8749 = vsub.s32 0, %v8748
        %v8750 = vrot.slane %v8598, %v8749
        %v8751 = vlaneseq
        %v8752 = vshrl.u32 %v8751, 7
        %v8753 = vsub.s32 0, %v8752
        %v8754 = vrot.slane %v8599, %v8753
        %v8755 = vlaneseq
        %v8756 = vshrl.u32 %v8755, 7
        %v8757 = vsub.s32 0, %v8756
        %v8758 = vrot.slane %v8600, %v8757
        %v8759 = vlaneseq
        %v8760 = vshrl.u32 %v8759, 7
        %v8761 = vsub.s32 0, %v8760
        %v8762 = vrot.slane %v8601, %v8761
        %v8763 = vlaneseq
        %v8764 = vshrl.u32 %v8763, 7
        %v8765 = vsub.s32 0, %v8764
        %v8766 = vrot.slane %v8602, %v8765
        %v8767 = vlaneseq
        %v8768 = vshrl.u32 %v8767, 7
        %v8769 = vsub.s32 0, %v8768
        %v8770 = vrot.slane %v8603, %v8769
        %v8771 = vlaneseq
        %v8772 = vshrl.u32 %v8771, 7
        %v8773 = vsub.s32 0, %v8772
        %v8774 = vrot.slane %v8604, %v8773
        %v8775 = vlaneseq
        %v8776 = vshrl.u32 %v8775, 7
        %v8777 = vsub.s32 0, %v8776
        %v8778 = vrot.slane %v8605, %v8777
        %v8779 = vlaneseq
        %v8780 = vshrl.u32 %v8779, 7
        %v8781 = vsub.s32 0, %v8780
        %v8782 = vrot.slane %v8606, %v8781
        %v8783 = vlaneseq
        %v8784 = vshrl.u32 %v8783, 7
        %v8785 = vsub.s32 0, %v8784
        %v8786 = vrot.slane %v8607, %v8785
        %v8787 = vlaneseq
        %v8788 = vshrl.u32 %v8787, 7
        %v8789 = vsub.s32 0, %v8788
        %v8790 = vrot.slane %v8608, %v8789
        %v8791 = vlaneseq
        %v8792 = vshrl.u32 %v8791, 7
        %v8793 = vsub.s32 0, %v8792
        %v8794 = vrot.slane %v8609, %v8793
        %v8795 = vlaneseq
        %v8796 = vshrl.u32 %v8795, 7
        %v8797 = vsub.s32 0, %v8796
        %v8798 = vrot.slane %v8610, %v8797
        %v8799 = vlaneseq
        %v8800 = vshrl.u32 %v8799, 7
        %v8801 = vsub.s32 0, %v8800
        %v8802 = vrot.slane %v8611, %v8801
        %v8803 = vlaneseq
        %v8804 = vshrl.u32 %v8803, 7
        %v8805 = vsub.s32 0, %v8804
        %v8806 = vrot.slane %v8612, %v8805
        %v8807 = vlaneseq
        %v8808 = vshrl.u32 %v8807, 7
        %v8809 = vsub.s32 0, %v8808
        %v8810 = vrot.slane %v8613, %v8809
        %v8811 = vlaneseq
        %v8812 = vshrl.u32 %v8811, 7
        %v8813 = vsub.s32 0, %v8812
        %v8814 = vrot.slane %v8614, %v8813
        %v8815 = vlaneseq
        %v8816 = vshrl.u32 %v8815, 7
        %v8817 = vsub.s32 0, %v8816
        %v8818 = vrot.slane %v8615, %v8817
        %v8819 = vlaneseq
        %v8820 = vshrl.u32 %v8819, 7
        %v8821 = vsub.s32 0, %v8820
        %v8822 = vrot.slane %v8616, %v8821
        %v8823 = vlaneseq
        %v8824 = vshrl.u32 %v8823, 7
        %v8825 = vsub.s32 0, %v8824
        %v8826 = vrot.slane %v8617, %v8825
        %v8827 = vlaneseq
        %v8828 = vshrl.u32 %v8827, 7
        %v8829 = vsub.s32 0, %v8828
        %v8830 = vrot.slane %v8618, %v8829
        %v8831 = vlaneseq
        %v8832 = vshrl.u32 %v8831, 7
        %v8833 = vsub.s32 0, %v8832
        %v8834 = vrot.slane %v8619, %v8833
        %v8835 = vlaneseq
        %v8836 = vshrl.u32 %v8835, 7
        %v8837 = vsub.s32 0, %v8836
        %v8838 = vrot.slane %v8620, %v8837
        %v8839 = vlaneseq
        %v8840 = vshrl.u32 %v8839, 7
        %v8841 = vsub.s32 0, %v8840
        %v8842 = vrot.slane %v8621, %v8841
        %v8843 = vlaneseq
        %v8844 = vshrl.u32 %v8843, 7
        %v8845 = vsub.s32 0, %v8844
        %v8846 = vrot.slane %v8622, %v8845
        %v8847 = vlaneseq
        %v8848 = vshrl.u32 %v8847, 7
        %v8849 = vsub.s32 0, %v8848
        %v8850 = vrot.slane %v8623, %v8849
        %v8851 = vlaneseq
        %v8852 = vshrl.u32 %v8851, 7
        %v8853 = vsub.s32 0, %v8852
        %v8854 = vrot.slane %v8624, %v8853
        %v8855 = vlaneseq
        %v8856 = vshrl.u32 %v8855, 7
        %v8857 = vsub.s32 0, %v8856
        %v8858 = vrot.slane %v8625, %v8857
        %v8859 = vlaneseq
        %v8860 = vshrl.u32 %v8859, 7
        %v8861 = vsub.s32 0, %v8860
        %v8862 = vrot.slane %v8626, %v8861
        %v8863 = vlaneseq
        %v8864 = vshrl.u32 %v8863, 7
        %v8865 = vsub.s32 0, %v8864
        %v8866 = vrot.slane %v8627, %v8865
        %v8867 = vlaneseq
        %v8868 = vshrl.u32 %v8867, 7
        %v8869 = vsub.s32 0, %v8868
        %v8870 = vrot.slane %v8628, %v8869
        %v8871 = vlaneseq
        %v8872 = vshrl.u32 %v8871, 7
        %v8873 = vsub.s32 0, %v8872
        %v8874 = vrot.slane %v8629, %v8873
        %v8875 = vlaneseq
        %v8876 = vshrl.u32 %v8875, 7
        %v8877 = vsub.s32 0, %v8876
        %v8878 = vrot.slane %v8630, %v8877
        %v8879 = vlaneseq
        %v8880 = vshrl.u32 %v8879, 7
        %v8881 = vsub.s32 0, %v8880
        %v8882 = vrot.slane %v8631, %v8881
        %v8883 = vlaneseq
        %v8884 = vshrl.u32 %v8883, 7
        %v8885 = vsub.s32 0, %v8884
        %v8886 = vrot.slane %v8632, %v8885
        %v8887 = vlaneseq
        %v8888 = vshrl.u32 %v8887, 7
        %v8889 = vsub.s32 0, %v8888
        %v8890 = vrot.slane %v8633, %v8889
        %v8891 = vlaneseq
        %v8892 = vshrl.u32 %v8891, 7
        %v8893 = vsub.s32 0, %v8892
        %v8894 = vrot.slane %v8634, %v8893
        %v8895 = vlaneseq
        %v8896 = vshrl.u32 %v8895, 7
        %v8897 = vsub.s32 0, %v8896
        %v8898 = vrot.slane %v8635, %v8897
        %v8899 = vlaneseq
        %v8900 = vshrl.u32 %v8899, 7
        %v8901 = vsub.s32 0, %v8900
        %v8902 = vrot.slane %v8636, %v8901
        %v8903 = vlaneseq
        %v8904 = vshrl.u32 %v8903, 7
        %v8905 = vsub.s32 0, %v8904
        %v8906 = vrot.slane %v8637, %v8905
        %v8907 = vlaneseq
        %v8908 = vshrl.u32 %v8907, 7
        %v8909 = vsub.s32 0, %v8908
        %v8910 = vrot.slane %v8638, %v8909
        %v8911 = vlaneseq
        %v8912 = vshrl.u32 %v8911, 7
        %v8913 = vsub.s32 0, %v8912
        %v8914 = vrot.slane %v8639, %v8913
        %v8915 = vlaneseq
        %v8916 = vshrl.u32 %v8915, 7
        %v8917 = vsub.s32 0, %v8916
        %v8918 = vrot.slane %v8640, %v8917
        %v8919 = vlaneseq
        %v8920 = vshrl.u32 %v8919, 7
        %v8921 = vsub.s32 0, %v8920
        %v8922 = vrot.slane %v8641, %v8921
        %v8923 = vlaneseq
        %v8924 = vshrl.u32 %v8923, 7
        %v8925 = vsub.s32 0, %v8924
        %v8926 = vrot.slane %v8642, %v8925
        %v8927 = vlaneseq
        %v8928 = vshrl.u32 %v8927, 7
        %v8929 = vsub.s32 0, %v8928
        %v8930 = vrot.slane %v8643, %v8929
        %v8931 = vlaneseq
        %v8932 = vshrl.u32 %v8931, 7
        %v8933 = vsub.s32 0, %v8932
        %v8934 = vrot.slane %v8644, %v8933
        %v8935 = vlaneseq
        %v8936 = vshrl.u32 %v8935, 7
        %v8937 = vsub.s32 0, %v8936
        %v8938 = vrot.slane %v8645, %v8937
        %v8939 = vlaneseq
        %v8940 = vshrl.u32 %v8939, 7
        %v8941 = vsub.s32 0, %v8940
        %v8942 = vrot.slane %v8646, %v8941
        %v8943 = vlaneseq
        %v8944 = vshrl.u32 %v8943, 7
        %v8945 = vsub.s32 0, %v8944
        %v8946 = vrot.slane %v8647, %v8945
        %v8947 = vlaneseq
        %v8948 = vshrl.u32 %v8947, 7
        %v8949 = vsub.s32 0, %v8948
        %v8950 = vrot.slane %v8648, %v8949
        %v8951 = vlaneseq
        %v8952 = vshrl.u32 %v8951, 7
        %v8953 = vsub.s32 0, %v8952
        %v8954 = vrot.slane %v8649, %v8953
        %v8955 = vlaneseq
        %v8956 = vshrl.u32 %v8955, 7
        %v8957 = vsub.s32 0, %v8956
        %v8958 = vrot.slane %v8650, %v8957
        %v8959 = vlaneseq
        %v8960 = vshrl.u32 %v8959, 7
        %v8961 = vsub.s32 0, %v8960
        %v8962 = vrot.slane %v8651, %v8961
        %v8963 = vlaneseq
        %v8964 = vshrl.u32 %v8963, 7
        %v8965 = vsub.s32 0, %v8964
        %v8966 = vrot.slane %v8652, %v8965
        %v8967 = vlaneseq
        %v8968 = vshrl.u32 %v8967, 7
        %v8969 = vsub.s32 0, %v8968
        %v8970 = vrot.slane %v8653, %v8969
        %v8971 = vlaneseq
        %v8972 = vshrl.u32 %v8971, 7
        %v8973 = vsub.s32 0, %v8972
        %v8974 = vrot.slane %v8654, %v8973
        %vm8975 = vcmask 1041409
        %v8976 = vsel %vm8975, %v8726, %v8722
        %vm8977 = vcmask 1042434
        %v8978 = vsel %vm8977, %v8730, %v8976
        %vm8979 = vcmask 1043459
        %v8980 = vsel %vm8979, %v8734, %v8978
        %vm8981 = vcmask 1044484
        %v8982 = vsel %vm8981, %v8738, %v8980
        %vm8983 = vcmask 1045509
        %v8984 = vsel %vm8983, %v8742, %v8982
        %vm8985 = vcmask 1046534
        %v8986 = vsel %vm8985, %v8746, %v8984
        %vm8987 = vcmask 1047559
        %v8988 = vsel %vm8987, %v8750, %v8986
        %v8989 = vsel %vm8975, %v8758, %v8754
        %v8990 = vsel %vm8977, %v8762, %v8989
        %v8991 = vsel %vm8979, %v8766, %v8990
        %v8992 = vsel %vm8981, %v8770, %v8991
        %v8993 = vsel %vm8983, %v8774, %v8992
        %v8994 = vsel %vm8985, %v8778, %v8993
        %v8995 = vsel %vm8987, %v8782, %v8994
        %v8996 = vsel %vm8975, %v8790, %v8786
        %v8997 = vsel %vm8977, %v8794, %v8996
        %v8998 = vsel %vm8979, %v8798, %v8997
        %v8999 = vsel %vm8981, %v8802, %v8998
        %v9000 = vsel %vm8983, %v8806, %v8999
        %v9001 = vsel %vm8985, %v8810, %v9000
        %v9002 = vsel %vm8987, %v8814, %v9001
        %v9003 = vsel %vm8975, %v8822, %v8818
        %v9004 = vsel %vm8977, %v8826, %v9003
        %v9005 = vsel %vm8979, %v8830, %v9004
        %v9006 = vsel %vm8981, %v8834, %v9005
        %v9007 = vsel %vm8983, %v8838, %v9006
        %v9008 = vsel %vm8985, %v8842, %v9007
        %v9009 = vsel %vm8987, %v8846, %v9008
        %v9010 = vsel %vm8975, %v8854, %v8850
        %v9011 = vsel %vm8977, %v8858, %v9010
        %v9012 = vsel %vm8979, %v8862, %v9011
        %v9013 = vsel %vm8981, %v8866, %v9012
        %v9014 = vsel %vm8983, %v8870, %v9013
        %v9015 = vsel %vm8985, %v8874, %v9014
        %v9016 = vsel %vm8987, %v8878, %v9015
        %v9017 = vsel %vm8975, %v8886, %v8882
        %v9018 = vsel %vm8977, %v8890, %v9017
        %v9019 = vsel %vm8979, %v8894, %v9018
        %v9020 = vsel %vm8981, %v8898, %v9019
        %v9021 = vsel %vm8983, %v8902, %v9020
        %v9022 = vsel %vm8985, %v8906, %v9021
        %v9023 = vsel %vm8987, %v8910, %v9022
        %v9024 = vsel %vm8975, %v8918, %v8914
        %v9025 = vsel %vm8977, %v8922, %v9024
        %v9026 = vsel %vm8979, %v8926, %v9025
        %v9027 = vsel %vm8981, %v8930, %v9026
        %v9028 = vsel %vm8983, %v8934, %v9027
        %v9029 = vsel %vm8985, %v8938, %v9028
        %v9030 = vsel %vm8987, %v8942, %v9029
        %v9031 = vsel %vm8975, %v8950, %v8946
        %v9032 = vsel %vm8977, %v8954, %v9031
        %v9033 = vsel %vm8979, %v8958, %v9032
        %v9034 = vsel %vm8981, %v8962, %v9033
        %v9035 = vsel %vm8983, %v8966, %v9034
        %v9036 = vsel %vm8985, %v8970, %v9035
        %v9037 = vsel %vm8987, %v8974, %v9036
        %v9046 = vsel %vm2875, %v8988, 0.0
        %v9047 = vsel %vm2875, %v8995, 0.0
        %v9048 = vadd.f32 %v9046, %v9047
        %v9049 = vsel %vm2875, %v9002, 0.0
        %v9050 = vadd.f32 %v9048, %v9049
        %v9051 = vsel %vm2875, %v9009, 0.0
        %v9052 = vadd.f32 %v9050, %v9051
        %v9053 = vsel %vm2875, %v9016, 0.0
        %v9054 = vadd.f32 %v9052, %v9053
        %v9055 = vsel %vm2875, %v9023, 0.0
        %v9056 = vadd.f32 %v9054, %v9055
        %v9057 = vsel %vm2875, %v9030, 0.0
        %v9058 = vadd.f32 %v9056, %v9057
        %v9059 = vsel %vm2875, %v9037, 0.0
        %v9060 = vadd.f32 %v9058, %v9059
        %v9061 = vrot.slane %v9060, 4
        %v9062 = vadd.f32 %v9060, %v9061
        %v9063 = vrot.slane %v9062, 2
        %v9064 = vadd.f32 %v9062, %v9063
        %v9065 = vrot.slane %v9064, 1
        %v9066 = vadd.f32 %v9064, %v9065
        %v9067 = vrcp.pop 64.0
        %v9068 = vmul.f32 %v9066, %v9067
        %v9069 = vlaneseq
        %v9070 = vshrl.u32 %v9069, 7
        %v9071 = vsub.s32 0, %v9070
        %v9072 = vrot.slane %v9068, %v9071
        %v9074 = vcombine.high %v9072, %v9072
        %v9076 = vunpack.c.l.s4 1983009808
        %v9077 = vunpack.c.0.s8 %v9076
        %v9078 = vlaneseq
        %v9079 = vshrl.u32 %v9078, 7
        %v9080 = vsub.s32 %v9077, %v9079
        %v9081 = vrot.slane %v9072, %v9080
        %v9083 = vunpack.c.l.s4 1983009808
        %v9084 = vunpack.c.0.s8 %v9083
        %v9085 = vlaneseq
        %v9086 = vshrl.u32 %v9085, 7
        %v9087 = vsub.s32 %v9084, %v9086
        %v9088 = vrot.slane %v9074, %v9087
        %v9089 = vcombine.high %v9081, %v9081
        %v9090 = vcombine.high %v9088, %v9088
        %v9091 = vrot.slane %v9081, 1
        %v9092 = vrot.slane %v9089, 1
        %v9093 = vrot.slane %v9088, 1
        %v9094 = vrot.slane %v9090, 1
        %v9103 = vsub.f32 %v8591, %v9081
        %v9104 = vsub.f32 %v8592, %v9091
        %v9105 = vsub.f32 %v8593, %v9089
        %v9106 = vsub.f32 %v8594, %v9092
        %v9107 = vsub.f32 %v8595, %v9088
        %v9108 = vsub.f32 %v8596, %v9093
        %v9109 = vsub.f32 %v8597, %v9090
        %v9110 = vsub.f32 %v8598, %v9094
        %v9111 = vsub.f32 %v8599, %v9081
        %v9112 = vsub.f32 %v8600, %v9091
        %v9113 = vsub.f32 %v8601, %v9089
        %v9114 = vsub.f32 %v8602, %v9092
        %v9115 = vsub.f32 %v8603, %v9088
        %v9116 = vsub.f32 %v8604, %v9093
        %v9117 = vsub.f32 %v8605, %v9090
        %v9118 = vsub.f32 %v8606, %v9094
        %v9119 = vsub.f32 %v8607, %v9081
        %v9120 = vsub.f32 %v8608, %v9091
        %v9121 = vsub.f32 %v8609, %v9089
        %v9122 = vsub.f32 %v8610, %v9092
        %v9123 = vsub.f32 %v8611, %v9088
        %v9124 = vsub.f32 %v8612, %v9093
        %v9125 = vsub.f32 %v8613, %v9090
        %v9126 = vsub.f32 %v8614, %v9094
        %v9127 = vsub.f32 %v8615, %v9081
        %v9128 = vsub.f32 %v8616, %v9091
        %v9129 = vsub.f32 %v8617, %v9089
        %v9130 = vsub.f32 %v8618, %v9092
        %v9131 = vsub.f32 %v8619, %v9088
        %v9132 = vsub.f32 %v8620, %v9093
        %v9133 = vsub.f32 %v8621, %v9090
        %v9134 = vsub.f32 %v8622, %v9094
        %v9135 = vsub.f32 %v8623, %v9081
        %v9136 = vsub.f32 %v8624, %v9091
        %v9137 = vsub.f32 %v8625, %v9089
        %v9138 = vsub.f32 %v8626, %v9092
        %v9139 = vsub.f32 %v8627, %v9088
        %v9140 = vsub.f32 %v8628, %v9093
        %v9141 = vsub.f32 %v8629, %v9090
        %v9142 = vsub.f32 %v8630, %v9094
        %v9143 = vsub.f32 %v8631, %v9081
        %v9144 = vsub.f32 %v8632, %v9091
        %v9145 = vsub.f32 %v8633, %v9089
        %v9146 = vsub.f32 %v8634, %v9092
        %v9147 = vsub.f32 %v8635, %v9088
        %v9148 = vsub.f32 %v8636, %v9093
        %v9149 = vsub.f32 %v8637, %v9090
        %v9150 = vsub.f32 %v8638, %v9094
        %v9151 = vsub.f32 %v8639, %v9081
        %v9152 = vsub.f32 %v8640, %v9091
        %v9153 = vsub.f32 %v8641, %v9089
        %v9154 = vsub.f32 %v8642, %v9092
        %v9155 = vsub.f32 %v8643, %v9088
        %v9156 = vsub.f32 %v8644, %v9093
        %v9157 = vsub.f32 %v8645, %v9090
        %v9158 = vsub.f32 %v8646, %v9094
        %v9159 = vsub.f32 %v8647, %v9081
        %v9160 = vsub.f32 %v8648, %v9091
        %v9161 = vsub.f32 %v8649, %v9089
        %v9162 = vsub.f32 %v8650, %v9092
        %v9163 = vsub.f32 %v8651, %v9088
        %v9164 = vsub.f32 %v8652, %v9093
        %v9165 = vsub.f32 %v8653, %v9090
        %v9166 = vsub.f32 %v8654, %v9094
        %v9167 = vmul.f32 %v9103, %v9103
        %v9168 = vmul.f32 %v9104, %v9104
        %v9169 = vmul.f32 %v9105, %v9105
        %v9170 = vmul.f32 %v9106, %v9106
        %v9171 = vmul.f32 %v9107, %v9107
        %v9172 = vmul.f32 %v9108, %v9108
        %v9173 = vmul.f32 %v9109, %v9109
        %v9174 = vmul.f32 %v9110, %v9110
        %v9175 = vmul.f32 %v9111, %v9111
        %v9176 = vmul.f32 %v9112, %v9112
        %v9177 = vmul.f32 %v9113, %v9113
        %v9178 = vmul.f32 %v9114, %v9114
        %v9179 = vmul.f32 %v9115, %v9115
        %v9180 = vmul.f32 %v9116, %v9116
        %v9181 = vmul.f32 %v9117, %v9117
        %v9182 = vmul.f32 %v9118, %v9118
        %v9183 = vmul.f32 %v9119, %v9119
        %v9184 = vmul.f32 %v9120, %v9120
        %v9185 = vmul.f32 %v9121, %v9121
        %v9186 = vmul.f32 %v9122, %v9122
        %v9187 = vmul.f32 %v9123, %v9123
        %v9188 = vmul.f32 %v9124, %v9124
        %v9189 = vmul.f32 %v9125, %v9125
        %v9190 = vmul.f32 %v9126, %v9126
        %v9191 = vmul.f32 %v9127, %v9127
        %v9192 = vmul.f32 %v9128, %v9128
        %v9193 = vmul.f32 %v9129, %v9129
        %v9194 = vmul.f32 %v9130, %v9130
        %v9195 = vmul.f32 %v9131, %v9131
        %v9196 = vmul.f32 %v9132, %v9132
        %v9197 = vmul.f32 %v9133, %v9133
        %v9198 = vmul.f32 %v9134, %v9134
        %v9199 = vmul.f32 %v9135, %v9135
        %v9200 = vmul.f32 %v9136, %v9136
        %v9201 = vmul.f32 %v9137, %v9137
        %v9202 = vmul.f32 %v9138, %v9138
        %v9203 = vmul.f32 %v9139, %v9139
        %v9204 = vmul.f32 %v9140, %v9140
        %v9205 = vmul.f32 %v9141, %v9141
        %v9206 = vmul.f32 %v9142, %v9142
        %v9207 = vmul.f32 %v9143, %v9143
        %v9208 = vmul.f32 %v9144, %v9144
        %v9209 = vmul.f32 %v9145, %v9145
        %v9210 = vmul.f32 %v9146, %v9146
        %v9211 = vmul.f32 %v9147, %v9147
        %v9212 = vmul.f32 %v9148, %v9148
        %v9213 = vmul.f32 %v9149, %v9149
        %v9214 = vmul.f32 %v9150, %v9150
        %v9215 = vmul.f32 %v9151, %v9151
        %v9216 = vmul.f32 %v9152, %v9152
        %v9217 = vmul.f32 %v9153, %v9153
        %v9218 = vmul.f32 %v9154, %v9154
        %v9219 = vmul.f32 %v9155, %v9155
        %v9220 = vmul.f32 %v9156, %v9156
        %v9221 = vmul.f32 %v9157, %v9157
        %v9222 = vmul.f32 %v9158, %v9158
        %v9223 = vmul.f32 %v9159, %v9159
        %v9224 = vmul.f32 %v9160, %v9160
        %v9225 = vmul.f32 %v9161, %v9161
        %v9226 = vmul.f32 %v9162, %v9162
        %v9227 = vmul.f32 %v9163, %v9163
        %v9228 = vmul.f32 %v9164, %v9164
        %v9229 = vmul.f32 %v9165, %v9165
        %v9230 = vmul.f32 %v9166, %v9166
        %v9295 = vlaneseq
        %v9296 = vshrl.u32 %v9295, 7
        %v9297 = vsub.s32 0, %v9296
        %v9298 = vrot.slane %v9167, %v9297
        %v9299 = vlaneseq
        %v9300 = vshrl.u32 %v9299, 7
        %v9301 = vsub.s32 0, %v9300
        %v9302 = vrot.slane %v9168, %v9301
        %v9303 = vlaneseq
        %v9304 = vshrl.u32 %v9303, 7
        %v9305 = vsub.s32 0, %v9304
        %v9306 = vrot.slane %v9169, %v9305
        %v9307 = vlaneseq
        %v9308 = vshrl.u32 %v9307, 7
        %v9309 = vsub.s32 0, %v9308
        %v9310 = vrot.slane %v9170, %v9309
        %v9311 = vlaneseq
        %v9312 = vshrl.u32 %v9311, 7
        %v9313 = vsub.s32 0, %v9312
        %v9314 = vrot.slane %v9171, %v9313
        %v9315 = vlaneseq
        %v9316 = vshrl.u32 %v9315, 7
        %v9317 = vsub.s32 0, %v9316
        %v9318 = vrot.slane %v9172, %v9317
        %v9319 = vlaneseq
        %v9320 = vshrl.u32 %v9319, 7
        %v9321 = vsub.s32 0, %v9320
        %v9322 = vrot.slane %v9173, %v9321
        %v9323 = vlaneseq
        %v9324 = vshrl.u32 %v9323, 7
        %v9325 = vsub.s32 0, %v9324
        %v9326 = vrot.slane %v9174, %v9325
        %v9327 = vlaneseq
        %v9328 = vshrl.u32 %v9327, 7
        %v9329 = vsub.s32 0, %v9328
        %v9330 = vrot.slane %v9175, %v9329
        %v9331 = vlaneseq
        %v9332 = vshrl.u32 %v9331, 7
        %v9333 = vsub.s32 0, %v9332
        %v9334 = vrot.slane %v9176, %v9333
        %v9335 = vlaneseq
        %v9336 = vshrl.u32 %v9335, 7
        %v9337 = vsub.s32 0, %v9336
        %v9338 = vrot.slane %v9177, %v9337
        %v9339 = vlaneseq
        %v9340 = vshrl.u32 %v9339, 7
        %v9341 = vsub.s32 0, %v9340
        %v9342 = vrot.slane %v9178, %v9341
        %v9343 = vlaneseq
        %v9344 = vshrl.u32 %v9343, 7
        %v9345 = vsub.s32 0, %v9344
        %v9346 = vrot.slane %v9179, %v9345
        %v9347 = vlaneseq
        %v9348 = vshrl.u32 %v9347, 7
        %v9349 = vsub.s32 0, %v9348
        %v9350 = vrot.slane %v9180, %v9349
        %v9351 = vlaneseq
        %v9352 = vshrl.u32 %v9351, 7
        %v9353 = vsub.s32 0, %v9352
        %v9354 = vrot.slane %v9181, %v9353
        %v9355 = vlaneseq
        %v9356 = vshrl.u32 %v9355, 7
        %v9357 = vsub.s32 0, %v9356
        %v9358 = vrot.slane %v9182, %v9357
        %v9359 = vlaneseq
        %v9360 = vshrl.u32 %v9359, 7
        %v9361 = vsub.s32 0, %v9360
        %v9362 = vrot.slane %v9183, %v9361
        %v9363 = vlaneseq
        %v9364 = vshrl.u32 %v9363, 7
        %v9365 = vsub.s32 0, %v9364
        %v9366 = vrot.slane %v9184, %v9365
        %v9367 = vlaneseq
        %v9368 = vshrl.u32 %v9367, 7
        %v9369 = vsub.s32 0, %v9368
        %v9370 = vrot.slane %v9185, %v9369
        %v9371 = vlaneseq
        %v9372 = vshrl.u32 %v9371, 7
        %v9373 = vsub.s32 0, %v9372
        %v9374 = vrot.slane %v9186, %v9373
        %v9375 = vlaneseq
        %v9376 = vshrl.u32 %v9375, 7
        %v9377 = vsub.s32 0, %v9376
        %v9378 = vrot.slane %v9187, %v9377
        %v9379 = vlaneseq
        %v9380 = vshrl.u32 %v9379, 7
        %v9381 = vsub.s32 0, %v9380
        %v9382 = vrot.slane %v9188, %v9381
        %v9383 = vlaneseq
        %v9384 = vshrl.u32 %v9383, 7
        %v9385 = vsub.s32 0, %v9384
        %v9386 = vrot.slane %v9189, %v9385
        %v9387 = vlaneseq
        %v9388 = vshrl.u32 %v9387, 7
        %v9389 = vsub.s32 0, %v9388
        %v9390 = vrot.slane %v9190, %v9389
        %v9391 = vlaneseq
        %v9392 = vshrl.u32 %v9391, 7
        %v9393 = vsub.s32 0, %v9392
        %v9394 = vrot.slane %v9191, %v9393
        %v9395 = vlaneseq
        %v9396 = vshrl.u32 %v9395, 7
        %v9397 = vsub.s32 0, %v9396
        %v9398 = vrot.slane %v9192, %v9397
        %v9399 = vlaneseq
        %v9400 = vshrl.u32 %v9399, 7
        %v9401 = vsub.s32 0, %v9400
        %v9402 = vrot.slane %v9193, %v9401
        %v9403 = vlaneseq
        %v9404 = vshrl.u32 %v9403, 7
        %v9405 = vsub.s32 0, %v9404
        %v9406 = vrot.slane %v9194, %v9405
        %v9407 = vlaneseq
        %v9408 = vshrl.u32 %v9407, 7
        %v9409 = vsub.s32 0, %v9408
        %v9410 = vrot.slane %v9195, %v9409
        %v9411 = vlaneseq
        %v9412 = vshrl.u32 %v9411, 7
        %v9413 = vsub.s32 0, %v9412
        %v9414 = vrot.slane %v9196, %v9413
        %v9415 = vlaneseq
        %v9416 = vshrl.u32 %v9415, 7
        %v9417 = vsub.s32 0, %v9416
        %v9418 = vrot.slane %v9197, %v9417
        %v9419 = vlaneseq
        %v9420 = vshrl.u32 %v9419, 7
        %v9421 = vsub.s32 0, %v9420
        %v9422 = vrot.slane %v9198, %v9421
        %v9423 = vlaneseq
        %v9424 = vshrl.u32 %v9423, 7
        %v9425 = vsub.s32 0, %v9424
        %v9426 = vrot.slane %v9199, %v9425
        %v9427 = vlaneseq
        %v9428 = vshrl.u32 %v9427, 7
        %v9429 = vsub.s32 0, %v9428
        %v9430 = vrot.slane %v9200, %v9429
        %v9431 = vlaneseq
        %v9432 = vshrl.u32 %v9431, 7
        %v9433 = vsub.s32 0, %v9432
        %v9434 = vrot.slane %v9201, %v9433
        %v9435 = vlaneseq
        %v9436 = vshrl.u32 %v9435, 7
        %v9437 = vsub.s32 0, %v9436
        %v9438 = vrot.slane %v9202, %v9437
        %v9439 = vlaneseq
        %v9440 = vshrl.u32 %v9439, 7
        %v9441 = vsub.s32 0, %v9440
        %v9442 = vrot.slane %v9203, %v9441
        %v9443 = vlaneseq
        %v9444 = vshrl.u32 %v9443, 7
        %v9445 = vsub.s32 0, %v9444
        %v9446 = vrot.slane %v9204, %v9445
        %v9447 = vlaneseq
        %v9448 = vshrl.u32 %v9447, 7
        %v9449 = vsub.s32 0, %v9448
        %v9450 = vrot.slane %v9205, %v9449
        %v9451 = vlaneseq
        %v9452 = vshrl.u32 %v9451, 7
        %v9453 = vsub.s32 0, %v9452
        %v9454 = vrot.slane %v9206, %v9453
        %v9455 = vlaneseq
        %v9456 = vshrl.u32 %v9455, 7
        %v9457 = vsub.s32 0, %v9456
        %v9458 = vrot.slane %v9207, %v9457
        %v9459 = vlaneseq
        %v9460 = vshrl.u32 %v9459, 7
        %v9461 = vsub.s32 0, %v9460
        %v9462 = vrot.slane %v9208, %v9461
        %v9463 = vlaneseq
        %v9464 = vshrl.u32 %v9463, 7
        %v9465 = vsub.s32 0, %v9464
        %v9466 = vrot.slane %v9209, %v9465
        %v9467 = vlaneseq
        %v9468 = vshrl.u32 %v9467, 7
        %v9469 = vsub.s32 0, %v9468
        %v9470 = vrot.slane %v9210, %v9469
        %v9471 = vlaneseq
        %v9472 = vshrl.u32 %v9471, 7
        %v9473 = vsub.s32 0, %v9472
        %v9474 = vrot.slane %v9211, %v9473
        %v9475 = vlaneseq
        %v9476 = vshrl.u32 %v9475, 7
        %v9477 = vsub.s32 0, %v9476
        %v9478 = vrot.slane %v9212, %v9477
        %v9479 = vlaneseq
        %v9480 = vshrl.u32 %v9479, 7
        %v9481 = vsub.s32 0, %v9480
        %v9482 = vrot.slane %v9213, %v9481
        %v9483 = vlaneseq
        %v9484 = vshrl.u32 %v9483, 7
        %v9485 = vsub.s32 0, %v9484
        %v9486 = vrot.slane %v9214, %v9485
        %v9487 = vlaneseq
        %v9488 = vshrl.u32 %v9487, 7
        %v9489 = vsub.s32 0, %v9488
        %v9490 = vrot.slane %v9215, %v9489
        %v9491 = vlaneseq
        %v9492 = vshrl.u32 %v9491, 7
        %v9493 = vsub.s32 0, %v9492
        %v9494 = vrot.slane %v9216, %v9493
        %v9495 = vlaneseq
        %v9496 = vshrl.u32 %v9495, 7
        %v9497 = vsub.s32 0, %v9496
        %v9498 = vrot.slane %v9217, %v9497
        %v9499 = vlaneseq
        %v9500 = vshrl.u32 %v9499, 7
        %v9501 = vsub.s32 0, %v9500
        %v9502 = vrot.slane %v9218, %v9501
        %v9503 = vlaneseq
        %v9504 = vshrl.u32 %v9503, 7
        %v9505 = vsub.s32 0, %v9504
        %v9506 = vrot.slane %v9219, %v9505
        %v9507 = vlaneseq
        %v9508 = vshrl.u32 %v9507, 7
        %v9509 = vsub.s32 0, %v9508
        %v9510 = vrot.slane %v9220, %v9509
        %v9511 = vlaneseq
        %v9512 = vshrl.u32 %v9511, 7
        %v9513 = vsub.s32 0, %v9512
        %v9514 = vrot.slane %v9221, %v9513
        %v9515 = vlaneseq
        %v9516 = vshrl.u32 %v9515, 7
        %v9517 = vsub.s32 0, %v9516
        %v9518 = vrot.slane %v9222, %v9517
        %v9519 = vlaneseq
        %v9520 = vshrl.u32 %v9519, 7
        %v9521 = vsub.s32 0, %v9520
        %v9522 = vrot.slane %v9223, %v9521
        %v9523 = vlaneseq
        %v9524 = vshrl.u32 %v9523, 7
        %v9525 = vsub.s32 0, %v9524
        %v9526 = vrot.slane %v9224, %v9525
        %v9527 = vlaneseq
        %v9528 = vshrl.u32 %v9527, 7
        %v9529 = vsub.s32 0, %v9528
        %v9530 = vrot.slane %v9225, %v9529
        %v9531 = vlaneseq
        %v9532 = vshrl.u32 %v9531, 7
        %v9533 = vsub.s32 0, %v9532
        %v9534 = vrot.slane %v9226, %v9533
        %v9535 = vlaneseq
        %v9536 = vshrl.u32 %v9535, 7
        %v9537 = vsub.s32 0, %v9536
        %v9538 = vrot.slane %v9227, %v9537
        %v9539 = vlaneseq
        %v9540 = vshrl.u32 %v9539, 7
        %v9541 = vsub.s32 0, %v9540
        %v9542 = vrot.slane %v9228, %v9541
        %v9543 = vlaneseq
        %v9544 = vshrl.u32 %v9543, 7
        %v9545 = vsub.s32 0, %v9544
        %v9546 = vrot.slane %v9229, %v9545
        %v9547 = vlaneseq
        %v9548 = vshrl.u32 %v9547, 7
        %v9549 = vsub.s32 0, %v9548
        %v9550 = vrot.slane %v9230, %v9549
        %v9551 = vsel %vm8975, %v9302, %v9298
        %v9552 = vsel %vm8977, %v9306, %v9551
        %v9553 = vsel %vm8979, %v9310, %v9552
        %v9554 = vsel %vm8981, %v9314, %v9553
        %v9555 = vsel %vm8983, %v9318, %v9554
        %v9556 = vsel %vm8985, %v9322, %v9555
        %v9557 = vsel %vm8987, %v9326, %v9556
        %v9558 = vsel %vm8975, %v9334, %v9330
        %v9559 = vsel %vm8977, %v9338, %v9558
        %v9560 = vsel %vm8979, %v9342, %v9559
        %v9561 = vsel %vm8981, %v9346, %v9560
        %v9562 = vsel %vm8983, %v9350, %v9561
        %v9563 = vsel %vm8985, %v9354, %v9562
        %v9564 = vsel %vm8987, %v9358, %v9563
        %v9565 = vsel %vm8975, %v9366, %v9362
        %v9566 = vsel %vm8977, %v9370, %v9565
        %v9567 = vsel %vm8979, %v9374, %v9566
        %v9568 = vsel %vm8981, %v9378, %v9567
        %v9569 = vsel %vm8983, %v9382, %v9568
        %v9570 = vsel %vm8985, %v9386, %v9569
        %v9571 = vsel %vm8987, %v9390, %v9570
        %v9572 = vsel %vm8975, %v9398, %v9394
        %v9573 = vsel %vm8977, %v9402, %v9572
        %v9574 = vsel %vm8979, %v9406, %v9573
        %v9575 = vsel %vm8981, %v9410, %v9574
        %v9576 = vsel %vm8983, %v9414, %v9575
        %v9577 = vsel %vm8985, %v9418, %v9576
        %v9578 = vsel %vm8987, %v9422, %v9577
        %v9579 = vsel %vm8975, %v9430, %v9426
        %v9580 = vsel %vm8977, %v9434, %v9579
        %v9581 = vsel %vm8979, %v9438, %v9580
        %v9582 = vsel %vm8981, %v9442, %v9581
        %v9583 = vsel %vm8983, %v9446, %v9582
        %v9584 = vsel %vm8985, %v9450, %v9583
        %v9585 = vsel %vm8987, %v9454, %v9584
        %v9586 = vsel %vm8975, %v9462, %v9458
        %v9587 = vsel %vm8977, %v9466, %v9586
        %v9588 = vsel %vm8979, %v9470, %v9587
        %v9589 = vsel %vm8981, %v9474, %v9588
        %v9590 = vsel %vm8983, %v9478, %v9589
        %v9591 = vsel %vm8985, %v9482, %v9590
        %v9592 = vsel %vm8987, %v9486, %v9591
        %v9593 = vsel %vm8975, %v9494, %v9490
        %v9594 = vsel %vm8977, %v9498, %v9593
        %v9595 = vsel %vm8979, %v9502, %v9594
        %v9596 = vsel %vm8981, %v9506, %v9595
        %v9597 = vsel %vm8983, %v9510, %v9596
        %v9598 = vsel %vm8985, %v9514, %v9597
        %v9599 = vsel %vm8987, %v9518, %v9598
        %v9600 = vsel %vm8975, %v9526, %v9522
        %v9601 = vsel %vm8977, %v9530, %v9600
        %v9602 = vsel %vm8979, %v9534, %v9601
        %v9603 = vsel %vm8981, %v9538, %v9602
        %v9604 = vsel %vm8983, %v9542, %v9603
        %v9605 = vsel %vm8985, %v9546, %v9604
        %v9606 = vsel %vm8987, %v9550, %v9605
        %v9615 = vsel %vm2875, %v9557, 0.0
        %v9616 = vsel %vm2875, %v9564, 0.0
        %v9617 = vadd.f32 %v9615, %v9616
        %v9618 = vsel %vm2875, %v9571, 0.0
        %v9619 = vadd.f32 %v9617, %v9618
        %v9620 = vsel %vm2875, %v9578, 0.0
        %v9621 = vadd.f32 %v9619, %v9620
        %v9622 = vsel %vm2875, %v9585, 0.0
        %v9623 = vadd.f32 %v9621, %v9622
        %v9624 = vsel %vm2875, %v9592, 0.0
        %v9625 = vadd.f32 %v9623, %v9624
        %v9626 = vsel %vm2875, %v9599, 0.0
        %v9627 = vadd.f32 %v9625, %v9626
        %v9628 = vsel %vm2875, %v9606, 0.0
        %v9629 = vadd.f32 %v9627, %v9628
        %v9630 = vrot.slane %v9629, 4
        %v9631 = vadd.f32 %v9629, %v9630
        %v9632 = vrot.slane %v9631, 2
        %v9633 = vadd.f32 %v9631, %v9632
        %v9634 = vrot.slane %v9633, 1
        %v9635 = vadd.f32 %v9633, %v9634
        %v9636 = vmul.f32 %v9635, %v9067
        %v9637 = vadd.f32 %v9636, 1e-08
        %v9638 = vrsqrt.pop %v9637
        %v9639 = vmul.f32 %v9637, %v9638
        %vm9640 = vcmp.eq.f32.partialorder %v9637, inf
        %v9641 = vsel %vm9640, %v9637, %v9639
        %vm9642 = vcmp.eq.f32.partialorder %v9637, 0.0
        %v9643 = vand.u32 %v9637, 2147483648
        %v9644 = vsel %vm9642, %v9643, %v9641
        %v9645 = vlaneseq
        %v9646 = vshrl.u32 %v9645, 7
        %v9647 = vsub.s32 0, %v9646
        %v9648 = vrot.slane %v9644, %v9647
        %v9650 = vcombine.high %v9648, %v9648
        %v9652 = vunpack.c.l.s4 1983009808
        %v9653 = vunpack.c.0.s8 %v9652
        %v9654 = vlaneseq
        %v9655 = vshrl.u32 %v9654, 7
        %v9656 = vsub.s32 %v9653, %v9655
        %v9657 = vrot.slane %v9648, %v9656
        %v9659 = vunpack.c.l.s4 1983009808
        %v9660 = vunpack.c.0.s8 %v9659
        %v9661 = vlaneseq
        %v9662 = vshrl.u32 %v9661, 7
        %v9663 = vsub.s32 %v9660, %v9662
        %v9664 = vrot.slane %v9650, %v9663
        %v9665 = vcombine.high %v9657, %v9657
        %v9666 = vcombine.high %v9664, %v9664
        %v9667 = vrot.slane %v9657, 1
        %v9668 = vrot.slane %v9665, 1
        %v9669 = vrot.slane %v9664, 1
        %v9670 = vrot.slane %v9666, 1
        %v9679 = vrcp.pop %v9657
        %v9680 = vmul.f32 %v9103, %v9679
        %v9681 = vrcp.pop %v9667
        %v9682 = vmul.f32 %v9104, %v9681
        %v9683 = vrcp.pop %v9665
        %v9684 = vmul.f32 %v9105, %v9683
        %v9685 = vrcp.pop %v9668
        %v9686 = vmul.f32 %v9106, %v9685
        %v9687 = vrcp.pop %v9664
        %v9688 = vmul.f32 %v9107, %v9687
        %v9689 = vrcp.pop %v9669
        %v9690 = vmul.f32 %v9108, %v9689
        %v9691 = vrcp.pop %v9666
        %v9692 = vmul.f32 %v9109, %v9691
        %v9693 = vrcp.pop %v9670
        %v9694 = vmul.f32 %v9110, %v9693
        %v9695 = vmul.f32 %v9111, %v9679
        %v9696 = vmul.f32 %v9112, %v9681
        %v9697 = vmul.f32 %v9113, %v9683
        %v9698 = vmul.f32 %v9114, %v9685
        %v9699 = vmul.f32 %v9115, %v9687
        %v9700 = vmul.f32 %v9116, %v9689
        %v9701 = vmul.f32 %v9117, %v9691
        %v9702 = vmul.f32 %v9118, %v9693
        %v9703 = vmul.f32 %v9119, %v9679
        %v9704 = vmul.f32 %v9120, %v9681
        %v9705 = vmul.f32 %v9121, %v9683
        %v9706 = vmul.f32 %v9122, %v9685
        %v9707 = vmul.f32 %v9123, %v9687
        %v9708 = vmul.f32 %v9124, %v9689
        %v9709 = vmul.f32 %v9125, %v9691
        %v9710 = vmul.f32 %v9126, %v9693
        %v9711 = vmul.f32 %v9127, %v9679
        %v9712 = vmul.f32 %v9128, %v9681
        %v9713 = vmul.f32 %v9129, %v9683
        %v9714 = vmul.f32 %v9130, %v9685
        %v9715 = vmul.f32 %v9131, %v9687
        %v9716 = vmul.f32 %v9132, %v9689
        %v9717 = vmul.f32 %v9133, %v9691
        %v9718 = vmul.f32 %v9134, %v9693
        %v9719 = vmul.f32 %v9135, %v9679
        %v9720 = vmul.f32 %v9136, %v9681
        %v9721 = vmul.f32 %v9137, %v9683
        %v9722 = vmul.f32 %v9138, %v9685
        %v9723 = vmul.f32 %v9139, %v9687
        %v9724 = vmul.f32 %v9140, %v9689
        %v9725 = vmul.f32 %v9141, %v9691
        %v9726 = vmul.f32 %v9142, %v9693
        %v9727 = vmul.f32 %v9143, %v9679
        %v9728 = vmul.f32 %v9144, %v9681
        %v9729 = vmul.f32 %v9145, %v9683
        %v9730 = vmul.f32 %v9146, %v9685
        %v9731 = vmul.f32 %v9147, %v9687
        %v9732 = vmul.f32 %v9148, %v9689
        %v9733 = vmul.f32 %v9149, %v9691
        %v9734 = vmul.f32 %v9150, %v9693
        %v9735 = vmul.f32 %v9151, %v9679
        %v9736 = vmul.f32 %v9152, %v9681
        %v9737 = vmul.f32 %v9153, %v9683
        %v9738 = vmul.f32 %v9154, %v9685
        %v9739 = vmul.f32 %v9155, %v9687
        %v9740 = vmul.f32 %v9156, %v9689
        %v9741 = vmul.f32 %v9157, %v9691
        %v9742 = vmul.f32 %v9158, %v9693
        %v9743 = vmul.f32 %v9159, %v9679
        %v9744 = vmul.f32 %v9160, %v9681
        %v9745 = vmul.f32 %v9161, %v9683
        %v9746 = vmul.f32 %v9162, %v9685
        %v9747 = vmul.f32 %v9163, %v9687
        %v9748 = vmul.f32 %v9164, %v9689
        %v9749 = vmul.f32 %v9165, %v9691
        %v9750 = vmul.f32 %v9166, %v9693
        %v9751 = vld [vmem:[%s10] sm:$0xff]
        %v9752 = vld [vmem:[%s11] sm:$0xff]
        %v9754 = vsel %vm2875, %v9644, 0
        %9756 = vmatprep.subr.mxu0 0.0
        %9757 = vmatpush1.msra.mxu0 0.0
        %9758 = vmatprep.subr.mxu0 0.0
        %9759 = vmatpush1.msra.mxu0 0.0
        %9760 = vmatprep.subr.mxu0 0.0
        %9761 = vmatpush1.msra.mxu0 0.0
        %9762 = vmatprep.subr.mxu0 0.0
        %9763 = vmatpush1.msra.mxu0 0.0
        %9764 = vmatprep.subr.mxu0 0.0
        %9765 = vmatpush1.msra.mxu0 0.0
        %9766 = vmatprep.subr.mxu0 0.0
        %9767 = vmatpush1.msra.mxu0 0.0
        %9768 = vmatprep.subr.mxu0 0.0
        %9769 = vmatpush1.msra.mxu0 0.0
        %9770 = vmatprep.subr.mxu0 0.0
        %9771 = vmatpush1.msra.mxu0 0.0
        %9772 = vmatprep.subr.mxu0 0.0
        %9773 = vmatpush1.msra.mxu0 0.0
        %9774 = vmatprep.subr.mxu0 0.0
        %9775 = vmatpush1.msra.mxu0 0.0
        %9776 = vmatprep.subr.mxu0 0.0
        %9777 = vmatpush1.msra.mxu0 0.0
        %9778 = vmatprep.subr.mxu0 0.0
        %9779 = vmatpush1.msra.mxu0 0.0
        %9780 = vmatprep.subr.mxu0 0.0
        %9781 = vmatpush1.msra.mxu0 0.0
        %9782 = vmatprep.subr.mxu0 0.0
        %9783 = vmatpush1.msra.mxu0 0.0
        %9784 = vmatprep.subr.mxu0 0.0
        %9785 = vmatpush1.msra.mxu0 0.0
        %9786 = vmatprep.subr.mxu0 0.0
        %9787 = vmatpush1.msra.mxu0 %v9752
        %9788 = vmatprep.subr.mxu0 0.0
        %9789 = vmatpush2.msra.mxu0 0.0
        %9790 = vmatprep.subr.mxu0 0.0
        %9791 = vmatpush2.msra.mxu0 0.0
        %9792 = vmatprep.subr.mxu0 0.0
        %9793 = vmatpush2.msra.mxu0 0.0
        %9794 = vmatprep.subr.mxu0 0.0
        %9795 = vmatpush2.msra.mxu0 0.0
        %9796 = vmatprep.subr.mxu0 0.0
        %9797 = vmatpush2.msra.mxu0 0.0
        %9798 = vmatprep.subr.mxu0 0.0
        %9799 = vmatpush2.msra.mxu0 0.0
        %9800 = vmatprep.subr.mxu0 0.0
        %9801 = vmatpush2.msra.mxu0 0.0
        %9802 = vmatprep.subr.mxu0 0.0
        %9803 = vmatpush2.msra.mxu0 0.0
        %9804 = vmatprep.subr.mxu0 0.0
        %9805 = vmatpush2.msra.mxu0 0.0
        %9806 = vmatprep.subr.mxu0 0.0
        %9807 = vmatpush2.msra.mxu0 0.0
        %9808 = vmatprep.subr.mxu0 0.0
        %9809 = vmatpush2.msra.mxu0 0.0
        %9810 = vmatprep.subr.mxu0 0.0
        %9811 = vmatpush2.msra.mxu0 0.0
        %9812 = vmatprep.subr.mxu0 0.0
        %9813 = vmatpush2.msra.mxu0 0.0
        %9814 = vmatprep.subr.mxu0 0.0
        %9815 = vmatpush2.msra.mxu0 0.0
        %9816 = vmatprep.subr.mxu0 0.0
        %9817 = vmatpush2.msra.mxu0 0.0
        %9818 = vmatprep.subr.mxu0 0.0
        %9819 = vmatpush2.msra.mxu0 0.0
        %9820 = vmatprep.mubr.f32.mxu0 0.0
        %9821 = vmatmul.mubr.f32.gmra.mxu0 %v9754
        %v9822 = vpop.f32.mrf.mxu0
        %v9823 = vadd.f32 0.0, %v9822
        %v9824 = vpop.f32.mrf.mxu0
        %9825 = vdwg.mxu0
        %v9827 = vsel %vm2875, %v9068, 0
        %9829 = vmatprep.subr.mxu0 0.0
        %9830 = vmatpush1.msra.mxu0 0.0
        %9831 = vmatprep.subr.mxu0 0.0
        %9832 = vmatpush1.msra.mxu0 0.0
        %9833 = vmatprep.subr.mxu0 0.0
        %9834 = vmatpush1.msra.mxu0 0.0
        %9835 = vmatprep.subr.mxu0 0.0
        %9836 = vmatpush1.msra.mxu0 0.0
        %9837 = vmatprep.subr.mxu0 0.0
        %9838 = vmatpush1.msra.mxu0 0.0
        %9839 = vmatprep.subr.mxu0 0.0
        %9840 = vmatpush1.msra.mxu0 0.0
        %9841 = vmatprep.subr.mxu0 0.0
        %9842 = vmatpush1.msra.mxu0 0.0
        %9843 = vmatprep.subr.mxu0 0.0
        %9844 = vmatpush1.msra.mxu0 0.0
        %9845 = vmatprep.subr.mxu0 0.0
        %9846 = vmatpush1.msra.mxu0 0.0
        %9847 = vmatprep.subr.mxu0 0.0
        %9848 = vmatpush1.msra.mxu0 0.0
        %9849 = vmatprep.subr.mxu0 0.0
        %9850 = vmatpush1.msra.mxu0 0.0
        %9851 = vmatprep.subr.mxu0 0.0
        %9852 = vmatpush1.msra.mxu0 0.0
        %9853 = vmatprep.subr.mxu0 0.0
        %9854 = vmatpush1.msra.mxu0 0.0
        %9855 = vmatprep.subr.mxu0 0.0
        %9856 = vmatpush1.msra.mxu0 0.0
        %9857 = vmatprep.subr.mxu0 0.0
        %9858 = vmatpush1.msra.mxu0 0.0
        %9859 = vmatprep.subr.mxu0 0.0
        %9860 = vmatpush1.msra.mxu0 %v9751
        %9861 = vmatprep.subr.mxu0 0.0
        %9862 = vmatpush2.msra.mxu0 0.0
        %9863 = vmatprep.subr.mxu0 0.0
        %9864 = vmatpush2.msra.mxu0 0.0
        %9865 = vmatprep.subr.mxu0 0.0
        %9866 = vmatpush2.msra.mxu0 0.0
        %9867 = vmatprep.subr.mxu0 0.0
        %9868 = vmatpush2.msra.mxu0 0.0
        %9869 = vmatprep.subr.mxu0 0.0
        %9870 = vmatpush2.msra.mxu0 0.0
        %9871 = vmatprep.subr.mxu0 0.0
        %9872 = vmatpush2.msra.mxu0 0.0
        %9873 = vmatprep.subr.mxu0 0.0
        %9874 = vmatpush2.msra.mxu0 0.0
        %9875 = vmatprep.subr.mxu0 0.0
        %9876 = vmatpush2.msra.mxu0 0.0
        %9877 = vmatprep.subr.mxu0 0.0
        %9878 = vmatpush2.msra.mxu0 0.0
        %9879 = vmatprep.subr.mxu0 0.0
        %9880 = vmatpush2.msra.mxu0 0.0
        %9881 = vmatprep.subr.mxu0 0.0
        %9882 = vmatpush2.msra.mxu0 0.0
        %9883 = vmatprep.subr.mxu0 0.0
        %9884 = vmatpush2.msra.mxu0 0.0
        %9885 = vmatprep.subr.mxu0 0.0
        %9886 = vmatpush2.msra.mxu0 0.0
        %9887 = vmatprep.subr.mxu0 0.0
        %9888 = vmatpush2.msra.mxu0 0.0
        %9889 = vmatprep.subr.mxu0 0.0
        %9890 = vmatpush2.msra.mxu0 0.0
        %9891 = vmatprep.subr.mxu0 0.0
        %9892 = vmatpush2.msra.mxu0 0.0
        %9893 = vmatprep.mubr.f32.mxu0 0.0
        %9894 = vmatmul.mubr.f32.gmra.mxu0 %v9827
        %v9895 = vpop.f32.mrf.mxu0
        %v9896 = vadd.f32 %v9823, %v9895
        %v9897 = vpop.f32.mrf.mxu0
        %9898 = vdwg.mxu0
        %v9899 = vld [vmem:[%s12] sm:$0x1]
        %v9900 = vadd.f32 %v9896, %v9899
        %v9901 = vpack.c.bf16 %v9680, %v9680
        %v9902 = vpack.c.bf16 %v9682, %v9682
        %v9903 = vpack.c.bf16 %v9684, %v9684
        %v9904 = vpack.c.bf16 %v9686, %v9686
        %v9905 = vpack.c.bf16 %v9688, %v9688
        %v9906 = vpack.c.bf16 %v9690, %v9690
        %v9907 = vpack.c.bf16 %v9692, %v9692
        %v9908 = vpack.c.bf16 %v9694, %v9694
        %v9909 = vpack.c.bf16 %v9695, %v9695
        %v9910 = vpack.c.bf16 %v9696, %v9696
        %v9911 = vpack.c.bf16 %v9697, %v9697
        %v9912 = vpack.c.bf16 %v9698, %v9698
        %v9913 = vpack.c.bf16 %v9699, %v9699
        %v9914 = vpack.c.bf16 %v9700, %v9700
        %v9915 = vpack.c.bf16 %v9701, %v9701
        %v9916 = vpack.c.bf16 %v9702, %v9702
        %v9917 = vpack.c.bf16 %v9703, %v9703
        %v9918 = vpack.c.bf16 %v9704, %v9704
        %v9919 = vpack.c.bf16 %v9705, %v9705
        %v9920 = vpack.c.bf16 %v9706, %v9706
        %v9921 = vpack.c.bf16 %v9707, %v9707
        %v9922 = vpack.c.bf16 %v9708, %v9708
        %v9923 = vpack.c.bf16 %v9709, %v9709
        %v9924 = vpack.c.bf16 %v9710, %v9710
        %v9925 = vpack.c.bf16 %v9711, %v9711
        %v9926 = vpack.c.bf16 %v9712, %v9712
        %v9927 = vpack.c.bf16 %v9713, %v9713
        %v9928 = vpack.c.bf16 %v9714, %v9714
        %v9929 = vpack.c.bf16 %v9715, %v9715
        %v9930 = vpack.c.bf16 %v9716, %v9716
        %v9931 = vpack.c.bf16 %v9717, %v9717
        %v9932 = vpack.c.bf16 %v9718, %v9718
        %v9933 = vpack.c.bf16 %v9719, %v9719
        %v9934 = vpack.c.bf16 %v9720, %v9720
        %v9935 = vpack.c.bf16 %v9721, %v9721
        %v9936 = vpack.c.bf16 %v9722, %v9722
        %v9937 = vpack.c.bf16 %v9723, %v9723
        %v9938 = vpack.c.bf16 %v9724, %v9724
        %v9939 = vpack.c.bf16 %v9725, %v9725
        %v9940 = vpack.c.bf16 %v9726, %v9726
        %v9941 = vpack.c.bf16 %v9727, %v9727
        %v9942 = vpack.c.bf16 %v9728, %v9728
        %v9943 = vpack.c.bf16 %v9729, %v9729
        %v9944 = vpack.c.bf16 %v9730, %v9730
        %v9945 = vpack.c.bf16 %v9731, %v9731
        %v9946 = vpack.c.bf16 %v9732, %v9732
        %v9947 = vpack.c.bf16 %v9733, %v9733
        %v9948 = vpack.c.bf16 %v9734, %v9734
        %v9949 = vpack.c.bf16 %v9735, %v9735
        %v9950 = vpack.c.bf16 %v9736, %v9736
        %v9951 = vpack.c.bf16 %v9737, %v9737
        %v9952 = vpack.c.bf16 %v9738, %v9738
        %v9953 = vpack.c.bf16 %v9739, %v9739
        %v9954 = vpack.c.bf16 %v9740, %v9740
        %v9955 = vpack.c.bf16 %v9741, %v9741
        %v9956 = vpack.c.bf16 %v9742, %v9742
        %v9957 = vpack.c.bf16 %v9743, %v9743
        %v9958 = vpack.c.bf16 %v9744, %v9744
        %v9959 = vpack.c.bf16 %v9745, %v9745
        %v9960 = vpack.c.bf16 %v9746, %v9746
        %v9961 = vpack.c.bf16 %v9747, %v9747
        %v9962 = vpack.c.bf16 %v9748, %v9748
        %v9963 = vpack.c.bf16 %v9749, %v9749
        %v9964 = vpack.c.bf16 %v9750, %v9750
        %v10029 = vunpack.c.l.b16 %v9901
        %v10030 = vunpack.c.l.b16 %v9902
        %v10031 = vunpack.c.l.b16 %v9903
        %v10032 = vunpack.c.l.b16 %v9904
        %v10033 = vunpack.c.l.b16 %v9905
        %v10034 = vunpack.c.l.b16 %v9906
        %v10035 = vunpack.c.l.b16 %v9907
        %v10036 = vunpack.c.l.b16 %v9908
        %v10037 = vunpack.c.l.b16 %v9909
        %v10038 = vunpack.c.l.b16 %v9910
        %v10039 = vunpack.c.l.b16 %v9911
        %v10040 = vunpack.c.l.b16 %v9912
        %v10041 = vunpack.c.l.b16 %v9913
        %v10042 = vunpack.c.l.b16 %v9914
        %v10043 = vunpack.c.l.b16 %v9915
        %v10044 = vunpack.c.l.b16 %v9916
        %v10045 = vunpack.c.l.b16 %v9917
        %v10046 = vunpack.c.l.b16 %v9918
        %v10047 = vunpack.c.l.b16 %v9919
        %v10048 = vunpack.c.l.b16 %v9920
        %v10049 = vunpack.c.l.b16 %v9921
        %v10050 = vunpack.c.l.b16 %v9922
        %v10051 = vunpack.c.l.b16 %v9923
        %v10052 = vunpack.c.l.b16 %v9924
        %v10053 = vunpack.c.l.b16 %v9925
        %v10054 = vunpack.c.l.b16 %v9926
        %v10055 = vunpack.c.l.b16 %v9927
        %v10056 = vunpack.c.l.b16 %v9928
        %v10057 = vunpack.c.l.b16 %v9929
        %v10058 = vunpack.c.l.b16 %v9930
        %v10059 = vunpack.c.l.b16 %v9931
        %v10060 = vunpack.c.l.b16 %v9932
        %v10061 = vunpack.c.l.b16 %v9933
        %v10062 = vunpack.c.l.b16 %v9934
        %v10063 = vunpack.c.l.b16 %v9935
        %v10064 = vunpack.c.l.b16 %v9936
        %v10065 = vunpack.c.l.b16 %v9937
        %v10066 = vunpack.c.l.b16 %v9938
        %v10067 = vunpack.c.l.b16 %v9939
        %v10068 = vunpack.c.l.b16 %v9940
        %v10069 = vunpack.c.l.b16 %v9941
        %v10070 = vunpack.c.l.b16 %v9942
        %v10071 = vunpack.c.l.b16 %v9943
        %v10072 = vunpack.c.l.b16 %v9944
        %v10073 = vunpack.c.l.b16 %v9945
        %v10074 = vunpack.c.l.b16 %v9946
        %v10075 = vunpack.c.l.b16 %v9947
        %v10076 = vunpack.c.l.b16 %v9948
        %v10077 = vunpack.c.l.b16 %v9949
        %v10078 = vunpack.c.l.b16 %v9950
        %v10079 = vunpack.c.l.b16 %v9951
        %v10080 = vunpack.c.l.b16 %v9952
        %v10081 = vunpack.c.l.b16 %v9953
        %v10082 = vunpack.c.l.b16 %v9954
        %v10083 = vunpack.c.l.b16 %v9955
        %v10084 = vunpack.c.l.b16 %v9956
        %v10085 = vunpack.c.l.b16 %v9957
        %v10086 = vunpack.c.l.b16 %v9958
        %v10087 = vunpack.c.l.b16 %v9959
        %v10088 = vunpack.c.l.b16 %v9960
        %v10089 = vunpack.c.l.b16 %v9961
        %v10090 = vunpack.c.l.b16 %v9962
        %v10091 = vunpack.c.l.b16 %v9963
        %v10092 = vunpack.c.l.b16 %v9964
        %v10093 = vpack.c.b16 %v10029, %v10029
        %v10094 = vpack.c.b16 %v10030, %v10030
        %v10095 = vpack.c.b16 %v10031, %v10031
        %v10096 = vpack.c.b16 %v10032, %v10032
        %v10097 = vpack.c.b16 %v10033, %v10033
        %v10098 = vpack.c.b16 %v10034, %v10034
        %v10099 = vpack.c.b16 %v10035, %v10035
        %v10100 = vpack.c.b16 %v10036, %v10036
        %v10101 = vpack.c.b16 %v10037, %v10037
        %v10102 = vpack.c.b16 %v10038, %v10038
        %v10103 = vpack.c.b16 %v10039, %v10039
        %v10104 = vpack.c.b16 %v10040, %v10040
        %v10105 = vpack.c.b16 %v10041, %v10041
        %v10106 = vpack.c.b16 %v10042, %v10042
        %v10107 = vpack.c.b16 %v10043, %v10043
        %v10108 = vpack.c.b16 %v10044, %v10044
        %v10109 = vpack.c.b16 %v10045, %v10045
        %v10110 = vpack.c.b16 %v10046, %v10046
        %v10111 = vpack.c.b16 %v10047, %v10047
        %v10112 = vpack.c.b16 %v10048, %v10048
        %v10113 = vpack.c.b16 %v10049, %v10049
        %v10114 = vpack.c.b16 %v10050, %v10050
        %v10115 = vpack.c.b16 %v10051, %v10051
        %v10116 = vpack.c.b16 %v10052, %v10052
        %v10117 = vpack.c.b16 %v10053, %v10053
        %v10118 = vpack.c.b16 %v10054, %v10054
        %v10119 = vpack.c.b16 %v10055, %v10055
        %v10120 = vpack.c.b16 %v10056, %v10056
        %v10121 = vpack.c.b16 %v10057, %v10057
        %v10122 = vpack.c.b16 %v10058, %v10058
        %v10123 = vpack.c.b16 %v10059, %v10059
        %v10124 = vpack.c.b16 %v10060, %v10060
        %v10125 = vpack.c.b16 %v10061, %v10061
        %v10126 = vpack.c.b16 %v10062, %v10062
        %v10127 = vpack.c.b16 %v10063, %v10063
        %v10128 = vpack.c.b16 %v10064, %v10064
        %v10129 = vpack.c.b16 %v10065, %v10065
        %v10130 = vpack.c.b16 %v10066, %v10066
        %v10131 = vpack.c.b16 %v10067, %v10067
        %v10132 = vpack.c.b16 %v10068, %v10068
        %v10133 = vpack.c.b16 %v10069, %v10069
        %v10134 = vpack.c.b16 %v10070, %v10070
        %v10135 = vpack.c.b16 %v10071, %v10071
        %v10136 = vpack.c.b16 %v10072, %v10072
        %v10137 = vpack.c.b16 %v10073, %v10073
        %v10138 = vpack.c.b16 %v10074, %v10074
        %v10139 = vpack.c.b16 %v10075, %v10075
        %v10140 = vpack.c.b16 %v10076, %v10076
        %v10141 = vpack.c.b16 %v10077, %v10077
        %v10142 = vpack.c.b16 %v10078, %v10078
        %v10143 = vpack.c.b16 %v10079, %v10079
        %v10144 = vpack.c.b16 %v10080, %v10080
        %v10145 = vpack.c.b16 %v10081, %v10081
        %v10146 = vpack.c.b16 %v10082, %v10082
        %v10147 = vpack.c.b16 %v10083, %v10083
        %v10148 = vpack.c.b16 %v10084, %v10084
        %v10149 = vpack.c.b16 %v10085, %v10085
        %v10150 = vpack.c.b16 %v10086, %v10086
        %v10151 = vpack.c.b16 %v10087, %v10087
        %v10152 = vpack.c.b16 %v10088, %v10088
        %v10153 = vpack.c.b16 %v10089, %v10089
        %v10154 = vpack.c.b16 %v10090, %v10090
        %v10155 = vpack.c.b16 %v10091, %v10091
        %v10156 = vpack.c.b16 %v10092, %v10092
        %v10157 = vunpack.c.l.b16 %v10093
        %v10158 = vunpack.c.l.b16 %v10094
        %v10159 = vunpack.c.l.b16 %v10095
        %v10160 = vunpack.c.l.b16 %v10096
        %v10161 = vunpack.c.l.b16 %v10097
        %v10162 = vunpack.c.l.b16 %v10098
        %v10163 = vunpack.c.l.b16 %v10099
        %v10164 = vunpack.c.l.b16 %v10100
        %v10165 = vunpack.c.l.b16 %v10101
        %v10166 = vunpack.c.l.b16 %v10102
        %v10167 = vunpack.c.l.b16 %v10103
        %v10168 = vunpack.c.l.b16 %v10104
        %v10169 = vunpack.c.l.b16 %v10105
        %v10170 = vunpack.c.l.b16 %v10106
        %v10171 = vunpack.c.l.b16 %v10107
        %v10172 = vunpack.c.l.b16 %v10108
        %v10173 = vunpack.c.l.b16 %v10109
        %v10174 = vunpack.c.l.b16 %v10110
        %v10175 = vunpack.c.l.b16 %v10111
        %v10176 = vunpack.c.l.b16 %v10112
        %v10177 = vunpack.c.l.b16 %v10113
        %v10178 = vunpack.c.l.b16 %v10114
        %v10179 = vunpack.c.l.b16 %v10115
        %v10180 = vunpack.c.l.b16 %v10116
        %v10181 = vunpack.c.l.b16 %v10117
        %v10182 = vunpack.c.l.b16 %v10118
        %v10183 = vunpack.c.l.b16 %v10119
        %v10184 = vunpack.c.l.b16 %v10120
        %v10185 = vunpack.c.l.b16 %v10121
        %v10186 = vunpack.c.l.b16 %v10122
        %v10187 = vunpack.c.l.b16 %v10123
        %v10188 = vunpack.c.l.b16 %v10124
        %v10189 = vunpack.c.l.b16 %v10125
        %v10190 = vunpack.c.l.b16 %v10126
        %v10191 = vunpack.c.l.b16 %v10127
        %v10192 = vunpack.c.l.b16 %v10128
        %v10193 = vunpack.c.l.b16 %v10129
        %v10194 = vunpack.c.l.b16 %v10130
        %v10195 = vunpack.c.l.b16 %v10131
        %v10196 = vunpack.c.l.b16 %v10132
        %v10197 = vunpack.c.l.b16 %v10133
        %v10198 = vunpack.c.l.b16 %v10134
        %v10199 = vunpack.c.l.b16 %v10135
        %v10200 = vunpack.c.l.b16 %v10136
        %v10201 = vunpack.c.l.b16 %v10137
        %v10202 = vunpack.c.l.b16 %v10138
        %v10203 = vunpack.c.l.b16 %v10139
        %v10204 = vunpack.c.l.b16 %v10140
        %v10205 = vunpack.c.l.b16 %v10141
        %v10206 = vunpack.c.l.b16 %v10142
        %v10207 = vunpack.c.l.b16 %v10143
        %v10208 = vunpack.c.l.b16 %v10144
        %v10209 = vunpack.c.l.b16 %v10145
        %v10210 = vunpack.c.l.b16 %v10146
        %v10211 = vunpack.c.l.b16 %v10147
        %v10212 = vunpack.c.l.b16 %v10148
        %v10213 = vunpack.c.l.b16 %v10149
        %v10214 = vunpack.c.l.b16 %v10150
        %v10215 = vunpack.c.l.b16 %v10151
        %v10216 = vunpack.c.l.b16 %v10152
        %v10217 = vunpack.c.l.b16 %v10153
        %v10218 = vunpack.c.l.b16 %v10154
        %v10219 = vunpack.c.l.b16 %v10155
        %v10220 = vunpack.c.l.b16 %v10156
        %v10221 = vrot.slane %v10158, 7
        %v10222 = vsel %vm8975, %v10221, %v10157
        %v10223 = vrot.slane %v10159, 6
        %v10224 = vsel %vm8977, %v10223, %v10222
        %v10225 = vrot.slane %v10160, 5
        %v10226 = vsel %vm8979, %v10225, %v10224
        %v10227 = vrot.slane %v10161, 4
        %v10228 = vsel %vm8981, %v10227, %v10226
        %v10229 = vrot.slane %v10162, 3
        %v10230 = vsel %vm8983, %v10229, %v10228
        %v10231 = vrot.slane %v10163, 2
        %v10232 = vsel %vm8985, %v10231, %v10230
        %v10233 = vrot.slane %v10164, 1
        %v10234 = vsel %vm8987, %v10233, %v10232
        %v10235 = vrot.slane %v10166, 7
        %v10236 = vsel %vm8975, %v10235, %v10165
        %v10237 = vrot.slane %v10167, 6
        %v10238 = vsel %vm8977, %v10237, %v10236
        %v10239 = vrot.slane %v10168, 5
        %v10240 = vsel %vm8979, %v10239, %v10238
        %v10241 = vrot.slane %v10169, 4
        %v10242 = vsel %vm8981, %v10241, %v10240
        %v10243 = vrot.slane %v10170, 3
        %v10244 = vsel %vm8983, %v10243, %v10242
        %v10245 = vrot.slane %v10171, 2
        %v10246 = vsel %vm8985, %v10245, %v10244
        %v10247 = vrot.slane %v10172, 1
        %v10248 = vsel %vm8987, %v10247, %v10246
        %v10249 = vrot.slane %v10174, 7
        %v10250 = vsel %vm8975, %v10249, %v10173
        %v10251 = vrot.slane %v10175, 6
        %v10252 = vsel %vm8977, %v10251, %v10250
        %v10253 = vrot.slane %v10176, 5
        %v10254 = vsel %vm8979, %v10253, %v10252
        %v10255 = vrot.slane %v10177, 4
        %v10256 = vsel %vm8981, %v10255, %v10254
        %v10257 = vrot.slane %v10178, 3
        %v10258 = vsel %vm8983, %v10257, %v10256
        %v10259 = vrot.slane %v10179, 2
        %v10260 = vsel %vm8985, %v10259, %v10258
        %v10261 = vrot.slane %v10180, 1
        %v10262 = vsel %vm8987, %v10261, %v10260
        %v10263 = vrot.slane %v10182, 7
        %v10264 = vsel %vm8975, %v10263, %v10181
        %v10265 = vrot.slane %v10183, 6
        %v10266 = vsel %vm8977, %v10265, %v10264
        %v10267 = vrot.slane %v10184, 5
        %v10268 = vsel %vm8979, %v10267, %v10266
        %v10269 = vrot.slane %v10185, 4
        %v10270 = vsel %vm8981, %v10269, %v10268
        %v10271 = vrot.slane %v10186, 3
        %v10272 = vsel %vm8983, %v10271, %v10270
        %v10273 = vrot.slane %v10187, 2
        %v10274 = vsel %vm8985, %v10273, %v10272
        %v10275 = vrot.slane %v10188, 1
        %v10276 = vsel %vm8987, %v10275, %v10274
        %v10277 = vrot.slane %v10190, 7
        %v10278 = vsel %vm8975, %v10277, %v10189
        %v10279 = vrot.slane %v10191, 6
        %v10280 = vsel %vm8977, %v10279, %v10278
        %v10281 = vrot.slane %v10192, 5
        %v10282 = vsel %vm8979, %v10281, %v10280
        %v10283 = vrot.slane %v10193, 4
        %v10284 = vsel %vm8981, %v10283, %v10282
        %v10285 = vrot.slane %v10194, 3
        %v10286 = vsel %vm8983, %v10285, %v10284
        %v10287 = vrot.slane %v10195, 2
        %v10288 = vsel %vm8985, %v10287, %v10286
        %v10289 = vrot.slane %v10196, 1
        %v10290 = vsel %vm8987, %v10289, %v10288
        %v10291 = vrot.slane %v10198, 7
        %v10292 = vsel %vm8975, %v10291, %v10197
        %v10293 = vrot.slane %v10199, 6
        %v10294 = vsel %vm8977, %v10293, %v10292
        %v10295 = vrot.slane %v10200, 5
        %v10296 = vsel %vm8979, %v10295, %v10294
        %v10297 = vrot.slane %v10201, 4
        %v10298 = vsel %vm8981, %v10297, %v10296
        %v10299 = vrot.slane %v10202, 3
        %v10300 = vsel %vm8983, %v10299, %v10298
        %v10301 = vrot.slane %v10203, 2
        %v10302 = vsel %vm8985, %v10301, %v10300
        %v10303 = vrot.slane %v10204, 1
        %v10304 = vsel %vm8987, %v10303, %v10302
        %v10305 = vrot.slane %v10206, 7
        %v10306 = vsel %vm8975, %v10305, %v10205
        %v10307 = vrot.slane %v10207, 6
        %v10308 = vsel %vm8977, %v10307, %v10306
        %v10309 = vrot.slane %v10208, 5
        %v10310 = vsel %vm8979, %v10309, %v10308
        %v10311 = vrot.slane %v10209, 4
        %v10312 = vsel %vm8981, %v10311, %v10310
        %v10313 = vrot.slane %v10210, 3
        %v10314 = vsel %vm8983, %v10313, %v10312
        %v10315 = vrot.slane %v10211, 2
        %v10316 = vsel %vm8985, %v10315, %v10314
        %v10317 = vrot.slane %v10212, 1
        %v10318 = vsel %vm8987, %v10317, %v10316
        %v10319 = vrot.slane %v10214, 7
        %v10320 = vsel %vm8975, %v10319, %v10213
        %v10321 = vrot.slane %v10215, 6
        %v10322 = vsel %vm8977, %v10321, %v10320
        %v10323 = vrot.slane %v10216, 5
        %v10324 = vsel %vm8979, %v10323, %v10322
        %v10325 = vrot.slane %v10217, 4
        %v10326 = vsel %vm8981, %v10325, %v10324
        %v10327 = vrot.slane %v10218, 3
        %v10328 = vsel %vm8983, %v10327, %v10326
        %v10329 = vrot.slane %v10219, 2
        %v10330 = vsel %vm8985, %v10329, %v10328
        %v10331 = vrot.slane %v10220, 1
        %v10332 = vsel %vm8987, %v10331, %v10330
        %v10333 = vpack.c.b16 %v10234, %v10234
        %v10334 = vpack.c.b16 %v10248, %v10248
        %v10335 = vpack.c.b16 %v10262, %v10262
        %v10336 = vpack.c.b16 %v10276, %v10276
        %v10337 = vpack.c.b16 %v10290, %v10290
        %v10338 = vpack.c.b16 %v10304, %v10304
        %v10339 = vpack.c.b16 %v10318, %v10318
        %v10340 = vpack.c.b16 %v10332, %v10332
        %10349 = vst.msk [vmem:[%s464] sm:$0xf] %vm4271, %v10333
        %10350 = vst.msk [vmem:[%s464 + $0x4] sm:$0xf] %vm4271, %v10334
        %10351 = vst.msk [vmem:[%s464 + $0x8] sm:$0xf] %vm4271, %v10335
        %10352 = vst.msk [vmem:[%s464 + $0xc] sm:$0xf] %vm4271, %v10336
        %10353 = vst.msk [vmem:[%s464 + $0x10] sm:$0xf] %vm4271, %v10337
        %10354 = vst.msk [vmem:[%s464 + $0x14] sm:$0xf] %vm4271, %v10338
        %10355 = vst.msk [vmem:[%s464 + $0x18] sm:$0xf] %vm4271, %v10339
        %10356 = vst.msk [vmem:[%s464 + $0x1c] sm:$0xf] %vm4271, %v10340
        %v10357 = vadd.f32 %v4270, %v9900
        %vm10358 = vcmask 57344
        %10359 = vst.msk [vmem:[%s470] sm:$0x1] %vm10358, %v10357
        %s10360 = sand.u32 %s318, 1
        %s10361 = scalar_lea.sflag [#allocation5], %s10360
        %s10362 = sand.u32 %s318, 1
        %s10363 = smul.addr %s10362, 32
        %s10364 = scalar_lea.vmem [#allocation4], %s10363
        %s10365 = sand.u32 %s344, 1
        %s10366 = scalar_lea.sflag [#allocation7], %s10365
        %s10367 = sand.u32 %s344, 1
        %s10368 = scalar_lea.vmem [#allocation6], %s10367
        // Predicated region
        $region73: #{tpu_custom_call.1} parent=71 // pred_check
          %p10369 = pneg %p328
        $region74: #{tpu_custom_call.1} parent=71 // pred_check_branch
          %10371 = sbr.rel (%p10369) target = $region76
        $region75: #{tpu_custom_call.1} parent=71 // pred_region
          %s10373 = ssub.s32 512, 512
          %10374 = vsyncadd %s10361, %s10373
          %s10375 = smul.addr %s32, 8
          %s10376 = smul.addr %s10375, 64
          %s10377 = scalar_lea.hbm %s13, %s10376
          %s10378 = sshll.u32 %s10364, 4
          %s10379 = int_to_ptr.vmem [resolvable:$true] %s10378
          %10384 = dma.vmem_to_hbm [thread:$0]  %s10379, 512, %s10377, %s10361, 64, 64, 4
        $region76: #{tpu_custom_call.1} parent=71 // pred_fallthru
          _
        // Predicated region
        $region77: #{tpu_custom_call.1} parent=71 // pred_check
          %p10385 = pneg %p354
        $region78: #{tpu_custom_call.1} parent=71 // pred_check_branch
          %10387 = sbr.rel (%p10385) target = $region80
        $region79: #{tpu_custom_call.1} parent=71 // pred_region
          %s10389 = ssub.s32 16, 16
          %10390 = vsyncadd %s10366, %s10389
          %s10391 = smul.addr %s32, 16
          %s10392 = scalar_lea.hbm %s14, %s10391
          %s10394 = sshll.u32 %s10368, 4
          %s10395 = int_to_ptr.vmem [resolvable:$true] %s10394
          %10397 = dma.vmem_to_hbm [thread:$0]  %s10395, 16, %s10392, %s10366
        $region80: #{tpu_custom_call.1} parent=71 // pred_fallthru
          _
      $region72: #{tpu_custom_call.1} parent=5 // pred_fallthru
        _
      %p10398 = scmp.le.s32.totalorder 2, %s27
      // Predicated region
      $region81: #{tpu_custom_call.1} parent=5 // pred_check
        %p10399 = pneg %p10398
      $region82: #{tpu_custom_call.1} parent=5 // pred_check_branch
        %10401 = sbr.rel (%p10399) target = $region84
      $region83: #{tpu_custom_call.1} parent=5 // pred_region
        %s10402 = ssub.s32 %s27, 2
        // Predicated region
        $region85: #{tpu_custom_call.1} parent=83 // pred_check
          %p10403 = pneg %p334
        $region86: #{tpu_custom_call.1} parent=83 // pred_check_branch
          %10405 = sbr.rel (%p10403) target = $region88
        $region87: #{tpu_custom_call.1} parent=83 // pred_region
          %s10406 = sand.u32 %s319, 1
          %s10407 = scalar_lea.sflag [#allocation5], %s10406
          %s10408 = sand.u32 %s319, 1
          %s10409 = smul.addr %s10408, 32
          %s10410 = scalar_lea.vmem [#allocation4], %s10409
          %10411 = dma.done %s10407, 512
        $region88: #{tpu_custom_call.1} parent=83 // pred_fallthru
          _
        // Predicated region
        $region89: #{tpu_custom_call.1} parent=83 // pred_check
          %p10412 = pneg %p360
        $region90: #{tpu_custom_call.1} parent=83 // pred_check_branch
          %10414 = sbr.rel (%p10412) target = $region92
        $region91: #{tpu_custom_call.1} parent=83 // pred_region
          %s10415 = sand.u32 %s345, 1
          %s10416 = scalar_lea.sflag [#allocation7], %s10415
          %s10417 = sand.u32 %s345, 1
          %s10418 = scalar_lea.vmem [#allocation6], %s10417
          %10419 = dma.done %s10416, 16
        $region92: #{tpu_custom_call.1} parent=83 // pred_fallthru
          _
      $region84: #{tpu_custom_call.1} parent=5 // pred_fallthru
        _
    $region6: #{tpu_custom_call.1} parent=1 // loop_footer
      %s31 = sadd.s32 1, %s27
    $region7: #{tpu_custom_call.1} parent=1 // loop_footer_branch
      %26 = sbr.rel target = $region3
    $region8: #{tpu_custom_call.1} parent=1 // loop_exit
      _
    %10420 = vsyncpa [#allocation5], 1
    %s10421 = scalar_lea.sflag [#allocation5], 1
    %10422 = vsyncpa %s10421, 1
    %10423 = vsyncpa [#allocation7], 1
    %s10424 = scalar_lea.sflag [#allocation7], 1
    %10425 = vsyncpa %s10424, 1

</llo_original>
